<compile_context>
chip_gen: v7x
topology: tpu7x:2x2x1
jax: 0.10.0
libtpu: 0.0.40
codegen_flags: <defaults>
</compile_context>

<pallas_src>
import math
import jax
import jax.numpy as jnp
from jax.experimental import pallas as pl
from jax.experimental.pallas import tpu as pltpu

LANE = 128


def _round_up(x, m):
    return ((x + m - 1) // m) * m


# ----------------------------------------------------------------------------
# Dense kernels (single grid point, whole operands as one VMEM block).
# ----------------------------------------------------------------------------
def dense_kernel(x_ref, w_ref, b_ref, o_ref):
    o_ref[...] = (
        jnp.dot(x_ref[...], w_ref[...], preferred_element_type=jnp.float32)
        + b_ref[...]
    )


def masked_dense_kernel(x_ref, m_ref, w_ref, b_ref, o_ref):
    o_ref[...] = (
        jnp.dot(x_ref[...] * m_ref[...], w_ref[...],
                preferred_element_type=jnp.float32)
        + b_ref[...]
    )


def dense(x, w, b):
    N, F = x.shape
    C = w.shape[1]
    return pl.pallas_call(
        dense_kernel,
        out_shape=jax.ShapeDtypeStruct((N, C), jnp.float32),
        grid_spec=pltpu.PrefetchScalarGridSpec(
            num_scalar_prefetch=0,
            grid=(1,),
            in_specs=[
                pl.BlockSpec((N, F), lambda i: (0, 0)),
                pl.BlockSpec((F, C), lambda i: (0, 0)),
                pl.BlockSpec((1, C), lambda i: (0, 0)),
            ],
            out_specs=pl.BlockSpec((N, C), lambda i: (0, 0)),
        ),
        compiler_params=pltpu.CompilerParams(dimension_semantics=("arbitrary",)),
    )(x, w, b)


def masked_dense(x, m, w, b):
    N, F = x.shape
    C = w.shape[1]
    return pl.pallas_call(
        masked_dense_kernel,
        out_shape=jax.ShapeDtypeStruct((N, C), jnp.float32),
        grid_spec=pltpu.PrefetchScalarGridSpec(
            num_scalar_prefetch=0,
            grid=(1,),
            in_specs=[
                pl.BlockSpec((N, F), lambda i: (0, 0)),
                pl.BlockSpec((N, 1), lambda i: (0, 0)),
                pl.BlockSpec((F, C), lambda i: (0, 0)),
                pl.BlockSpec((1, C), lambda i: (0, 0)),
            ],
            out_specs=pl.BlockSpec((N, C), lambda i: (0, 0)),
        ),
        compiler_params=pltpu.CompilerParams(dimension_semantics=("arbitrary",)),
    )(x, m, w, b)


# ----------------------------------------------------------------------------
# Fused bidirectional LSTM recurrence kernel (single grid point).
#
# gx_ref  : (T, B, 8*Hp)  precomputed x@W_ih^T + b ; [..., :4Hp]=fwd, [..., 4Hp:]=bwd
# whh_ref : (2*Hp, 4*Hp)  rows 0:Hp = W_hh_fwd^T (padded), rows Hp:2Hp = W_hh_bwd^T
# out_ref : (T, B, 2*Hp)  [..., :Hp]=fwd h_t, [..., Hp:]=bwd h_t
#
# Hidden state is kept block-diagonally: h_bd (2B, 2Hp), fwd rows use cols 0:Hp,
# bwd rows use cols Hp:2Hp, so one matmul drives both directions.
# PyTorch gate order [i, f, g, o];  c = f*c + i*g ; h = o*tanh(c)
# ----------------------------------------------------------------------------
def bilstm_kernel(gx_ref, whh_ref, out_ref):
    T, B, _ = gx_ref.shape
    Hp = whh_ref.shape[1] // 4

    whh = whh_ref[...]                                   # hoisted: read once

    row = jax.lax.broadcasted_iota(jnp.int32, (2 * B, 2 * Hp), 0)
    col = jax.lax.broadcasted_iota(jnp.int32, (2 * B, 2 * Hp), 1)
    bd_mask = jnp.where((row < B) == (col < Hp), 1.0, 0.0).astype(jnp.float32)

    h_bd = jnp.zeros((2 * B, 2 * Hp), jnp.float32)
    c = jnp.zeros((2 * B, Hp), jnp.float32)

    # Fully unrolled time loop (T is small & static): all indices are static,
    # all slices are 128-lane tile-aligned free views.
    for s in range(T):
        gx_f = gx_ref[s, :, : 4 * Hp]                    # (B, 4Hp) fwd, time s
        gx_b = gx_ref[T - 1 - s, :, 4 * Hp:]             # (B, 4Hp) bwd, time T-1-s
        gates = (
            jnp.concatenate([gx_f, gx_b], axis=0)        # (2B, 4Hp)
            + jnp.dot(h_bd, whh, preferred_element_type=jnp.float32)
        )
        i_g = jax.nn.sigmoid(gates[:, 0 * Hp: 1 * Hp])
        f_g = jax.nn.sigmoid(gates[:, 1 * Hp: 2 * Hp])
        g_g = jnp.tanh(gates[:, 2 * Hp: 3 * Hp])
        o_g = jax.nn.sigmoid(gates[:, 3 * Hp: 4 * Hp])

        c = f_g * c + i_g * g_g                          # (2B, Hp)
        h_new = o_g * jnp.tanh(c)                        # (2B, Hp)

        out_ref[s, :, :Hp] = h_new[:B]                   # fwd result at time s
        out_ref[T - 1 - s, :, Hp:] = h_new[B:]           # bwd result at time T-1-s

        h_bd = jnp.concatenate([h_new, h_new], axis=-1) * bd_mask


def bilstm_recurrence(gx, whh):
    T, B, G = gx.shape
    Hp = whh.shape[1] // 4
    return pl.pallas_call(
        bilstm_kernel,
        out_shape=jax.ShapeDtypeStruct((T, B, 2 * Hp), jnp.float32),
        grid_spec=pltpu.PrefetchScalarGridSpec(
            num_scalar_prefetch=0,
            grid=(1,),
            in_specs=[
                pl.BlockSpec((T, B, G), lambda i: (0, 0, 0)),
                pl.BlockSpec((2 * Hp, 4 * Hp), lambda i: (0, 0)),
            ],
            out_specs=pl.BlockSpec((T, B, 2 * Hp), lambda i: (0, 0, 0)),
        ),
        compiler_params=pltpu.CompilerParams(dimension_semantics=("arbitrary",)),
    )(gx, whh)


# ----------------------------------------------------------------------------
# Parameter init (PyTorch layout) and padded / fused kernel operands.
# ----------------------------------------------------------------------------
def init_params(key, input_dim, hidden_dim, num_classes_list, num_layers=2):
    H = hidden_dim
    k_rnn = 1.0 / math.sqrt(H)
    params = {"lstm": [], "heads": []}
    for layer in range(num_layers):
        in_dim = input_dim if layer == 0 else 2 * H
        layer_p = {}
        for dname in ("fwd", "bwd"):
            key, k1, k2, k3, k4 = jax.random.split(key, 5)
            w_ih = jax.random.uniform(k1, (4 * H, in_dim), jnp.float32, -k_rnn, k_rnn)
            w_hh = jax.random.uniform(k2, (4 * H, H), jnp.float32, -k_rnn, k_rnn)
            b_ih = jax.random.uniform(k3, (4 * H,), jnp.float32, -k_rnn, k_rnn)
            b_hh = jax.random.uniform(k4, (4 * H,), jnp.float32, -k_rnn, k_rnn)
            layer_p[dname] = (w_ih, w_hh, b_ih, b_hh)
        params["lstm"].append(layer_p)

    k_head = 1.0 / math.sqrt(2 * H)
    for C in num_classes_list:
        key, k1, k2 = jax.random.split(key, 3)
        w = jax.random.uniform(k1, (C, 2 * H), jnp.float32, -k_head, k_head)
        b = jax.random.uniform(k2, (C,), jnp.float32, -k_head, k_head)
        params["heads"].append((w, b))
    return params


def prepare_kernel_params(params, hidden_dim, num_classes_list):
    """Pad H -> Hp=128 lanes, fuse fwd/bwd weights and all head weights."""
    H = hidden_dim
    Hp = _round_up(H, LANE)

    def pad_gate_cols(w_t_real):            # (rows, 4H) -> (rows, 4Hp)
        rows = w_t_real.shape[0]
        out = jnp.zeros((rows, 4 * Hp), jnp.float32)
        for g in range(4):
            out = out.at[:, g * Hp: g * Hp + H].set(w_t_real[:, g * H:(g + 1) * H])
        return out

    def pad_input_rows(w_pad):              # (2H, 4Hp) -> (2Hp, 4Hp)
        out = jnp.zeros((2 * Hp, 4 * Hp), jnp.float32)
        out = out.at[0:H].set(w_pad[0:H])               # fwd features
        out = out.at[Hp:Hp + H].set(w_pad[H:2 * H])     # bwd features
        return out

    layers = []
    for li, layer_p in enumerate(params["lstm"]):
        wih_dirs, b_dirs, whh_dirs = [], [], []
        for dname in ("fwd", "bwd"):
            w_ih, w_hh, b_ih, b_hh = layer_p[dname]
            wih_t = pad_gate_cols(w_ih.T)                       # (in_dim, 4Hp)
            if li > 0:
                wih_t = pad_input_rows(wih_t)                   # (2Hp, 4Hp)
            whh_t = jnp.zeros((Hp, 4 * Hp), jnp.float32).at[0:H].set(
                pad_gate_cols(w_hh.T))
            b_row = pad_gate_cols((b_ih + b_hh).reshape(1, 4 * H))
            wih_dirs.append(wih_t)
            whh_dirs.append(whh_t)
            b_dirs.append(b_row)
        wih_cat = jnp.concatenate(wih_dirs, axis=1)             # (in_pad, 8Hp)
        b_cat = jnp.concatenate(b_dirs, axis=1)                 # (1, 8Hp)
        whh_cat = jnp.concatenate(whh_dirs, axis=0)             # (2Hp, 4Hp)
        layers.append((wih_cat, b_cat, whh_cat))

    C_total = sum(num_classes_list)
    Cp = _round_up(C_total, LANE)
    head_w = jnp.zeros((2 * Hp, Cp), jnp.float32)
    head_b = jnp.zeros((1, Cp), jnp.float32)
    off = 0
    for (w, b) in params["heads"]:
        C = w.shape[0]
        w_t = w.T                                               # (2H, C)
        head_w = head_w.at[0:H, off:off + C].set(w_t[0:H])
        head_w = head_w.at[Hp:Hp + H, off:off + C].set(w_t[H:2 * H])
        head_b = head_b.at[0, off:off + C].set(b)
        off += C
    return {"layers": layers, "head_w": head_w, "head_b": head_b}


# ----------------------------------------------------------------------------
# Forward pass (matches MT_RNN_dp.forward in eval mode).
# ----------------------------------------------------------------------------
def mt_rnn_dp_forward(kparams, rnn_inputs, mask, num_classes_list):
    B, _, T = rnn_inputs.shape
    Hp = kparams["head_w"].shape[0] // 2

    x = jnp.transpose(rnn_inputs, (2, 0, 1))        # (T, B, Din) time-major
    m = jnp.transpose(mask, (2, 0, 1))              # (T, B, 1)
    # dropout -> identity (eval mode)

    h = x
    for (wih_cat, b_cat, whh_cat) in kparams["layers"]:
        F = h.shape[-1]
        # Hoisted input->hidden matmul for both directions: one big matmul.
        gx = dense(h.reshape(T * B, F), wih_cat, b_cat).reshape(T, B, -1)
        # Fused fwd+bwd recurrence, everything VMEM-resident.
        h = bilstm_recurrence(gx, whh_cat)          # (T, B, 2*Hp)

    # All task heads in one masked matmul (class axis padded to 128 lanes).
    logits = masked_dense(h.reshape(T * B, 2 * Hp), m.reshape(T * B, 1),
                          kparams["head_w"], kparams["head_b"])
    logits = logits.reshape(T, B, -1)

    outputs, off = [], 0
    for C in num_classes_list:
        o = logits[:, :, off:off + C]               # (T, B, C)
        outputs.append([jnp.transpose(o, (1, 2, 0))])  # (B, C, T) == .permute(0,2,1)
        off += C
    return outputs


# ----------------------------------------------------------------------------
# Pure-JAX reference (standard LSTM equations) for correctness checking.
# ----------------------------------------------------------------------------
def reference_forward(params, rnn_inputs, mask):
    x = jnp.transpose(rnn_inputs, (2, 0, 1))        # (T, B, Din)
    m = jnp.transpose(mask, (2, 0, 1))              # (T, B, 1)
    h = x
    for layer_p in params["lstm"]:
        outs = []
        for dname, rev in (("fwd", False), ("bwd", True)):
            w_ih, w_hh, b_ih, b_hh = layer_p[dname]
            H = w_hh.shape[1]

            def step(carry, x_t, w_ih=w_ih, w_hh=w_hh, b=b_ih + b_hh, H=H):
                hh, cc = carry
                g = x_t @ w_ih.T + hh @ w_hh.T + b
                i = jax.nn.sigmoid(g[:, 0 * H:1 * H])
                f = jax.nn.sigmoid(g[:, 1 * H:2 * H])
                gg = jnp.tanh(g[:, 2 * H:3 * H])
                o = jax.nn.sigmoid(g[:, 3 * H:4 * H])
                cc = f * cc + i * gg
                hh = o * jnp.tanh(cc)
                return (hh, cc), hh

            Bv = h.shape[1]
            init = (jnp.zeros((Bv, H), jnp.float32), jnp.zeros((Bv, H), jnp.float32))
            xs = h[::-1] if rev else h
            _, hs = jax.lax.scan(step, init, xs)
            outs.append(hs[::-1] if rev else hs)
        h = jnp.concatenate(outs, axis=-1)          # (T, B, 2H)
    h = h * m
    return [jnp.transpose(h @ w.T + b, (1, 2, 0)) for (w, b) in params["heads"]]


if __name__ == "__main__":
    B, input_dim, T = 2, 8, 16
    hidden_dim = 16
    num_classes_list = [5, 7]

    key = jax.random.PRNGKey(0)
    key, kx, km, kp = jax.random.split(key, 4)
    rnn_inputs = jax.random.normal(kx, (B, input_dim, T), jnp.float32)
    mask = (jax.random.uniform(km, (B, 1, T)) > 0.2).astype(jnp.float32)

    params = init_params(kp, input_dim, hidden_dim, num_classes_list, num_layers=2)
    kparams = prepare_kernel_params(params, hidden_dim, num_classes_list)

    fwd = jax.jit(lambda kp_, x_, m_: mt_rnn_dp_forward(kp_, x_, m_, num_classes_list))
    outputs = fwd(kparams, rnn_inputs, mask)
    for task_out in outputs:
        jax.block_until_ready(task_out[0])

    assert outputs[0][0].shape == (B, num_classes_list[0], T)
    assert outputs[1][0].shape == (B, num_classes_list[1], T)

    # Correctness check against the pure-JAX reference.
    ref_outs = reference_forward(params, rnn_inputs, mask)
    for ti in range(len(num_classes_list)):
        err = float(jnp.max(jnp.abs(outputs[ti][0] - ref_outs[ti])))
        assert err < 1e-4, f"task {ti} max abs err {err}"

    print("KERNEL_OK")
</pallas_src>

<mosaic_0001>
module attributes {stable_mosaic.version = 11 : i64} {
  func.func @dense_kernel(%arg0: i32, %arg1: memref<32x8xf32, #tpu.memory_space<vmem>>, %arg2: memref<8x1024xf32, #tpu.memory_space<vmem>>, %arg3: memref<1x1024xf32, #tpu.memory_space<vmem>>, %arg4: memref<32x1024xf32, #tpu.memory_space<vmem>>) attributes {dimension_semantics = [#tpu.dimension_semantics<arbitrary>], iteration_bounds = array<i64: 1>, scalar_prefetch = 0 : i64, scratch_operands = 0 : i64, tpu.core_type = #tpu.core_type<tc>, window_params = [{pipeline_mode = #tpu.pipeline_mode<synchronous>, transform_indices = @transform_0, window_bounds = array<i64: 32, 8>}, {pipeline_mode = #tpu.pipeline_mode<synchronous>, transform_indices = @transform_1, window_bounds = array<i64: 8, 1024>}, {pipeline_mode = #tpu.pipeline_mode<synchronous>, transform_indices = @transform_2, window_bounds = array<i64: 1, 1024>}, {pipeline_mode = #tpu.pipeline_mode<synchronous>, transform_indices = @transform_3, window_bounds = array<i64: 32, 1024>}]} {
    %c0 = arith.constant 0 : index
    %c0_0 = arith.constant 0 : index
    %0 = vector.load %arg1[%c0, %c0_0] : memref<32x8xf32, #tpu.memory_space<vmem>>, vector<32x8xf32>
    %c0_1 = arith.constant 0 : index
    %c0_2 = arith.constant 0 : index
    %1 = vector.load %arg2[%c0_1, %c0_2] : memref<8x1024xf32, #tpu.memory_space<vmem>>, vector<8x1024xf32>
    %cst = arith.constant dense<0.000000e+00> : vector<32x1024xf32>
    %2 = tpu.matmul %0, %1, %cst {dimension_numbers = #tpu.dot_dimension_numbers<[1], [0], [0], [1], [0, 0, 1, 1], [], []>} : vector<32x8xf32>, vector<8x1024xf32>, vector<32x1024xf32> -> vector<32x1024xf32>
    %c0_3 = arith.constant 0 : index
    %c0_4 = arith.constant 0 : index
    %3 = vector.load %arg3[%c0_3, %c0_4] : memref<1x1024xf32, #tpu.memory_space<vmem>>, vector<1x1024xf32>
    %4 = vector.broadcast %3 : vector<1x1024xf32> to vector<32x1024xf32>
    %5 = arith.addf %2, %4 : vector<32x1024xf32>
    %c0_5 = arith.constant 0 : index
    %c0_6 = arith.constant 0 : index
    %6 = vector.load %arg4[%c0_5, %c0_6] : memref<32x1024xf32, #tpu.memory_space<vmem>>, vector<32x1024xf32>
    tpu.vector_store %arg4[%c0_5, %c0_6], %5 {strides = array<i32>} : memref<32x1024xf32, #tpu.memory_space<vmem>>, vector<32x1024xf32>,
    return
  }
  func.func @transform_0(%arg0: i32) -> (i32, i32) {
    %c0_i32 = arith.constant 0 : i32
    %c0_i32_0 = arith.constant 0 : i32
    %c0_i32_1 = arith.constant 0 : i32
    return %c0_i32, %c0_i32_0 : i32, i32
  }
  func.func @transform_1(%arg0: i32) -> (i32, i32) {
    %c0_i32 = arith.constant 0 : i32
    %c0_i32_0 = arith.constant 0 : i32
    %c0_i32_1 = arith.constant 0 : i32
    return %c0_i32, %c0_i32_0 : i32, i32
  }
  func.func @transform_2(%arg0: i32) -> (i32, i32) {
    %c0_i32 = arith.constant 0 : i32
    %c0_i32_0 = arith.constant 0 : i32
    %c0_i32_1 = arith.constant 0 : i32
    return %c0_i32, %c0_i32_0 : i32, i32
  }
  func.func @transform_3(%arg0: i32) -> (i32, i32) {
    %c0_i32 = arith.constant 0 : i32
    %c0_i32_0 = arith.constant 0 : i32
    %c0_i32_1 = arith.constant 0 : i32
    return %c0_i32, %c0_i32_0 : i32, i32
  }
}

module attributes {stable_mosaic.version = 11 : i64} {
  func.func @bilstm_kernel(%arg0: i32, %arg1: memref<16x2x1024xf32, #tpu.memory_space<vmem>>, %arg2: memref<256x512xf32, #tpu.memory_space<vmem>>, %arg3: memref<16x2x256xf32, #tpu.memory_space<vmem>>) attributes {dimension_semantics = [#tpu.dimension_semantics<arbitrary>], iteration_bounds = array<i64: 1>, scalar_prefetch = 0 : i64, scratch_operands = 0 : i64, tpu.core_type = #tpu.core_type<tc>, window_params = [{pipeline_mode = #tpu.pipeline_mode<synchronous>, transform_indices = @transform_0, window_bounds = array<i64: 16, 2, 1024>}, {pipeline_mode = #tpu.pipeline_mode<synchronous>, transform_indices = @transform_1, window_bounds = array<i64: 256, 512>}, {pipeline_mode = #tpu.pipeline_mode<synchronous>, transform_indices = @transform_2, window_bounds = array<i64: 16, 2, 256>}]} {
    %c0 = arith.constant 0 : index
    %c0_0 = arith.constant 0 : index
    %0 = vector.load %arg2[%c0, %c0_0] : memref<256x512xf32, #tpu.memory_space<vmem>>, vector<256x512xf32>
    %1 = tpu.iota {dimensions = array<i32: 0>} : vector<4x256xi32>
    %2 = tpu.iota {dimensions = array<i32: 1>} : vector<4x256xi32>
    %c2_i32 = arith.constant 2 : i32
    %3 = vector.broadcast %c2_i32 : i32 to vector<4x256xi32>
    %4 = arith.cmpi slt, %1, %3 : vector<4x256xi32>
    %c128_i32 = arith.constant 128 : i32
    %5 = vector.broadcast %c128_i32 : i32 to vector<4x256xi32>
    %6 = arith.cmpi slt, %2, %5 : vector<4x256xi32>
    %7 = arith.xori %4, %6 : vector<4x256xi1>
    %cst = arith.constant dense<true> : vector<4x256xi1>
    %8 = arith.xori %7, %cst : vector<4x256xi1>
    %cst_1 = arith.constant 1.000000e+00 : f32
    %cst_2 = arith.constant 0.000000e+00 : f32
    %9 = vector.broadcast %cst_1 : f32 to vector<4x256xf32>
    %10 = vector.broadcast %cst_2 : f32 to vector<4x256xf32>
    %11 = arith.select %8, %9, %10 : vector<4x256xi1>, vector<4x256xf32>
    %cst_3 = arith.constant 0.000000e+00 : f32
    %12 = vector.broadcast %cst_3 : f32 to vector<4x256xf32>
    %cst_4 = arith.constant 0.000000e+00 : f32
    %13 = vector.broadcast %cst_4 : f32 to vector<4x128xf32>
    %c0_5 = arith.constant 0 : index
    %c0_6 = arith.constant 0 : index
    %c0_7 = arith.constant 0 : index
    %14 = vector.load %arg1[%c0_5, %c0_6, %c0_7] : memref<16x2x1024xf32, #tpu.memory_space<vmem>>, vector<1x2x512xf32>
    %15 = vector.shape_cast %14 : vector<1x2x512xf32> to vector<2x512xf32>
    %c15 = arith.constant 15 : index
    %c0_8 = arith.constant 0 : index
    %c512 = arith.constant 512 : index
    %16 = vector.load %arg1[%c15, %c0_8, %c512] : memref<16x2x1024xf32, #tpu.memory_space<vmem>>, vector<1x2x512xf32>
    %17 = vector.shape_cast %16 : vector<1x2x512xf32> to vector<2x512xf32>
    %18 = tpu.concatenate %15, %17 in 0 : vector<2x512xf32>, vector<2x512xf32> -> vector<4x512xf32>
    %cst_9 = arith.constant dense<0.000000e+00> : vector<4x512xf32>
    %19 = tpu.matmul %12, %0, %cst_9 {dimension_numbers = #tpu.dot_dimension_numbers<[1], [0], [0], [1], [0, 0, 1, 1], [], []>} : vector<4x256xf32>, vector<256x512xf32>, vector<4x512xf32> -> vector<4x512xf32>
    %20 = arith.addf %18, %19 : vector<4x512xf32>
    %21 = vector.extract_strided_slice %20 {offsets = [0, 0], sizes = [4, 128], strides = [1, 1]} : vector<4x512xf32> to vector<4x128xf32>
    %22 = arith.negf %21 : vector<4x128xf32>
    %23 = math.exp %22 : vector<4x128xf32>
    %cst_10 = arith.constant 1.000000e+00 : f32
    %24 = vector.broadcast %cst_10 : f32 to vector<4x128xf32>
    %25 = arith.addf %24, %23 : vector<4x128xf32>
    %26 = arith.divf %24, %25 : vector<4x128xf32>
    %27 = vector.extract_strided_slice %20 {offsets = [0, 128], sizes = [4, 128], strides = [1, 1]} : vector<4x512xf32> to vector<4x128xf32>
    %28 = arith.negf %27 : vector<4x128xf32>
    %29 = math.exp %28 : vector<4x128xf32>
    %cst_11 = arith.constant 1.000000e+00 : f32
    %30 = vector.broadcast %cst_11 : f32 to vector<4x128xf32>
    %31 = arith.addf %30, %29 : vector<4x128xf32>
    %32 = arith.divf %30, %31 : vector<4x128xf32>
    %33 = vector.extract_strided_slice %20 {offsets = [0, 256], sizes = [4, 128], strides = [1, 1]} : vector<4x512xf32> to vector<4x128xf32>
    %34 = math.tanh %33 : vector<4x128xf32>
    %35 = vector.extract_strided_slice %20 {offsets = [0, 384], sizes = [4, 128], strides = [1, 1]} : vector<4x512xf32> to vector<4x128xf32>
    %36 = arith.negf %35 : vector<4x128xf32>
    %37 = math.exp %36 : vector<4x128xf32>
    %cst_12 = arith.constant 1.000000e+00 : f32
    %38 = vector.broadcast %cst_12 : f32 to vector<4x128xf32>
    %39 = arith.addf %38, %37 : vector<4x128xf32>
    %40 = arith.divf %38, %39 : vector<4x128xf32>
    %41 = arith.mulf %32, %13 : vector<4x128xf32>
    %42 = arith.mulf %26, %34 : vector<4x128xf32>
    %43 = arith.addf %41, %42 : vector<4x128xf32>
    %44 = math.tanh %43 : vector<4x128xf32>
    %45 = arith.mulf %40, %44 : vector<4x128xf32>
    %46 = vector.extract_strided_slice %45 {offsets = [0, 0], sizes = [2, 128], strides = [1, 1]} : vector<4x128xf32> to vector<2x128xf32>
    %c0_13 = arith.constant 0 : index
    %c0_14 = arith.constant 0 : index
    %c0_15 = arith.constant 0 : index
    %47 = vector.load %arg3[%c0_13, %c0_14, %c0_15] : memref<16x2x256xf32, #tpu.memory_space<vmem>>, vector<1x2x128xf32>
    %48 = vector.shape_cast %47 : vector<1x2x128xf32> to vector<2x128xf32>
    %49 = vector.shape_cast %46 : vector<2x128xf32> to vector<1x2x128xf32>
    tpu.vector_store %arg3[%c0_13, %c0_14, %c0_15], %49 {strides = array<i32>} : memref<16x2x256xf32, #tpu.memory_space<vmem>>, vector<1x2x128xf32>,
    %50 = vector.extract_strided_slice %45 {offsets = [2, 0], sizes = [2, 128], strides = [1, 1]} : vector<4x128xf32> to vector<2x128xf32>
    %c15_16 = arith.constant 15 : index
    %c0_17 = arith.constant 0 : index
    %c128 = arith.constant 128 : index
    %51 = vector.load %arg3[%c15_16, %c0_17, %c128] : memref<16x2x256xf32, #tpu.memory_space<vmem>>, vector<1x2x128xf32>
    %52 = vector.shape_cast %51 : vector<1x2x128xf32> to vector<2x128xf32>
    %53 = vector.shape_cast %50 : vector<2x128xf32> to vector<1x2x128xf32>
    tpu.vector_store %arg3[%c15_16, %c0_17, %c128], %53 {strides = array<i32>} : memref<16x2x256xf32, #tpu.memory_space<vmem>>, vector<1x2x128xf32>,
    %54 = tpu.concatenate %45, %45 in 1 : vector<4x128xf32>, vector<4x128xf32> -> vector<4x256xf32>
    %55 = arith.mulf %54, %11 : vector<4x256xf32>
    %c1 = arith.constant 1 : index
    %c0_18 = arith.constant 0 : index
    %c0_19 = arith.constant 0 : index
    %56 = vector.load %arg1[%c1, %c0_18, %c0_19] : memref<16x2x1024xf32, #tpu.memory_space<vmem>>, vector<1x2x512xf32>
    %57 = vector.shape_cast %56 : vector<1x2x512xf32> to vector<2x512xf32>
    %c14 = arith.constant 14 : index
    %c0_20 = arith.constant 0 : index
    %c512_21 = arith.constant 512 : index
    %58 = vector.load %arg1[%c14, %c0_20, %c512_21] : memref<16x2x1024xf32, #tpu.memory_space<vmem>>, vector<1x2x512xf32>
    %59 = vector.shape_cast %58 : vector<1x2x512xf32> to vector<2x512xf32>
    %60 = tpu.concatenate %57, %59 in 0 : vector<2x512xf32>, vector<2x512xf32> -> vector<4x512xf32>
    %cst_22 = arith.constant dense<0.000000e+00> : vector<4x512xf32>
    %61 = tpu.matmul %55, %0, %cst_22 {dimension_numbers = #tpu.dot_dimension_numbers<[1], [0], [0], [1], [0, 0, 1, 1], [], []>} : vector<4x256xf32>, vector<256x512xf32>, vector<4x512xf32> -> vector<4x512xf32>
    %62 = arith.addf %60, %61 : vector<4x512xf32>
    %63 = vector.extract_strided_slice %62 {offsets = [0, 0], sizes = [4, 128], strides = [1, 1]} : vector<4x512xf32> to vector<4x128xf32>
    %64 = arith.negf %63 : vector<4x128xf32>
    %65 = math.exp %64 : vector<4x128xf32>
    %cst_23 = arith.constant 1.000000e+00 : f32
    %66 = vector.broadcast %cst_23 : f32 to vector<4x128xf32>
    %67 = arith.addf %66, %65 : vector<4x128xf32>
    %68 = arith.divf %66, %67 : vector<4x128xf32>
    %69 = vector.extract_strided_slice %62 {offsets = [0, 128], sizes = [4, 128], strides = [1, 1]} : vector<4x512xf32> to vector<4x128xf32>
    %70 = arith.negf %69 : vector<4x128xf32>
    %71 = math.exp %70 : vector<4x128xf32>
    %cst_24 = arith.constant 1.000000e+00 : f32
    %72 = vector.broadcast %cst_24 : f32 to vector<4x128xf32>
    %73 = arith.addf %72, %71 : vector<4x128xf32>
    %74 = arith.divf %72, %73 : vector<4x128xf32>
    %75 = vector.extract_strided_slice %62 {offsets = [0, 256], sizes = [4, 128], strides = [1, 1]} : vector<4x512xf32> to vector<4x128xf32>
    %76 = math.tanh %75 : vector<4x128xf32>
    %77 = vector.extract_strided_slice %62 {offsets = [0, 384], sizes = [4, 128], strides = [1, 1]} : vector<4x512xf32> to vector<4x128xf32>
    %78 = arith.negf %77 : vector<4x128xf32>
    %79 = math.exp %78 : vector<4x128xf32>
    %cst_25 = arith.constant 1.000000e+00 : f32
    %80 = vector.broadcast %cst_25 : f32 to vector<4x128xf32>
    %81 = arith.addf %80, %79 : vector<4x128xf32>
    %82 = arith.divf %80, %81 : vector<4x128xf32>
    %83 = arith.mulf %74, %43 : vector<4x128xf32>
    %84 = arith.mulf %68, %76 : vector<4x128xf32>
    %85 = arith.addf %83, %84 : vector<4x128xf32>
    %86 = math.tanh %85 : vector<4x128xf32>
    %87 = arith.mulf %82, %86 : vector<4x128xf32>
    %88 = vector.extract_strided_slice %87 {offsets = [0, 0], sizes = [2, 128], strides = [1, 1]} : vector<4x128xf32> to vector<2x128xf32>
    %c1_26 = arith.constant 1 : index
    %c0_27 = arith.constant 0 : index
    %c0_28 = arith.constant 0 : index
    %89 = vector.load %arg3[%c1_26, %c0_27, %c0_28] : memref<16x2x256xf32, #tpu.memory_space<vmem>>, vector<1x2x128xf32>
    %90 = vector.shape_cast %89 : vector<1x2x128xf32> to vector<2x128xf32>
    %91 = vector.shape_cast %88 : vector<2x128xf32> to vector<1x2x128xf32>
    tpu.vector_store %arg3[%c1_26, %c0_27, %c0_28], %91 {strides = array<i32>} : memref<16x2x256xf32, #tpu.memory_space<vmem>>, vector<1x2x128xf32>,
    %92 = vector.extract_strided_slice %87 {offsets = [2, 0], sizes = [2, 128], strides = [1, 1]} : vector<4x128xf32> to vector<2x128xf32>
    %c14_29 = arith.constant 14 : index
    %c0_30 = arith.constant 0 : index
    %c128_31 = arith.constant 128 : index
    %93 = vector.load %arg3[%c14_29, %c0_30, %c128_31] : memref<16x2x256xf32, #tpu.memory_space<vmem>>, vector<1x2x128xf32>
    %94 = vector.shape_cast %93 : vector<1x2x128xf32> to vector<2x128xf32>
    %95 = vector.shape_cast %92 : vector<2x128xf32> to vector<1x2x128xf32>
    tpu.vector_store %arg3[%c14_29, %c0_30, %c128_31], %95 {strides = array<i32>} : memref<16x2x256xf32, #tpu.memory_space<vmem>>, vector<1x2x128xf32>,
    %96 = tpu.concatenate %87, %87 in 1 : vector<4x128xf32>, vector<4x128xf32> -> vector<4x256xf32>
    %97 = arith.mulf %96, %11 : vector<4x256xf32>
    %c2 = arith.constant 2 : index
    %c0_32 = arith.constant 0 : index
    %c0_33 = arith.constant 0 : index
    %98 = vector.load %arg1[%c2, %c0_32, %c0_33] : memref<16x2x1024xf32, #tpu.memory_space<vmem>>, vector<1x2x512xf32>
    %99 = vector.shape_cast %98 : vector<1x2x512xf32> to vector<2x512xf32>
    %c13 = arith.constant 13 : index
    %c0_34 = arith.constant 0 : index
    %c512_35 = arith.constant 512 : index
    %100 = vector.load %arg1[%c13, %c0_34, %c512_35] : memref<16x2x1024xf32, #tpu.memory_space<vmem>>, vector<1x2x512xf32>
    %101 = vector.shape_cast %100 : vector<1x2x512xf32> to vector<2x512xf32>
    %102 = tpu.concatenate %99, %101 in 0 : vector<2x512xf32>, vector<2x512xf32> -> vector<4x512xf32>
    %cst_36 = arith.constant dense<0.000000e+00> : vector<4x512xf32>
    %103 = tpu.matmul %97, %0, %cst_36 {dimension_numbers = #tpu.dot_dimension_numbers<[1], [0], [0], [1], [0, 0, 1, 1], [], []>} : vector<4x256xf32>, vector<256x512xf32>, vector<4x512xf32> -> vector<4x512xf32>
    %104 = arith.addf %102, %103 : vector<4x512xf32>
    %105 = vector.extract_strided_slice %104 {offsets = [0, 0], sizes = [4, 128], strides = [1, 1]} : vector<4x512xf32> to vector<4x128xf32>
    %106 = arith.negf %105 : vector<4x128xf32>
    %107 = math.exp %106 : vector<4x128xf32>
    %cst_37 = arith.constant 1.000000e+00 : f32
    %108 = vector.broadcast %cst_37 : f32 to vector<4x128xf32>
    %109 = arith.addf %108, %107 : vector<4x128xf32>
    %110 = arith.divf %108, %109 : vector<4x128xf32>
    %111 = vector.extract_strided_slice %104 {offsets = [0, 128], sizes = [4, 128], strides = [1, 1]} : vector<4x512xf32> to vector<4x128xf32>
    %112 = arith.negf %111 : vector<4x128xf32>
    %113 = math.exp %112 : vector<4x128xf32>
    %cst_38 = arith.constant 1.000000e+00 : f32
    %114 = vector.broadcast %cst_38 : f32 to vector<4x128xf32>
    %115 = arith.addf %114, %113 : vector<4x128xf32>
    %116 = arith.divf %114, %115 : vector<4x128xf32>
    %117 = vector.extract_strided_slice %104 {offsets = [0, 256], sizes = [4, 128], strides = [1, 1]} : vector<4x512xf32> to vector<4x128xf32>
    %118 = math.tanh %117 : vector<4x128xf32>
    %119 = vector.extract_strided_slice %104 {offsets = [0, 384], sizes = [4, 128], strides = [1, 1]} : vector<4x512xf32> to vector<4x128xf32>
    %120 = arith.negf %119 : vector<4x128xf32>
    %121 = math.exp %120 : vector<4x128xf32>
    %cst_39 = arith.constant 1.000000e+00 : f32
    %122 = vector.broadcast %cst_39 : f32 to vector<4x128xf32>
    %123 = arith.addf %122, %121 : vector<4x128xf32>
    %124 = arith.divf %122, %123 : vector<4x128xf32>
    %125 = arith.mulf %116, %85 : vector<4x128xf32>
    %126 = arith.mulf %110, %118 : vector<4x128xf32>
    %127 = arith.addf %125, %126 : vector<4x128xf32>
    %128 = math.tanh %127 : vector<4x128xf32>
    %129 = arith.mulf %124, %128 : vector<4x128xf32>
    %130 = vector.extract_strided_slice %129 {offsets = [0, 0], sizes = [2, 128], strides = [1, 1]} : vector<4x128xf32> to vector<2x128xf32>
    %c2_40 = arith.constant 2 : index
    %c0_41 = arith.constant 0 : index
    %c0_42 = arith.constant 0 : index
    %131 = vector.load %arg3[%c2_40, %c0_41, %c0_42] : memref<16x2x256xf32, #tpu.memory_space<vmem>>, vector<1x2x128xf32>
    %132 = vector.shape_cast %131 : vector<1x2x128xf32> to vector<2x128xf32>
    %133 = vector.shape_cast %130 : vector<2x128xf32> to vector<1x2x128xf32>
    tpu.vector_store %arg3[%c2_40, %c0_41, %c0_42], %133 {strides = array<i32>} : memref<16x2x256xf32, #tpu.memory_space<vmem>>, vector<1x2x128xf32>,
    %134 = vector.extract_strided_slice %129 {offsets = [2, 0], sizes = [2, 128], strides = [1, 1]} : vector<4x128xf32> to vector<2x128xf32>
    %c13_43 = arith.constant 13 : index
    %c0_44 = arith.constant 0 : index
    %c128_45 = arith.constant 128 : index
    %135 = vector.load %arg3[%c13_43, %c0_44, %c128_45] : memref<16x2x256xf32, #tpu.memory_space<vmem>>, vector<1x2x128xf32>
    %136 = vector.shape_cast %135 : vector<1x2x128xf32> to vector<2x128xf32>
    %137 = vector.shape_cast %134 : vector<2x128xf32> to vector<1x2x128xf32>
    tpu.vector_store %arg3[%c13_43, %c0_44, %c128_45], %137 {strides = array<i32>} : memref<16x2x256xf32, #tpu.memory_space<vmem>>, vector<1x2x128xf32>,
    %138 = tpu.concatenate %129, %129 in 1 : vector<4x128xf32>, vector<4x128xf32> -> vector<4x256xf32>
    %139 = arith.mulf %138, %11 : vector<4x256xf32>
    %c3 = arith.constant 3 : index
    %c0_46 = arith.constant 0 : index
    %c0_47 = arith.constant 0 : index
    %140 = vector.load %arg1[%c3, %c0_46, %c0_47] : memref<16x2x1024xf32, #tpu.memory_space<vmem>>, vector<1x2x512xf32>
    %141 = vector.shape_cast %140 : vector<1x2x512xf32> to vector<2x512xf32>
    %c12 = arith.constant 12 : index
    %c0_48 = arith.constant 0 : index
    %c512_49 = arith.constant 512 : index
    %142 = vector.load %arg1[%c12, %c0_48, %c512_49] : memref<16x2x1024xf32, #tpu.memory_space<vmem>>, vector<1x2x512xf32>
    %143 = vector.shape_cast %142 : vector<1x2x512xf32> to vector<2x512xf32>
    %144 = tpu.concatenate %141, %143 in 0 : vector<2x512xf32>, vector<2x512xf32> -> vector<4x512xf32>
    %cst_50 = arith.constant dense<0.000000e+00> : vector<4x512xf32>
    %145 = tpu.matmul %139, %0, %cst_50 {dimension_numbers = #tpu.dot_dimension_numbers<[1], [0], [0], [1], [0, 0, 1, 1], [], []>} : vector<4x256xf32>, vector<256x512xf32>, vector<4x512xf32> -> vector<4x512xf32>
    %146 = arith.addf %144, %145 : vector<4x512xf32>
    %147 = vector.extract_strided_slice %146 {offsets = [0, 0], sizes = [4, 128], strides = [1, 1]} : vector<4x512xf32> to vector<4x128xf32>
    %148 = arith.negf %147 : vector<4x128xf32>
    %149 = math.exp %148 : vector<4x128xf32>
    %cst_51 = arith.constant 1.000000e+00 : f32
    %150 = vector.broadcast %cst_51 : f32 to vector<4x128xf32>
    %151 = arith.addf %150, %149 : vector<4x128xf32>
    %152 = arith.divf %150, %151 : vector<4x128xf32>
    %153 = vector.extract_strided_slice %146 {offsets = [0, 128], sizes = [4, 128], strides = [1, 1]} : vector<4x512xf32> to vector<4x128xf32>
    %154 = arith.negf %153 : vector<4x128xf32>
    %155 = math.exp %154 : vector<4x128xf32>
    %cst_52 = arith.constant 1.000000e+00 : f32
    %156 = vector.broadcast %cst_52 : f32 to vector<4x128xf32>
    %157 = arith.addf %156, %155 : vector<4x128xf32>
    %158 = arith.divf %156, %157 : vector<4x128xf32>
    %159 = vector.extract_strided_slice %146 {offsets = [0, 256], sizes = [4, 128], strides = [1, 1]} : vector<4x512xf32> to vector<4x128xf32>
    %160 = math.tanh %159 : vector<4x128xf32>
    %161 = vector.extract_strided_slice %146 {offsets = [0, 384], sizes = [4, 128], strides = [1, 1]} : vector<4x512xf32> to vector<4x128xf32>
    %162 = arith.negf %161 : vector<4x128xf32>
    %163 = math.exp %162 : vector<4x128xf32>
    %cst_53 = arith.constant 1.000000e+00 : f32
    %164 = vector.broadcast %cst_53 : f32 to vector<4x128xf32>
    %165 = arith.addf %164, %163 : vector<4x128xf32>
    %166 = arith.divf %164, %165 : vector<4x128xf32>
    %167 = arith.mulf %158, %127 : vector<4x128xf32>
    %168 = arith.mulf %152, %160 : vector<4x128xf32>
    %169 = arith.addf %167, %168 : vector<4x128xf32>
    %170 = math.tanh %169 : vector<4x128xf32>
    %171 = arith.mulf %166, %170 : vector<4x128xf32>
    %172 = vector.extract_strided_slice %171 {offsets = [0, 0], sizes = [2, 128], strides = [1, 1]} : vector<4x128xf32> to vector<2x128xf32>
    %c3_54 = arith.constant 3 : index
    %c0_55 = arith.constant 0 : index
    %c0_56 = arith.constant 0 : index
    %173 = vector.load %arg3[%c3_54, %c0_55, %c0_56] : memref<16x2x256xf32, #tpu.memory_space<vmem>>, vector<1x2x128xf32>
    %174 = vector.shape_cast %173 : vector<1x2x128xf32> to vector<2x128xf32>
    %175 = vector.shape_cast %172 : vector<2x128xf32> to vector<1x2x128xf32>
    tpu.vector_store %arg3[%c3_54, %c0_55, %c0_56], %175 {strides = array<i32>} : memref<16x2x256xf32, #tpu.memory_space<vmem>>, vector<1x2x128xf32>,
    %176 = vector.extract_strided_slice %171 {offsets = [2, 0], sizes = [2, 128], strides = [1, 1]} : vector<4x128xf32> to vector<2x128xf32>
    %c12_57 = arith.constant 12 : index
    %c0_58 = arith.constant 0 : index
    %c128_59 = arith.constant 128 : index
    %177 = vector.load %arg3[%c12_57, %c0_58, %c128_59] : memref<16x2x256xf32, #tpu.memory_space<vmem>>, vector<1x2x128xf32>
    %178 = vector.shape_cast %177 : vector<1x2x128xf32> to vector<2x128xf32>
    %179 = vector.shape_cast %176 : vector<2x128xf32> to vector<1x2x128xf32>
    tpu.vector_store %arg3[%c12_57, %c0_58, %c128_59], %179 {strides = array<i32>} : memref<16x2x256xf32, #tpu.memory_space<vmem>>, vector<1x2x128xf32>,
    %180 = tpu.concatenate %171, %171 in 1 : vector<4x128xf32>, vector<4x128xf32> -> vector<4x256xf32>
    %181 = arith.mulf %180, %11 : vector<4x256xf32>
    %c4 = arith.constant 4 : index
    %c0_60 = arith.constant 0 : index
    %c0_61 = arith.constant 0 : index
    %182 = vector.load %arg1[%c4, %c0_60, %c0_61] : memref<16x2x1024xf32, #tpu.memory_space<vmem>>, vector<1x2x512xf32>
    %183 = vector.shape_cast %182 : vector<1x2x512xf32> to vector<2x512xf32>
    %c11 = arith.constant 11 : index
    %c0_62 = arith.constant 0 : index
    %c512_63 = arith.constant 512 : index
    %184 = vector.load %arg1[%c11, %c0_62, %c512_63] : memref<16x2x1024xf32, #tpu.memory_space<vmem>>, vector<1x2x512xf32>
    %185 = vector.shape_cast %184 : vector<1x2x512xf32> to vector<2x512xf32>
    %186 = tpu.concatenate %183, %185 in 0 : vector<2x512xf32>, vector<2x512xf32> -> vector<4x512xf32>
    %cst_64 = arith.constant dense<0.000000e+00> : vector<4x512xf32>
    %187 = tpu.matmul %181, %0, %cst_64 {dimension_numbers = #tpu.dot_dimension_numbers<[1], [0], [0], [1], [0, 0, 1, 1], [], []>} : vector<4x256xf32>, vector<256x512xf32>, vector<4x512xf32> -> vector<4x512xf32>
    %188 = arith.addf %186, %187 : vector<4x512xf32>
    %189 = vector.extract_strided_slice %188 {offsets = [0, 0], sizes = [4, 128], strides = [1, 1]} : vector<4x512xf32> to vector<4x128xf32>
    %190 = arith.negf %189 : vector<4x128xf32>
    %191 = math.exp %190 : vector<4x128xf32>
    %cst_65 = arith.constant 1.000000e+00 : f32
    %192 = vector.broadcast %cst_65 : f32 to vector<4x128xf32>
    %193 = arith.addf %192, %191 : vector<4x128xf32>
    %194 = arith.divf %192, %193 : vector<4x128xf32>
    %195 = vector.extract_strided_slice %188 {offsets = [0, 128], sizes = [4, 128], strides = [1, 1]} : vector<4x512xf32> to vector<4x128xf32>
    %196 = arith.negf %195 : vector<4x128xf32>
    %197 = math.exp %196 : vector<4x128xf32>
    %cst_66 = arith.constant 1.000000e+00 : f32
    %198 = vector.broadcast %cst_66 : f32 to vector<4x128xf32>
    %199 = arith.addf %198, %197 : vector<4x128xf32>
    %200 = arith.divf %198, %199 : vector<4x128xf32>
    %201 = vector.extract_strided_slice %188 {offsets = [0, 256], sizes = [4, 128], strides = [1, 1]} : vector<4x512xf32> to vector<4x128xf32>
    %202 = math.tanh %201 : vector<4x128xf32>
    %203 = vector.extract_strided_slice %188 {offsets = [0, 384], sizes = [4, 128], strides = [1, 1]} : vector<4x512xf32> to vector<4x128xf32>
    %204 = arith.negf %203 : vector<4x128xf32>
    %205 = math.exp %204 : vector<4x128xf32>
    %cst_67 = arith.constant 1.000000e+00 : f32
    %206 = vector.broadcast %cst_67 : f32 to vector<4x128xf32>
    %207 = arith.addf %206, %205 : vector<4x128xf32>
    %208 = arith.divf %206, %207 : vector<4x128xf32>
    %209 = arith.mulf %200, %169 : vector<4x128xf32>
    %210 = arith.mulf %194, %202 : vector<4x128xf32>
    %211 = arith.addf %209, %210 : vector<4x128xf32>
    %212 = math.tanh %211 : vector<4x128xf32>
    %213 = arith.mulf %208, %212 : vector<4x128xf32>
    %214 = vector.extract_strided_slice %213 {offsets = [0, 0], sizes = [2, 128], strides = [1, 1]} : vector<4x128xf32> to vector<2x128xf32>
    %c4_68 = arith.constant 4 : index
    %c0_69 = arith.constant 0 : index
    %c0_70 = arith.constant 0 : index
    %215 = vector.load %arg3[%c4_68, %c0_69, %c0_70] : memref<16x2x256xf32, #tpu.memory_space<vmem>>, vector<1x2x128xf32>
    %216 = vector.shape_cast %215 : vector<1x2x128xf32> to vector<2x128xf32>
    %217 = vector.shape_cast %214 : vector<2x128xf32> to vector<1x2x128xf32>
    tpu.vector_store %arg3[%c4_68, %c0_69, %c0_70], %217 {strides = array<i32>} : memref<16x2x256xf32, #tpu.memory_space<vmem>>, vector<1x2x128xf32>,
    %218 = vector.extract_strided_slice %213 {offsets = [2, 0], sizes = [2, 128], strides = [1, 1]} : vector<4x128xf32> to vector<2x128xf32>
    %c11_71 = arith.constant 11 : index
    %c0_72 = arith.constant 0 : index
    %c128_73 = arith.constant 128 : index
    %219 = vector.load %arg3[%c11_71, %c0_72, %c128_73] : memref<16x2x256xf32, #tpu.memory_space<vmem>>, vector<1x2x128xf32>
    %220 = vector.shape_cast %219 : vector<1x2x128xf32> to vector<2x128xf32>
    %221 = vector.shape_cast %218 : vector<2x128xf32> to vector<1x2x128xf32>
    tpu.vector_store %arg3[%c11_71, %c0_72, %c128_73], %221 {strides = array<i32>} : memref<16x2x256xf32, #tpu.memory_space<vmem>>, vector<1x2x128xf32>,
    %222 = tpu.concatenate %213, %213 in 1 : vector<4x128xf32>, vector<4x128xf32> -> vector<4x256xf32>
    %223 = arith.mulf %222, %11 : vector<4x256xf32>
    %c5 = arith.constant 5 : index
    %c0_74 = arith.constant 0 : index
    %c0_75 = arith.constant 0 : index
    %224 = vector.load %arg1[%c5, %c0_74, %c0_75] : memref<16x2x1024xf32, #tpu.memory_space<vmem>>, vector<1x2x512xf32>
    %225 = vector.shape_cast %224 : vector<1x2x512xf32> to vector<2x512xf32>
    %c10 = arith.constant 10 : index
    %c0_76 = arith.constant 0 : index
    %c512_77 = arith.constant 512 : index
    %226 = vector.load %arg1[%c10, %c0_76, %c512_77] : memref<16x2x1024xf32, #tpu.memory_space<vmem>>, vector<1x2x512xf32>
    %227 = vector.shape_cast %226 : vector<1x2x512xf32> to vector<2x512xf32>
    %228 = tpu.concatenate %225, %227 in 0 : vector<2x512xf32>, vector<2x512xf32> -> vector<4x512xf32>
    %cst_78 = arith.constant dense<0.000000e+00> : vector<4x512xf32>
    %229 = tpu.matmul %223, %0, %cst_78 {dimension_numbers = #tpu.dot_dimension_numbers<[1], [0], [0], [1], [0, 0, 1, 1], [], []>} : vector<4x256xf32>, vector<256x512xf32>, vector<4x512xf32> -> vector<4x512xf32>
    %230 = arith.addf %228, %229 : vector<4x512xf32>
    %231 = vector.extract_strided_slice %230 {offsets = [0, 0], sizes = [4, 128], strides = [1, 1]} : vector<4x512xf32> to vector<4x128xf32>
    %232 = arith.negf %231 : vector<4x128xf32>
    %233 = math.exp %232 : vector<4x128xf32>
    %cst_79 = arith.constant 1.000000e+00 : f32
    %234 = vector.broadcast %cst_79 : f32 to vector<4x128xf32>
    %235 = arith.addf %234, %233 : vector<4x128xf32>
    %236 = arith.divf %234, %235 : vector<4x128xf32>
    %237 = vector.extract_strided_slice %230 {offsets = [0, 128], sizes = [4, 128], strides = [1, 1]} : vector<4x512xf32> to vector<4x128xf32>
    %238 = arith.negf %237 : vector<4x128xf32>
    %239 = math.exp %238 : vector<4x128xf32>
    %cst_80 = arith.constant 1.000000e+00 : f32
    %240 = vector.broadcast %cst_80 : f32 to vector<4x128xf32>
    %241 = arith.addf %240, %239 : vector<4x128xf32>
    %242 = arith.divf %240, %241 : vector<4x128xf32>
    %243 = vector.extract_strided_slice %230 {offsets = [0, 256], sizes = [4, 128], strides = [1, 1]} : vector<4x512xf32> to vector<4x128xf32>
    %244 = math.tanh %243 : vector<4x128xf32>
    %245 = vector.extract_strided_slice %230 {offsets = [0, 384], sizes = [4, 128], strides = [1, 1]} : vector<4x512xf32> to vector<4x128xf32>
    %246 = arith.negf %245 : vector<4x128xf32>
    %247 = math.exp %246 : vector<4x128xf32>
    %cst_81 = arith.constant 1.000000e+00 : f32
    %248 = vector.broadcast %cst_81 : f32 to vector<4x128xf32>
    %249 = arith.addf %248, %247 : vector<4x128xf32>
    %250 = arith.divf %248, %249 : vector<4x128xf32>
    %251 = arith.mulf %242, %211 : vector<4x128xf32>
    %252 = arith.mulf %236, %244 : vector<4x128xf32>
    %253 = arith.addf %251, %252 : vector<4x128xf32>
    %254 = math.tanh %253 : vector<4x128xf32>
    %255 = arith.mulf %250, %254 : vector<4x128xf32>
    %256 = vector.extract_strided_slice %255 {offsets = [0, 0], sizes = [2, 128], strides = [1, 1]} : vector<4x128xf32> to vector<2x128xf32>
    %c5_82 = arith.constant 5 : index
    %c0_83 = arith.constant 0 : index
    %c0_84 = arith.constant 0 : index
    %257 = vector.load %arg3[%c5_82, %c0_83, %c0_84] : memref<16x2x256xf32, #tpu.memory_space<vmem>>, vector<1x2x128xf32>
    %258 = vector.shape_cast %257 : vector<1x2x128xf32> to vector<2x128xf32>
    %259 = vector.shape_cast %256 : vector<2x128xf32> to vector<1x2x128xf32>
    tpu.vector_store %arg3[%c5_82, %c0_83, %c0_84], %259 {strides = array<i32>} : memref<16x2x256xf32, #tpu.memory_space<vmem>>, vector<1x2x128xf32>,
    %260 = vector.extract_strided_slice %255 {offsets = [2, 0], sizes = [2, 128], strides = [1, 1]} : vector<4x128xf32> to vector<2x128xf32>
    %c10_85 = arith.constant 10 : index
    %c0_86 = arith.constant 0 : index
    %c128_87 = arith.constant 128 : index
    %261 = vector.load %arg3[%c10_85, %c0_86, %c128_87] : memref<16x2x256xf32, #tpu.memory_space<vmem>>, vector<1x2x128xf32>
    %262 = vector.shape_cast %261 : vector<1x2x128xf32> to vector<2x128xf32>
    %263 = vector.shape_cast %260 : vector<2x128xf32> to vector<1x2x128xf32>
    tpu.vector_store %arg3[%c10_85, %c0_86, %c128_87], %263 {strides = array<i32>} : memref<16x2x256xf32, #tpu.memory_space<vmem>>, vector<1x2x128xf32>,
    %264 = tpu.concatenate %255, %255 in 1 : vector<4x128xf32>, vector<4x128xf32> -> vector<4x256xf32>
    %265 = arith.mulf %264, %11 : vector<4x256xf32>
    %c6 = arith.constant 6 : index
    %c0_88 = arith.constant 0 : index
    %c0_89 = arith.constant 0 : index
    %266 = vector.load %arg1[%c6, %c0_88, %c0_89] : memref<16x2x1024xf32, #tpu.memory_space<vmem>>, vector<1x2x512xf32>
    %267 = vector.shape_cast %266 : vector<1x2x512xf32> to vector<2x512xf32>
    %c9 = arith.constant 9 : index
    %c0_90 = arith.constant 0 : index
    %c512_91 = arith.constant 512 : index
    %268 = vector.load %arg1[%c9, %c0_90, %c512_91] : memref<16x2x1024xf32, #tpu.memory_space<vmem>>, vector<1x2x512xf32>
    %269 = vector.shape_cast %268 : vector<1x2x512xf32> to vector<2x512xf32>
    %270 = tpu.concatenate %267, %269 in 0 : vector<2x512xf32>, vector<2x512xf32> -> vector<4x512xf32>
    %cst_92 = arith.constant dense<0.000000e+00> : vector<4x512xf32>
    %271 = tpu.matmul %265, %0, %cst_92 {dimension_numbers = #tpu.dot_dimension_numbers<[1], [0], [0], [1], [0, 0, 1, 1], [], []>} : vector<4x256xf32>, vector<256x512xf32>, vector<4x512xf32> -> vector<4x512xf32>
    %272 = arith.addf %270, %271 : vector<4x512xf32>
    %273 = vector.extract_strided_slice %272 {offsets = [0, 0], sizes = [4, 128], strides = [1, 1]} : vector<4x512xf32> to vector<4x128xf32>
    %274 = arith.negf %273 : vector<4x128xf32>
    %275 = math.exp %274 : vector<4x128xf32>
    %cst_93 = arith.constant 1.000000e+00 : f32
    %276 = vector.broadcast %cst_93 : f32 to vector<4x128xf32>
    %277 = arith.addf %276, %275 : vector<4x128xf32>
    %278 = arith.divf %276, %277 : vector<4x128xf32>
    %279 = vector.extract_strided_slice %272 {offsets = [0, 128], sizes = [4, 128], strides = [1, 1]} : vector<4x512xf32> to vector<4x128xf32>
    %280 = arith.negf %279 : vector<4x128xf32>
    %281 = math.exp %280 : vector<4x128xf32>
    %cst_94 = arith.constant 1.000000e+00 : f32
    %282 = vector.broadcast %cst_94 : f32 to vector<4x128xf32>
    %283 = arith.addf %282, %281 : vector<4x128xf32>
    %284 = arith.divf %282, %283 : vector<4x128xf32>
    %285 = vector.extract_strided_slice %272 {offsets = [0, 256], sizes = [4, 128], strides = [1, 1]} : vector<4x512xf32> to vector<4x128xf32>
    %286 = math.tanh %285 : vector<4x128xf32>
    %287 = vector.extract_strided_slice %272 {offsets = [0, 384], sizes = [4, 128], strides = [1, 1]} : vector<4x512xf32> to vector<4x128xf32>
    %288 = arith.negf %287 : vector<4x128xf32>
    %289 = math.exp %288 : vector<4x128xf32>
    %cst_95 = arith.constant 1.000000e+00 : f32
    %290 = vector.broadcast %cst_95 : f32 to vector<4x128xf32>
    %291 = arith.addf %290, %289 : vector<4x128xf32>
    %292 = arith.divf %290, %291 : vector<4x128xf32>
    %293 = arith.mulf %284, %253 : vector<4x128xf32>
    %294 = arith.mulf %278, %286 : vector<4x128xf32>
    %295 = arith.addf %293, %294 : vector<4x128xf32>
    %296 = math.tanh %295 : vector<4x128xf32>
    %297 = arith.mulf %292, %296 : vector<4x128xf32>
    %298 = vector.extract_strided_slice %297 {offsets = [0, 0], sizes = [2, 128], strides = [1, 1]} : vector<4x128xf32> to vector<2x128xf32>
    %c6_96 = arith.constant 6 : index
    %c0_97 = arith.constant 0 : index
    %c0_98 = arith.constant 0 : index
    %299 = vector.load %arg3[%c6_96, %c0_97, %c0_98] : memref<16x2x256xf32, #tpu.memory_space<vmem>>, vector<1x2x128xf32>
    %300 = vector.shape_cast %299 : vector<1x2x128xf32> to vector<2x128xf32>
    %301 = vector.shape_cast %298 : vector<2x128xf32> to vector<1x2x128xf32>
    tpu.vector_store %arg3[%c6_96, %c0_97, %c0_98], %301 {strides = array<i32>} : memref<16x2x256xf32, #tpu.memory_space<vmem>>, vector<1x2x128xf32>,
    %302 = vector.extract_strided_slice %297 {offsets = [2, 0], sizes = [2, 128], strides = [1, 1]} : vector<4x128xf32> to vector<2x128xf32>
    %c9_99 = arith.constant 9 : index
    %c0_100 = arith.constant 0 : index
    %c128_101 = arith.constant 128 : index
    %303 = vector.load %arg3[%c9_99, %c0_100, %c128_101] : memref<16x2x256xf32, #tpu.memory_space<vmem>>, vector<1x2x128xf32>
    %304 = vector.shape_cast %303 : vector<1x2x128xf32> to vector<2x128xf32>
    %305 = vector.shape_cast %302 : vector<2x128xf32> to vector<1x2x128xf32>
    tpu.vector_store %arg3[%c9_99, %c0_100, %c128_101], %305 {strides = array<i32>} : memref<16x2x256xf32, #tpu.memory_space<vmem>>, vector<1x2x128xf32>,
    %306 = tpu.concatenate %297, %297 in 1 : vector<4x128xf32>, vector<4x128xf32> -> vector<4x256xf32>
    %307 = arith.mulf %306, %11 : vector<4x256xf32>
    %c7 = arith.constant 7 : index
    %c0_102 = arith.constant 0 : index
    %c0_103 = arith.constant 0 : index
    %308 = vector.load %arg1[%c7, %c0_102, %c0_103] : memref<16x2x1024xf32, #tpu.memory_space<vmem>>, vector<1x2x512xf32>
    %309 = vector.shape_cast %308 : vector<1x2x512xf32> to vector<2x512xf32>
    %c8 = arith.constant 8 : index
    %c0_104 = arith.constant 0 : index
    %c512_105 = arith.constant 512 : index
    %310 = vector.load %arg1[%c8, %c0_104, %c512_105] : memref<16x2x1024xf32, #tpu.memory_space<vmem>>, vector<1x2x512xf32>
    %311 = vector.shape_cast %310 : vector<1x2x512xf32> to vector<2x512xf32>
    %312 = tpu.concatenate %309, %311 in 0 : vector<2x512xf32>, vector<2x512xf32> -> vector<4x512xf32>
    %cst_106 = arith.constant dense<0.000000e+00> : vector<4x512xf32>
    %313 = tpu.matmul %307, %0, %cst_106 {dimension_numbers = #tpu.dot_dimension_numbers<[1], [0], [0], [1], [0, 0, 1, 1], [], []>} : vector<4x256xf32>, vector<256x512xf32>, vector<4x512xf32> -> vector<4x512xf32>
    %314 = arith.addf %312, %313 : vector<4x512xf32>
    %315 = vector.extract_strided_slice %314 {offsets = [0, 0], sizes = [4, 128], strides = [1, 1]} : vector<4x512xf32> to vector<4x128xf32>
    %316 = arith.negf %315 : vector<4x128xf32>
    %317 = math.exp %316 : vector<4x128xf32>
    %cst_107 = arith.constant 1.000000e+00 : f32
    %318 = vector.broadcast %cst_107 : f32 to vector<4x128xf32>
    %319 = arith.addf %318, %317 : vector<4x128xf32>
    %320 = arith.divf %318, %319 : vector<4x128xf32>
    %321 = vector.extract_strided_slice %314 {offsets = [0, 128], sizes = [4, 128], strides = [1, 1]} : vector<4x512xf32> to vector<4x128xf32>
    %322 = arith.negf %321 : vector<4x128xf32>
    %323 = math.exp %322 : vector<4x128xf32>
    %cst_108 = arith.constant 1.000000e+00 : f32
    %324 = vector.broadcast %cst_108 : f32 to vector<4x128xf32>
    %325 = arith.addf %324, %323 : vector<4x128xf32>
    %326 = arith.divf %324, %325 : vector<4x128xf32>
    %327 = vector.extract_strided_slice %314 {offsets = [0, 256], sizes = [4, 128], strides = [1, 1]} : vector<4x512xf32> to vector<4x128xf32>
    %328 = math.tanh %327 : vector<4x128xf32>
    %329 = vector.extract_strided_slice %314 {offsets = [0, 384], sizes = [4, 128], strides = [1, 1]} : vector<4x512xf32> to vector<4x128xf32>
    %330 = arith.negf %329 : vector<4x128xf32>
    %331 = math.exp %330 : vector<4x128xf32>
    %cst_109 = arith.constant 1.000000e+00 : f32
    %332 = vector.broadcast %cst_109 : f32 to vector<4x128xf32>
    %333 = arith.addf %332, %331 : vector<4x128xf32>
    %334 = arith.divf %332, %333 : vector<4x128xf32>
    %335 = arith.mulf %326, %295 : vector<4x128xf32>
    %336 = arith.mulf %320, %328 : vector<4x128xf32>
    %337 = arith.addf %335, %336 : vector<4x128xf32>
    %338 = math.tanh %337 : vector<4x128xf32>
    %339 = arith.mulf %334, %338 : vector<4x128xf32>
    %340 = vector.extract_strided_slice %339 {offsets = [0, 0], sizes = [2, 128], strides = [1, 1]} : vector<4x128xf32> to vector<2x128xf32>
    %c7_110 = arith.constant 7 : index
    %c0_111 = arith.constant 0 : index
    %c0_112 = arith.constant 0 : index
    %341 = vector.load %arg3[%c7_110, %c0_111, %c0_112] : memref<16x2x256xf32, #tpu.memory_space<vmem>>, vector<1x2x128xf32>
    %342 = vector.shape_cast %341 : vector<1x2x128xf32> to vector<2x128xf32>
    %343 = vector.shape_cast %340 : vector<2x128xf32> to vector<1x2x128xf32>
    tpu.vector_store %arg3[%c7_110, %c0_111, %c0_112], %343 {strides = array<i32>} : memref<16x2x256xf32, #tpu.memory_space<vmem>>, vector<1x2x128xf32>,
    %344 = vector.extract_strided_slice %339 {offsets = [2, 0], sizes = [2, 128], strides = [1, 1]} : vector<4x128xf32> to vector<2x128xf32>
    %c8_113 = arith.constant 8 : index
    %c0_114 = arith.constant 0 : index
    %c128_115 = arith.constant 128 : index
    %345 = vector.load %arg3[%c8_113, %c0_114, %c128_115] : memref<16x2x256xf32, #tpu.memory_space<vmem>>, vector<1x2x128xf32>
    %346 = vector.shape_cast %345 : vector<1x2x128xf32> to vector<2x128xf32>
    %347 = vector.shape_cast %344 : vector<2x128xf32> to vector<1x2x128xf32>
    tpu.vector_store %arg3[%c8_113, %c0_114, %c128_115], %347 {strides = array<i32>} : memref<16x2x256xf32, #tpu.memory_space<vmem>>, vector<1x2x128xf32>,
    %348 = tpu.concatenate %339, %339 in 1 : vector<4x128xf32>, vector<4x128xf32> -> vector<4x256xf32>
    %349 = arith.mulf %348, %11 : vector<4x256xf32>
    %c8_116 = arith.constant 8 : index
    %c0_117 = arith.constant 0 : index
    %c0_118 = arith.constant 0 : index
    %350 = vector.load %arg1[%c8_116, %c0_117, %c0_118] : memref<16x2x1024xf32, #tpu.memory_space<vmem>>, vector<1x2x512xf32>
    %351 = vector.shape_cast %350 : vector<1x2x512xf32> to vector<2x512xf32>
    %c7_119 = arith.constant 7 : index
    %c0_120 = arith.constant 0 : index
    %c512_121 = arith.constant 512 : index
    %352 = vector.load %arg1[%c7_119, %c0_120, %c512_121] : memref<16x2x1024xf32, #tpu.memory_space<vmem>>, vector<1x2x512xf32>
    %353 = vector.shape_cast %352 : vector<1x2x512xf32> to vector<2x512xf32>
    %354 = tpu.concatenate %351, %353 in 0 : vector<2x512xf32>, vector<2x512xf32> -> vector<4x512xf32>
    %cst_122 = arith.constant dense<0.000000e+00> : vector<4x512xf32>
    %355 = tpu.matmul %349, %0, %cst_122 {dimension_numbers = #tpu.dot_dimension_numbers<[1], [0], [0], [1], [0, 0, 1, 1], [], []>} : vector<4x256xf32>, vector<256x512xf32>, vector<4x512xf32> -> vector<4x512xf32>
    %356 = arith.addf %354, %355 : vector<4x512xf32>
    %357 = vector.extract_strided_slice %356 {offsets = [0, 0], sizes = [4, 128], strides = [1, 1]} : vector<4x512xf32> to vector<4x128xf32>
    %358 = arith.negf %357 : vector<4x128xf32>
    %359 = math.exp %358 : vector<4x128xf32>
    %cst_123 = arith.constant 1.000000e+00 : f32
    %360 = vector.broadcast %cst_123 : f32 to vector<4x128xf32>
    %361 = arith.addf %360, %359 : vector<4x128xf32>
    %362 = arith.divf %360, %361 : vector<4x128xf32>
    %363 = vector.extract_strided_slice %356 {offsets = [0, 128], sizes = [4, 128], strides = [1, 1]} : vector<4x512xf32> to vector<4x128xf32>
    %364 = arith.negf %363 : vector<4x128xf32>
    %365 = math.exp %364 : vector<4x128xf32>
    %cst_124 = arith.constant 1.000000e+00 : f32
    %366 = vector.broadcast %cst_124 : f32 to vector<4x128xf32>
    %367 = arith.addf %366, %365 : vector<4x128xf32>
    %368 = arith.divf %366, %367 : vector<4x128xf32>
    %369 = vector.extract_strided_slice %356 {offsets = [0, 256], sizes = [4, 128], strides = [1, 1]} : vector<4x512xf32> to vector<4x128xf32>
    %370 = math.tanh %369 : vector<4x128xf32>
    %371 = vector.extract_strided_slice %356 {offsets = [0, 384], sizes = [4, 128], strides = [1, 1]} : vector<4x512xf32> to vector<4x128xf32>
    %372 = arith.negf %371 : vector<4x128xf32>
    %373 = math.exp %372 : vector<4x128xf32>
    %cst_125 = arith.constant 1.000000e+00 : f32
    %374 = vector.broadcast %cst_125 : f32 to vector<4x128xf32>
    %375 = arith.addf %374, %373 : vector<4x128xf32>
    %376 = arith.divf %374, %375 : vector<4x128xf32>
    %377 = arith.mulf %368, %337 : vector<4x128xf32>
    %378 = arith.mulf %362, %370 : vector<4x128xf32>
    %379 = arith.addf %377, %378 : vector<4x128xf32>
    %380 = math.tanh %379 : vector<4x128xf32>
    %381 = arith.mulf %376, %380 : vector<4x128xf32>
    %382 = vector.extract_strided_slice %381 {offsets = [0, 0], sizes = [2, 128], strides = [1, 1]} : vector<4x128xf32> to vector<2x128xf32>
    %c8_126 = arith.constant 8 : index
    %c0_127 = arith.constant 0 : index
    %c0_128 = arith.constant 0 : index
    %383 = vector.load %arg3[%c8_126, %c0_127, %c0_128] : memref<16x2x256xf32, #tpu.memory_space<vmem>>, vector<1x2x128xf32>
    %384 = vector.shape_cast %383 : vector<1x2x128xf32> to vector<2x128xf32>
    %385 = vector.shape_cast %382 : vector<2x128xf32> to vector<1x2x128xf32>
    tpu.vector_store %arg3[%c8_126, %c0_127, %c0_128], %385 {strides = array<i32>} : memref<16x2x256xf32, #tpu.memory_space<vmem>>, vector<1x2x128xf32>,
    %386 = vector.extract_strided_slice %381 {offsets = [2, 0], sizes = [2, 128], strides = [1, 1]} : vector<4x128xf32> to vector<2x128xf32>
    %c7_129 = arith.constant 7 : index
    %c0_130 = arith.constant 0 : index
    %c128_131 = arith.constant 128 : index
    %387 = vector.load %arg3[%c7_129, %c0_130, %c128_131] : memref<16x2x256xf32, #tpu.memory_space<vmem>>, vector<1x2x128xf32>
    %388 = vector.shape_cast %387 : vector<1x2x128xf32> to vector<2x128xf32>
    %389 = vector.shape_cast %386 : vector<2x128xf32> to vector<1x2x128xf32>
    tpu.vector_store %arg3[%c7_129, %c0_130, %c128_131], %389 {strides = array<i32>} : memref<16x2x256xf32, #tpu.memory_space<vmem>>, vector<1x2x128xf32>,
    %390 = tpu.concatenate %381, %381 in 1 : vector<4x128xf32>, vector<4x128xf32> -> vector<4x256xf32>
    %391 = arith.mulf %390, %11 : vector<4x256xf32>
    %c9_132 = arith.constant 9 : index
    %c0_133 = arith.constant 0 : index
    %c0_134 = arith.constant 0 : index
    %392 = vector.load %arg1[%c9_132, %c0_133, %c0_134] : memref<16x2x1024xf32, #tpu.memory_space<vmem>>, vector<1x2x512xf32>
    %393 = vector.shape_cast %392 : vector<1x2x512xf32> to vector<2x512xf32>
    %c6_135 = arith.constant 6 : index
    %c0_136 = arith.constant 0 : index
    %c512_137 = arith.constant 512 : index
    %394 = vector.load %arg1[%c6_135, %c0_136, %c512_137] : memref<16x2x1024xf32, #tpu.memory_space<vmem>>, vector<1x2x512xf32>
    %395 = vector.shape_cast %394 : vector<1x2x512xf32> to vector<2x512xf32>
    %396 = tpu.concatenate %393, %395 in 0 : vector<2x512xf32>, vector<2x512xf32> -> vector<4x512xf32>
    %cst_138 = arith.constant dense<0.000000e+00> : vector<4x512xf32>
    %397 = tpu.matmul %391, %0, %cst_138 {dimension_numbers = #tpu.dot_dimension_numbers<[1], [0], [0], [1], [0, 0, 1, 1], [], []>} : vector<4x256xf32>, vector<256x512xf32>, vector<4x512xf32> -> vector<4x512xf32>
    %398 = arith.addf %396, %397 : vector<4x512xf32>
    %399 = vector.extract_strided_slice %398 {offsets = [0, 0], sizes = [4, 128], strides = [1, 1]} : vector<4x512xf32> to vector<4x128xf32>
    %400 = arith.negf %399 : vector<4x128xf32>
    %401 = math.exp %400 : vector<4x128xf32>
    %cst_139 = arith.constant 1.000000e+00 : f32
    %402 = vector.broadcast %cst_139 : f32 to vector<4x128xf32>
    %403 = arith.addf %402, %401 : vector<4x128xf32>
    %404 = arith.divf %402, %403 : vector<4x128xf32>
    %405 = vector.extract_strided_slice %398 {offsets = [0, 128], sizes = [4, 128], strides = [1, 1]} : vector<4x512xf32> to vector<4x128xf32>
    %406 = arith.negf %405 : vector<4x128xf32>
    %407 = math.exp %406 : vector<4x128xf32>
    %cst_140 = arith.constant 1.000000e+00 : f32
    %408 = vector.broadcast %cst_140 : f32 to vector<4x128xf32>
    %409 = arith.addf %408, %407 : vector<4x128xf32>
    %410 = arith.divf %408, %409 : vector<4x128xf32>
    %411 = vector.extract_strided_slice %398 {offsets = [0, 256], sizes = [4, 128], strides = [1, 1]} : vector<4x512xf32> to vector<4x128xf32>
    %412 = math.tanh %411 : vector<4x128xf32>
    %413 = vector.extract_strided_slice %398 {offsets = [0, 384], sizes = [4, 128], strides = [1, 1]} : vector<4x512xf32> to vector<4x128xf32>
    %414 = arith.negf %413 : vector<4x128xf32>
    %415 = math.exp %414 : vector<4x128xf32>
    %cst_141 = arith.constant 1.000000e+00 : f32
    %416 = vector.broadcast %cst_141 : f32 to vector<4x128xf32>
    %417 = arith.addf %416, %415 : vector<4x128xf32>
    %418 = arith.divf %416, %417 : vector<4x128xf32>
    %419 = arith.mulf %410, %379 : vector<4x128xf32>
    %420 = arith.mulf %404, %412 : vector<4x128xf32>
    %421 = arith.addf %419, %420 : vector<4x128xf32>
    %422 = math.tanh %421 : vector<4x128xf32>
    %423 = arith.mulf %418, %422 : vector<4x128xf32>
    %424 = vector.extract_strided_slice %423 {offsets = [0, 0], sizes = [2, 128], strides = [1, 1]} : vector<4x128xf32> to vector<2x128xf32>
    %c9_142 = arith.constant 9 : index
    %c0_143 = arith.constant 0 : index
    %c0_144 = arith.constant 0 : index
    %425 = vector.load %arg3[%c9_142, %c0_143, %c0_144] : memref<16x2x256xf32, #tpu.memory_space<vmem>>, vector<1x2x128xf32>
    %426 = vector.shape_cast %425 : vector<1x2x128xf32> to vector<2x128xf32>
    %427 = vector.shape_cast %424 : vector<2x128xf32> to vector<1x2x128xf32>
    tpu.vector_store %arg3[%c9_142, %c0_143, %c0_144], %427 {strides = array<i32>} : memref<16x2x256xf32, #tpu.memory_space<vmem>>, vector<1x2x128xf32>,
    %428 = vector.extract_strided_slice %423 {offsets = [2, 0], sizes = [2, 128], strides = [1, 1]} : vector<4x128xf32> to vector<2x128xf32>
    %c6_145 = arith.constant 6 : index
    %c0_146 = arith.constant 0 : index
    %c128_147 = arith.constant 128 : index
    %429 = vector.load %arg3[%c6_145, %c0_146, %c128_147] : memref<16x2x256xf32, #tpu.memory_space<vmem>>, vector<1x2x128xf32>
    %430 = vector.shape_cast %429 : vector<1x2x128xf32> to vector<2x128xf32>
    %431 = vector.shape_cast %428 : vector<2x128xf32> to vector<1x2x128xf32>
    tpu.vector_store %arg3[%c6_145, %c0_146, %c128_147], %431 {strides = array<i32>} : memref<16x2x256xf32, #tpu.memory_space<vmem>>, vector<1x2x128xf32>,
    %432 = tpu.concatenate %423, %423 in 1 : vector<4x128xf32>, vector<4x128xf32> -> vector<4x256xf32>
    %433 = arith.mulf %432, %11 : vector<4x256xf32>
    %c10_148 = arith.constant 10 : index
    %c0_149 = arith.constant 0 : index
    %c0_150 = arith.constant 0 : index
    %434 = vector.load %arg1[%c10_148, %c0_149, %c0_150] : memref<16x2x1024xf32, #tpu.memory_space<vmem>>, vector<1x2x512xf32>
    %435 = vector.shape_cast %434 : vector<1x2x512xf32> to vector<2x512xf32>
    %c5_151 = arith.constant 5 : index
    %c0_152 = arith.constant 0 : index
    %c512_153 = arith.constant 512 : index
    %436 = vector.load %arg1[%c5_151, %c0_152, %c512_153] : memref<16x2x1024xf32, #tpu.memory_space<vmem>>, vector<1x2x512xf32>
    %437 = vector.shape_cast %436 : vector<1x2x512xf32> to vector<2x512xf32>
    %438 = tpu.concatenate %435, %437 in 0 : vector<2x512xf32>, vector<2x512xf32> -> vector<4x512xf32>
    %cst_154 = arith.constant dense<0.000000e+00> : vector<4x512xf32>
    %439 = tpu.matmul %433, %0, %cst_154 {dimension_numbers = #tpu.dot_dimension_numbers<[1], [0], [0], [1], [0, 0, 1, 1], [], []>} : vector<4x256xf32>, vector<256x512xf32>, vector<4x512xf32> -> vector<4x512xf32>
    %440 = arith.addf %438, %439 : vector<4x512xf32>
    %441 = vector.extract_strided_slice %440 {offsets = [0, 0], sizes = [4, 128], strides = [1, 1]} : vector<4x512xf32> to vector<4x128xf32>
    %442 = arith.negf %441 : vector<4x128xf32>
    %443 = math.exp %442 : vector<4x128xf32>
    %cst_155 = arith.constant 1.000000e+00 : f32
    %444 = vector.broadcast %cst_155 : f32 to vector<4x128xf32>
    %445 = arith.addf %444, %443 : vector<4x128xf32>
    %446 = arith.divf %444, %445 : vector<4x128xf32>
    %447 = vector.extract_strided_slice %440 {offsets = [0, 128], sizes = [4, 128], strides = [1, 1]} : vector<4x512xf32> to vector<4x128xf32>
    %448 = arith.negf %447 : vector<4x128xf32>
    %449 = math.exp %448 : vector<4x128xf32>
    %cst_156 = arith.constant 1.000000e+00 : f32
    %450 = vector.broadcast %cst_156 : f32 to vector<4x128xf32>
    %451 = arith.addf %450, %449 : vector<4x128xf32>
    %452 = arith.divf %450, %451 : vector<4x128xf32>
    %453 = vector.extract_strided_slice %440 {offsets = [0, 256], sizes = [4, 128], strides = [1, 1]} : vector<4x512xf32> to vector<4x128xf32>
    %454 = math.tanh %453 : vector<4x128xf32>
    %455 = vector.extract_strided_slice %440 {offsets = [0, 384], sizes = [4, 128], strides = [1, 1]} : vector<4x512xf32> to vector<4x128xf32>
    %456 = arith.negf %455 : vector<4x128xf32>
    %457 = math.exp %456 : vector<4x128xf32>
    %cst_157 = arith.constant 1.000000e+00 : f32
    %458 = vector.broadcast %cst_157 : f32 to vector<4x128xf32>
    %459 = arith.addf %458, %457 : vector<4x128xf32>
    %460 = arith.divf %458, %459 : vector<4x128xf32>
    %461 = arith.mulf %452, %421 : vector<4x128xf32>
    %462 = arith.mulf %446, %454 : vector<4x128xf32>
    %463 = arith.addf %461, %462 : vector<4x128xf32>
    %464 = math.tanh %463 : vector<4x128xf32>
    %465 = arith.mulf %460, %464 : vector<4x128xf32>
    %466 = vector.extract_strided_slice %465 {offsets = [0, 0], sizes = [2, 128], strides = [1, 1]} : vector<4x128xf32> to vector<2x128xf32>
    %c10_158 = arith.constant 10 : index
    %c0_159 = arith.constant 0 : index
    %c0_160 = arith.constant 0 : index
    %467 = vector.load %arg3[%c10_158, %c0_159, %c0_160] : memref<16x2x256xf32, #tpu.memory_space<vmem>>, vector<1x2x128xf32>
    %468 = vector.shape_cast %467 : vector<1x2x128xf32> to vector<2x128xf32>
    %469 = vector.shape_cast %466 : vector<2x128xf32> to vector<1x2x128xf32>
    tpu.vector_store %arg3[%c10_158, %c0_159, %c0_160], %469 {strides = array<i32>} : memref<16x2x256xf32, #tpu.memory_space<vmem>>, vector<1x2x128xf32>,
    %470 = vector.extract_strided_slice %465 {offsets = [2, 0], sizes = [2, 128], strides = [1, 1]} : vector<4x128xf32> to vector<2x128xf32>
    %c5_161 = arith.constant 5 : index
    %c0_162 = arith.constant 0 : index
    %c128_163 = arith.constant 128 : index
    %471 = vector.load %arg3[%c5_161, %c0_162, %c128_163] : memref<16x2x256xf32, #tpu.memory_space<vmem>>, vector<1x2x128xf32>
    %472 = vector.shape_cast %471 : vector<1x2x128xf32> to vector<2x128xf32>
    %473 = vector.shape_cast %470 : vector<2x128xf32> to vector<1x2x128xf32>
    tpu.vector_store %arg3[%c5_161, %c0_162, %c128_163], %473 {strides = array<i32>} : memref<16x2x256xf32, #tpu.memory_space<vmem>>, vector<1x2x128xf32>,
    %474 = tpu.concatenate %465, %465 in 1 : vector<4x128xf32>, vector<4x128xf32> -> vector<4x256xf32>
    %475 = arith.mulf %474, %11 : vector<4x256xf32>
    %c11_164 = arith.constant 11 : index
    %c0_165 = arith.constant 0 : index
    %c0_166 = arith.constant 0 : index
    %476 = vector.load %arg1[%c11_164, %c0_165, %c0_166] : memref<16x2x1024xf32, #tpu.memory_space<vmem>>, vector<1x2x512xf32>
    %477 = vector.shape_cast %476 : vector<1x2x512xf32> to vector<2x512xf32>
    %c4_167 = arith.constant 4 : index
    %c0_168 = arith.constant 0 : index
    %c512_169 = arith.constant 512 : index
    %478 = vector.load %arg1[%c4_167, %c0_168, %c512_169] : memref<16x2x1024xf32, #tpu.memory_space<vmem>>, vector<1x2x512xf32>
    %479 = vector.shape_cast %478 : vector<1x2x512xf32> to vector<2x512xf32>
    %480 = tpu.concatenate %477, %479 in 0 : vector<2x512xf32>, vector<2x512xf32> -> vector<4x512xf32>
    %cst_170 = arith.constant dense<0.000000e+00> : vector<4x512xf32>
    %481 = tpu.matmul %475, %0, %cst_170 {dimension_numbers = #tpu.dot_dimension_numbers<[1], [0], [0], [1], [0, 0, 1, 1], [], []>} : vector<4x256xf32>, vector<256x512xf32>, vector<4x512xf32> -> vector<4x512xf32>
    %482 = arith.addf %480, %481 : vector<4x512xf32>
    %483 = vector.extract_strided_slice %482 {offsets = [0, 0], sizes = [4, 128], strides = [1, 1]} : vector<4x512xf32> to vector<4x128xf32>
    %484 = arith.negf %483 : vector<4x128xf32>
    %485 = math.exp %484 : vector<4x128xf32>
    %cst_171 = arith.constant 1.000000e+00 : f32
    %486 = vector.broadcast %cst_171 : f32 to vector<4x128xf32>
    %487 = arith.addf %486, %485 : vector<4x128xf32>
    %488 = arith.divf %486, %487 : vector<4x128xf32>
    %489 = vector.extract_strided_slice %482 {offsets = [0, 128], sizes = [4, 128], strides = [1, 1]} : vector<4x512xf32> to vector<4x128xf32>
    %490 = arith.negf %489 : vector<4x128xf32>
    %491 = math.exp %490 : vector<4x128xf32>
    %cst_172 = arith.constant 1.000000e+00 : f32
    %492 = vector.broadcast %cst_172 : f32 to vector<4x128xf32>
    %493 = arith.addf %492, %491 : vector<4x128xf32>
    %494 = arith.divf %492, %493 : vector<4x128xf32>
    %495 = vector.extract_strided_slice %482 {offsets = [0, 256], sizes = [4, 128], strides = [1, 1]} : vector<4x512xf32> to vector<4x128xf32>
    %496 = math.tanh %495 : vector<4x128xf32>
    %497 = vector.extract_strided_slice %482 {offsets = [0, 384], sizes = [4, 128], strides = [1, 1]} : vector<4x512xf32> to vector<4x128xf32>
    %498 = arith.negf %497 : vector<4x128xf32>
    %499 = math.exp %498 : vector<4x128xf32>
    %cst_173 = arith.constant 1.000000e+00 : f32
    %500 = vector.broadcast %cst_173 : f32 to vector<4x128xf32>
    %501 = arith.addf %500, %499 : vector<4x128xf32>
    %502 = arith.divf %500, %501 : vector<4x128xf32>
    %503 = arith.mulf %494, %463 : vector<4x128xf32>
    %504 = arith.mulf %488, %496 : vector<4x128xf32>
    %505 = arith.addf %503, %504 : vector<4x128xf32>
    %506 = math.tanh %505 : vector<4x128xf32>
    %507 = arith.mulf %502, %506 : vector<4x128xf32>
    %508 = vector.extract_strided_slice %507 {offsets = [0, 0], sizes = [2, 128], strides = [1, 1]} : vector<4x128xf32> to vector<2x128xf32>
    %c11_174 = arith.constant 11 : index
    %c0_175 = arith.constant 0 : index
    %c0_176 = arith.constant 0 : index
    %509 = vector.load %arg3[%c11_174, %c0_175, %c0_176] : memref<16x2x256xf32, #tpu.memory_space<vmem>>, vector<1x2x128xf32>
    %510 = vector.shape_cast %509 : vector<1x2x128xf32> to vector<2x128xf32>
    %511 = vector.shape_cast %508 : vector<2x128xf32> to vector<1x2x128xf32>
    tpu.vector_store %arg3[%c11_174, %c0_175, %c0_176], %511 {strides = array<i32>} : memref<16x2x256xf32, #tpu.memory_space<vmem>>, vector<1x2x128xf32>,
    %512 = vector.extract_strided_slice %507 {offsets = [2, 0], sizes = [2, 128], strides = [1, 1]} : vector<4x128xf32> to vector<2x128xf32>
    %c4_177 = arith.constant 4 : index
    %c0_178 = arith.constant 0 : index
    %c128_179 = arith.constant 128 : index
    %513 = vector.load %arg3[%c4_177, %c0_178, %c128_179] : memref<16x2x256xf32, #tpu.memory_space<vmem>>, vector<1x2x128xf32>
    %514 = vector.shape_cast %513 : vector<1x2x128xf32> to vector<2x128xf32>
    %515 = vector.shape_cast %512 : vector<2x128xf32> to vector<1x2x128xf32>
    tpu.vector_store %arg3[%c4_177, %c0_178, %c128_179], %515 {strides = array<i32>} : memref<16x2x256xf32, #tpu.memory_space<vmem>>, vector<1x2x128xf32>,
    %516 = tpu.concatenate %507, %507 in 1 : vector<4x128xf32>, vector<4x128xf32> -> vector<4x256xf32>
    %517 = arith.mulf %516, %11 : vector<4x256xf32>
    %c12_180 = arith.constant 12 : index
    %c0_181 = arith.constant 0 : index
    %c0_182 = arith.constant 0 : index
    %518 = vector.load %arg1[%c12_180, %c0_181, %c0_182] : memref<16x2x1024xf32, #tpu.memory_space<vmem>>, vector<1x2x512xf32>
    %519 = vector.shape_cast %518 : vector<1x2x512xf32> to vector<2x512xf32>
    %c3_183 = arith.constant 3 : index
    %c0_184 = arith.constant 0 : index
    %c512_185 = arith.constant 512 : index
    %520 = vector.load %arg1[%c3_183, %c0_184, %c512_185] : memref<16x2x1024xf32, #tpu.memory_space<vmem>>, vector<1x2x512xf32>
    %521 = vector.shape_cast %520 : vector<1x2x512xf32> to vector<2x512xf32>
    %522 = tpu.concatenate %519, %521 in 0 : vector<2x512xf32>, vector<2x512xf32> -> vector<4x512xf32>
    %cst_186 = arith.constant dense<0.000000e+00> : vector<4x512xf32>
    %523 = tpu.matmul %517, %0, %cst_186 {dimension_numbers = #tpu.dot_dimension_numbers<[1], [0], [0], [1], [0, 0, 1, 1], [], []>} : vector<4x256xf32>, vector<256x512xf32>, vector<4x512xf32> -> vector<4x512xf32>
    %524 = arith.addf %522, %523 : vector<4x512xf32>
    %525 = vector.extract_strided_slice %524 {offsets = [0, 0], sizes = [4, 128], strides = [1, 1]} : vector<4x512xf32> to vector<4x128xf32>
    %526 = arith.negf %525 : vector<4x128xf32>
    %527 = math.exp %526 : vector<4x128xf32>
    %cst_187 = arith.constant 1.000000e+00 : f32
    %528 = vector.broadcast %cst_187 : f32 to vector<4x128xf32>
    %529 = arith.addf %528, %527 : vector<4x128xf32>
    %530 = arith.divf %528, %529 : vector<4x128xf32>
    %531 = vector.extract_strided_slice %524 {offsets = [0, 128], sizes = [4, 128], strides = [1, 1]} : vector<4x512xf32> to vector<4x128xf32>
    %532 = arith.negf %531 : vector<4x128xf32>
    %533 = math.exp %532 : vector<4x128xf32>
    %cst_188 = arith.constant 1.000000e+00 : f32
    %534 = vector.broadcast %cst_188 : f32 to vector<4x128xf32>
    %535 = arith.addf %534, %533 : vector<4x128xf32>
    %536 = arith.divf %534, %535 : vector<4x128xf32>
    %537 = vector.extract_strided_slice %524 {offsets = [0, 256], sizes = [4, 128], strides = [1, 1]} : vector<4x512xf32> to vector<4x128xf32>
    %538 = math.tanh %537 : vector<4x128xf32>
    %539 = vector.extract_strided_slice %524 {offsets = [0, 384], sizes = [4, 128], strides = [1, 1]} : vector<4x512xf32> to vector<4x128xf32>
    %540 = arith.negf %539 : vector<4x128xf32>
    %541 = math.exp %540 : vector<4x128xf32>
    %cst_189 = arith.constant 1.000000e+00 : f32
    %542 = vector.broadcast %cst_189 : f32 to vector<4x128xf32>
    %543 = arith.addf %542, %541 : vector<4x128xf32>
    %544 = arith.divf %542, %543 : vector<4x128xf32>
    %545 = arith.mulf %536, %505 : vector<4x128xf32>
    %546 = arith.mulf %530, %538 : vector<4x128xf32>
    %547 = arith.addf %545, %546 : vector<4x128xf32>
    %548 = math.tanh %547 : vector<4x128xf32>
    %549 = arith.mulf %544, %548 : vector<4x128xf32>
    %550 = vector.extract_strided_slice %549 {offsets = [0, 0], sizes = [2, 128], strides = [1, 1]} : vector<4x128xf32> to vector<2x128xf32>
    %c12_190 = arith.constant 12 : index
    %c0_191 = arith.constant 0 : index
    %c0_192 = arith.constant 0 : index
    %551 = vector.load %arg3[%c12_190, %c0_191, %c0_192] : memref<16x2x256xf32, #tpu.memory_space<vmem>>, vector<1x2x128xf32>
    %552 = vector.shape_cast %551 : vector<1x2x128xf32> to vector<2x128xf32>
    %553 = vector.shape_cast %550 : vector<2x128xf32> to vector<1x2x128xf32>
    tpu.vector_store %arg3[%c12_190, %c0_191, %c0_192], %553 {strides = array<i32>} : memref<16x2x256xf32, #tpu.memory_space<vmem>>, vector<1x2x128xf32>,
    %554 = vector.extract_strided_slice %549 {offsets = [2, 0], sizes = [2, 128], strides = [1, 1]} : vector<4x128xf32> to vector<2x128xf32>
    %c3_193 = arith.constant 3 : index
    %c0_194 = arith.constant 0 : index
    %c128_195 = arith.constant 128 : index
    %555 = vector.load %arg3[%c3_193, %c0_194, %c128_195] : memref<16x2x256xf32, #tpu.memory_space<vmem>>, vector<1x2x128xf32>
    %556 = vector.shape_cast %555 : vector<1x2x128xf32> to vector<2x128xf32>
    %557 = vector.shape_cast %554 : vector<2x128xf32> to vector<1x2x128xf32>
    tpu.vector_store %arg3[%c3_193, %c0_194, %c128_195], %557 {strides = array<i32>} : memref<16x2x256xf32, #tpu.memory_space<vmem>>, vector<1x2x128xf32>,
    %558 = tpu.concatenate %549, %549 in 1 : vector<4x128xf32>, vector<4x128xf32> -> vector<4x256xf32>
    %559 = arith.mulf %558, %11 : vector<4x256xf32>
    %c13_196 = arith.constant 13 : index
    %c0_197 = arith.constant 0 : index
    %c0_198 = arith.constant 0 : index
    %560 = vector.load %arg1[%c13_196, %c0_197, %c0_198] : memref<16x2x1024xf32, #tpu.memory_space<vmem>>, vector<1x2x512xf32>
    %561 = vector.shape_cast %560 : vector<1x2x512xf32> to vector<2x512xf32>
    %c2_199 = arith.constant 2 : index
    %c0_200 = arith.constant 0 : index
    %c512_201 = arith.constant 512 : index
    %562 = vector.load %arg1[%c2_199, %c0_200, %c512_201] : memref<16x2x1024xf32, #tpu.memory_space<vmem>>, vector<1x2x512xf32>
    %563 = vector.shape_cast %562 : vector<1x2x512xf32> to vector<2x512xf32>
    %564 = tpu.concatenate %561, %563 in 0 : vector<2x512xf32>, vector<2x512xf32> -> vector<4x512xf32>
    %cst_202 = arith.constant dense<0.000000e+00> : vector<4x512xf32>
    %565 = tpu.matmul %559, %0, %cst_202 {dimension_numbers = #tpu.dot_dimension_numbers<[1], [0], [0], [1], [0, 0, 1, 1], [], []>} : vector<4x256xf32>, vector<256x512xf32>, vector<4x512xf32> -> vector<4x512xf32>
    %566 = arith.addf %564, %565 : vector<4x512xf32>
    %567 = vector.extract_strided_slice %566 {offsets = [0, 0], sizes = [4, 128], strides = [1, 1]} : vector<4x512xf32> to vector<4x128xf32>
    %568 = arith.negf %567 : vector<4x128xf32>
    %569 = math.exp %568 : vector<4x128xf32>
    %cst_203 = arith.constant 1.000000e+00 : f32
    %570 = vector.broadcast %cst_203 : f32 to vector<4x128xf32>
    %571 = arith.addf %570, %569 : vector<4x128xf32>
    %572 = arith.divf %570, %571 : vector<4x128xf32>
    %573 = vector.extract_strided_slice %566 {offsets = [0, 128], sizes = [4, 128], strides = [1, 1]} : vector<4x512xf32> to vector<4x128xf32>
    %574 = arith.negf %573 : vector<4x128xf32>
    %575 = math.exp %574 : vector<4x128xf32>
    %cst_204 = arith.constant 1.000000e+00 : f32
    %576 = vector.broadcast %cst_204 : f32 to vector<4x128xf32>
    %577 = arith.addf %576, %575 : vector<4x128xf32>
    %578 = arith.divf %576, %577 : vector<4x128xf32>
    %579 = vector.extract_strided_slice %566 {offsets = [0, 256], sizes = [4, 128], strides = [1, 1]} : vector<4x512xf32> to vector<4x128xf32>
    %580 = math.tanh %579 : vector<4x128xf32>
    %581 = vector.extract_strided_slice %566 {offsets = [0, 384], sizes = [4, 128], strides = [1, 1]} : vector<4x512xf32> to vector<4x128xf32>
    %582 = arith.negf %581 : vector<4x128xf32>
    %583 = math.exp %582 : vector<4x128xf32>
    %cst_205 = arith.constant 1.000000e+00 : f32
    %584 = vector.broadcast %cst_205 : f32 to vector<4x128xf32>
    %585 = arith.addf %584, %583 : vector<4x128xf32>
    %586 = arith.divf %584, %585 : vector<4x128xf32>
    %587 = arith.mulf %578, %547 : vector<4x128xf32>
    %588 = arith.mulf %572, %580 : vector<4x128xf32>
    %589 = arith.addf %587, %588 : vector<4x128xf32>
    %590 = math.tanh %589 : vector<4x128xf32>
    %591 = arith.mulf %586, %590 : vector<4x128xf32>
    %592 = vector.extract_strided_slice %591 {offsets = [0, 0], sizes = [2, 128], strides = [1, 1]} : vector<4x128xf32> to vector<2x128xf32>
    %c13_206 = arith.constant 13 : index
    %c0_207 = arith.constant 0 : index
    %c0_208 = arith.constant 0 : index
    %593 = vector.load %arg3[%c13_206, %c0_207, %c0_208] : memref<16x2x256xf32, #tpu.memory_space<vmem>>, vector<1x2x128xf32>
    %594 = vector.shape_cast %593 : vector<1x2x128xf32> to vector<2x128xf32>
    %595 = vector.shape_cast %592 : vector<2x128xf32> to vector<1x2x128xf32>
    tpu.vector_store %arg3[%c13_206, %c0_207, %c0_208], %595 {strides = array<i32>} : memref<16x2x256xf32, #tpu.memory_space<vmem>>, vector<1x2x128xf32>,
    %596 = vector.extract_strided_slice %591 {offsets = [2, 0], sizes = [2, 128], strides = [1, 1]} : vector<4x128xf32> to vector<2x128xf32>
    %c2_209 = arith.constant 2 : index
    %c0_210 = arith.constant 0 : index
    %c128_211 = arith.constant 128 : index
    %597 = vector.load %arg3[%c2_209, %c0_210, %c128_211] : memref<16x2x256xf32, #tpu.memory_space<vmem>>, vector<1x2x128xf32>
    %598 = vector.shape_cast %597 : vector<1x2x128xf32> to vector<2x128xf32>
    %599 = vector.shape_cast %596 : vector<2x128xf32> to vector<1x2x128xf32>
    tpu.vector_store %arg3[%c2_209, %c0_210, %c128_211], %599 {strides = array<i32>} : memref<16x2x256xf32, #tpu.memory_space<vmem>>, vector<1x2x128xf32>,
    %600 = tpu.concatenate %591, %591 in 1 : vector<4x128xf32>, vector<4x128xf32> -> vector<4x256xf32>
    %601 = arith.mulf %600, %11 : vector<4x256xf32>
    %c14_212 = arith.constant 14 : index
    %c0_213 = arith.constant 0 : index
    %c0_214 = arith.constant 0 : index
    %602 = vector.load %arg1[%c14_212, %c0_213, %c0_214] : memref<16x2x1024xf32, #tpu.memory_space<vmem>>, vector<1x2x512xf32>
    %603 = vector.shape_cast %602 : vector<1x2x512xf32> to vector<2x512xf32>
    %c1_215 = arith.constant 1 : index
    %c0_216 = arith.constant 0 : index
    %c512_217 = arith.constant 512 : index
    %604 = vector.load %arg1[%c1_215, %c0_216, %c512_217] : memref<16x2x1024xf32, #tpu.memory_space<vmem>>, vector<1x2x512xf32>
    %605 = vector.shape_cast %604 : vector<1x2x512xf32> to vector<2x512xf32>
    %606 = tpu.concatenate %603, %605 in 0 : vector<2x512xf32>, vector<2x512xf32> -> vector<4x512xf32>
    %cst_218 = arith.constant dense<0.000000e+00> : vector<4x512xf32>
    %607 = tpu.matmul %601, %0, %cst_218 {dimension_numbers = #tpu.dot_dimension_numbers<[1], [0], [0], [1], [0, 0, 1, 1], [], []>} : vector<4x256xf32>, vector<256x512xf32>, vector<4x512xf32> -> vector<4x512xf32>
    %608 = arith.addf %606, %607 : vector<4x512xf32>
    %609 = vector.extract_strided_slice %608 {offsets = [0, 0], sizes = [4, 128], strides = [1, 1]} : vector<4x512xf32> to vector<4x128xf32>
    %610 = arith.negf %609 : vector<4x128xf32>
    %611 = math.exp %610 : vector<4x128xf32>
    %cst_219 = arith.constant 1.000000e+00 : f32
    %612 = vector.broadcast %cst_219 : f32 to vector<4x128xf32>
    %613 = arith.addf %612, %611 : vector<4x128xf32>
    %614 = arith.divf %612, %613 : vector<4x128xf32>
    %615 = vector.extract_strided_slice %608 {offsets = [0, 128], sizes = [4, 128], strides = [1, 1]} : vector<4x512xf32> to vector<4x128xf32>
    %616 = arith.negf %615 : vector<4x128xf32>
    %617 = math.exp %616 : vector<4x128xf32>
    %cst_220 = arith.constant 1.000000e+00 : f32
    %618 = vector.broadcast %cst_220 : f32 to vector<4x128xf32>
    %619 = arith.addf %618, %617 : vector<4x128xf32>
    %620 = arith.divf %618, %619 : vector<4x128xf32>
    %621 = vector.extract_strided_slice %608 {offsets = [0, 256], sizes = [4, 128], strides = [1, 1]} : vector<4x512xf32> to vector<4x128xf32>
    %622 = math.tanh %621 : vector<4x128xf32>
    %623 = vector.extract_strided_slice %608 {offsets = [0, 384], sizes = [4, 128], strides = [1, 1]} : vector<4x512xf32> to vector<4x128xf32>
    %624 = arith.negf %623 : vector<4x128xf32>
    %625 = math.exp %624 : vector<4x128xf32>
    %cst_221 = arith.constant 1.000000e+00 : f32
    %626 = vector.broadcast %cst_221 : f32 to vector<4x128xf32>
    %627 = arith.addf %626, %625 : vector<4x128xf32>
    %628 = arith.divf %626, %627 : vector<4x128xf32>
    %629 = arith.mulf %620, %589 : vector<4x128xf32>
    %630 = arith.mulf %614, %622 : vector<4x128xf32>
    %631 = arith.addf %629, %630 : vector<4x128xf32>
    %632 = math.tanh %631 : vector<4x128xf32>
    %633 = arith.mulf %628, %632 : vector<4x128xf32>
    %634 = vector.extract_strided_slice %633 {offsets = [0, 0], sizes = [2, 128], strides = [1, 1]} : vector<4x128xf32> to vector<2x128xf32>
    %c14_222 = arith.constant 14 : index
    %c0_223 = arith.constant 0 : index
    %c0_224 = arith.constant 0 : index
    %635 = vector.load %arg3[%c14_222, %c0_223, %c0_224] : memref<16x2x256xf32, #tpu.memory_space<vmem>>, vector<1x2x128xf32>
    %636 = vector.shape_cast %635 : vector<1x2x128xf32> to vector<2x128xf32>
    %637 = vector.shape_cast %634 : vector<2x128xf32> to vector<1x2x128xf32>
    tpu.vector_store %arg3[%c14_222, %c0_223, %c0_224], %637 {strides = array<i32>} : memref<16x2x256xf32, #tpu.memory_space<vmem>>, vector<1x2x128xf32>,
    %638 = vector.extract_strided_slice %633 {offsets = [2, 0], sizes = [2, 128], strides = [1, 1]} : vector<4x128xf32> to vector<2x128xf32>
    %c1_225 = arith.constant 1 : index
    %c0_226 = arith.constant 0 : index
    %c128_227 = arith.constant 128 : index
    %639 = vector.load %arg3[%c1_225, %c0_226, %c128_227] : memref<16x2x256xf32, #tpu.memory_space<vmem>>, vector<1x2x128xf32>
    %640 = vector.shape_cast %639 : vector<1x2x128xf32> to vector<2x128xf32>
    %641 = vector.shape_cast %638 : vector<2x128xf32> to vector<1x2x128xf32>
    tpu.vector_store %arg3[%c1_225, %c0_226, %c128_227], %641 {strides = array<i32>} : memref<16x2x256xf32, #tpu.memory_space<vmem>>, vector<1x2x128xf32>,
    %642 = tpu.concatenate %633, %633 in 1 : vector<4x128xf32>, vector<4x128xf32> -> vector<4x256xf32>
    %643 = arith.mulf %642, %11 : vector<4x256xf32>
    %c15_228 = arith.constant 15 : index
    %c0_229 = arith.constant 0 : index
    %c0_230 = arith.constant 0 : index
    %644 = vector.load %arg1[%c15_228, %c0_229, %c0_230] : memref<16x2x1024xf32, #tpu.memory_space<vmem>>, vector<1x2x512xf32>
    %645 = vector.shape_cast %644 : vector<1x2x512xf32> to vector<2x512xf32>
    %c0_231 = arith.constant 0 : index
    %c0_232 = arith.constant 0 : index
    %c512_233 = arith.constant 512 : index
    %646 = vector.load %arg1[%c0_231, %c0_232, %c512_233] : memref<16x2x1024xf32, #tpu.memory_space<vmem>>, vector<1x2x512xf32>
    %647 = vector.shape_cast %646 : vector<1x2x512xf32> to vector<2x512xf32>
    %648 = tpu.concatenate %645, %647 in 0 : vector<2x512xf32>, vector<2x512xf32> -> vector<4x512xf32>
    %cst_234 = arith.constant dense<0.000000e+00> : vector<4x512xf32>
    %649 = tpu.matmul %643, %0, %cst_234 {dimension_numbers = #tpu.dot_dimension_numbers<[1], [0], [0], [1], [0, 0, 1, 1], [], []>} : vector<4x256xf32>, vector<256x512xf32>, vector<4x512xf32> -> vector<4x512xf32>
    %650 = arith.addf %648, %649 : vector<4x512xf32>
    %651 = vector.extract_strided_slice %650 {offsets = [0, 0], sizes = [4, 128], strides = [1, 1]} : vector<4x512xf32> to vector<4x128xf32>
    %652 = arith.negf %651 : vector<4x128xf32>
    %653 = math.exp %652 : vector<4x128xf32>
    %cst_235 = arith.constant 1.000000e+00 : f32
    %654 = vector.broadcast %cst_235 : f32 to vector<4x128xf32>
    %655 = arith.addf %654, %653 : vector<4x128xf32>
    %656 = arith.divf %654, %655 : vector<4x128xf32>
    %657 = vector.extract_strided_slice %650 {offsets = [0, 128], sizes = [4, 128], strides = [1, 1]} : vector<4x512xf32> to vector<4x128xf32>
    %658 = arith.negf %657 : vector<4x128xf32>
    %659 = math.exp %658 : vector<4x128xf32>
    %cst_236 = arith.constant 1.000000e+00 : f32
    %660 = vector.broadcast %cst_236 : f32 to vector<4x128xf32>
    %661 = arith.addf %660, %659 : vector<4x128xf32>
    %662 = arith.divf %660, %661 : vector<4x128xf32>
    %663 = vector.extract_strided_slice %650 {offsets = [0, 256], sizes = [4, 128], strides = [1, 1]} : vector<4x512xf32> to vector<4x128xf32>
    %664 = math.tanh %663 : vector<4x128xf32>
    %665 = vector.extract_strided_slice %650 {offsets = [0, 384], sizes = [4, 128], strides = [1, 1]} : vector<4x512xf32> to vector<4x128xf32>
    %666 = arith.negf %665 : vector<4x128xf32>
    %667 = math.exp %666 : vector<4x128xf32>
    %cst_237 = arith.constant 1.000000e+00 : f32
    %668 = vector.broadcast %cst_237 : f32 to vector<4x128xf32>
    %669 = arith.addf %668, %667 : vector<4x128xf32>
    %670 = arith.divf %668, %669 : vector<4x128xf32>
    %671 = arith.mulf %662, %631 : vector<4x128xf32>
    %672 = arith.mulf %656, %664 : vector<4x128xf32>
    %673 = arith.addf %671, %672 : vector<4x128xf32>
    %674 = math.tanh %673 : vector<4x128xf32>
    %675 = arith.mulf %670, %674 : vector<4x128xf32>
    %676 = vector.extract_strided_slice %675 {offsets = [0, 0], sizes = [2, 128], strides = [1, 1]} : vector<4x128xf32> to vector<2x128xf32>
    %c15_238 = arith.constant 15 : index
    %c0_239 = arith.constant 0 : index
    %c0_240 = arith.constant 0 : index
    %677 = vector.load %arg3[%c15_238, %c0_239, %c0_240] : memref<16x2x256xf32, #tpu.memory_space<vmem>>, vector<1x2x128xf32>
    %678 = vector.shape_cast %677 : vector<1x2x128xf32> to vector<2x128xf32>
    %679 = vector.shape_cast %676 : vector<2x128xf32> to vector<1x2x128xf32>
    tpu.vector_store %arg3[%c15_238, %c0_239, %c0_240], %679 {strides = array<i32>} : memref<16x2x256xf32, #tpu.memory_space<vmem>>, vector<1x2x128xf32>,
    %680 = vector.extract_strided_slice %675 {offsets = [2, 0], sizes = [2, 128], strides = [1, 1]} : vector<4x128xf32> to vector<2x128xf32>
    %c0_241 = arith.constant 0 : index
    %c0_242 = arith.constant 0 : index
    %c128_243 = arith.constant 128 : index
    %681 = vector.load %arg3[%c0_241, %c0_242, %c128_243] : memref<16x2x256xf32, #tpu.memory_space<vmem>>, vector<1x2x128xf32>
    %682 = vector.shape_cast %681 : vector<1x2x128xf32> to vector<2x128xf32>
    %683 = vector.shape_cast %680 : vector<2x128xf32> to vector<1x2x128xf32>
    tpu.vector_store %arg3[%c0_241, %c0_242, %c128_243], %683 {strides = array<i32>} : memref<16x2x256xf32, #tpu.memory_space<vmem>>, vector<1x2x128xf32>,
    return
  }
  func.func @transform_0(%arg0: i32) -> (i32, i32, i32) {
    %c0_i32 = arith.constant 0 : i32
    %c0_i32_0 = arith.constant 0 : i32
    %c0_i32_1 = arith.constant 0 : i32
    %c0_i32_2 = arith.constant 0 : i32
    return %c0_i32, %c0_i32_0, %c0_i32_1 : i32, i32, i32
  }
  func.func @transform_1(%arg0: i32) -> (i32, i32) {
    %c0_i32 = arith.constant 0 : i32
    %c0_i32_0 = arith.constant 0 : i32
    %c0_i32_1 = arith.constant 0 : i32
    return %c0_i32, %c0_i32_0 : i32, i32
  }
  func.func @transform_2(%arg0: i32) -> (i32, i32, i32) {
    %c0_i32 = arith.constant 0 : i32
    %c0_i32_0 = arith.constant 0 : i32
    %c0_i32_1 = arith.constant 0 : i32
    %c0_i32_2 = arith.constant 0 : i32
    return %c0_i32, %c0_i32_0, %c0_i32_1 : i32, i32, i32
  }
}

module attributes {stable_mosaic.version = 11 : i64} {
  func.func @dense_kernel(%arg0: i32, %arg1: memref<32x256xf32, #tpu.memory_space<vmem>>, %arg2: memref<256x1024xf32, #tpu.memory_space<vmem>>, %arg3: memref<1x1024xf32, #tpu.memory_space<vmem>>, %arg4: memref<32x1024xf32, #tpu.memory_space<vmem>>) attributes {dimension_semantics = [#tpu.dimension_semantics<arbitrary>], iteration_bounds = array<i64: 1>, scalar_prefetch = 0 : i64, scratch_operands = 0 : i64, tpu.core_type = #tpu.core_type<tc>, window_params = [{pipeline_mode = #tpu.pipeline_mode<synchronous>, transform_indices = @transform_0, window_bounds = array<i64: 32, 256>}, {pipeline_mode = #tpu.pipeline_mode<synchronous>, transform_indices = @transform_1, window_bounds = array<i64: 256, 1024>}, {pipeline_mode = #tpu.pipeline_mode<synchronous>, transform_indices = @transform_2, window_bounds = array<i64: 1, 1024>}, {pipeline_mode = #tpu.pipeline_mode<synchronous>, transform_indices = @transform_3, window_bounds = array<i64: 32, 1024>}]} {
    %c0 = arith.constant 0 : index
    %c0_0 = arith.constant 0 : index
    %0 = vector.load %arg1[%c0, %c0_0] : memref<32x256xf32, #tpu.memory_space<vmem>>, vector<32x256xf32>
    %c0_1 = arith.constant 0 : index
    %c0_2 = arith.constant 0 : index
    %1 = vector.load %arg2[%c0_1, %c0_2] : memref<256x1024xf32, #tpu.memory_space<vmem>>, vector<256x1024xf32>
    %cst = arith.constant dense<0.000000e+00> : vector<32x1024xf32>
    %2 = tpu.matmul %0, %1, %cst {dimension_numbers = #tpu.dot_dimension_numbers<[1], [0], [0], [1], [0, 0, 1, 1], [], []>} : vector<32x256xf32>, vector<256x1024xf32>, vector<32x1024xf32> -> vector<32x1024xf32>
    %c0_3 = arith.constant 0 : index
    %c0_4 = arith.constant 0 : index
    %3 = vector.load %arg3[%c0_3, %c0_4] : memref<1x1024xf32, #tpu.memory_space<vmem>>, vector<1x1024xf32>
    %4 = vector.broadcast %3 : vector<1x1024xf32> to vector<32x1024xf32>
    %5 = arith.addf %2, %4 : vector<32x1024xf32>
    %c0_5 = arith.constant 0 : index
    %c0_6 = arith.constant 0 : index
    %6 = vector.load %arg4[%c0_5, %c0_6] : memref<32x1024xf32, #tpu.memory_space<vmem>>, vector<32x1024xf32>
    tpu.vector_store %arg4[%c0_5, %c0_6], %5 {strides = array<i32>} : memref<32x1024xf32, #tpu.memory_space<vmem>>, vector<32x1024xf32>,
    return
  }
  func.func @transform_0(%arg0: i32) -> (i32, i32) {
    %c0_i32 = arith.constant 0 : i32
    %c0_i32_0 = arith.constant 0 : i32
    %c0_i32_1 = arith.constant 0 : i32
    return %c0_i32, %c0_i32_0 : i32, i32
  }
  func.func @transform_1(%arg0: i32) -> (i32, i32) {
    %c0_i32 = arith.constant 0 : i32
    %c0_i32_0 = arith.constant 0 : i32
    %c0_i32_1 = arith.constant 0 : i32
    return %c0_i32, %c0_i32_0 : i32, i32
  }
  func.func @transform_2(%arg0: i32) -> (i32, i32) {
    %c0_i32 = arith.constant 0 : i32
    %c0_i32_0 = arith.constant 0 : i32
    %c0_i32_1 = arith.constant 0 : i32
    return %c0_i32, %c0_i32_0 : i32, i32
  }
  func.func @transform_3(%arg0: i32) -> (i32, i32) {
    %c0_i32 = arith.constant 0 : i32
    %c0_i32_0 = arith.constant 0 : i32
    %c0_i32_1 = arith.constant 0 : i32
    return %c0_i32, %c0_i32_0 : i32, i32
  }
}

module attributes {stable_mosaic.version = 11 : i64} {
  func.func @bilstm_kernel(%arg0: i32, %arg1: memref<16x2x1024xf32, #tpu.memory_space<vmem>>, %arg2: memref<256x512xf32, #tpu.memory_space<vmem>>, %arg3: memref<16x2x256xf32, #tpu.memory_space<vmem>>) attributes {dimension_semantics = [#tpu.dimension_semantics<arbitrary>], iteration_bounds = array<i64: 1>, scalar_prefetch = 0 : i64, scratch_operands = 0 : i64, tpu.core_type = #tpu.core_type<tc>, window_params = [{pipeline_mode = #tpu.pipeline_mode<synchronous>, transform_indices = @transform_0, window_bounds = array<i64: 16, 2, 1024>}, {pipeline_mode = #tpu.pipeline_mode<synchronous>, transform_indices = @transform_1, window_bounds = array<i64: 256, 512>}, {pipeline_mode = #tpu.pipeline_mode<synchronous>, transform_indices = @transform_2, window_bounds = array<i64: 16, 2, 256>}]} {
    %c0 = arith.constant 0 : index
    %c0_0 = arith.constant 0 : index
    %0 = vector.load %arg2[%c0, %c0_0] : memref<256x512xf32, #tpu.memory_space<vmem>>, vector<256x512xf32>
    %1 = tpu.iota {dimensions = array<i32: 0>} : vector<4x256xi32>
    %2 = tpu.iota {dimensions = array<i32: 1>} : vector<4x256xi32>
    %c2_i32 = arith.constant 2 : i32
    %3 = vector.broadcast %c2_i32 : i32 to vector<4x256xi32>
    %4 = arith.cmpi slt, %1, %3 : vector<4x256xi32>
    %c128_i32 = arith.constant 128 : i32
    %5 = vector.broadcast %c128_i32 : i32 to vector<4x256xi32>
    %6 = arith.cmpi slt, %2, %5 : vector<4x256xi32>
    %7 = arith.xori %4, %6 : vector<4x256xi1>
    %cst = arith.constant dense<true> : vector<4x256xi1>
    %8 = arith.xori %7, %cst : vector<4x256xi1>
    %cst_1 = arith.constant 1.000000e+00 : f32
    %cst_2 = arith.constant 0.000000e+00 : f32
    %9 = vector.broadcast %cst_1 : f32 to vector<4x256xf32>
    %10 = vector.broadcast %cst_2 : f32 to vector<4x256xf32>
    %11 = arith.select %8, %9, %10 : vector<4x256xi1>, vector<4x256xf32>
    %cst_3 = arith.constant 0.000000e+00 : f32
    %12 = vector.broadcast %cst_3 : f32 to vector<4x256xf32>
    %cst_4 = arith.constant 0.000000e+00 : f32
    %13 = vector.broadcast %cst_4 : f32 to vector<4x128xf32>
    %c0_5 = arith.constant 0 : index
    %c0_6 = arith.constant 0 : index
    %c0_7 = arith.constant 0 : index
    %14 = vector.load %arg1[%c0_5, %c0_6, %c0_7] : memref<16x2x1024xf32, #tpu.memory_space<vmem>>, vector<1x2x512xf32>
    %15 = vector.shape_cast %14 : vector<1x2x512xf32> to vector<2x512xf32>
    %c15 = arith.constant 15 : index
    %c0_8 = arith.constant 0 : index
    %c512 = arith.constant 512 : index
    %16 = vector.load %arg1[%c15, %c0_8, %c512] : memref<16x2x1024xf32, #tpu.memory_space<vmem>>, vector<1x2x512xf32>
    %17 = vector.shape_cast %16 : vector<1x2x512xf32> to vector<2x512xf32>
    %18 = tpu.concatenate %15, %17 in 0 : vector<2x512xf32>, vector<2x512xf32> -> vector<4x512xf32>
    %cst_9 = arith.constant dense<0.000000e+00> : vector<4x512xf32>
    %19 = tpu.matmul %12, %0, %cst_9 {dimension_numbers = #tpu.dot_dimension_numbers<[1], [0], [0], [1], [0, 0, 1, 1], [], []>} : vector<4x256xf32>, vector<256x512xf32>, vector<4x512xf32> -> vector<4x512xf32>
    %20 = arith.addf %18, %19 : vector<4x512xf32>
    %21 = vector.extract_strided_slice %20 {offsets = [0, 0], sizes = [4, 128], strides = [1, 1]} : vector<4x512xf32> to vector<4x128xf32>
    %22 = arith.negf %21 : vector<4x128xf32>
    %23 = math.exp %22 : vector<4x128xf32>
    %cst_10 = arith.constant 1.000000e+00 : f32
    %24 = vector.broadcast %cst_10 : f32 to vector<4x128xf32>
    %25 = arith.addf %24, %23 : vector<4x128xf32>
    %26 = arith.divf %24, %25 : vector<4x128xf32>
    %27 = vector.extract_strided_slice %20 {offsets = [0, 128], sizes = [4, 128], strides = [1, 1]} : vector<4x512xf32> to vector<4x128xf32>
    %28 = arith.negf %27 : vector<4x128xf32>
    %29 = math.exp %28 : vector<4x128xf32>
    %cst_11 = arith.constant 1.000000e+00 : f32
    %30 = vector.broadcast %cst_11 : f32 to vector<4x128xf32>
    %31 = arith.addf %30, %29 : vector<4x128xf32>
    %32 = arith.divf %30, %31 : vector<4x128xf32>
    %33 = vector.extract_strided_slice %20 {offsets = [0, 256], sizes = [4, 128], strides = [1, 1]} : vector<4x512xf32> to vector<4x128xf32>
    %34 = math.tanh %33 : vector<4x128xf32>
    %35 = vector.extract_strided_slice %20 {offsets = [0, 384], sizes = [4, 128], strides = [1, 1]} : vector<4x512xf32> to vector<4x128xf32>
    %36 = arith.negf %35 : vector<4x128xf32>
    %37 = math.exp %36 : vector<4x128xf32>
    %cst_12 = arith.constant 1.000000e+00 : f32
    %38 = vector.broadcast %cst_12 : f32 to vector<4x128xf32>
    %39 = arith.addf %38, %37 : vector<4x128xf32>
    %40 = arith.divf %38, %39 : vector<4x128xf32>
    %41 = arith.mulf %32, %13 : vector<4x128xf32>
    %42 = arith.mulf %26, %34 : vector<4x128xf32>
    %43 = arith.addf %41, %42 : vector<4x128xf32>
    %44 = math.tanh %43 : vector<4x128xf32>
    %45 = arith.mulf %40, %44 : vector<4x128xf32>
    %46 = vector.extract_strided_slice %45 {offsets = [0, 0], sizes = [2, 128], strides = [1, 1]} : vector<4x128xf32> to vector<2x128xf32>
    %c0_13 = arith.constant 0 : index
    %c0_14 = arith.constant 0 : index
    %c0_15 = arith.constant 0 : index
    %47 = vector.load %arg3[%c0_13, %c0_14, %c0_15] : memref<16x2x256xf32, #tpu.memory_space<vmem>>, vector<1x2x128xf32>
    %48 = vector.shape_cast %47 : vector<1x2x128xf32> to vector<2x128xf32>
    %49 = vector.shape_cast %46 : vector<2x128xf32> to vector<1x2x128xf32>
    tpu.vector_store %arg3[%c0_13, %c0_14, %c0_15], %49 {strides = array<i32>} : memref<16x2x256xf32, #tpu.memory_space<vmem>>, vector<1x2x128xf32>,
    %50 = vector.extract_strided_slice %45 {offsets = [2, 0], sizes = [2, 128], strides = [1, 1]} : vector<4x128xf32> to vector<2x128xf32>
    %c15_16 = arith.constant 15 : index
    %c0_17 = arith.constant 0 : index
    %c128 = arith.constant 128 : index
    %51 = vector.load %arg3[%c15_16, %c0_17, %c128] : memref<16x2x256xf32, #tpu.memory_space<vmem>>, vector<1x2x128xf32>
    %52 = vector.shape_cast %51 : vector<1x2x128xf32> to vector<2x128xf32>
    %53 = vector.shape_cast %50 : vector<2x128xf32> to vector<1x2x128xf32>
    tpu.vector_store %arg3[%c15_16, %c0_17, %c128], %53 {strides = array<i32>} : memref<16x2x256xf32, #tpu.memory_space<vmem>>, vector<1x2x128xf32>,
    %54 = tpu.concatenate %45, %45 in 1 : vector<4x128xf32>, vector<4x128xf32> -> vector<4x256xf32>
    %55 = arith.mulf %54, %11 : vector<4x256xf32>
    %c1 = arith.constant 1 : index
    %c0_18 = arith.constant 0 : index
    %c0_19 = arith.constant 0 : index
    %56 = vector.load %arg1[%c1, %c0_18, %c0_19] : memref<16x2x1024xf32, #tpu.memory_space<vmem>>, vector<1x2x512xf32>
    %57 = vector.shape_cast %56 : vector<1x2x512xf32> to vector<2x512xf32>
    %c14 = arith.constant 14 : index
    %c0_20 = arith.constant 0 : index
    %c512_21 = arith.constant 512 : index
    %58 = vector.load %arg1[%c14, %c0_20, %c512_21] : memref<16x2x1024xf32, #tpu.memory_space<vmem>>, vector<1x2x512xf32>
    %59 = vector.shape_cast %58 : vector<1x2x512xf32> to vector<2x512xf32>
    %60 = tpu.concatenate %57, %59 in 0 : vector<2x512xf32>, vector<2x512xf32> -> vector<4x512xf32>
    %cst_22 = arith.constant dense<0.000000e+00> : vector<4x512xf32>
    %61 = tpu.matmul %55, %0, %cst_22 {dimension_numbers = #tpu.dot_dimension_numbers<[1], [0], [0], [1], [0, 0, 1, 1], [], []>} : vector<4x256xf32>, vector<256x512xf32>, vector<4x512xf32> -> vector<4x512xf32>
    %62 = arith.addf %60, %61 : vector<4x512xf32>
    %63 = vector.extract_strided_slice %62 {offsets = [0, 0], sizes = [4, 128], strides = [1, 1]} : vector<4x512xf32> to vector<4x128xf32>
    %64 = arith.negf %63 : vector<4x128xf32>
    %65 = math.exp %64 : vector<4x128xf32>
    %cst_23 = arith.constant 1.000000e+00 : f32
    %66 = vector.broadcast %cst_23 : f32 to vector<4x128xf32>
    %67 = arith.addf %66, %65 : vector<4x128xf32>
    %68 = arith.divf %66, %67 : vector<4x128xf32>
    %69 = vector.extract_strided_slice %62 {offsets = [0, 128], sizes = [4, 128], strides = [1, 1]} : vector<4x512xf32> to vector<4x128xf32>
    %70 = arith.negf %69 : vector<4x128xf32>
    %71 = math.exp %70 : vector<4x128xf32>
    %cst_24 = arith.constant 1.000000e+00 : f32
    %72 = vector.broadcast %cst_24 : f32 to vector<4x128xf32>
    %73 = arith.addf %72, %71 : vector<4x128xf32>
    %74 = arith.divf %72, %73 : vector<4x128xf32>
    %75 = vector.extract_strided_slice %62 {offsets = [0, 256], sizes = [4, 128], strides = [1, 1]} : vector<4x512xf32> to vector<4x128xf32>
    %76 = math.tanh %75 : vector<4x128xf32>
    %77 = vector.extract_strided_slice %62 {offsets = [0, 384], sizes = [4, 128], strides = [1, 1]} : vector<4x512xf32> to vector<4x128xf32>
    %78 = arith.negf %77 : vector<4x128xf32>
    %79 = math.exp %78 : vector<4x128xf32>
    %cst_25 = arith.constant 1.000000e+00 : f32
    %80 = vector.broadcast %cst_25 : f32 to vector<4x128xf32>
    %81 = arith.addf %80, %79 : vector<4x128xf32>
    %82 = arith.divf %80, %81 : vector<4x128xf32>
    %83 = arith.mulf %74, %43 : vector<4x128xf32>
    %84 = arith.mulf %68, %76 : vector<4x128xf32>
    %85 = arith.addf %83, %84 : vector<4x128xf32>
    %86 = math.tanh %85 : vector<4x128xf32>
    %87 = arith.mulf %82, %86 : vector<4x128xf32>
    %88 = vector.extract_strided_slice %87 {offsets = [0, 0], sizes = [2, 128], strides = [1, 1]} : vector<4x128xf32> to vector<2x128xf32>
    %c1_26 = arith.constant 1 : index
    %c0_27 = arith.constant 0 : index
    %c0_28 = arith.constant 0 : index
    %89 = vector.load %arg3[%c1_26, %c0_27, %c0_28] : memref<16x2x256xf32, #tpu.memory_space<vmem>>, vector<1x2x128xf32>
    %90 = vector.shape_cast %89 : vector<1x2x128xf32> to vector<2x128xf32>
    %91 = vector.shape_cast %88 : vector<2x128xf32> to vector<1x2x128xf32>
    tpu.vector_store %arg3[%c1_26, %c0_27, %c0_28], %91 {strides = array<i32>} : memref<16x2x256xf32, #tpu.memory_space<vmem>>, vector<1x2x128xf32>,
    %92 = vector.extract_strided_slice %87 {offsets = [2, 0], sizes = [2, 128], strides = [1, 1]} : vector<4x128xf32> to vector<2x128xf32>
    %c14_29 = arith.constant 14 : index
    %c0_30 = arith.constant 0 : index
    %c128_31 = arith.constant 128 : index
    %93 = vector.load %arg3[%c14_29, %c0_30, %c128_31] : memref<16x2x256xf32, #tpu.memory_space<vmem>>, vector<1x2x128xf32>
    %94 = vector.shape_cast %93 : vector<1x2x128xf32> to vector<2x128xf32>
    %95 = vector.shape_cast %92 : vector<2x128xf32> to vector<1x2x128xf32>
    tpu.vector_store %arg3[%c14_29, %c0_30, %c128_31], %95 {strides = array<i32>} : memref<16x2x256xf32, #tpu.memory_space<vmem>>, vector<1x2x128xf32>,
    %96 = tpu.concatenate %87, %87 in 1 : vector<4x128xf32>, vector<4x128xf32> -> vector<4x256xf32>
    %97 = arith.mulf %96, %11 : vector<4x256xf32>
    %c2 = arith.constant 2 : index
    %c0_32 = arith.constant 0 : index
    %c0_33 = arith.constant 0 : index
    %98 = vector.load %arg1[%c2, %c0_32, %c0_33] : memref<16x2x1024xf32, #tpu.memory_space<vmem>>, vector<1x2x512xf32>
    %99 = vector.shape_cast %98 : vector<1x2x512xf32> to vector<2x512xf32>
    %c13 = arith.constant 13 : index
    %c0_34 = arith.constant 0 : index
    %c512_35 = arith.constant 512 : index
    %100 = vector.load %arg1[%c13, %c0_34, %c512_35] : memref<16x2x1024xf32, #tpu.memory_space<vmem>>, vector<1x2x512xf32>
    %101 = vector.shape_cast %100 : vector<1x2x512xf32> to vector<2x512xf32>
    %102 = tpu.concatenate %99, %101 in 0 : vector<2x512xf32>, vector<2x512xf32> -> vector<4x512xf32>
    %cst_36 = arith.constant dense<0.000000e+00> : vector<4x512xf32>
    %103 = tpu.matmul %97, %0, %cst_36 {dimension_numbers = #tpu.dot_dimension_numbers<[1], [0], [0], [1], [0, 0, 1, 1], [], []>} : vector<4x256xf32>, vector<256x512xf32>, vector<4x512xf32> -> vector<4x512xf32>
    %104 = arith.addf %102, %103 : vector<4x512xf32>
    %105 = vector.extract_strided_slice %104 {offsets = [0, 0], sizes = [4, 128], strides = [1, 1]} : vector<4x512xf32> to vector<4x128xf32>
    %106 = arith.negf %105 : vector<4x128xf32>
    %107 = math.exp %106 : vector<4x128xf32>
    %cst_37 = arith.constant 1.000000e+00 : f32
    %108 = vector.broadcast %cst_37 : f32 to vector<4x128xf32>
    %109 = arith.addf %108, %107 : vector<4x128xf32>
    %110 = arith.divf %108, %109 : vector<4x128xf32>
    %111 = vector.extract_strided_slice %104 {offsets = [0, 128], sizes = [4, 128], strides = [1, 1]} : vector<4x512xf32> to vector<4x128xf32>
    %112 = arith.negf %111 : vector<4x128xf32>
    %113 = math.exp %112 : vector<4x128xf32>
    %cst_38 = arith.constant 1.000000e+00 : f32
    %114 = vector.broadcast %cst_38 : f32 to vector<4x128xf32>
    %115 = arith.addf %114, %113 : vector<4x128xf32>
    %116 = arith.divf %114, %115 : vector<4x128xf32>
    %117 = vector.extract_strided_slice %104 {offsets = [0, 256], sizes = [4, 128], strides = [1, 1]} : vector<4x512xf32> to vector<4x128xf32>
    %118 = math.tanh %117 : vector<4x128xf32>
    %119 = vector.extract_strided_slice %104 {offsets = [0, 384], sizes = [4, 128], strides = [1, 1]} : vector<4x512xf32> to vector<4x128xf32>
    %120 = arith.negf %119 : vector<4x128xf32>
    %121 = math.exp %120 : vector<4x128xf32>
    %cst_39 = arith.constant 1.000000e+00 : f32
    %122 = vector.broadcast %cst_39 : f32 to vector<4x128xf32>
    %123 = arith.addf %122, %121 : vector<4x128xf32>
    %124 = arith.divf %122, %123 : vector<4x128xf32>
    %125 = arith.mulf %116, %85 : vector<4x128xf32>
    %126 = arith.mulf %110, %118 : vector<4x128xf32>
    %127 = arith.addf %125, %126 : vector<4x128xf32>
    %128 = math.tanh %127 : vector<4x128xf32>
    %129 = arith.mulf %124, %128 : vector<4x128xf32>
    %130 = vector.extract_strided_slice %129 {offsets = [0, 0], sizes = [2, 128], strides = [1, 1]} : vector<4x128xf32> to vector<2x128xf32>
    %c2_40 = arith.constant 2 : index
    %c0_41 = arith.constant 0 : index
    %c0_42 = arith.constant 0 : index
    %131 = vector.load %arg3[%c2_40, %c0_41, %c0_42] : memref<16x2x256xf32, #tpu.memory_space<vmem>>, vector<1x2x128xf32>
    %132 = vector.shape_cast %131 : vector<1x2x128xf32> to vector<2x128xf32>
    %133 = vector.shape_cast %130 : vector<2x128xf32> to vector<1x2x128xf32>
    tpu.vector_store %arg3[%c2_40, %c0_41, %c0_42], %133 {strides = array<i32>} : memref<16x2x256xf32, #tpu.memory_space<vmem>>, vector<1x2x128xf32>,
    %134 = vector.extract_strided_slice %129 {offsets = [2, 0], sizes = [2, 128], strides = [1, 1]} : vector<4x128xf32> to vector<2x128xf32>
    %c13_43 = arith.constant 13 : index
    %c0_44 = arith.constant 0 : index
    %c128_45 = arith.constant 128 : index
    %135 = vector.load %arg3[%c13_43, %c0_44, %c128_45] : memref<16x2x256xf32, #tpu.memory_space<vmem>>, vector<1x2x128xf32>
    %136 = vector.shape_cast %135 : vector<1x2x128xf32> to vector<2x128xf32>
    %137 = vector.shape_cast %134 : vector<2x128xf32> to vector<1x2x128xf32>
    tpu.vector_store %arg3[%c13_43, %c0_44, %c128_45], %137 {strides = array<i32>} : memref<16x2x256xf32, #tpu.memory_space<vmem>>, vector<1x2x128xf32>,
    %138 = tpu.concatenate %129, %129 in 1 : vector<4x128xf32>, vector<4x128xf32> -> vector<4x256xf32>
    %139 = arith.mulf %138, %11 : vector<4x256xf32>
    %c3 = arith.constant 3 : index
    %c0_46 = arith.constant 0 : index
    %c0_47 = arith.constant 0 : index
    %140 = vector.load %arg1[%c3, %c0_46, %c0_47] : memref<16x2x1024xf32, #tpu.memory_space<vmem>>, vector<1x2x512xf32>
    %141 = vector.shape_cast %140 : vector<1x2x512xf32> to vector<2x512xf32>
    %c12 = arith.constant 12 : index
    %c0_48 = arith.constant 0 : index
    %c512_49 = arith.constant 512 : index
    %142 = vector.load %arg1[%c12, %c0_48, %c512_49] : memref<16x2x1024xf32, #tpu.memory_space<vmem>>, vector<1x2x512xf32>
    %143 = vector.shape_cast %142 : vector<1x2x512xf32> to vector<2x512xf32>
    %144 = tpu.concatenate %141, %143 in 0 : vector<2x512xf32>, vector<2x512xf32> -> vector<4x512xf32>
    %cst_50 = arith.constant dense<0.000000e+00> : vector<4x512xf32>
    %145 = tpu.matmul %139, %0, %cst_50 {dimension_numbers = #tpu.dot_dimension_numbers<[1], [0], [0], [1], [0, 0, 1, 1], [], []>} : vector<4x256xf32>, vector<256x512xf32>, vector<4x512xf32> -> vector<4x512xf32>
    %146 = arith.addf %144, %145 : vector<4x512xf32>
    %147 = vector.extract_strided_slice %146 {offsets = [0, 0], sizes = [4, 128], strides = [1, 1]} : vector<4x512xf32> to vector<4x128xf32>
    %148 = arith.negf %147 : vector<4x128xf32>
    %149 = math.exp %148 : vector<4x128xf32>
    %cst_51 = arith.constant 1.000000e+00 : f32
    %150 = vector.broadcast %cst_51 : f32 to vector<4x128xf32>
    %151 = arith.addf %150, %149 : vector<4x128xf32>
    %152 = arith.divf %150, %151 : vector<4x128xf32>
    %153 = vector.extract_strided_slice %146 {offsets = [0, 128], sizes = [4, 128], strides = [1, 1]} : vector<4x512xf32> to vector<4x128xf32>
    %154 = arith.negf %153 : vector<4x128xf32>
    %155 = math.exp %154 : vector<4x128xf32>
    %cst_52 = arith.constant 1.000000e+00 : f32
    %156 = vector.broadcast %cst_52 : f32 to vector<4x128xf32>
    %157 = arith.addf %156, %155 : vector<4x128xf32>
    %158 = arith.divf %156, %157 : vector<4x128xf32>
    %159 = vector.extract_strided_slice %146 {offsets = [0, 256], sizes = [4, 128], strides = [1, 1]} : vector<4x512xf32> to vector<4x128xf32>
    %160 = math.tanh %159 : vector<4x128xf32>
    %161 = vector.extract_strided_slice %146 {offsets = [0, 384], sizes = [4, 128], strides = [1, 1]} : vector<4x512xf32> to vector<4x128xf32>
    %162 = arith.negf %161 : vector<4x128xf32>
    %163 = math.exp %162 : vector<4x128xf32>
    %cst_53 = arith.constant 1.000000e+00 : f32
    %164 = vector.broadcast %cst_53 : f32 to vector<4x128xf32>
    %165 = arith.addf %164, %163 : vector<4x128xf32>
    %166 = arith.divf %164, %165 : vector<4x128xf32>
    %167 = arith.mulf %158, %127 : vector<4x128xf32>
    %168 = arith.mulf %152, %160 : vector<4x128xf32>
    %169 = arith.addf %167, %168 : vector<4x128xf32>
    %170 = math.tanh %169 : vector<4x128xf32>
    %171 = arith.mulf %166, %170 : vector<4x128xf32>
    %172 = vector.extract_strided_slice %171 {offsets = [0, 0], sizes = [2, 128], strides = [1, 1]} : vector<4x128xf32> to vector<2x128xf32>
    %c3_54 = arith.constant 3 : index
    %c0_55 = arith.constant 0 : index
    %c0_56 = arith.constant 0 : index
    %173 = vector.load %arg3[%c3_54, %c0_55, %c0_56] : memref<16x2x256xf32, #tpu.memory_space<vmem>>, vector<1x2x128xf32>
    %174 = vector.shape_cast %173 : vector<1x2x128xf32> to vector<2x128xf32>
    %175 = vector.shape_cast %172 : vector<2x128xf32> to vector<1x2x128xf32>
    tpu.vector_store %arg3[%c3_54, %c0_55, %c0_56], %175 {strides = array<i32>} : memref<16x2x256xf32, #tpu.memory_space<vmem>>, vector<1x2x128xf32>,
    %176 = vector.extract_strided_slice %171 {offsets = [2, 0], sizes = [2, 128], strides = [1, 1]} : vector<4x128xf32> to vector<2x128xf32>
    %c12_57 = arith.constant 12 : index
    %c0_58 = arith.constant 0 : index
    %c128_59 = arith.constant 128 : index
    %177 = vector.load %arg3[%c12_57, %c0_58, %c128_59] : memref<16x2x256xf32, #tpu.memory_space<vmem>>, vector<1x2x128xf32>
    %178 = vector.shape_cast %177 : vector<1x2x128xf32> to vector<2x128xf32>
    %179 = vector.shape_cast %176 : vector<2x128xf32> to vector<1x2x128xf32>
    tpu.vector_store %arg3[%c12_57, %c0_58, %c128_59], %179 {strides = array<i32>} : memref<16x2x256xf32, #tpu.memory_space<vmem>>, vector<1x2x128xf32>,
    %180 = tpu.concatenate %171, %171 in 1 : vector<4x128xf32>, vector<4x128xf32> -> vector<4x256xf32>
    %181 = arith.mulf %180, %11 : vector<4x256xf32>
    %c4 = arith.constant 4 : index
    %c0_60 = arith.constant 0 : index
    %c0_61 = arith.constant 0 : index
    %182 = vector.load %arg1[%c4, %c0_60, %c0_61] : memref<16x2x1024xf32, #tpu.memory_space<vmem>>, vector<1x2x512xf32>
    %183 = vector.shape_cast %182 : vector<1x2x512xf32> to vector<2x512xf32>
    %c11 = arith.constant 11 : index
    %c0_62 = arith.constant 0 : index
    %c512_63 = arith.constant 512 : index
    %184 = vector.load %arg1[%c11, %c0_62, %c512_63] : memref<16x2x1024xf32, #tpu.memory_space<vmem>>, vector<1x2x512xf32>
    %185 = vector.shape_cast %184 : vector<1x2x512xf32> to vector<2x512xf32>
    %186 = tpu.concatenate %183, %185 in 0 : vector<2x512xf32>, vector<2x512xf32> -> vector<4x512xf32>
    %cst_64 = arith.constant dense<0.000000e+00> : vector<4x512xf32>
    %187 = tpu.matmul %181, %0, %cst_64 {dimension_numbers = #tpu.dot_dimension_numbers<[1], [0], [0], [1], [0, 0, 1, 1], [], []>} : vector<4x256xf32>, vector<256x512xf32>, vector<4x512xf32> -> vector<4x512xf32>
    %188 = arith.addf %186, %187 : vector<4x512xf32>
    %189 = vector.extract_strided_slice %188 {offsets = [0, 0], sizes = [4, 128], strides = [1, 1]} : vector<4x512xf32> to vector<4x128xf32>
    %190 = arith.negf %189 : vector<4x128xf32>
    %191 = math.exp %190 : vector<4x128xf32>
    %cst_65 = arith.constant 1.000000e+00 : f32
    %192 = vector.broadcast %cst_65 : f32 to vector<4x128xf32>
    %193 = arith.addf %192, %191 : vector<4x128xf32>
    %194 = arith.divf %192, %193 : vector<4x128xf32>
    %195 = vector.extract_strided_slice %188 {offsets = [0, 128], sizes = [4, 128], strides = [1, 1]} : vector<4x512xf32> to vector<4x128xf32>
    %196 = arith.negf %195 : vector<4x128xf32>
    %197 = math.exp %196 : vector<4x128xf32>
    %cst_66 = arith.constant 1.000000e+00 : f32
    %198 = vector.broadcast %cst_66 : f32 to vector<4x128xf32>
    %199 = arith.addf %198, %197 : vector<4x128xf32>
    %200 = arith.divf %198, %199 : vector<4x128xf32>
    %201 = vector.extract_strided_slice %188 {offsets = [0, 256], sizes = [4, 128], strides = [1, 1]} : vector<4x512xf32> to vector<4x128xf32>
    %202 = math.tanh %201 : vector<4x128xf32>
    %203 = vector.extract_strided_slice %188 {offsets = [0, 384], sizes = [4, 128], strides = [1, 1]} : vector<4x512xf32> to vector<4x128xf32>
    %204 = arith.negf %203 : vector<4x128xf32>
    %205 = math.exp %204 : vector<4x128xf32>
    %cst_67 = arith.constant 1.000000e+00 : f32
    %206 = vector.broadcast %cst_67 : f32 to vector<4x128xf32>
    %207 = arith.addf %206, %205 : vector<4x128xf32>
    %208 = arith.divf %206, %207 : vector<4x128xf32>
    %209 = arith.mulf %200, %169 : vector<4x128xf32>
    %210 = arith.mulf %194, %202 : vector<4x128xf32>
    %211 = arith.addf %209, %210 : vector<4x128xf32>
    %212 = math.tanh %211 : vector<4x128xf32>
    %213 = arith.mulf %208, %212 : vector<4x128xf32>
    %214 = vector.extract_strided_slice %213 {offsets = [0, 0], sizes = [2, 128], strides = [1, 1]} : vector<4x128xf32> to vector<2x128xf32>
    %c4_68 = arith.constant 4 : index
    %c0_69 = arith.constant 0 : index
    %c0_70 = arith.constant 0 : index
    %215 = vector.load %arg3[%c4_68, %c0_69, %c0_70] : memref<16x2x256xf32, #tpu.memory_space<vmem>>, vector<1x2x128xf32>
    %216 = vector.shape_cast %215 : vector<1x2x128xf32> to vector<2x128xf32>
    %217 = vector.shape_cast %214 : vector<2x128xf32> to vector<1x2x128xf32>
    tpu.vector_store %arg3[%c4_68, %c0_69, %c0_70], %217 {strides = array<i32>} : memref<16x2x256xf32, #tpu.memory_space<vmem>>, vector<1x2x128xf32>,
    %218 = vector.extract_strided_slice %213 {offsets = [2, 0], sizes = [2, 128], strides = [1, 1]} : vector<4x128xf32> to vector<2x128xf32>
    %c11_71 = arith.constant 11 : index
    %c0_72 = arith.constant 0 : index
    %c128_73 = arith.constant 128 : index
    %219 = vector.load %arg3[%c11_71, %c0_72, %c128_73] : memref<16x2x256xf32, #tpu.memory_space<vmem>>, vector<1x2x128xf32>
    %220 = vector.shape_cast %219 : vector<1x2x128xf32> to vector<2x128xf32>
    %221 = vector.shape_cast %218 : vector<2x128xf32> to vector<1x2x128xf32>
    tpu.vector_store %arg3[%c11_71, %c0_72, %c128_73], %221 {strides = array<i32>} : memref<16x2x256xf32, #tpu.memory_space<vmem>>, vector<1x2x128xf32>,
    %222 = tpu.concatenate %213, %213 in 1 : vector<4x128xf32>, vector<4x128xf32> -> vector<4x256xf32>
    %223 = arith.mulf %222, %11 : vector<4x256xf32>
    %c5 = arith.constant 5 : index
    %c0_74 = arith.constant 0 : index
    %c0_75 = arith.constant 0 : index
    %224 = vector.load %arg1[%c5, %c0_74, %c0_75] : memref<16x2x1024xf32, #tpu.memory_space<vmem>>, vector<1x2x512xf32>
    %225 = vector.shape_cast %224 : vector<1x2x512xf32> to vector<2x512xf32>
    %c10 = arith.constant 10 : index
    %c0_76 = arith.constant 0 : index
    %c512_77 = arith.constant 512 : index
    %226 = vector.load %arg1[%c10, %c0_76, %c512_77] : memref<16x2x1024xf32, #tpu.memory_space<vmem>>, vector<1x2x512xf32>
    %227 = vector.shape_cast %226 : vector<1x2x512xf32> to vector<2x512xf32>
    %228 = tpu.concatenate %225, %227 in 0 : vector<2x512xf32>, vector<2x512xf32> -> vector<4x512xf32>
    %cst_78 = arith.constant dense<0.000000e+00> : vector<4x512xf32>
    %229 = tpu.matmul %223, %0, %cst_78 {dimension_numbers = #tpu.dot_dimension_numbers<[1], [0], [0], [1], [0, 0, 1, 1], [], []>} : vector<4x256xf32>, vector<256x512xf32>, vector<4x512xf32> -> vector<4x512xf32>
    %230 = arith.addf %228, %229 : vector<4x512xf32>
    %231 = vector.extract_strided_slice %230 {offsets = [0, 0], sizes = [4, 128], strides = [1, 1]} : vector<4x512xf32> to vector<4x128xf32>
    %232 = arith.negf %231 : vector<4x128xf32>
    %233 = math.exp %232 : vector<4x128xf32>
    %cst_79 = arith.constant 1.000000e+00 : f32
    %234 = vector.broadcast %cst_79 : f32 to vector<4x128xf32>
    %235 = arith.addf %234, %233 : vector<4x128xf32>
    %236 = arith.divf %234, %235 : vector<4x128xf32>
    %237 = vector.extract_strided_slice %230 {offsets = [0, 128], sizes = [4, 128], strides = [1, 1]} : vector<4x512xf32> to vector<4x128xf32>
    %238 = arith.negf %237 : vector<4x128xf32>
    %239 = math.exp %238 : vector<4x128xf32>
    %cst_80 = arith.constant 1.000000e+00 : f32
    %240 = vector.broadcast %cst_80 : f32 to vector<4x128xf32>
    %241 = arith.addf %240, %239 : vector<4x128xf32>
    %242 = arith.divf %240, %241 : vector<4x128xf32>
    %243 = vector.extract_strided_slice %230 {offsets = [0, 256], sizes = [4, 128], strides = [1, 1]} : vector<4x512xf32> to vector<4x128xf32>
    %244 = math.tanh %243 : vector<4x128xf32>
    %245 = vector.extract_strided_slice %230 {offsets = [0, 384], sizes = [4, 128], strides = [1, 1]} : vector<4x512xf32> to vector<4x128xf32>
    %246 = arith.negf %245 : vector<4x128xf32>
    %247 = math.exp %246 : vector<4x128xf32>
    %cst_81 = arith.constant 1.000000e+00 : f32
    %248 = vector.broadcast %cst_81 : f32 to vector<4x128xf32>
    %249 = arith.addf %248, %247 : vector<4x128xf32>
    %250 = arith.divf %248, %249 : vector<4x128xf32>
    %251 = arith.mulf %242, %211 : vector<4x128xf32>
    %252 = arith.mulf %236, %244 : vector<4x128xf32>
    %253 = arith.addf %251, %252 : vector<4x128xf32>
    %254 = math.tanh %253 : vector<4x128xf32>
    %255 = arith.mulf %250, %254 : vector<4x128xf32>
    %256 = vector.extract_strided_slice %255 {offsets = [0, 0], sizes = [2, 128], strides = [1, 1]} : vector<4x128xf32> to vector<2x128xf32>
    %c5_82 = arith.constant 5 : index
    %c0_83 = arith.constant 0 : index
    %c0_84 = arith.constant 0 : index
    %257 = vector.load %arg3[%c5_82, %c0_83, %c0_84] : memref<16x2x256xf32, #tpu.memory_space<vmem>>, vector<1x2x128xf32>
    %258 = vector.shape_cast %257 : vector<1x2x128xf32> to vector<2x128xf32>
    %259 = vector.shape_cast %256 : vector<2x128xf32> to vector<1x2x128xf32>
    tpu.vector_store %arg3[%c5_82, %c0_83, %c0_84], %259 {strides = array<i32>} : memref<16x2x256xf32, #tpu.memory_space<vmem>>, vector<1x2x128xf32>,
    %260 = vector.extract_strided_slice %255 {offsets = [2, 0], sizes = [2, 128], strides = [1, 1]} : vector<4x128xf32> to vector<2x128xf32>
    %c10_85 = arith.constant 10 : index
    %c0_86 = arith.constant 0 : index
    %c128_87 = arith.constant 128 : index
    %261 = vector.load %arg3[%c10_85, %c0_86, %c128_87] : memref<16x2x256xf32, #tpu.memory_space<vmem>>, vector<1x2x128xf32>
    %262 = vector.shape_cast %261 : vector<1x2x128xf32> to vector<2x128xf32>
    %263 = vector.shape_cast %260 : vector<2x128xf32> to vector<1x2x128xf32>
    tpu.vector_store %arg3[%c10_85, %c0_86, %c128_87], %263 {strides = array<i32>} : memref<16x2x256xf32, #tpu.memory_space<vmem>>, vector<1x2x128xf32>,
    %264 = tpu.concatenate %255, %255 in 1 : vector<4x128xf32>, vector<4x128xf32> -> vector<4x256xf32>
    %265 = arith.mulf %264, %11 : vector<4x256xf32>
    %c6 = arith.constant 6 : index
    %c0_88 = arith.constant 0 : index
    %c0_89 = arith.constant 0 : index
    %266 = vector.load %arg1[%c6, %c0_88, %c0_89] : memref<16x2x1024xf32, #tpu.memory_space<vmem>>, vector<1x2x512xf32>
    %267 = vector.shape_cast %266 : vector<1x2x512xf32> to vector<2x512xf32>
    %c9 = arith.constant 9 : index
    %c0_90 = arith.constant 0 : index
    %c512_91 = arith.constant 512 : index
    %268 = vector.load %arg1[%c9, %c0_90, %c512_91] : memref<16x2x1024xf32, #tpu.memory_space<vmem>>, vector<1x2x512xf32>
    %269 = vector.shape_cast %268 : vector<1x2x512xf32> to vector<2x512xf32>
    %270 = tpu.concatenate %267, %269 in 0 : vector<2x512xf32>, vector<2x512xf32> -> vector<4x512xf32>
    %cst_92 = arith.constant dense<0.000000e+00> : vector<4x512xf32>
    %271 = tpu.matmul %265, %0, %cst_92 {dimension_numbers = #tpu.dot_dimension_numbers<[1], [0], [0], [1], [0, 0, 1, 1], [], []>} : vector<4x256xf32>, vector<256x512xf32>, vector<4x512xf32> -> vector<4x512xf32>
    %272 = arith.addf %270, %271 : vector<4x512xf32>
    %273 = vector.extract_strided_slice %272 {offsets = [0, 0], sizes = [4, 128], strides = [1, 1]} : vector<4x512xf32> to vector<4x128xf32>
    %274 = arith.negf %273 : vector<4x128xf32>
    %275 = math.exp %274 : vector<4x128xf32>
    %cst_93 = arith.constant 1.000000e+00 : f32
    %276 = vector.broadcast %cst_93 : f32 to vector<4x128xf32>
    %277 = arith.addf %276, %275 : vector<4x128xf32>
    %278 = arith.divf %276, %277 : vector<4x128xf32>
    %279 = vector.extract_strided_slice %272 {offsets = [0, 128], sizes = [4, 128], strides = [1, 1]} : vector<4x512xf32> to vector<4x128xf32>
    %280 = arith.negf %279 : vector<4x128xf32>
    %281 = math.exp %280 : vector<4x128xf32>
    %cst_94 = arith.constant 1.000000e+00 : f32
    %282 = vector.broadcast %cst_94 : f32 to vector<4x128xf32>
    %283 = arith.addf %282, %281 : vector<4x128xf32>
    %284 = arith.divf %282, %283 : vector<4x128xf32>
    %285 = vector.extract_strided_slice %272 {offsets = [0, 256], sizes = [4, 128], strides = [1, 1]} : vector<4x512xf32> to vector<4x128xf32>
    %286 = math.tanh %285 : vector<4x128xf32>
    %287 = vector.extract_strided_slice %272 {offsets = [0, 384], sizes = [4, 128], strides = [1, 1]} : vector<4x512xf32> to vector<4x128xf32>
    %288 = arith.negf %287 : vector<4x128xf32>
    %289 = math.exp %288 : vector<4x128xf32>
    %cst_95 = arith.constant 1.000000e+00 : f32
    %290 = vector.broadcast %cst_95 : f32 to vector<4x128xf32>
    %291 = arith.addf %290, %289 : vector<4x128xf32>
    %292 = arith.divf %290, %291 : vector<4x128xf32>
    %293 = arith.mulf %284, %253 : vector<4x128xf32>
    %294 = arith.mulf %278, %286 : vector<4x128xf32>
    %295 = arith.addf %293, %294 : vector<4x128xf32>
    %296 = math.tanh %295 : vector<4x128xf32>
    %297 = arith.mulf %292, %296 : vector<4x128xf32>
    %298 = vector.extract_strided_slice %297 {offsets = [0, 0], sizes = [2, 128], strides = [1, 1]} : vector<4x128xf32> to vector<2x128xf32>
    %c6_96 = arith.constant 6 : index
    %c0_97 = arith.constant 0 : index
    %c0_98 = arith.constant 0 : index
    %299 = vector.load %arg3[%c6_96, %c0_97, %c0_98] : memref<16x2x256xf32, #tpu.memory_space<vmem>>, vector<1x2x128xf32>
    %300 = vector.shape_cast %299 : vector<1x2x128xf32> to vector<2x128xf32>
    %301 = vector.shape_cast %298 : vector<2x128xf32> to vector<1x2x128xf32>
    tpu.vector_store %arg3[%c6_96, %c0_97, %c0_98], %301 {strides = array<i32>} : memref<16x2x256xf32, #tpu.memory_space<vmem>>, vector<1x2x128xf32>,
    %302 = vector.extract_strided_slice %297 {offsets = [2, 0], sizes = [2, 128], strides = [1, 1]} : vector<4x128xf32> to vector<2x128xf32>
    %c9_99 = arith.constant 9 : index
    %c0_100 = arith.constant 0 : index
    %c128_101 = arith.constant 128 : index
    %303 = vector.load %arg3[%c9_99, %c0_100, %c128_101] : memref<16x2x256xf32, #tpu.memory_space<vmem>>, vector<1x2x128xf32>
    %304 = vector.shape_cast %303 : vector<1x2x128xf32> to vector<2x128xf32>
    %305 = vector.shape_cast %302 : vector<2x128xf32> to vector<1x2x128xf32>
    tpu.vector_store %arg3[%c9_99, %c0_100, %c128_101], %305 {strides = array<i32>} : memref<16x2x256xf32, #tpu.memory_space<vmem>>, vector<1x2x128xf32>,
    %306 = tpu.concatenate %297, %297 in 1 : vector<4x128xf32>, vector<4x128xf32> -> vector<4x256xf32>
    %307 = arith.mulf %306, %11 : vector<4x256xf32>
    %c7 = arith.constant 7 : index
    %c0_102 = arith.constant 0 : index
    %c0_103 = arith.constant 0 : index
    %308 = vector.load %arg1[%c7, %c0_102, %c0_103] : memref<16x2x1024xf32, #tpu.memory_space<vmem>>, vector<1x2x512xf32>
    %309 = vector.shape_cast %308 : vector<1x2x512xf32> to vector<2x512xf32>
    %c8 = arith.constant 8 : index
    %c0_104 = arith.constant 0 : index
    %c512_105 = arith.constant 512 : index
    %310 = vector.load %arg1[%c8, %c0_104, %c512_105] : memref<16x2x1024xf32, #tpu.memory_space<vmem>>, vector<1x2x512xf32>
    %311 = vector.shape_cast %310 : vector<1x2x512xf32> to vector<2x512xf32>
    %312 = tpu.concatenate %309, %311 in 0 : vector<2x512xf32>, vector<2x512xf32> -> vector<4x512xf32>
    %cst_106 = arith.constant dense<0.000000e+00> : vector<4x512xf32>
    %313 = tpu.matmul %307, %0, %cst_106 {dimension_numbers = #tpu.dot_dimension_numbers<[1], [0], [0], [1], [0, 0, 1, 1], [], []>} : vector<4x256xf32>, vector<256x512xf32>, vector<4x512xf32> -> vector<4x512xf32>
    %314 = arith.addf %312, %313 : vector<4x512xf32>
    %315 = vector.extract_strided_slice %314 {offsets = [0, 0], sizes = [4, 128], strides = [1, 1]} : vector<4x512xf32> to vector<4x128xf32>
    %316 = arith.negf %315 : vector<4x128xf32>
    %317 = math.exp %316 : vector<4x128xf32>
    %cst_107 = arith.constant 1.000000e+00 : f32
    %318 = vector.broadcast %cst_107 : f32 to vector<4x128xf32>
    %319 = arith.addf %318, %317 : vector<4x128xf32>
    %320 = arith.divf %318, %319 : vector<4x128xf32>
    %321 = vector.extract_strided_slice %314 {offsets = [0, 128], sizes = [4, 128], strides = [1, 1]} : vector<4x512xf32> to vector<4x128xf32>
    %322 = arith.negf %321 : vector<4x128xf32>
    %323 = math.exp %322 : vector<4x128xf32>
    %cst_108 = arith.constant 1.000000e+00 : f32
    %324 = vector.broadcast %cst_108 : f32 to vector<4x128xf32>
    %325 = arith.addf %324, %323 : vector<4x128xf32>
    %326 = arith.divf %324, %325 : vector<4x128xf32>
    %327 = vector.extract_strided_slice %314 {offsets = [0, 256], sizes = [4, 128], strides = [1, 1]} : vector<4x512xf32> to vector<4x128xf32>
    %328 = math.tanh %327 : vector<4x128xf32>
    %329 = vector.extract_strided_slice %314 {offsets = [0, 384], sizes = [4, 128], strides = [1, 1]} : vector<4x512xf32> to vector<4x128xf32>
    %330 = arith.negf %329 : vector<4x128xf32>
    %331 = math.exp %330 : vector<4x128xf32>
    %cst_109 = arith.constant 1.000000e+00 : f32
    %332 = vector.broadcast %cst_109 : f32 to vector<4x128xf32>
    %333 = arith.addf %332, %331 : vector<4x128xf32>
    %334 = arith.divf %332, %333 : vector<4x128xf32>
    %335 = arith.mulf %326, %295 : vector<4x128xf32>
    %336 = arith.mulf %320, %328 : vector<4x128xf32>
    %337 = arith.addf %335, %336 : vector<4x128xf32>
    %338 = math.tanh %337 : vector<4x128xf32>
    %339 = arith.mulf %334, %338 : vector<4x128xf32>
    %340 = vector.extract_strided_slice %339 {offsets = [0, 0], sizes = [2, 128], strides = [1, 1]} : vector<4x128xf32> to vector<2x128xf32>
    %c7_110 = arith.constant 7 : index
    %c0_111 = arith.constant 0 : index
    %c0_112 = arith.constant 0 : index
    %341 = vector.load %arg3[%c7_110, %c0_111, %c0_112] : memref<16x2x256xf32, #tpu.memory_space<vmem>>, vector<1x2x128xf32>
    %342 = vector.shape_cast %341 : vector<1x2x128xf32> to vector<2x128xf32>
    %343 = vector.shape_cast %340 : vector<2x128xf32> to vector<1x2x128xf32>
    tpu.vector_store %arg3[%c7_110, %c0_111, %c0_112], %343 {strides = array<i32>} : memref<16x2x256xf32, #tpu.memory_space<vmem>>, vector<1x2x128xf32>,
    %344 = vector.extract_strided_slice %339 {offsets = [2, 0], sizes = [2, 128], strides = [1, 1]} : vector<4x128xf32> to vector<2x128xf32>
    %c8_113 = arith.constant 8 : index
    %c0_114 = arith.constant 0 : index
    %c128_115 = arith.constant 128 : index
    %345 = vector.load %arg3[%c8_113, %c0_114, %c128_115] : memref<16x2x256xf32, #tpu.memory_space<vmem>>, vector<1x2x128xf32>
    %346 = vector.shape_cast %345 : vector<1x2x128xf32> to vector<2x128xf32>
    %347 = vector.shape_cast %344 : vector<2x128xf32> to vector<1x2x128xf32>
    tpu.vector_store %arg3[%c8_113, %c0_114, %c128_115], %347 {strides = array<i32>} : memref<16x2x256xf32, #tpu.memory_space<vmem>>, vector<1x2x128xf32>,
    %348 = tpu.concatenate %339, %339 in 1 : vector<4x128xf32>, vector<4x128xf32> -> vector<4x256xf32>
    %349 = arith.mulf %348, %11 : vector<4x256xf32>
    %c8_116 = arith.constant 8 : index
    %c0_117 = arith.constant 0 : index
    %c0_118 = arith.constant 0 : index
    %350 = vector.load %arg1[%c8_116, %c0_117, %c0_118] : memref<16x2x1024xf32, #tpu.memory_space<vmem>>, vector<1x2x512xf32>
    %351 = vector.shape_cast %350 : vector<1x2x512xf32> to vector<2x512xf32>
    %c7_119 = arith.constant 7 : index
    %c0_120 = arith.constant 0 : index
    %c512_121 = arith.constant 512 : index
    %352 = vector.load %arg1[%c7_119, %c0_120, %c512_121] : memref<16x2x1024xf32, #tpu.memory_space<vmem>>, vector<1x2x512xf32>
    %353 = vector.shape_cast %352 : vector<1x2x512xf32> to vector<2x512xf32>
    %354 = tpu.concatenate %351, %353 in 0 : vector<2x512xf32>, vector<2x512xf32> -> vector<4x512xf32>
    %cst_122 = arith.constant dense<0.000000e+00> : vector<4x512xf32>
    %355 = tpu.matmul %349, %0, %cst_122 {dimension_numbers = #tpu.dot_dimension_numbers<[1], [0], [0], [1], [0, 0, 1, 1], [], []>} : vector<4x256xf32>, vector<256x512xf32>, vector<4x512xf32> -> vector<4x512xf32>
    %356 = arith.addf %354, %355 : vector<4x512xf32>
    %357 = vector.extract_strided_slice %356 {offsets = [0, 0], sizes = [4, 128], strides = [1, 1]} : vector<4x512xf32> to vector<4x128xf32>
    %358 = arith.negf %357 : vector<4x128xf32>
    %359 = math.exp %358 : vector<4x128xf32>
    %cst_123 = arith.constant 1.000000e+00 : f32
    %360 = vector.broadcast %cst_123 : f32 to vector<4x128xf32>
    %361 = arith.addf %360, %359 : vector<4x128xf32>
    %362 = arith.divf %360, %361 : vector<4x128xf32>
    %363 = vector.extract_strided_slice %356 {offsets = [0, 128], sizes = [4, 128], strides = [1, 1]} : vector<4x512xf32> to vector<4x128xf32>
    %364 = arith.negf %363 : vector<4x128xf32>
    %365 = math.exp %364 : vector<4x128xf32>
    %cst_124 = arith.constant 1.000000e+00 : f32
    %366 = vector.broadcast %cst_124 : f32 to vector<4x128xf32>
    %367 = arith.addf %366, %365 : vector<4x128xf32>
    %368 = arith.divf %366, %367 : vector<4x128xf32>
    %369 = vector.extract_strided_slice %356 {offsets = [0, 256], sizes = [4, 128], strides = [1, 1]} : vector<4x512xf32> to vector<4x128xf32>
    %370 = math.tanh %369 : vector<4x128xf32>
    %371 = vector.extract_strided_slice %356 {offsets = [0, 384], sizes = [4, 128], strides = [1, 1]} : vector<4x512xf32> to vector<4x128xf32>
    %372 = arith.negf %371 : vector<4x128xf32>
    %373 = math.exp %372 : vector<4x128xf32>
    %cst_125 = arith.constant 1.000000e+00 : f32
    %374 = vector.broadcast %cst_125 : f32 to vector<4x128xf32>
    %375 = arith.addf %374, %373 : vector<4x128xf32>
    %376 = arith.divf %374, %375 : vector<4x128xf32>
    %377 = arith.mulf %368, %337 : vector<4x128xf32>
    %378 = arith.mulf %362, %370 : vector<4x128xf32>
    %379 = arith.addf %377, %378 : vector<4x128xf32>
    %380 = math.tanh %379 : vector<4x128xf32>
    %381 = arith.mulf %376, %380 : vector<4x128xf32>
    %382 = vector.extract_strided_slice %381 {offsets = [0, 0], sizes = [2, 128], strides = [1, 1]} : vector<4x128xf32> to vector<2x128xf32>
    %c8_126 = arith.constant 8 : index
    %c0_127 = arith.constant 0 : index
    %c0_128 = arith.constant 0 : index
    %383 = vector.load %arg3[%c8_126, %c0_127, %c0_128] : memref<16x2x256xf32, #tpu.memory_space<vmem>>, vector<1x2x128xf32>
    %384 = vector.shape_cast %383 : vector<1x2x128xf32> to vector<2x128xf32>
    %385 = vector.shape_cast %382 : vector<2x128xf32> to vector<1x2x128xf32>
    tpu.vector_store %arg3[%c8_126, %c0_127, %c0_128], %385 {strides = array<i32>} : memref<16x2x256xf32, #tpu.memory_space<vmem>>, vector<1x2x128xf32>,
    %386 = vector.extract_strided_slice %381 {offsets = [2, 0], sizes = [2, 128], strides = [1, 1]} : vector<4x128xf32> to vector<2x128xf32>
    %c7_129 = arith.constant 7 : index
    %c0_130 = arith.constant 0 : index
    %c128_131 = arith.constant 128 : index
    %387 = vector.load %arg3[%c7_129, %c0_130, %c128_131] : memref<16x2x256xf32, #tpu.memory_space<vmem>>, vector<1x2x128xf32>
    %388 = vector.shape_cast %387 : vector<1x2x128xf32> to vector<2x128xf32>
    %389 = vector.shape_cast %386 : vector<2x128xf32> to vector<1x2x128xf32>
    tpu.vector_store %arg3[%c7_129, %c0_130, %c128_131], %389 {strides = array<i32>} : memref<16x2x256xf32, #tpu.memory_space<vmem>>, vector<1x2x128xf32>,
    %390 = tpu.concatenate %381, %381 in 1 : vector<4x128xf32>, vector<4x128xf32> -> vector<4x256xf32>
    %391 = arith.mulf %390, %11 : vector<4x256xf32>
    %c9_132 = arith.constant 9 : index
    %c0_133 = arith.constant 0 : index
    %c0_134 = arith.constant 0 : index
    %392 = vector.load %arg1[%c9_132, %c0_133, %c0_134] : memref<16x2x1024xf32, #tpu.memory_space<vmem>>, vector<1x2x512xf32>
    %393 = vector.shape_cast %392 : vector<1x2x512xf32> to vector<2x512xf32>
    %c6_135 = arith.constant 6 : index
    %c0_136 = arith.constant 0 : index
    %c512_137 = arith.constant 512 : index
    %394 = vector.load %arg1[%c6_135, %c0_136, %c512_137] : memref<16x2x1024xf32, #tpu.memory_space<vmem>>, vector<1x2x512xf32>
    %395 = vector.shape_cast %394 : vector<1x2x512xf32> to vector<2x512xf32>
    %396 = tpu.concatenate %393, %395 in 0 : vector<2x512xf32>, vector<2x512xf32> -> vector<4x512xf32>
    %cst_138 = arith.constant dense<0.000000e+00> : vector<4x512xf32>
    %397 = tpu.matmul %391, %0, %cst_138 {dimension_numbers = #tpu.dot_dimension_numbers<[1], [0], [0], [1], [0, 0, 1, 1], [], []>} : vector<4x256xf32>, vector<256x512xf32>, vector<4x512xf32> -> vector<4x512xf32>
    %398 = arith.addf %396, %397 : vector<4x512xf32>
    %399 = vector.extract_strided_slice %398 {offsets = [0, 0], sizes = [4, 128], strides = [1, 1]} : vector<4x512xf32> to vector<4x128xf32>
    %400 = arith.negf %399 : vector<4x128xf32>
    %401 = math.exp %400 : vector<4x128xf32>
    %cst_139 = arith.constant 1.000000e+00 : f32
    %402 = vector.broadcast %cst_139 : f32 to vector<4x128xf32>
    %403 = arith.addf %402, %401 : vector<4x128xf32>
    %404 = arith.divf %402, %403 : vector<4x128xf32>
    %405 = vector.extract_strided_slice %398 {offsets = [0, 128], sizes = [4, 128], strides = [1, 1]} : vector<4x512xf32> to vector<4x128xf32>
    %406 = arith.negf %405 : vector<4x128xf32>
    %407 = math.exp %406 : vector<4x128xf32>
    %cst_140 = arith.constant 1.000000e+00 : f32
    %408 = vector.broadcast %cst_140 : f32 to vector<4x128xf32>
    %409 = arith.addf %408, %407 : vector<4x128xf32>
    %410 = arith.divf %408, %409 : vector<4x128xf32>
    %411 = vector.extract_strided_slice %398 {offsets = [0, 256], sizes = [4, 128], strides = [1, 1]} : vector<4x512xf32> to vector<4x128xf32>
    %412 = math.tanh %411 : vector<4x128xf32>
    %413 = vector.extract_strided_slice %398 {offsets = [0, 384], sizes = [4, 128], strides = [1, 1]} : vector<4x512xf32> to vector<4x128xf32>
    %414 = arith.negf %413 : vector<4x128xf32>
    %415 = math.exp %414 : vector<4x128xf32>
    %cst_141 = arith.constant 1.000000e+00 : f32
    %416 = vector.broadcast %cst_141 : f32 to vector<4x128xf32>
    %417 = arith.addf %416, %415 : vector<4x128xf32>
    %418 = arith.divf %416, %417 : vector<4x128xf32>
    %419 = arith.mulf %410, %379 : vector<4x128xf32>
    %420 = arith.mulf %404, %412 : vector<4x128xf32>
    %421 = arith.addf %419, %420 : vector<4x128xf32>
    %422 = math.tanh %421 : vector<4x128xf32>
    %423 = arith.mulf %418, %422 : vector<4x128xf32>
    %424 = vector.extract_strided_slice %423 {offsets = [0, 0], sizes = [2, 128], strides = [1, 1]} : vector<4x128xf32> to vector<2x128xf32>
    %c9_142 = arith.constant 9 : index
    %c0_143 = arith.constant 0 : index
    %c0_144 = arith.constant 0 : index
    %425 = vector.load %arg3[%c9_142, %c0_143, %c0_144] : memref<16x2x256xf32, #tpu.memory_space<vmem>>, vector<1x2x128xf32>
    %426 = vector.shape_cast %425 : vector<1x2x128xf32> to vector<2x128xf32>
    %427 = vector.shape_cast %424 : vector<2x128xf32> to vector<1x2x128xf32>
    tpu.vector_store %arg3[%c9_142, %c0_143, %c0_144], %427 {strides = array<i32>} : memref<16x2x256xf32, #tpu.memory_space<vmem>>, vector<1x2x128xf32>,
    %428 = vector.extract_strided_slice %423 {offsets = [2, 0], sizes = [2, 128], strides = [1, 1]} : vector<4x128xf32> to vector<2x128xf32>
    %c6_145 = arith.constant 6 : index
    %c0_146 = arith.constant 0 : index
    %c128_147 = arith.constant 128 : index
    %429 = vector.load %arg3[%c6_145, %c0_146, %c128_147] : memref<16x2x256xf32, #tpu.memory_space<vmem>>, vector<1x2x128xf32>
    %430 = vector.shape_cast %429 : vector<1x2x128xf32> to vector<2x128xf32>
    %431 = vector.shape_cast %428 : vector<2x128xf32> to vector<1x2x128xf32>
    tpu.vector_store %arg3[%c6_145, %c0_146, %c128_147], %431 {strides = array<i32>} : memref<16x2x256xf32, #tpu.memory_space<vmem>>, vector<1x2x128xf32>,
    %432 = tpu.concatenate %423, %423 in 1 : vector<4x128xf32>, vector<4x128xf32> -> vector<4x256xf32>
    %433 = arith.mulf %432, %11 : vector<4x256xf32>
    %c10_148 = arith.constant 10 : index
    %c0_149 = arith.constant 0 : index
    %c0_150 = arith.constant 0 : index
    %434 = vector.load %arg1[%c10_148, %c0_149, %c0_150] : memref<16x2x1024xf32, #tpu.memory_space<vmem>>, vector<1x2x512xf32>
    %435 = vector.shape_cast %434 : vector<1x2x512xf32> to vector<2x512xf32>
    %c5_151 = arith.constant 5 : index
    %c0_152 = arith.constant 0 : index
    %c512_153 = arith.constant 512 : index
    %436 = vector.load %arg1[%c5_151, %c0_152, %c512_153] : memref<16x2x1024xf32, #tpu.memory_space<vmem>>, vector<1x2x512xf32>
    %437 = vector.shape_cast %436 : vector<1x2x512xf32> to vector<2x512xf32>
    %438 = tpu.concatenate %435, %437 in 0 : vector<2x512xf32>, vector<2x512xf32> -> vector<4x512xf32>
    %cst_154 = arith.constant dense<0.000000e+00> : vector<4x512xf32>
    %439 = tpu.matmul %433, %0, %cst_154 {dimension_numbers = #tpu.dot_dimension_numbers<[1], [0], [0], [1], [0, 0, 1, 1], [], []>} : vector<4x256xf32>, vector<256x512xf32>, vector<4x512xf32> -> vector<4x512xf32>
    %440 = arith.addf %438, %439 : vector<4x512xf32>
    %441 = vector.extract_strided_slice %440 {offsets = [0, 0], sizes = [4, 128], strides = [1, 1]} : vector<4x512xf32> to vector<4x128xf32>
    %442 = arith.negf %441 : vector<4x128xf32>
    %443 = math.exp %442 : vector<4x128xf32>
    %cst_155 = arith.constant 1.000000e+00 : f32
    %444 = vector.broadcast %cst_155 : f32 to vector<4x128xf32>
    %445 = arith.addf %444, %443 : vector<4x128xf32>
    %446 = arith.divf %444, %445 : vector<4x128xf32>
    %447 = vector.extract_strided_slice %440 {offsets = [0, 128], sizes = [4, 128], strides = [1, 1]} : vector<4x512xf32> to vector<4x128xf32>
    %448 = arith.negf %447 : vector<4x128xf32>
    %449 = math.exp %448 : vector<4x128xf32>
    %cst_156 = arith.constant 1.000000e+00 : f32
    %450 = vector.broadcast %cst_156 : f32 to vector<4x128xf32>
    %451 = arith.addf %450, %449 : vector<4x128xf32>
    %452 = arith.divf %450, %451 : vector<4x128xf32>
    %453 = vector.extract_strided_slice %440 {offsets = [0, 256], sizes = [4, 128], strides = [1, 1]} : vector<4x512xf32> to vector<4x128xf32>
    %454 = math.tanh %453 : vector<4x128xf32>
    %455 = vector.extract_strided_slice %440 {offsets = [0, 384], sizes = [4, 128], strides = [1, 1]} : vector<4x512xf32> to vector<4x128xf32>
    %456 = arith.negf %455 : vector<4x128xf32>
    %457 = math.exp %456 : vector<4x128xf32>
    %cst_157 = arith.constant 1.000000e+00 : f32
    %458 = vector.broadcast %cst_157 : f32 to vector<4x128xf32>
    %459 = arith.addf %458, %457 : vector<4x128xf32>
    %460 = arith.divf %458, %459 : vector<4x128xf32>
    %461 = arith.mulf %452, %421 : vector<4x128xf32>
    %462 = arith.mulf %446, %454 : vector<4x128xf32>
    %463 = arith.addf %461, %462 : vector<4x128xf32>
    %464 = math.tanh %463 : vector<4x128xf32>
    %465 = arith.mulf %460, %464 : vector<4x128xf32>
    %466 = vector.extract_strided_slice %465 {offsets = [0, 0], sizes = [2, 128], strides = [1, 1]} : vector<4x128xf32> to vector<2x128xf32>
    %c10_158 = arith.constant 10 : index
    %c0_159 = arith.constant 0 : index
    %c0_160 = arith.constant 0 : index
    %467 = vector.load %arg3[%c10_158, %c0_159, %c0_160] : memref<16x2x256xf32, #tpu.memory_space<vmem>>, vector<1x2x128xf32>
    %468 = vector.shape_cast %467 : vector<1x2x128xf32> to vector<2x128xf32>
    %469 = vector.shape_cast %466 : vector<2x128xf32> to vector<1x2x128xf32>
    tpu.vector_store %arg3[%c10_158, %c0_159, %c0_160], %469 {strides = array<i32>} : memref<16x2x256xf32, #tpu.memory_space<vmem>>, vector<1x2x128xf32>,
    %470 = vector.extract_strided_slice %465 {offsets = [2, 0], sizes = [2, 128], strides = [1, 1]} : vector<4x128xf32> to vector<2x128xf32>
    %c5_161 = arith.constant 5 : index
    %c0_162 = arith.constant 0 : index
    %c128_163 = arith.constant 128 : index
    %471 = vector.load %arg3[%c5_161, %c0_162, %c128_163] : memref<16x2x256xf32, #tpu.memory_space<vmem>>, vector<1x2x128xf32>
    %472 = vector.shape_cast %471 : vector<1x2x128xf32> to vector<2x128xf32>
    %473 = vector.shape_cast %470 : vector<2x128xf32> to vector<1x2x128xf32>
    tpu.vector_store %arg3[%c5_161, %c0_162, %c128_163], %473 {strides = array<i32>} : memref<16x2x256xf32, #tpu.memory_space<vmem>>, vector<1x2x128xf32>,
    %474 = tpu.concatenate %465, %465 in 1 : vector<4x128xf32>, vector<4x128xf32> -> vector<4x256xf32>
    %475 = arith.mulf %474, %11 : vector<4x256xf32>
    %c11_164 = arith.constant 11 : index
    %c0_165 = arith.constant 0 : index
    %c0_166 = arith.constant 0 : index
    %476 = vector.load %arg1[%c11_164, %c0_165, %c0_166] : memref<16x2x1024xf32, #tpu.memory_space<vmem>>, vector<1x2x512xf32>
    %477 = vector.shape_cast %476 : vector<1x2x512xf32> to vector<2x512xf32>
    %c4_167 = arith.constant 4 : index
    %c0_168 = arith.constant 0 : index
    %c512_169 = arith.constant 512 : index
    %478 = vector.load %arg1[%c4_167, %c0_168, %c512_169] : memref<16x2x1024xf32, #tpu.memory_space<vmem>>, vector<1x2x512xf32>
    %479 = vector.shape_cast %478 : vector<1x2x512xf32> to vector<2x512xf32>
    %480 = tpu.concatenate %477, %479 in 0 : vector<2x512xf32>, vector<2x512xf32> -> vector<4x512xf32>
    %cst_170 = arith.constant dense<0.000000e+00> : vector<4x512xf32>
    %481 = tpu.matmul %475, %0, %cst_170 {dimension_numbers = #tpu.dot_dimension_numbers<[1], [0], [0], [1], [0, 0, 1, 1], [], []>} : vector<4x256xf32>, vector<256x512xf32>, vector<4x512xf32> -> vector<4x512xf32>
    %482 = arith.addf %480, %481 : vector<4x512xf32>
    %483 = vector.extract_strided_slice %482 {offsets = [0, 0], sizes = [4, 128], strides = [1, 1]} : vector<4x512xf32> to vector<4x128xf32>
    %484 = arith.negf %483 : vector<4x128xf32>
    %485 = math.exp %484 : vector<4x128xf32>
    %cst_171 = arith.constant 1.000000e+00 : f32
    %486 = vector.broadcast %cst_171 : f32 to vector<4x128xf32>
    %487 = arith.addf %486, %485 : vector<4x128xf32>
    %488 = arith.divf %486, %487 : vector<4x128xf32>
    %489 = vector.extract_strided_slice %482 {offsets = [0, 128], sizes = [4, 128], strides = [1, 1]} : vector<4x512xf32> to vector<4x128xf32>
    %490 = arith.negf %489 : vector<4x128xf32>
    %491 = math.exp %490 : vector<4x128xf32>
    %cst_172 = arith.constant 1.000000e+00 : f32
    %492 = vector.broadcast %cst_172 : f32 to vector<4x128xf32>
    %493 = arith.addf %492, %491 : vector<4x128xf32>
    %494 = arith.divf %492, %493 : vector<4x128xf32>
    %495 = vector.extract_strided_slice %482 {offsets = [0, 256], sizes = [4, 128], strides = [1, 1]} : vector<4x512xf32> to vector<4x128xf32>
    %496 = math.tanh %495 : vector<4x128xf32>
    %497 = vector.extract_strided_slice %482 {offsets = [0, 384], sizes = [4, 128], strides = [1, 1]} : vector<4x512xf32> to vector<4x128xf32>
    %498 = arith.negf %497 : vector<4x128xf32>
    %499 = math.exp %498 : vector<4x128xf32>
    %cst_173 = arith.constant 1.000000e+00 : f32
    %500 = vector.broadcast %cst_173 : f32 to vector<4x128xf32>
    %501 = arith.addf %500, %499 : vector<4x128xf32>
    %502 = arith.divf %500, %501 : vector<4x128xf32>
    %503 = arith.mulf %494, %463 : vector<4x128xf32>
    %504 = arith.mulf %488, %496 : vector<4x128xf32>
    %505 = arith.addf %503, %504 : vector<4x128xf32>
    %506 = math.tanh %505 : vector<4x128xf32>
    %507 = arith.mulf %502, %506 : vector<4x128xf32>
    %508 = vector.extract_strided_slice %507 {offsets = [0, 0], sizes = [2, 128], strides = [1, 1]} : vector<4x128xf32> to vector<2x128xf32>
    %c11_174 = arith.constant 11 : index
    %c0_175 = arith.constant 0 : index
    %c0_176 = arith.constant 0 : index
    %509 = vector.load %arg3[%c11_174, %c0_175, %c0_176] : memref<16x2x256xf32, #tpu.memory_space<vmem>>, vector<1x2x128xf32>
    %510 = vector.shape_cast %509 : vector<1x2x128xf32> to vector<2x128xf32>
    %511 = vector.shape_cast %508 : vector<2x128xf32> to vector<1x2x128xf32>
    tpu.vector_store %arg3[%c11_174, %c0_175, %c0_176], %511 {strides = array<i32>} : memref<16x2x256xf32, #tpu.memory_space<vmem>>, vector<1x2x128xf32>,
    %512 = vector.extract_strided_slice %507 {offsets = [2, 0], sizes = [2, 128], strides = [1, 1]} : vector<4x128xf32> to vector<2x128xf32>
    %c4_177 = arith.constant 4 : index
    %c0_178 = arith.constant 0 : index
    %c128_179 = arith.constant 128 : index
    %513 = vector.load %arg3[%c4_177, %c0_178, %c128_179] : memref<16x2x256xf32, #tpu.memory_space<vmem>>, vector<1x2x128xf32>
    %514 = vector.shape_cast %513 : vector<1x2x128xf32> to vector<2x128xf32>
    %515 = vector.shape_cast %512 : vector<2x128xf32> to vector<1x2x128xf32>
    tpu.vector_store %arg3[%c4_177, %c0_178, %c128_179], %515 {strides = array<i32>} : memref<16x2x256xf32, #tpu.memory_space<vmem>>, vector<1x2x128xf32>,
    %516 = tpu.concatenate %507, %507 in 1 : vector<4x128xf32>, vector<4x128xf32> -> vector<4x256xf32>
    %517 = arith.mulf %516, %11 : vector<4x256xf32>
    %c12_180 = arith.constant 12 : index
    %c0_181 = arith.constant 0 : index
    %c0_182 = arith.constant 0 : index
    %518 = vector.load %arg1[%c12_180, %c0_181, %c0_182] : memref<16x2x1024xf32, #tpu.memory_space<vmem>>, vector<1x2x512xf32>
    %519 = vector.shape_cast %518 : vector<1x2x512xf32> to vector<2x512xf32>
    %c3_183 = arith.constant 3 : index
    %c0_184 = arith.constant 0 : index
    %c512_185 = arith.constant 512 : index
    %520 = vector.load %arg1[%c3_183, %c0_184, %c512_185] : memref<16x2x1024xf32, #tpu.memory_space<vmem>>, vector<1x2x512xf32>
    %521 = vector.shape_cast %520 : vector<1x2x512xf32> to vector<2x512xf32>
    %522 = tpu.concatenate %519, %521 in 0 : vector<2x512xf32>, vector<2x512xf32> -> vector<4x512xf32>
    %cst_186 = arith.constant dense<0.000000e+00> : vector<4x512xf32>
    %523 = tpu.matmul %517, %0, %cst_186 {dimension_numbers = #tpu.dot_dimension_numbers<[1], [0], [0], [1], [0, 0, 1, 1], [], []>} : vector<4x256xf32>, vector<256x512xf32>, vector<4x512xf32> -> vector<4x512xf32>
    %524 = arith.addf %522, %523 : vector<4x512xf32>
    %525 = vector.extract_strided_slice %524 {offsets = [0, 0], sizes = [4, 128], strides = [1, 1]} : vector<4x512xf32> to vector<4x128xf32>
    %526 = arith.negf %525 : vector<4x128xf32>
    %527 = math.exp %526 : vector<4x128xf32>
    %cst_187 = arith.constant 1.000000e+00 : f32
    %528 = vector.broadcast %cst_187 : f32 to vector<4x128xf32>
    %529 = arith.addf %528, %527 : vector<4x128xf32>
    %530 = arith.divf %528, %529 : vector<4x128xf32>
    %531 = vector.extract_strided_slice %524 {offsets = [0, 128], sizes = [4, 128], strides = [1, 1]} : vector<4x512xf32> to vector<4x128xf32>
    %532 = arith.negf %531 : vector<4x128xf32>
    %533 = math.exp %532 : vector<4x128xf32>
    %cst_188 = arith.constant 1.000000e+00 : f32
    %534 = vector.broadcast %cst_188 : f32 to vector<4x128xf32>
    %535 = arith.addf %534, %533 : vector<4x128xf32>
    %536 = arith.divf %534, %535 : vector<4x128xf32>
    %537 = vector.extract_strided_slice %524 {offsets = [0, 256], sizes = [4, 128], strides = [1, 1]} : vector<4x512xf32> to vector<4x128xf32>
    %538 = math.tanh %537 : vector<4x128xf32>
    %539 = vector.extract_strided_slice %524 {offsets = [0, 384], sizes = [4, 128], strides = [1, 1]} : vector<4x512xf32> to vector<4x128xf32>
    %540 = arith.negf %539 : vector<4x128xf32>
    %541 = math.exp %540 : vector<4x128xf32>
    %cst_189 = arith.constant 1.000000e+00 : f32
    %542 = vector.broadcast %cst_189 : f32 to vector<4x128xf32>
    %543 = arith.addf %542, %541 : vector<4x128xf32>
    %544 = arith.divf %542, %543 : vector<4x128xf32>
    %545 = arith.mulf %536, %505 : vector<4x128xf32>
    %546 = arith.mulf %530, %538 : vector<4x128xf32>
    %547 = arith.addf %545, %546 : vector<4x128xf32>
    %548 = math.tanh %547 : vector<4x128xf32>
    %549 = arith.mulf %544, %548 : vector<4x128xf32>
    %550 = vector.extract_strided_slice %549 {offsets = [0, 0], sizes = [2, 128], strides = [1, 1]} : vector<4x128xf32> to vector<2x128xf32>
    %c12_190 = arith.constant 12 : index
    %c0_191 = arith.constant 0 : index
    %c0_192 = arith.constant 0 : index
    %551 = vector.load %arg3[%c12_190, %c0_191, %c0_192] : memref<16x2x256xf32, #tpu.memory_space<vmem>>, vector<1x2x128xf32>
    %552 = vector.shape_cast %551 : vector<1x2x128xf32> to vector<2x128xf32>
    %553 = vector.shape_cast %550 : vector<2x128xf32> to vector<1x2x128xf32>
    tpu.vector_store %arg3[%c12_190, %c0_191, %c0_192], %553 {strides = array<i32>} : memref<16x2x256xf32, #tpu.memory_space<vmem>>, vector<1x2x128xf32>,
    %554 = vector.extract_strided_slice %549 {offsets = [2, 0], sizes = [2, 128], strides = [1, 1]} : vector<4x128xf32> to vector<2x128xf32>
    %c3_193 = arith.constant 3 : index
    %c0_194 = arith.constant 0 : index
    %c128_195 = arith.constant 128 : index
    %555 = vector.load %arg3[%c3_193, %c0_194, %c128_195] : memref<16x2x256xf32, #tpu.memory_space<vmem>>, vector<1x2x128xf32>
    %556 = vector.shape_cast %555 : vector<1x2x128xf32> to vector<2x128xf32>
    %557 = vector.shape_cast %554 : vector<2x128xf32> to vector<1x2x128xf32>
    tpu.vector_store %arg3[%c3_193, %c0_194, %c128_195], %557 {strides = array<i32>} : memref<16x2x256xf32, #tpu.memory_space<vmem>>, vector<1x2x128xf32>,
    %558 = tpu.concatenate %549, %549 in 1 : vector<4x128xf32>, vector<4x128xf32> -> vector<4x256xf32>
    %559 = arith.mulf %558, %11 : vector<4x256xf32>
    %c13_196 = arith.constant 13 : index
    %c0_197 = arith.constant 0 : index
    %c0_198 = arith.constant 0 : index
    %560 = vector.load %arg1[%c13_196, %c0_197, %c0_198] : memref<16x2x1024xf32, #tpu.memory_space<vmem>>, vector<1x2x512xf32>
    %561 = vector.shape_cast %560 : vector<1x2x512xf32> to vector<2x512xf32>
    %c2_199 = arith.constant 2 : index
    %c0_200 = arith.constant 0 : index
    %c512_201 = arith.constant 512 : index
    %562 = vector.load %arg1[%c2_199, %c0_200, %c512_201] : memref<16x2x1024xf32, #tpu.memory_space<vmem>>, vector<1x2x512xf32>
    %563 = vector.shape_cast %562 : vector<1x2x512xf32> to vector<2x512xf32>
    %564 = tpu.concatenate %561, %563 in 0 : vector<2x512xf32>, vector<2x512xf32> -> vector<4x512xf32>
    %cst_202 = arith.constant dense<0.000000e+00> : vector<4x512xf32>
    %565 = tpu.matmul %559, %0, %cst_202 {dimension_numbers = #tpu.dot_dimension_numbers<[1], [0], [0], [1], [0, 0, 1, 1], [], []>} : vector<4x256xf32>, vector<256x512xf32>, vector<4x512xf32> -> vector<4x512xf32>
    %566 = arith.addf %564, %565 : vector<4x512xf32>
    %567 = vector.extract_strided_slice %566 {offsets = [0, 0], sizes = [4, 128], strides = [1, 1]} : vector<4x512xf32> to vector<4x128xf32>
    %568 = arith.negf %567 : vector<4x128xf32>
    %569 = math.exp %568 : vector<4x128xf32>
    %cst_203 = arith.constant 1.000000e+00 : f32
    %570 = vector.broadcast %cst_203 : f32 to vector<4x128xf32>
    %571 = arith.addf %570, %569 : vector<4x128xf32>
    %572 = arith.divf %570, %571 : vector<4x128xf32>
    %573 = vector.extract_strided_slice %566 {offsets = [0, 128], sizes = [4, 128], strides = [1, 1]} : vector<4x512xf32> to vector<4x128xf32>
    %574 = arith.negf %573 : vector<4x128xf32>
    %575 = math.exp %574 : vector<4x128xf32>
    %cst_204 = arith.constant 1.000000e+00 : f32
    %576 = vector.broadcast %cst_204 : f32 to vector<4x128xf32>
    %577 = arith.addf %576, %575 : vector<4x128xf32>
    %578 = arith.divf %576, %577 : vector<4x128xf32>
    %579 = vector.extract_strided_slice %566 {offsets = [0, 256], sizes = [4, 128], strides = [1, 1]} : vector<4x512xf32> to vector<4x128xf32>
    %580 = math.tanh %579 : vector<4x128xf32>
    %581 = vector.extract_strided_slice %566 {offsets = [0, 384], sizes = [4, 128], strides = [1, 1]} : vector<4x512xf32> to vector<4x128xf32>
    %582 = arith.negf %581 : vector<4x128xf32>
    %583 = math.exp %582 : vector<4x128xf32>
    %cst_205 = arith.constant 1.000000e+00 : f32
    %584 = vector.broadcast %cst_205 : f32 to vector<4x128xf32>
    %585 = arith.addf %584, %583 : vector<4x128xf32>
    %586 = arith.divf %584, %585 : vector<4x128xf32>
    %587 = arith.mulf %578, %547 : vector<4x128xf32>
    %588 = arith.mulf %572, %580 : vector<4x128xf32>
    %589 = arith.addf %587, %588 : vector<4x128xf32>
    %590 = math.tanh %589 : vector<4x128xf32>
    %591 = arith.mulf %586, %590 : vector<4x128xf32>
    %592 = vector.extract_strided_slice %591 {offsets = [0, 0], sizes = [2, 128], strides = [1, 1]} : vector<4x128xf32> to vector<2x128xf32>
    %c13_206 = arith.constant 13 : index
    %c0_207 = arith.constant 0 : index
    %c0_208 = arith.constant 0 : index
    %593 = vector.load %arg3[%c13_206, %c0_207, %c0_208] : memref<16x2x256xf32, #tpu.memory_space<vmem>>, vector<1x2x128xf32>
    %594 = vector.shape_cast %593 : vector<1x2x128xf32> to vector<2x128xf32>
    %595 = vector.shape_cast %592 : vector<2x128xf32> to vector<1x2x128xf32>
    tpu.vector_store %arg3[%c13_206, %c0_207, %c0_208], %595 {strides = array<i32>} : memref<16x2x256xf32, #tpu.memory_space<vmem>>, vector<1x2x128xf32>,
    %596 = vector.extract_strided_slice %591 {offsets = [2, 0], sizes = [2, 128], strides = [1, 1]} : vector<4x128xf32> to vector<2x128xf32>
    %c2_209 = arith.constant 2 : index
    %c0_210 = arith.constant 0 : index
    %c128_211 = arith.constant 128 : index
    %597 = vector.load %arg3[%c2_209, %c0_210, %c128_211] : memref<16x2x256xf32, #tpu.memory_space<vmem>>, vector<1x2x128xf32>
    %598 = vector.shape_cast %597 : vector<1x2x128xf32> to vector<2x128xf32>
    %599 = vector.shape_cast %596 : vector<2x128xf32> to vector<1x2x128xf32>
    tpu.vector_store %arg3[%c2_209, %c0_210, %c128_211], %599 {strides = array<i32>} : memref<16x2x256xf32, #tpu.memory_space<vmem>>, vector<1x2x128xf32>,
    %600 = tpu.concatenate %591, %591 in 1 : vector<4x128xf32>, vector<4x128xf32> -> vector<4x256xf32>
    %601 = arith.mulf %600, %11 : vector<4x256xf32>
    %c14_212 = arith.constant 14 : index
    %c0_213 = arith.constant 0 : index
    %c0_214 = arith.constant 0 : index
    %602 = vector.load %arg1[%c14_212, %c0_213, %c0_214] : memref<16x2x1024xf32, #tpu.memory_space<vmem>>, vector<1x2x512xf32>
    %603 = vector.shape_cast %602 : vector<1x2x512xf32> to vector<2x512xf32>
    %c1_215 = arith.constant 1 : index
    %c0_216 = arith.constant 0 : index
    %c512_217 = arith.constant 512 : index
    %604 = vector.load %arg1[%c1_215, %c0_216, %c512_217] : memref<16x2x1024xf32, #tpu.memory_space<vmem>>, vector<1x2x512xf32>
    %605 = vector.shape_cast %604 : vector<1x2x512xf32> to vector<2x512xf32>
    %606 = tpu.concatenate %603, %605 in 0 : vector<2x512xf32>, vector<2x512xf32> -> vector<4x512xf32>
    %cst_218 = arith.constant dense<0.000000e+00> : vector<4x512xf32>
    %607 = tpu.matmul %601, %0, %cst_218 {dimension_numbers = #tpu.dot_dimension_numbers<[1], [0], [0], [1], [0, 0, 1, 1], [], []>} : vector<4x256xf32>, vector<256x512xf32>, vector<4x512xf32> -> vector<4x512xf32>
    %608 = arith.addf %606, %607 : vector<4x512xf32>
    %609 = vector.extract_strided_slice %608 {offsets = [0, 0], sizes = [4, 128], strides = [1, 1]} : vector<4x512xf32> to vector<4x128xf32>
    %610 = arith.negf %609 : vector<4x128xf32>
    %611 = math.exp %610 : vector<4x128xf32>
    %cst_219 = arith.constant 1.000000e+00 : f32
    %612 = vector.broadcast %cst_219 : f32 to vector<4x128xf32>
    %613 = arith.addf %612, %611 : vector<4x128xf32>
    %614 = arith.divf %612, %613 : vector<4x128xf32>
    %615 = vector.extract_strided_slice %608 {offsets = [0, 128], sizes = [4, 128], strides = [1, 1]} : vector<4x512xf32> to vector<4x128xf32>
    %616 = arith.negf %615 : vector<4x128xf32>
    %617 = math.exp %616 : vector<4x128xf32>
    %cst_220 = arith.constant 1.000000e+00 : f32
    %618 = vector.broadcast %cst_220 : f32 to vector<4x128xf32>
    %619 = arith.addf %618, %617 : vector<4x128xf32>
    %620 = arith.divf %618, %619 : vector<4x128xf32>
    %621 = vector.extract_strided_slice %608 {offsets = [0, 256], sizes = [4, 128], strides = [1, 1]} : vector<4x512xf32> to vector<4x128xf32>
    %622 = math.tanh %621 : vector<4x128xf32>
    %623 = vector.extract_strided_slice %608 {offsets = [0, 384], sizes = [4, 128], strides = [1, 1]} : vector<4x512xf32> to vector<4x128xf32>
    %624 = arith.negf %623 : vector<4x128xf32>
    %625 = math.exp %624 : vector<4x128xf32>
    %cst_221 = arith.constant 1.000000e+00 : f32
    %626 = vector.broadcast %cst_221 : f32 to vector<4x128xf32>
    %627 = arith.addf %626, %625 : vector<4x128xf32>
    %628 = arith.divf %626, %627 : vector<4x128xf32>
    %629 = arith.mulf %620, %589 : vector<4x128xf32>
    %630 = arith.mulf %614, %622 : vector<4x128xf32>
    %631 = arith.addf %629, %630 : vector<4x128xf32>
    %632 = math.tanh %631 : vector<4x128xf32>
    %633 = arith.mulf %628, %632 : vector<4x128xf32>
    %634 = vector.extract_strided_slice %633 {offsets = [0, 0], sizes = [2, 128], strides = [1, 1]} : vector<4x128xf32> to vector<2x128xf32>
    %c14_222 = arith.constant 14 : index
    %c0_223 = arith.constant 0 : index
    %c0_224 = arith.constant 0 : index
    %635 = vector.load %arg3[%c14_222, %c0_223, %c0_224] : memref<16x2x256xf32, #tpu.memory_space<vmem>>, vector<1x2x128xf32>
    %636 = vector.shape_cast %635 : vector<1x2x128xf32> to vector<2x128xf32>
    %637 = vector.shape_cast %634 : vector<2x128xf32> to vector<1x2x128xf32>
    tpu.vector_store %arg3[%c14_222, %c0_223, %c0_224], %637 {strides = array<i32>} : memref<16x2x256xf32, #tpu.memory_space<vmem>>, vector<1x2x128xf32>,
    %638 = vector.extract_strided_slice %633 {offsets = [2, 0], sizes = [2, 128], strides = [1, 1]} : vector<4x128xf32> to vector<2x128xf32>
    %c1_225 = arith.constant 1 : index
    %c0_226 = arith.constant 0 : index
    %c128_227 = arith.constant 128 : index
    %639 = vector.load %arg3[%c1_225, %c0_226, %c128_227] : memref<16x2x256xf32, #tpu.memory_space<vmem>>, vector<1x2x128xf32>
    %640 = vector.shape_cast %639 : vector<1x2x128xf32> to vector<2x128xf32>
    %641 = vector.shape_cast %638 : vector<2x128xf32> to vector<1x2x128xf32>
    tpu.vector_store %arg3[%c1_225, %c0_226, %c128_227], %641 {strides = array<i32>} : memref<16x2x256xf32, #tpu.memory_space<vmem>>, vector<1x2x128xf32>,
    %642 = tpu.concatenate %633, %633 in 1 : vector<4x128xf32>, vector<4x128xf32> -> vector<4x256xf32>
    %643 = arith.mulf %642, %11 : vector<4x256xf32>
    %c15_228 = arith.constant 15 : index
    %c0_229 = arith.constant 0 : index
    %c0_230 = arith.constant 0 : index
    %644 = vector.load %arg1[%c15_228, %c0_229, %c0_230] : memref<16x2x1024xf32, #tpu.memory_space<vmem>>, vector<1x2x512xf32>
    %645 = vector.shape_cast %644 : vector<1x2x512xf32> to vector<2x512xf32>
    %c0_231 = arith.constant 0 : index
    %c0_232 = arith.constant 0 : index
    %c512_233 = arith.constant 512 : index
    %646 = vector.load %arg1[%c0_231, %c0_232, %c512_233] : memref<16x2x1024xf32, #tpu.memory_space<vmem>>, vector<1x2x512xf32>
    %647 = vector.shape_cast %646 : vector<1x2x512xf32> to vector<2x512xf32>
    %648 = tpu.concatenate %645, %647 in 0 : vector<2x512xf32>, vector<2x512xf32> -> vector<4x512xf32>
    %cst_234 = arith.constant dense<0.000000e+00> : vector<4x512xf32>
    %649 = tpu.matmul %643, %0, %cst_234 {dimension_numbers = #tpu.dot_dimension_numbers<[1], [0], [0], [1], [0, 0, 1, 1], [], []>} : vector<4x256xf32>, vector<256x512xf32>, vector<4x512xf32> -> vector<4x512xf32>
    %650 = arith.addf %648, %649 : vector<4x512xf32>
    %651 = vector.extract_strided_slice %650 {offsets = [0, 0], sizes = [4, 128], strides = [1, 1]} : vector<4x512xf32> to vector<4x128xf32>
    %652 = arith.negf %651 : vector<4x128xf32>
    %653 = math.exp %652 : vector<4x128xf32>
    %cst_235 = arith.constant 1.000000e+00 : f32
    %654 = vector.broadcast %cst_235 : f32 to vector<4x128xf32>
    %655 = arith.addf %654, %653 : vector<4x128xf32>
    %656 = arith.divf %654, %655 : vector<4x128xf32>
    %657 = vector.extract_strided_slice %650 {offsets = [0, 128], sizes = [4, 128], strides = [1, 1]} : vector<4x512xf32> to vector<4x128xf32>
    %658 = arith.negf %657 : vector<4x128xf32>
    %659 = math.exp %658 : vector<4x128xf32>
    %cst_236 = arith.constant 1.000000e+00 : f32
    %660 = vector.broadcast %cst_236 : f32 to vector<4x128xf32>
    %661 = arith.addf %660, %659 : vector<4x128xf32>
    %662 = arith.divf %660, %661 : vector<4x128xf32>
    %663 = vector.extract_strided_slice %650 {offsets = [0, 256], sizes = [4, 128], strides = [1, 1]} : vector<4x512xf32> to vector<4x128xf32>
    %664 = math.tanh %663 : vector<4x128xf32>
    %665 = vector.extract_strided_slice %650 {offsets = [0, 384], sizes = [4, 128], strides = [1, 1]} : vector<4x512xf32> to vector<4x128xf32>
    %666 = arith.negf %665 : vector<4x128xf32>
    %667 = math.exp %666 : vector<4x128xf32>
    %cst_237 = arith.constant 1.000000e+00 : f32
    %668 = vector.broadcast %cst_237 : f32 to vector<4x128xf32>
    %669 = arith.addf %668, %667 : vector<4x128xf32>
    %670 = arith.divf %668, %669 : vector<4x128xf32>
    %671 = arith.mulf %662, %631 : vector<4x128xf32>
    %672 = arith.mulf %656, %664 : vector<4x128xf32>
    %673 = arith.addf %671, %672 : vector<4x128xf32>
    %674 = math.tanh %673 : vector<4x128xf32>
    %675 = arith.mulf %670, %674 : vector<4x128xf32>
    %676 = vector.extract_strided_slice %675 {offsets = [0, 0], sizes = [2, 128], strides = [1, 1]} : vector<4x128xf32> to vector<2x128xf32>
    %c15_238 = arith.constant 15 : index
    %c0_239 = arith.constant 0 : index
    %c0_240 = arith.constant 0 : index
    %677 = vector.load %arg3[%c15_238, %c0_239, %c0_240] : memref<16x2x256xf32, #tpu.memory_space<vmem>>, vector<1x2x128xf32>
    %678 = vector.shape_cast %677 : vector<1x2x128xf32> to vector<2x128xf32>
    %679 = vector.shape_cast %676 : vector<2x128xf32> to vector<1x2x128xf32>
    tpu.vector_store %arg3[%c15_238, %c0_239, %c0_240], %679 {strides = array<i32>} : memref<16x2x256xf32, #tpu.memory_space<vmem>>, vector<1x2x128xf32>,
    %680 = vector.extract_strided_slice %675 {offsets = [2, 0], sizes = [2, 128], strides = [1, 1]} : vector<4x128xf32> to vector<2x128xf32>
    %c0_241 = arith.constant 0 : index
    %c0_242 = arith.constant 0 : index
    %c128_243 = arith.constant 128 : index
    %681 = vector.load %arg3[%c0_241, %c0_242, %c128_243] : memref<16x2x256xf32, #tpu.memory_space<vmem>>, vector<1x2x128xf32>
    %682 = vector.shape_cast %681 : vector<1x2x128xf32> to vector<2x128xf32>
    %683 = vector.shape_cast %680 : vector<2x128xf32> to vector<1x2x128xf32>
    tpu.vector_store %arg3[%c0_241, %c0_242, %c128_243], %683 {strides = array<i32>} : memref<16x2x256xf32, #tpu.memory_space<vmem>>, vector<1x2x128xf32>,
    return
  }
  func.func @transform_0(%arg0: i32) -> (i32, i32, i32) {
    %c0_i32 = arith.constant 0 : i32
    %c0_i32_0 = arith.constant 0 : i32
    %c0_i32_1 = arith.constant 0 : i32
    %c0_i32_2 = arith.constant 0 : i32
    return %c0_i32, %c0_i32_0, %c0_i32_1 : i32, i32, i32
  }
  func.func @transform_1(%arg0: i32) -> (i32, i32) {
    %c0_i32 = arith.constant 0 : i32
    %c0_i32_0 = arith.constant 0 : i32
    %c0_i32_1 = arith.constant 0 : i32
    return %c0_i32, %c0_i32_0 : i32, i32
  }
  func.func @transform_2(%arg0: i32) -> (i32, i32, i32) {
    %c0_i32 = arith.constant 0 : i32
    %c0_i32_0 = arith.constant 0 : i32
    %c0_i32_1 = arith.constant 0 : i32
    %c0_i32_2 = arith.constant 0 : i32
    return %c0_i32, %c0_i32_0, %c0_i32_1 : i32, i32, i32
  }
}

module attributes {stable_mosaic.version = 11 : i64} {
  func.func @masked_dense_kernel(%arg0: i32, %arg1: memref<32x256xf32, #tpu.memory_space<vmem>>, %arg2: memref<32x1xf32, #tpu.memory_space<vmem>>, %arg3: memref<256x128xf32, #tpu.memory_space<vmem>>, %arg4: memref<1x128xf32, #tpu.memory_space<vmem>>, %arg5: memref<32x128xf32, #tpu.memory_space<vmem>>) attributes {dimension_semantics = [#tpu.dimension_semantics<arbitrary>], iteration_bounds = array<i64: 1>, scalar_prefetch = 0 : i64, scratch_operands = 0 : i64, tpu.core_type = #tpu.core_type<tc>, window_params = [{pipeline_mode = #tpu.pipeline_mode<synchronous>, transform_indices = @transform_0, window_bounds = array<i64: 32, 256>}, {pipeline_mode = #tpu.pipeline_mode<synchronous>, transform_indices = @transform_1, window_bounds = array<i64: 32, 1>}, {pipeline_mode = #tpu.pipeline_mode<synchronous>, transform_indices = @transform_2, window_bounds = array<i64: 256, 128>}, {pipeline_mode = #tpu.pipeline_mode<synchronous>, transform_indices = @transform_3, window_bounds = array<i64: 1, 128>}, {pipeline_mode = #tpu.pipeline_mode<synchronous>, transform_indices = @transform_4, window_bounds = array<i64: 32, 128>}]} {
    %c0 = arith.constant 0 : index
    %c0_0 = arith.constant 0 : index
    %0 = vector.load %arg1[%c0, %c0_0] : memref<32x256xf32, #tpu.memory_space<vmem>>, vector<32x256xf32>
    %c0_1 = arith.constant 0 : index
    %c0_2 = arith.constant 0 : index
    %1 = vector.load %arg2[%c0_1, %c0_2] : memref<32x1xf32, #tpu.memory_space<vmem>>, vector<32x1xf32>
    %2 = vector.broadcast %1 : vector<32x1xf32> to vector<32x256xf32>
    %3 = arith.mulf %0, %2 : vector<32x256xf32>
    %c0_3 = arith.constant 0 : index
    %c0_4 = arith.constant 0 : index
    %4 = vector.load %arg3[%c0_3, %c0_4] : memref<256x128xf32, #tpu.memory_space<vmem>>, vector<256x128xf32>
    %cst = arith.constant dense<0.000000e+00> : vector<32x128xf32>
    %5 = tpu.matmul %3, %4, %cst {dimension_numbers = #tpu.dot_dimension_numbers<[1], [0], [0], [1], [0, 0, 1, 1], [], []>} : vector<32x256xf32>, vector<256x128xf32>, vector<32x128xf32> -> vector<32x128xf32>
    %c0_5 = arith.constant 0 : index
    %c0_6 = arith.constant 0 : index
    %6 = vector.load %arg4[%c0_5, %c0_6] : memref<1x128xf32, #tpu.memory_space<vmem>>, vector<1x128xf32>
    %7 = vector.broadcast %6 : vector<1x128xf32> to vector<32x128xf32>
    %8 = arith.addf %5, %7 : vector<32x128xf32>
    %c0_7 = arith.constant 0 : index
    %c0_8 = arith.constant 0 : index
    %9 = vector.load %arg5[%c0_7, %c0_8] : memref<32x128xf32, #tpu.memory_space<vmem>>, vector<32x128xf32>
    tpu.vector_store %arg5[%c0_7, %c0_8], %8 {strides = array<i32>} : memref<32x128xf32, #tpu.memory_space<vmem>>, vector<32x128xf32>,
    return
  }
  func.func @transform_0(%arg0: i32) -> (i32, i32) {
    %c0_i32 = arith.constant 0 : i32
    %c0_i32_0 = arith.constant 0 : i32
    %c0_i32_1 = arith.constant 0 : i32
    return %c0_i32, %c0_i32_0 : i32, i32
  }
  func.func @transform_1(%arg0: i32) -> (i32, i32) {
    %c0_i32 = arith.constant 0 : i32
    %c0_i32_0 = arith.constant 0 : i32
    %c0_i32_1 = arith.constant 0 : i32
    return %c0_i32, %c0_i32_0 : i32, i32
  }
  func.func @transform_2(%arg0: i32) -> (i32, i32) {
    %c0_i32 = arith.constant 0 : i32
    %c0_i32_0 = arith.constant 0 : i32
    %c0_i32_1 = arith.constant 0 : i32
    return %c0_i32, %c0_i32_0 : i32, i32
  }
  func.func @transform_3(%arg0: i32) -> (i32, i32) {
    %c0_i32 = arith.constant 0 : i32
    %c0_i32_0 = arith.constant 0 : i32
    %c0_i32_1 = arith.constant 0 : i32
    return %c0_i32, %c0_i32_0 : i32, i32
  }
  func.func @transform_4(%arg0: i32) -> (i32, i32) {
    %c0_i32 = arith.constant 0 : i32
    %c0_i32_0 = arith.constant 0 : i32
    %c0_i32_1 = arith.constant 0 : i32
    return %c0_i32, %c0_i32_0 : i32, i32
  }
}

</mosaic_0001>

<llo_original>
// kernel: _lambda_.5
$region0: #{_lambda_.5}
  #allocation0 [shape = 'u32[]', space=smem, size = 0x4, offset = 0x4, fixed_abs, tag = 'smem constant byte address 0x4 - core index']
  #allocation1 [shape = 'u32[144,128]{1,0:T(1,128)}', space=vmem, size = 0x12000, scoped, tag = 'internal scratch']
  %s0 = inlined_call_operand.vmem [shape: f32[32,8], index: 0, kind: input, shape index: {}]
  %s1 = inlined_call_operand.vmem [shape: f32[8,1024], index: 1, kind: input, shape index: {}]
  %s2 = inlined_call_operand.vmem [shape: f32[1,1024], index: 2, kind: input, shape index: {}]
  %s3 = inlined_call_operand.vmem [shape: f32[32,1024], index: 3, kind: output, shape index: {}]
  %s4 = sld [smem:[#allocation0]]
  $region22: #{_lambda_.5} parent=0
    _
  %s6 = ssub.s32 1, %s4
  %s7 = scalar_select 0, %s6, %s4
  // Predicated region
  $region2: #{_lambda_.5} parent=0 // pred_check
    _
  $region3: #{_lambda_.5} parent=0 // pred_check_branch
    %9 = sbr.rel (0) target = $region5
  $region4: #{_lambda_.5} parent=0 // pred_region
    _
  $region5: #{_lambda_.5} parent=0 // pred_fallthru
    _
  // Predicated region
  $region6: #{_lambda_.5} parent=0 // pred_check
    _
  $region7: #{_lambda_.5} parent=0 // pred_check_branch
    %11 = sbr.rel (0) target = $region9
  $region8: #{_lambda_.5} parent=0 // pred_region
    _
  $region9: #{_lambda_.5} parent=0 // pred_fallthru
    _
  // Predicated region
  $region10: #{_lambda_.5} parent=0 // pred_check
    _
  $region11: #{_lambda_.5} parent=0 // pred_check_branch
    %13 = sbr.rel (0) target = $region13
  $region12: #{_lambda_.5} parent=0 // pred_region
    _
  $region13: #{_lambda_.5} parent=0 // pred_fallthru
    _
  %v14 = vld [vmem:[%s0] sm:$0xff]
  %v15 = vld [vmem:[%s0 + $0x8] sm:$0xff]
  %v16 = vld [vmem:[%s0 + $0x10] sm:$0xff]
  %v17 = vld [vmem:[%s0 + $0x18] sm:$0xff]
  %v18 = vld [vmem:[%s1] sm:$0xff]
  %v19 = vld [vmem:[%s1 + $0x8] sm:$0xff]
  %v20 = vld [vmem:[%s1 + $0x10] sm:$0xff]
  %v21 = vld [vmem:[%s1 + $0x18] sm:$0xff]
  %v22 = vld [vmem:[%s1 + $0x20] sm:$0xff]
  %v23 = vld [vmem:[%s1 + $0x28] sm:$0xff]
  %v24 = vld [vmem:[%s1 + $0x30] sm:$0xff]
  %v25 = vld [vmem:[%s1 + $0x38] sm:$0xff]
  %v26 = vld [vmem:[%s2] sm:$0xff]
  %v28 = vlaneseq
  %v29 = vshrl.u32 %v28, 7
  %v30 = vsub.s32 0, %v29
  %v31 = vrot.slane %v26, %v30
  %v32 = vlaneseq
  %v33 = vshrl.u32 %v32, 7
  %v34 = vsub.s32 1, %v33
  %v35 = vrot.slane %v26, %v34
  %v36 = vlaneseq
  %v37 = vshrl.u32 %v36, 7
  %v38 = vsub.s32 2, %v37
  %v39 = vrot.slane %v26, %v38
  %v40 = vlaneseq
  %v41 = vshrl.u32 %v40, 7
  %v42 = vsub.s32 3, %v41
  %v43 = vrot.slane %v26, %v42
  %v44 = vlaneseq
  %v45 = vshrl.u32 %v44, 7
  %v46 = vsub.s32 4, %v45
  %v47 = vrot.slane %v26, %v46
  %v48 = vlaneseq
  %v49 = vshrl.u32 %v48, 7
  %v50 = vsub.s32 5, %v49
  %v51 = vrot.slane %v26, %v50
  %v52 = vlaneseq
  %v53 = vshrl.u32 %v52, 7
  %v54 = vsub.s32 6, %v53
  %v55 = vrot.slane %v26, %v54
  %v56 = vlaneseq
  %v57 = vshrl.u32 %v56, 7
  %v58 = vsub.s32 7, %v57
  %v59 = vrot.slane %v26, %v58
  %vm68 = vcmask 64512
  %v70 = vsel %vm68, %v14, 0
  %v73 = vsel %vm68, %v15, 0
  %v76 = vsel %vm68, %v16, 0
  %v79 = vsel %vm68, %v17, 0
  %81 = vmatprep.subr.mxu0 %v19
  %82 = vmatpush1.msra.mxu0 %v18
  %83 = vmatprep.subr.mxu0 0.0
  %84 = vmatpush1.msra.mxu0 0.0
  %85 = vmatprep.subr.mxu0 0.0
  %86 = vmatpush1.msra.mxu0 0.0
  %87 = vmatprep.subr.mxu0 0.0
  %88 = vmatpush1.msra.mxu0 0.0
  %89 = vmatprep.subr.mxu0 0.0
  %90 = vmatpush1.msra.mxu0 0.0
  %91 = vmatprep.subr.mxu0 0.0
  %92 = vmatpush1.msra.mxu0 0.0
  %93 = vmatprep.subr.mxu0 0.0
  %94 = vmatpush1.msra.mxu0 0.0
  %95 = vmatprep.subr.mxu0 0.0
  %96 = vmatpush1.msra.mxu0 0.0
  %97 = vmatprep.subr.mxu0 0.0
  %98 = vmatpush1.msra.mxu0 0.0
  %99 = vmatprep.subr.mxu0 0.0
  %100 = vmatpush1.msra.mxu0 0.0
  %101 = vmatprep.subr.mxu0 0.0
  %102 = vmatpush1.msra.mxu0 0.0
  %103 = vmatprep.subr.mxu0 0.0
  %104 = vmatpush1.msra.mxu0 0.0
  %105 = vmatprep.subr.mxu0 0.0
  %106 = vmatpush1.msra.mxu0 0.0
  %107 = vmatprep.subr.mxu0 0.0
  %108 = vmatpush1.msra.mxu0 0.0
  %109 = vmatprep.subr.mxu0 0.0
  %110 = vmatpush1.msra.mxu0 0.0
  %111 = vmatprep.subr.mxu0 0.0
  %112 = vmatpush1.msra.mxu0 0.0
  %113 = vmatprep.subr.mxu0 0.0
  %114 = vmatpush1.msra.mxu0 0.0
  %115 = vmatprep.subr.mxu0 0.0
  %116 = vmatpush1.msra.mxu0 0.0
  %117 = vmatprep.subr.mxu0 0.0
  %118 = vmatpush1.msra.mxu0 0.0
  %119 = vmatprep.subr.mxu0 0.0
  %120 = vmatpush1.msra.mxu0 0.0
  %121 = vmatprep.subr.mxu0 0.0
  %122 = vmatpush1.msra.mxu0 0.0
  %123 = vmatprep.subr.mxu0 0.0
  %124 = vmatpush1.msra.mxu0 0.0
  %125 = vmatprep.subr.mxu0 0.0
  %126 = vmatpush1.msra.mxu0 0.0
  %127 = vmatprep.subr.mxu0 0.0
  %128 = vmatpush1.msra.mxu0 0.0
  %129 = vmatprep.subr.mxu0 0.0
  %130 = vmatpush1.msra.mxu0 0.0
  %131 = vmatprep.subr.mxu0 0.0
  %132 = vmatpush1.msra.mxu0 0.0
  %133 = vmatprep.subr.mxu0 0.0
  %134 = vmatpush1.msra.mxu0 0.0
  %135 = vmatprep.subr.mxu0 0.0
  %136 = vmatpush1.msra.mxu0 0.0
  %137 = vmatprep.subr.mxu0 0.0
  %138 = vmatpush1.msra.mxu0 0.0
  %139 = vmatprep.subr.mxu0 0.0
  %140 = vmatpush1.msra.mxu0 0.0
  %141 = vmatprep.subr.mxu0 0.0
  %142 = vmatpush1.msra.mxu0 0.0
  %143 = vmatprep.subr.mxu0 0.0
  %144 = vmatpush1.msra.mxu0 0.0
  %145 = vmatprep.mubr.f32.mxu0 0.0
  %146 = vmatmul.mubr.f32.gmra.mrb[0].mxu0 %v70
  %v147 = vpop.f32.mrb[0].mxu0
  %v148 = vadd.f32 %v31, %v147
  %v149 = vpop.f32.mrb[0].mxu0
  %v150 = vadd.f32 %v35, %v149
  %151 = vmatprep.mubr.f32.mxu0 0.0
  %152 = vmatmul.mubr.f32.gmra.mrb[0].mxu0 %v73
  %v153 = vpop.f32.mrb[0].mxu0
  %v154 = vadd.f32 %v31, %v153
  %v155 = vpop.f32.mrb[0].mxu0
  %v156 = vadd.f32 %v35, %v155
  %157 = vmatprep.mubr.f32.mxu0 0.0
  %158 = vmatmul.mubr.f32.gmra.mrb[0].mxu0 %v76
  %v159 = vpop.f32.mrb[0].mxu0
  %v160 = vadd.f32 %v31, %v159
  %v161 = vpop.f32.mrb[0].mxu0
  %v162 = vadd.f32 %v35, %v161
  %163 = vmatprep.mubr.f32.mxu0 0.0
  %164 = vmatmul.mubr.f32.gmra.mrb[0].mxu0 %v79
  %v165 = vpop.f32.mrb[0].mxu0
  %v166 = vadd.f32 %v31, %v165
  %v167 = vpop.f32.mrb[0].mxu0
  %v168 = vadd.f32 %v35, %v167
  %169 = vdwg.mxu0
  %170 = vmatprep.subr.mxu0 %v21
  %171 = vmatpush1.msra.mxu0 %v20
  %172 = vmatprep.subr.mxu0 0.0
  %173 = vmatpush1.msra.mxu0 0.0
  %174 = vmatprep.subr.mxu0 0.0
  %175 = vmatpush1.msra.mxu0 0.0
  %176 = vmatprep.subr.mxu0 0.0
  %177 = vmatpush1.msra.mxu0 0.0
  %178 = vmatprep.subr.mxu0 0.0
  %179 = vmatpush1.msra.mxu0 0.0
  %180 = vmatprep.subr.mxu0 0.0
  %181 = vmatpush1.msra.mxu0 0.0
  %182 = vmatprep.subr.mxu0 0.0
  %183 = vmatpush1.msra.mxu0 0.0
  %184 = vmatprep.subr.mxu0 0.0
  %185 = vmatpush1.msra.mxu0 0.0
  %186 = vmatprep.subr.mxu0 0.0
  %187 = vmatpush1.msra.mxu0 0.0
  %188 = vmatprep.subr.mxu0 0.0
  %189 = vmatpush1.msra.mxu0 0.0
  %190 = vmatprep.subr.mxu0 0.0
  %191 = vmatpush1.msra.mxu0 0.0
  %192 = vmatprep.subr.mxu0 0.0
  %193 = vmatpush1.msra.mxu0 0.0
  %194 = vmatprep.subr.mxu0 0.0
  %195 = vmatpush1.msra.mxu0 0.0
  %196 = vmatprep.subr.mxu0 0.0
  %197 = vmatpush1.msra.mxu0 0.0
  %198 = vmatprep.subr.mxu0 0.0
  %199 = vmatpush1.msra.mxu0 0.0
  %200 = vmatprep.subr.mxu0 0.0
  %201 = vmatpush1.msra.mxu0 0.0
  %202 = vmatprep.subr.mxu0 0.0
  %203 = vmatpush1.msra.mxu0 0.0
  %204 = vmatprep.subr.mxu0 0.0
  %205 = vmatpush1.msra.mxu0 0.0
  %206 = vmatprep.subr.mxu0 0.0
  %207 = vmatpush1.msra.mxu0 0.0
  %208 = vmatprep.subr.mxu0 0.0
  %209 = vmatpush1.msra.mxu0 0.0
  %210 = vmatprep.subr.mxu0 0.0
  %211 = vmatpush1.msra.mxu0 0.0
  %212 = vmatprep.subr.mxu0 0.0
  %213 = vmatpush1.msra.mxu0 0.0
  %214 = vmatprep.subr.mxu0 0.0
  %215 = vmatpush1.msra.mxu0 0.0
  %216 = vmatprep.subr.mxu0 0.0
  %217 = vmatpush1.msra.mxu0 0.0
  %218 = vmatprep.subr.mxu0 0.0
  %219 = vmatpush1.msra.mxu0 0.0
  %220 = vmatprep.subr.mxu0 0.0
  %221 = vmatpush1.msra.mxu0 0.0
  %222 = vmatprep.subr.mxu0 0.0
  %223 = vmatpush1.msra.mxu0 0.0
  %224 = vmatprep.subr.mxu0 0.0
  %225 = vmatpush1.msra.mxu0 0.0
  %226 = vmatprep.subr.mxu0 0.0
  %227 = vmatpush1.msra.mxu0 0.0
  %228 = vmatprep.subr.mxu0 0.0
  %229 = vmatpush1.msra.mxu0 0.0
  %230 = vmatprep.subr.mxu0 0.0
  %231 = vmatpush1.msra.mxu0 0.0
  %232 = vmatprep.subr.mxu0 0.0
  %233 = vmatpush1.msra.mxu0 0.0
  %234 = vmatprep.mubr.f32.mxu0 0.0
  %235 = vmatmul.mubr.f32.gmra.mrb[0].mxu0 %v70
  %v236 = vpop.f32.mrb[0].mxu0
  %v237 = vadd.f32 %v39, %v236
  %v238 = vpop.f32.mrb[0].mxu0
  %v239 = vadd.f32 %v43, %v238
  %240 = vmatprep.mubr.f32.mxu0 0.0
  %241 = vmatmul.mubr.f32.gmra.mrb[0].mxu0 %v73
  %v242 = vpop.f32.mrb[0].mxu0
  %v243 = vadd.f32 %v39, %v242
  %v244 = vpop.f32.mrb[0].mxu0
  %v245 = vadd.f32 %v43, %v244
  %246 = vmatprep.mubr.f32.mxu0 0.0
  %247 = vmatmul.mubr.f32.gmra.mrb[0].mxu0 %v76
  %v248 = vpop.f32.mrb[0].mxu0
  %v249 = vadd.f32 %v39, %v248
  %v250 = vpop.f32.mrb[0].mxu0
  %v251 = vadd.f32 %v43, %v250
  %252 = vmatprep.mubr.f32.mxu0 0.0
  %253 = vmatmul.mubr.f32.gmra.mrb[0].mxu0 %v79
  %v254 = vpop.f32.mrb[0].mxu0
  %v255 = vadd.f32 %v39, %v254
  %v256 = vpop.f32.mrb[0].mxu0
  %v257 = vadd.f32 %v43, %v256
  %258 = vdwg.mxu0
  %259 = vmatprep.subr.mxu0 %v23
  %260 = vmatpush1.msra.mxu0 %v22
  %261 = vmatprep.subr.mxu0 0.0
  %262 = vmatpush1.msra.mxu0 0.0
  %263 = vmatprep.subr.mxu0 0.0
  %264 = vmatpush1.msra.mxu0 0.0
  %265 = vmatprep.subr.mxu0 0.0
  %266 = vmatpush1.msra.mxu0 0.0
  %267 = vmatprep.subr.mxu0 0.0
  %268 = vmatpush1.msra.mxu0 0.0
  %269 = vmatprep.subr.mxu0 0.0
  %270 = vmatpush1.msra.mxu0 0.0
  %271 = vmatprep.subr.mxu0 0.0
  %272 = vmatpush1.msra.mxu0 0.0
  %273 = vmatprep.subr.mxu0 0.0
  %274 = vmatpush1.msra.mxu0 0.0
  %275 = vmatprep.subr.mxu0 0.0
  %276 = vmatpush1.msra.mxu0 0.0
  %277 = vmatprep.subr.mxu0 0.0
  %278 = vmatpush1.msra.mxu0 0.0
  %279 = vmatprep.subr.mxu0 0.0
  %280 = vmatpush1.msra.mxu0 0.0
  %281 = vmatprep.subr.mxu0 0.0
  %282 = vmatpush1.msra.mxu0 0.0
  %283 = vmatprep.subr.mxu0 0.0
  %284 = vmatpush1.msra.mxu0 0.0
  %285 = vmatprep.subr.mxu0 0.0
  %286 = vmatpush1.msra.mxu0 0.0
  %287 = vmatprep.subr.mxu0 0.0
  %288 = vmatpush1.msra.mxu0 0.0
  %289 = vmatprep.subr.mxu0 0.0
  %290 = vmatpush1.msra.mxu0 0.0
  %291 = vmatprep.subr.mxu0 0.0
  %292 = vmatpush1.msra.mxu0 0.0
  %293 = vmatprep.subr.mxu0 0.0
  %294 = vmatpush1.msra.mxu0 0.0
  %295 = vmatprep.subr.mxu0 0.0
  %296 = vmatpush1.msra.mxu0 0.0
  %297 = vmatprep.subr.mxu0 0.0
  %298 = vmatpush1.msra.mxu0 0.0
  %299 = vmatprep.subr.mxu0 0.0
  %300 = vmatpush1.msra.mxu0 0.0
  %301 = vmatprep.subr.mxu0 0.0
  %302 = vmatpush1.msra.mxu0 0.0
  %303 = vmatprep.subr.mxu0 0.0
  %304 = vmatpush1.msra.mxu0 0.0
  %305 = vmatprep.subr.mxu0 0.0
  %306 = vmatpush1.msra.mxu0 0.0
  %307 = vmatprep.subr.mxu0 0.0
  %308 = vmatpush1.msra.mxu0 0.0
  %309 = vmatprep.subr.mxu0 0.0
  %310 = vmatpush1.msra.mxu0 0.0
  %311 = vmatprep.subr.mxu0 0.0
  %312 = vmatpush1.msra.mxu0 0.0
  %313 = vmatprep.subr.mxu0 0.0
  %314 = vmatpush1.msra.mxu0 0.0
  %315 = vmatprep.subr.mxu0 0.0
  %316 = vmatpush1.msra.mxu0 0.0
  %317 = vmatprep.subr.mxu0 0.0
  %318 = vmatpush1.msra.mxu0 0.0
  %319 = vmatprep.subr.mxu0 0.0
  %320 = vmatpush1.msra.mxu0 0.0
  %321 = vmatprep.subr.mxu0 0.0
  %322 = vmatpush1.msra.mxu0 0.0
  %323 = vmatprep.mubr.f32.mxu0 0.0
  %324 = vmatmul.mubr.f32.gmra.mrb[0].mxu0 %v70
  %v325 = vpop.f32.mrb[0].mxu0
  %v326 = vadd.f32 %v47, %v325
  %v327 = vpop.f32.mrb[0].mxu0
  %v328 = vadd.f32 %v51, %v327
  %329 = vmatprep.mubr.f32.mxu0 0.0
  %330 = vmatmul.mubr.f32.gmra.mrb[0].mxu0 %v73
  %v331 = vpop.f32.mrb[0].mxu0
  %v332 = vadd.f32 %v47, %v331
  %v333 = vpop.f32.mrb[0].mxu0
  %v334 = vadd.f32 %v51, %v333
  %335 = vmatprep.mubr.f32.mxu0 0.0
  %336 = vmatmul.mubr.f32.gmra.mrb[0].mxu0 %v76
  %v337 = vpop.f32.mrb[0].mxu0
  %v338 = vadd.f32 %v47, %v337
  %v339 = vpop.f32.mrb[0].mxu0
  %v340 = vadd.f32 %v51, %v339
  %341 = vmatprep.mubr.f32.mxu0 0.0
  %342 = vmatmul.mubr.f32.gmra.mrb[0].mxu0 %v79
  %v343 = vpop.f32.mrb[0].mxu0
  %v344 = vadd.f32 %v47, %v343
  %v345 = vpop.f32.mrb[0].mxu0
  %v346 = vadd.f32 %v51, %v345
  %347 = vdwg.mxu0
  %348 = vmatprep.subr.mxu0 %v25
  %349 = vmatpush1.msra.mxu0 %v24
  %350 = vmatprep.subr.mxu0 0.0
  %351 = vmatpush1.msra.mxu0 0.0
  %352 = vmatprep.subr.mxu0 0.0
  %353 = vmatpush1.msra.mxu0 0.0
  %354 = vmatprep.subr.mxu0 0.0
  %355 = vmatpush1.msra.mxu0 0.0
  %356 = vmatprep.subr.mxu0 0.0
  %357 = vmatpush1.msra.mxu0 0.0
  %358 = vmatprep.subr.mxu0 0.0
  %359 = vmatpush1.msra.mxu0 0.0
  %360 = vmatprep.subr.mxu0 0.0
  %361 = vmatpush1.msra.mxu0 0.0
  %362 = vmatprep.subr.mxu0 0.0
  %363 = vmatpush1.msra.mxu0 0.0
  %364 = vmatprep.subr.mxu0 0.0
  %365 = vmatpush1.msra.mxu0 0.0
  %366 = vmatprep.subr.mxu0 0.0
  %367 = vmatpush1.msra.mxu0 0.0
  %368 = vmatprep.subr.mxu0 0.0
  %369 = vmatpush1.msra.mxu0 0.0
  %370 = vmatprep.subr.mxu0 0.0
  %371 = vmatpush1.msra.mxu0 0.0
  %372 = vmatprep.subr.mxu0 0.0
  %373 = vmatpush1.msra.mxu0 0.0
  %374 = vmatprep.subr.mxu0 0.0
  %375 = vmatpush1.msra.mxu0 0.0
  %376 = vmatprep.subr.mxu0 0.0
  %377 = vmatpush1.msra.mxu0 0.0
  %378 = vmatprep.subr.mxu0 0.0
  %379 = vmatpush1.msra.mxu0 0.0
  %380 = vmatprep.subr.mxu0 0.0
  %381 = vmatpush1.msra.mxu0 0.0
  %382 = vmatprep.subr.mxu0 0.0
  %383 = vmatpush1.msra.mxu0 0.0
  %384 = vmatprep.subr.mxu0 0.0
  %385 = vmatpush1.msra.mxu0 0.0
  %386 = vmatprep.subr.mxu0 0.0
  %387 = vmatpush1.msra.mxu0 0.0
  %388 = vmatprep.subr.mxu0 0.0
  %389 = vmatpush1.msra.mxu0 0.0
  %390 = vmatprep.subr.mxu0 0.0
  %391 = vmatpush1.msra.mxu0 0.0
  %392 = vmatprep.subr.mxu0 0.0
  %393 = vmatpush1.msra.mxu0 0.0
  %394 = vmatprep.subr.mxu0 0.0
  %395 = vmatpush1.msra.mxu0 0.0
  %396 = vmatprep.subr.mxu0 0.0
  %397 = vmatpush1.msra.mxu0 0.0
  %398 = vmatprep.subr.mxu0 0.0
  %399 = vmatpush1.msra.mxu0 0.0
  %400 = vmatprep.subr.mxu0 0.0
  %401 = vmatpush1.msra.mxu0 0.0
  %402 = vmatprep.subr.mxu0 0.0
  %403 = vmatpush1.msra.mxu0 0.0
  %404 = vmatprep.subr.mxu0 0.0
  %405 = vmatpush1.msra.mxu0 0.0
  %406 = vmatprep.subr.mxu0 0.0
  %407 = vmatpush1.msra.mxu0 0.0
  %408 = vmatprep.subr.mxu0 0.0
  %409 = vmatpush1.msra.mxu0 0.0
  %410 = vmatprep.subr.mxu0 0.0
  %411 = vmatpush1.msra.mxu0 0.0
  %412 = vmatprep.mubr.f32.mxu0 0.0
  %413 = vmatmul.mubr.f32.gmra.mrb[0].mxu0 %v70
  %v414 = vpop.f32.mrb[0].mxu0
  %v415 = vadd.f32 %v55, %v414
  %v416 = vpop.f32.mrb[0].mxu0
  %v417 = vadd.f32 %v59, %v416
  %418 = vmatprep.mubr.f32.mxu0 0.0
  %419 = vmatmul.mubr.f32.gmra.mrb[0].mxu0 %v73
  %v420 = vpop.f32.mrb[0].mxu0
  %v421 = vadd.f32 %v55, %v420
  %v422 = vpop.f32.mrb[0].mxu0
  %v423 = vadd.f32 %v59, %v422
  %424 = vmatprep.mubr.f32.mxu0 0.0
  %425 = vmatmul.mubr.f32.gmra.mrb[0].mxu0 %v76
  %v426 = vpop.f32.mrb[0].mxu0
  %v427 = vadd.f32 %v55, %v426
  %v428 = vpop.f32.mrb[0].mxu0
  %v429 = vadd.f32 %v59, %v428
  %430 = vmatprep.mubr.f32.mxu0 0.0
  %431 = vmatmul.mubr.f32.gmra.mrb[0].mxu0 %v79
  %v432 = vpop.f32.mrb[0].mxu0
  %v433 = vadd.f32 %v55, %v432
  %v434 = vpop.f32.mrb[0].mxu0
  %v435 = vadd.f32 %v59, %v434
  %436 = vdwg.mxu0
  %437 = vst [vmem:[%s3] sm:$0xff] %v148
  %438 = vst [vmem:[%s3 + $0x8] sm:$0xff] %v150
  %439 = vst [vmem:[%s3 + $0x10] sm:$0xff] %v237
  %440 = vst [vmem:[%s3 + $0x18] sm:$0xff] %v239
  %441 = vst [vmem:[%s3 + $0x20] sm:$0xff] %v326
  %442 = vst [vmem:[%s3 + $0x28] sm:$0xff] %v328
  %443 = vst [vmem:[%s3 + $0x30] sm:$0xff] %v415
  %444 = vst [vmem:[%s3 + $0x38] sm:$0xff] %v417
  %445 = vst [vmem:[%s3 + $0x40] sm:$0xff] %v154
  %446 = vst [vmem:[%s3 + $0x48] sm:$0xff] %v156
  %447 = vst [vmem:[%s3 + $0x50] sm:$0xff] %v243
  %448 = vst [vmem:[%s3 + $0x58] sm:$0xff] %v245
  %449 = vst [vmem:[%s3 + $0x60] sm:$0xff] %v332
  %450 = vst [vmem:[%s3 + $0x68] sm:$0xff] %v334
  %451 = vst [vmem:[%s3 + $0x70] sm:$0xff] %v421
  %452 = vst [vmem:[%s3 + $0x78] sm:$0xff] %v423
  %453 = vst [vmem:[%s3 + $0x80] sm:$0xff] %v160
  %454 = vst [vmem:[%s3 + $0x88] sm:$0xff] %v162
  %455 = vst [vmem:[%s3 + $0x90] sm:$0xff] %v249
  %456 = vst [vmem:[%s3 + $0x98] sm:$0xff] %v251
  %457 = vst [vmem:[%s3 + $0xa0] sm:$0xff] %v338
  %458 = vst [vmem:[%s3 + $0xa8] sm:$0xff] %v340
  %459 = vst [vmem:[%s3 + $0xb0] sm:$0xff] %v427
  %460 = vst [vmem:[%s3 + $0xb8] sm:$0xff] %v429
  %461 = vst [vmem:[%s3 + $0xc0] sm:$0xff] %v166
  %462 = vst [vmem:[%s3 + $0xc8] sm:$0xff] %v168
  %463 = vst [vmem:[%s3 + $0xd0] sm:$0xff] %v255
  %464 = vst [vmem:[%s3 + $0xd8] sm:$0xff] %v257
  %465 = vst [vmem:[%s3 + $0xe0] sm:$0xff] %v344
  %466 = vst [vmem:[%s3 + $0xe8] sm:$0xff] %v346
  %467 = vst [vmem:[%s3 + $0xf0] sm:$0xff] %v433
  %468 = vst [vmem:[%s3 + $0xf8] sm:$0xff] %v435
  // Predicated region
  $region14: #{_lambda_.5} parent=0 // pred_check
    _
  $region15: #{_lambda_.5} parent=0 // pred_check_branch
    %470 = sbr.rel (0) target = $region17
  $region16: #{_lambda_.5} parent=0 // pred_region
    _
  $region17: #{_lambda_.5} parent=0 // pred_fallthru
    _
  // Predicated region
  $region18: #{_lambda_.5} parent=0 // pred_check
    _
  $region19: #{_lambda_.5} parent=0 // pred_check_branch
    %472 = sbr.rel (0) target = $region21
  $region20: #{_lambda_.5} parent=0 // pred_region
    _
  $region21: #{_lambda_.5} parent=0 // pred_fallthru
    _

// kernel: _lambda_.7
$region0: #{_lambda_.7}
  #allocation0 [shape = 'u32[]', space=smem, size = 0x4, offset = 0x4, fixed_abs, tag = 'smem constant byte address 0x4 - core index']
  #allocation1 [shape = 'u32[144,128]{1,0:T(1,128)}', space=vmem, size = 0x12000, scoped, tag = 'internal scratch']
  %s0 = inlined_call_operand.vmem [shape: f32[32,256], index: 0, kind: input, shape index: {}]
  %s1 = inlined_call_operand.vmem [shape: f32[256,1024], index: 1, kind: input, shape index: {}]
  %s2 = inlined_call_operand.vmem [shape: f32[1,1024], index: 2, kind: input, shape index: {}]
  %s3 = inlined_call_operand.vmem [shape: f32[32,1024], index: 3, kind: output, shape index: {}]
  %s4 = sld [smem:[#allocation0]]
  $region22: #{_lambda_.7} parent=0
    _
  %s6 = ssub.s32 1, %s4
  %s7 = scalar_select 0, %s6, %s4
  // Predicated region
  $region2: #{_lambda_.7} parent=0 // pred_check
    _
  $region3: #{_lambda_.7} parent=0 // pred_check_branch
    %9 = sbr.rel (0) target = $region5
  $region4: #{_lambda_.7} parent=0 // pred_region
    _
  $region5: #{_lambda_.7} parent=0 // pred_fallthru
    _
  // Predicated region
  $region6: #{_lambda_.7} parent=0 // pred_check
    _
  $region7: #{_lambda_.7} parent=0 // pred_check_branch
    %11 = sbr.rel (0) target = $region9
  $region8: #{_lambda_.7} parent=0 // pred_region
    _
  $region9: #{_lambda_.7} parent=0 // pred_fallthru
    _
  // Predicated region
  $region10: #{_lambda_.7} parent=0 // pred_check
    _
  $region11: #{_lambda_.7} parent=0 // pred_check_branch
    %13 = sbr.rel (0) target = $region13
  $region12: #{_lambda_.7} parent=0 // pred_region
    _
  $region13: #{_lambda_.7} parent=0 // pred_fallthru
    _
  %v14 = vld [vmem:[%s0] sm:$0xff]
  %v15 = vld [vmem:[%s0 + $0x8] sm:$0xff]
  %v16 = vld [vmem:[%s0 + $0x10] sm:$0xff]
  %v17 = vld [vmem:[%s0 + $0x18] sm:$0xff]
  %v18 = vld [vmem:[%s0 + $0x20] sm:$0xff]
  %v19 = vld [vmem:[%s0 + $0x28] sm:$0xff]
  %v20 = vld [vmem:[%s0 + $0x30] sm:$0xff]
  %v21 = vld [vmem:[%s0 + $0x38] sm:$0xff]
  %v22 = vld [vmem:[%s1] sm:$0xff]
  %v23 = vld [vmem:[%s1 + $0x8] sm:$0xff]
  %v24 = vld [vmem:[%s1 + $0x10] sm:$0xff]
  %v25 = vld [vmem:[%s1 + $0x18] sm:$0xff]
  %v26 = vld [vmem:[%s1 + $0x20] sm:$0xff]
  %v27 = vld [vmem:[%s1 + $0x28] sm:$0xff]
  %v28 = vld [vmem:[%s1 + $0x30] sm:$0xff]
  %v29 = vld [vmem:[%s1 + $0x38] sm:$0xff]
  %v30 = vld [vmem:[%s1 + $0x40] sm:$0xff]
  %v31 = vld [vmem:[%s1 + $0x48] sm:$0xff]
  %v32 = vld [vmem:[%s1 + $0x50] sm:$0xff]
  %v33 = vld [vmem:[%s1 + $0x58] sm:$0xff]
  %v34 = vld [vmem:[%s1 + $0x60] sm:$0xff]
  %v35 = vld [vmem:[%s1 + $0x68] sm:$0xff]
  %v36 = vld [vmem:[%s1 + $0x70] sm:$0xff]
  %v37 = vld [vmem:[%s1 + $0x78] sm:$0xff]
  %v38 = vld [vmem:[%s1 + $0x80] sm:$0xff]
  %v39 = vld [vmem:[%s1 + $0x88] sm:$0xff]
  %v40 = vld [vmem:[%s1 + $0x90] sm:$0xff]
  %v41 = vld [vmem:[%s1 + $0x98] sm:$0xff]
  %v42 = vld [vmem:[%s1 + $0xa0] sm:$0xff]
  %v43 = vld [vmem:[%s1 + $0xa8] sm:$0xff]
  %v44 = vld [vmem:[%s1 + $0xb0] sm:$0xff]
  %v45 = vld [vmem:[%s1 + $0xb8] sm:$0xff]
  %v46 = vld [vmem:[%s1 + $0xc0] sm:$0xff]
  %v47 = vld [vmem:[%s1 + $0xc8] sm:$0xff]
  %v48 = vld [vmem:[%s1 + $0xd0] sm:$0xff]
  %v49 = vld [vmem:[%s1 + $0xd8] sm:$0xff]
  %v50 = vld [vmem:[%s1 + $0xe0] sm:$0xff]
  %v51 = vld [vmem:[%s1 + $0xe8] sm:$0xff]
  %v52 = vld [vmem:[%s1 + $0xf0] sm:$0xff]
  %v53 = vld [vmem:[%s1 + $0xf8] sm:$0xff]
  %v54 = vld [vmem:[%s1 + $0x100] sm:$0xff]
  %v55 = vld [vmem:[%s1 + $0x108] sm:$0xff]
  %v56 = vld [vmem:[%s1 + $0x110] sm:$0xff]
  %v57 = vld [vmem:[%s1 + $0x118] sm:$0xff]
  %v58 = vld [vmem:[%s1 + $0x120] sm:$0xff]
  %v59 = vld [vmem:[%s1 + $0x128] sm:$0xff]
  %v60 = vld [vmem:[%s1 + $0x130] sm:$0xff]
  %v61 = vld [vmem:[%s1 + $0x138] sm:$0xff]
  %v62 = vld [vmem:[%s1 + $0x140] sm:$0xff]
  %v63 = vld [vmem:[%s1 + $0x148] sm:$0xff]
  %v64 = vld [vmem:[%s1 + $0x150] sm:$0xff]
  %v65 = vld [vmem:[%s1 + $0x158] sm:$0xff]
  %v66 = vld [vmem:[%s1 + $0x160] sm:$0xff]
  %v67 = vld [vmem:[%s1 + $0x168] sm:$0xff]
  %v68 = vld [vmem:[%s1 + $0x170] sm:$0xff]
  %v69 = vld [vmem:[%s1 + $0x178] sm:$0xff]
  %v70 = vld [vmem:[%s1 + $0x180] sm:$0xff]
  %v71 = vld [vmem:[%s1 + $0x188] sm:$0xff]
  %v72 = vld [vmem:[%s1 + $0x190] sm:$0xff]
  %v73 = vld [vmem:[%s1 + $0x198] sm:$0xff]
  %v74 = vld [vmem:[%s1 + $0x1a0] sm:$0xff]
  %v75 = vld [vmem:[%s1 + $0x1a8] sm:$0xff]
  %v76 = vld [vmem:[%s1 + $0x1b0] sm:$0xff]
  %v77 = vld [vmem:[%s1 + $0x1b8] sm:$0xff]
  %v78 = vld [vmem:[%s1 + $0x1c0] sm:$0xff]
  %v79 = vld [vmem:[%s1 + $0x1c8] sm:$0xff]
  %v80 = vld [vmem:[%s1 + $0x1d0] sm:$0xff]
  %v81 = vld [vmem:[%s1 + $0x1d8] sm:$0xff]
  %v82 = vld [vmem:[%s1 + $0x1e0] sm:$0xff]
  %v83 = vld [vmem:[%s1 + $0x1e8] sm:$0xff]
  %v84 = vld [vmem:[%s1 + $0x1f0] sm:$0xff]
  %v85 = vld [vmem:[%s1 + $0x1f8] sm:$0xff]
  %v86 = vld [vmem:[%s1 + $0x200] sm:$0xff]
  %v87 = vld [vmem:[%s1 + $0x208] sm:$0xff]
  %v88 = vld [vmem:[%s1 + $0x210] sm:$0xff]
  %v89 = vld [vmem:[%s1 + $0x218] sm:$0xff]
  %v90 = vld [vmem:[%s1 + $0x220] sm:$0xff]
  %v91 = vld [vmem:[%s1 + $0x228] sm:$0xff]
  %v92 = vld [vmem:[%s1 + $0x230] sm:$0xff]
  %v93 = vld [vmem:[%s1 + $0x238] sm:$0xff]
  %v94 = vld [vmem:[%s1 + $0x240] sm:$0xff]
  %v95 = vld [vmem:[%s1 + $0x248] sm:$0xff]
  %v96 = vld [vmem:[%s1 + $0x250] sm:$0xff]
  %v97 = vld [vmem:[%s1 + $0x258] sm:$0xff]
  %v98 = vld [vmem:[%s1 + $0x260] sm:$0xff]
  %v99 = vld [vmem:[%s1 + $0x268] sm:$0xff]
  %v100 = vld [vmem:[%s1 + $0x270] sm:$0xff]
  %v101 = vld [vmem:[%s1 + $0x278] sm:$0xff]
  %v102 = vld [vmem:[%s1 + $0x280] sm:$0xff]
  %v103 = vld [vmem:[%s1 + $0x288] sm:$0xff]
  %v104 = vld [vmem:[%s1 + $0x290] sm:$0xff]
  %v105 = vld [vmem:[%s1 + $0x298] sm:$0xff]
  %v106 = vld [vmem:[%s1 + $0x2a0] sm:$0xff]
  %v107 = vld [vmem:[%s1 + $0x2a8] sm:$0xff]
  %v108 = vld [vmem:[%s1 + $0x2b0] sm:$0xff]
  %v109 = vld [vmem:[%s1 + $0x2b8] sm:$0xff]
  %v110 = vld [vmem:[%s1 + $0x2c0] sm:$0xff]
  %v111 = vld [vmem:[%s1 + $0x2c8] sm:$0xff]
  %v112 = vld [vmem:[%s1 + $0x2d0] sm:$0xff]
  %v113 = vld [vmem:[%s1 + $0x2d8] sm:$0xff]
  %v114 = vld [vmem:[%s1 + $0x2e0] sm:$0xff]
  %v115 = vld [vmem:[%s1 + $0x2e8] sm:$0xff]
  %v116 = vld [vmem:[%s1 + $0x2f0] sm:$0xff]
  %v117 = vld [vmem:[%s1 + $0x2f8] sm:$0xff]
  %v118 = vld [vmem:[%s1 + $0x300] sm:$0xff]
  %v119 = vld [vmem:[%s1 + $0x308] sm:$0xff]
  %v120 = vld [vmem:[%s1 + $0x310] sm:$0xff]
  %v121 = vld [vmem:[%s1 + $0x318] sm:$0xff]
  %v122 = vld [vmem:[%s1 + $0x320] sm:$0xff]
  %v123 = vld [vmem:[%s1 + $0x328] sm:$0xff]
  %v124 = vld [vmem:[%s1 + $0x330] sm:$0xff]
  %v125 = vld [vmem:[%s1 + $0x338] sm:$0xff]
  %v126 = vld [vmem:[%s1 + $0x340] sm:$0xff]
  %v127 = vld [vmem:[%s1 + $0x348] sm:$0xff]
  %v128 = vld [vmem:[%s1 + $0x350] sm:$0xff]
  %v129 = vld [vmem:[%s1 + $0x358] sm:$0xff]
  %v130 = vld [vmem:[%s1 + $0x360] sm:$0xff]
  %v131 = vld [vmem:[%s1 + $0x368] sm:$0xff]
  %v132 = vld [vmem:[%s1 + $0x370] sm:$0xff]
  %v133 = vld [vmem:[%s1 + $0x378] sm:$0xff]
  %v134 = vld [vmem:[%s1 + $0x380] sm:$0xff]
  %v135 = vld [vmem:[%s1 + $0x388] sm:$0xff]
  %v136 = vld [vmem:[%s1 + $0x390] sm:$0xff]
  %v137 = vld [vmem:[%s1 + $0x398] sm:$0xff]
  %v138 = vld [vmem:[%s1 + $0x3a0] sm:$0xff]
  %v139 = vld [vmem:[%s1 + $0x3a8] sm:$0xff]
  %v140 = vld [vmem:[%s1 + $0x3b0] sm:$0xff]
  %v141 = vld [vmem:[%s1 + $0x3b8] sm:$0xff]
  %v142 = vld [vmem:[%s1 + $0x3c0] sm:$0xff]
  %v143 = vld [vmem:[%s1 + $0x3c8] sm:$0xff]
  %v144 = vld [vmem:[%s1 + $0x3d0] sm:$0xff]
  %v145 = vld [vmem:[%s1 + $0x3d8] sm:$0xff]
  %v146 = vld [vmem:[%s1 + $0x3e0] sm:$0xff]
  %v147 = vld [vmem:[%s1 + $0x3e8] sm:$0xff]
  %v148 = vld [vmem:[%s1 + $0x3f0] sm:$0xff]
  %v149 = vld [vmem:[%s1 + $0x3f8] sm:$0xff]
  %v150 = vld [vmem:[%s1 + $0x400] sm:$0xff]
  %v151 = vld [vmem:[%s1 + $0x408] sm:$0xff]
  %v152 = vld [vmem:[%s1 + $0x410] sm:$0xff]
  %v153 = vld [vmem:[%s1 + $0x418] sm:$0xff]
  %v154 = vld [vmem:[%s1 + $0x420] sm:$0xff]
  %v155 = vld [vmem:[%s1 + $0x428] sm:$0xff]
  %v156 = vld [vmem:[%s1 + $0x430] sm:$0xff]
  %v157 = vld [vmem:[%s1 + $0x438] sm:$0xff]
  %v158 = vld [vmem:[%s1 + $0x440] sm:$0xff]
  %v159 = vld [vmem:[%s1 + $0x448] sm:$0xff]
  %v160 = vld [vmem:[%s1 + $0x450] sm:$0xff]
  %v161 = vld [vmem:[%s1 + $0x458] sm:$0xff]
  %v162 = vld [vmem:[%s1 + $0x460] sm:$0xff]
  %v163 = vld [vmem:[%s1 + $0x468] sm:$0xff]
  %v164 = vld [vmem:[%s1 + $0x470] sm:$0xff]
  %v165 = vld [vmem:[%s1 + $0x478] sm:$0xff]
  %v166 = vld [vmem:[%s1 + $0x480] sm:$0xff]
  %v167 = vld [vmem:[%s1 + $0x488] sm:$0xff]
  %v168 = vld [vmem:[%s1 + $0x490] sm:$0xff]
  %v169 = vld [vmem:[%s1 + $0x498] sm:$0xff]
  %v170 = vld [vmem:[%s1 + $0x4a0] sm:$0xff]
  %v171 = vld [vmem:[%s1 + $0x4a8] sm:$0xff]
  %v172 = vld [vmem:[%s1 + $0x4b0] sm:$0xff]
  %v173 = vld [vmem:[%s1 + $0x4b8] sm:$0xff]
  %v174 = vld [vmem:[%s1 + $0x4c0] sm:$0xff]
  %v175 = vld [vmem:[%s1 + $0x4c8] sm:$0xff]
  %v176 = vld [vmem:[%s1 + $0x4d0] sm:$0xff]
  %v177 = vld [vmem:[%s1 + $0x4d8] sm:$0xff]
  %v178 = vld [vmem:[%s1 + $0x4e0] sm:$0xff]
  %v179 = vld [vmem:[%s1 + $0x4e8] sm:$0xff]
  %v180 = vld [vmem:[%s1 + $0x4f0] sm:$0xff]
  %v181 = vld [vmem:[%s1 + $0x4f8] sm:$0xff]
  %v182 = vld [vmem:[%s1 + $0x500] sm:$0xff]
  %v183 = vld [vmem:[%s1 + $0x508] sm:$0xff]
  %v184 = vld [vmem:[%s1 + $0x510] sm:$0xff]
  %v185 = vld [vmem:[%s1 + $0x518] sm:$0xff]
  %v186 = vld [vmem:[%s1 + $0x520] sm:$0xff]
  %v187 = vld [vmem:[%s1 + $0x528] sm:$0xff]
  %v188 = vld [vmem:[%s1 + $0x530] sm:$0xff]
  %v189 = vld [vmem:[%s1 + $0x538] sm:$0xff]
  %v190 = vld [vmem:[%s1 + $0x540] sm:$0xff]
  %v191 = vld [vmem:[%s1 + $0x548] sm:$0xff]
  %v192 = vld [vmem:[%s1 + $0x550] sm:$0xff]
  %v193 = vld [vmem:[%s1 + $0x558] sm:$0xff]
  %v194 = vld [vmem:[%s1 + $0x560] sm:$0xff]
  %v195 = vld [vmem:[%s1 + $0x568] sm:$0xff]
  %v196 = vld [vmem:[%s1 + $0x570] sm:$0xff]
  %v197 = vld [vmem:[%s1 + $0x578] sm:$0xff]
  %v198 = vld [vmem:[%s1 + $0x580] sm:$0xff]
  %v199 = vld [vmem:[%s1 + $0x588] sm:$0xff]
  %v200 = vld [vmem:[%s1 + $0x590] sm:$0xff]
  %v201 = vld [vmem:[%s1 + $0x598] sm:$0xff]
  %v202 = vld [vmem:[%s1 + $0x5a0] sm:$0xff]
  %v203 = vld [vmem:[%s1 + $0x5a8] sm:$0xff]
  %v204 = vld [vmem:[%s1 + $0x5b0] sm:$0xff]
  %v205 = vld [vmem:[%s1 + $0x5b8] sm:$0xff]
  %v206 = vld [vmem:[%s1 + $0x5c0] sm:$0xff]
  %v207 = vld [vmem:[%s1 + $0x5c8] sm:$0xff]
  %v208 = vld [vmem:[%s1 + $0x5d0] sm:$0xff]
  %v209 = vld [vmem:[%s1 + $0x5d8] sm:$0xff]
  %v210 = vld [vmem:[%s1 + $0x5e0] sm:$0xff]
  %v211 = vld [vmem:[%s1 + $0x5e8] sm:$0xff]
  %v212 = vld [vmem:[%s1 + $0x5f0] sm:$0xff]
  %v213 = vld [vmem:[%s1 + $0x5f8] sm:$0xff]
  %v214 = vld [vmem:[%s1 + $0x600] sm:$0xff]
  %v215 = vld [vmem:[%s1 + $0x608] sm:$0xff]
  %v216 = vld [vmem:[%s1 + $0x610] sm:$0xff]
  %v217 = vld [vmem:[%s1 + $0x618] sm:$0xff]
  %v218 = vld [vmem:[%s1 + $0x620] sm:$0xff]
  %v219 = vld [vmem:[%s1 + $0x628] sm:$0xff]
  %v220 = vld [vmem:[%s1 + $0x630] sm:$0xff]
  %v221 = vld [vmem:[%s1 + $0x638] sm:$0xff]
  %v222 = vld [vmem:[%s1 + $0x640] sm:$0xff]
  %v223 = vld [vmem:[%s1 + $0x648] sm:$0xff]
  %v224 = vld [vmem:[%s1 + $0x650] sm:$0xff]
  %v225 = vld [vmem:[%s1 + $0x658] sm:$0xff]
  %v226 = vld [vmem:[%s1 + $0x660] sm:$0xff]
  %v227 = vld [vmem:[%s1 + $0x668] sm:$0xff]
  %v228 = vld [vmem:[%s1 + $0x670] sm:$0xff]
  %v229 = vld [vmem:[%s1 + $0x678] sm:$0xff]
  %v230 = vld [vmem:[%s1 + $0x680] sm:$0xff]
  %v231 = vld [vmem:[%s1 + $0x688] sm:$0xff]
  %v232 = vld [vmem:[%s1 + $0x690] sm:$0xff]
  %v233 = vld [vmem:[%s1 + $0x698] sm:$0xff]
  %v234 = vld [vmem:[%s1 + $0x6a0] sm:$0xff]
  %v235 = vld [vmem:[%s1 + $0x6a8] sm:$0xff]
  %v236 = vld [vmem:[%s1 + $0x6b0] sm:$0xff]
  %v237 = vld [vmem:[%s1 + $0x6b8] sm:$0xff]
  %v238 = vld [vmem:[%s1 + $0x6c0] sm:$0xff]
  %v239 = vld [vmem:[%s1 + $0x6c8] sm:$0xff]
  %v240 = vld [vmem:[%s1 + $0x6d0] sm:$0xff]
  %v241 = vld [vmem:[%s1 + $0x6d8] sm:$0xff]
  %v242 = vld [vmem:[%s1 + $0x6e0] sm:$0xff]
  %v243 = vld [vmem:[%s1 + $0x6e8] sm:$0xff]
  %v244 = vld [vmem:[%s1 + $0x6f0] sm:$0xff]
  %v245 = vld [vmem:[%s1 + $0x6f8] sm:$0xff]
  %v246 = vld [vmem:[%s1 + $0x700] sm:$0xff]
  %v247 = vld [vmem:[%s1 + $0x708] sm:$0xff]
  %v248 = vld [vmem:[%s1 + $0x710] sm:$0xff]
  %v249 = vld [vmem:[%s1 + $0x718] sm:$0xff]
  %v250 = vld [vmem:[%s1 + $0x720] sm:$0xff]
  %v251 = vld [vmem:[%s1 + $0x728] sm:$0xff]
  %v252 = vld [vmem:[%s1 + $0x730] sm:$0xff]
  %v253 = vld [vmem:[%s1 + $0x738] sm:$0xff]
  %v254 = vld [vmem:[%s1 + $0x740] sm:$0xff]
  %v255 = vld [vmem:[%s1 + $0x748] sm:$0xff]
  %v256 = vld [vmem:[%s1 + $0x750] sm:$0xff]
  %v257 = vld [vmem:[%s1 + $0x758] sm:$0xff]
  %v258 = vld [vmem:[%s1 + $0x760] sm:$0xff]
  %v259 = vld [vmem:[%s1 + $0x768] sm:$0xff]
  %v260 = vld [vmem:[%s1 + $0x770] sm:$0xff]
  %v261 = vld [vmem:[%s1 + $0x778] sm:$0xff]
  %v262 = vld [vmem:[%s1 + $0x780] sm:$0xff]
  %v263 = vld [vmem:[%s1 + $0x788] sm:$0xff]
  %v264 = vld [vmem:[%s1 + $0x790] sm:$0xff]
  %v265 = vld [vmem:[%s1 + $0x798] sm:$0xff]
  %v266 = vld [vmem:[%s1 + $0x7a0] sm:$0xff]
  %v267 = vld [vmem:[%s1 + $0x7a8] sm:$0xff]
  %v268 = vld [vmem:[%s1 + $0x7b0] sm:$0xff]
  %v269 = vld [vmem:[%s1 + $0x7b8] sm:$0xff]
  %v270 = vld [vmem:[%s1 + $0x7c0] sm:$0xff]
  %v271 = vld [vmem:[%s1 + $0x7c8] sm:$0xff]
  %v272 = vld [vmem:[%s1 + $0x7d0] sm:$0xff]
  %v273 = vld [vmem:[%s1 + $0x7d8] sm:$0xff]
  %v274 = vld [vmem:[%s1 + $0x7e0] sm:$0xff]
  %v275 = vld [vmem:[%s1 + $0x7e8] sm:$0xff]
  %v276 = vld [vmem:[%s1 + $0x7f0] sm:$0xff]
  %v277 = vld [vmem:[%s1 + $0x7f8] sm:$0xff]
  %v278 = vld [vmem:[%s2] sm:$0xff]
  %v280 = vlaneseq
  %v281 = vshrl.u32 %v280, 7
  %v282 = vsub.s32 0, %v281
  %v283 = vrot.slane %v278, %v282
  %v284 = vlaneseq
  %v285 = vshrl.u32 %v284, 7
  %v286 = vsub.s32 1, %v285
  %v287 = vrot.slane %v278, %v286
  %v288 = vlaneseq
  %v289 = vshrl.u32 %v288, 7
  %v290 = vsub.s32 2, %v289
  %v291 = vrot.slane %v278, %v290
  %v292 = vlaneseq
  %v293 = vshrl.u32 %v292, 7
  %v294 = vsub.s32 3, %v293
  %v295 = vrot.slane %v278, %v294
  %v296 = vlaneseq
  %v297 = vshrl.u32 %v296, 7
  %v298 = vsub.s32 4, %v297
  %v299 = vrot.slane %v278, %v298
  %v300 = vlaneseq
  %v301 = vshrl.u32 %v300, 7
  %v302 = vsub.s32 5, %v301
  %v303 = vrot.slane %v278, %v302
  %v304 = vlaneseq
  %v305 = vshrl.u32 %v304, 7
  %v306 = vsub.s32 6, %v305
  %v307 = vrot.slane %v278, %v306
  %v308 = vlaneseq
  %v309 = vshrl.u32 %v308, 7
  %v310 = vsub.s32 7, %v309
  %v311 = vrot.slane %v278, %v310
  %320 = vmatprep.subr.mxu0 %v23
  %321 = vmatpush1.msra.mxu0 %v22
  %322 = vmatprep.subr.mxu0 %v31
  %323 = vmatpush1.msra.mxu0 %v30
  %324 = vmatprep.subr.mxu0 %v39
  %325 = vmatpush1.msra.mxu0 %v38
  %326 = vmatprep.subr.mxu0 %v47
  %327 = vmatpush1.msra.mxu0 %v46
  %328 = vmatprep.subr.mxu0 %v55
  %329 = vmatpush1.msra.mxu0 %v54
  %330 = vmatprep.subr.mxu0 %v63
  %331 = vmatpush1.msra.mxu0 %v62
  %332 = vmatprep.subr.mxu0 %v71
  %333 = vmatpush1.msra.mxu0 %v70
  %334 = vmatprep.subr.mxu0 %v79
  %335 = vmatpush1.msra.mxu0 %v78
  %336 = vmatprep.subr.mxu0 %v87
  %337 = vmatpush1.msra.mxu0 %v86
  %338 = vmatprep.subr.mxu0 %v95
  %339 = vmatpush1.msra.mxu0 %v94
  %340 = vmatprep.subr.mxu0 %v103
  %341 = vmatpush1.msra.mxu0 %v102
  %342 = vmatprep.subr.mxu0 %v111
  %343 = vmatpush1.msra.mxu0 %v110
  %344 = vmatprep.subr.mxu0 %v119
  %345 = vmatpush1.msra.mxu0 %v118
  %346 = vmatprep.subr.mxu0 %v127
  %347 = vmatpush1.msra.mxu0 %v126
  %348 = vmatprep.subr.mxu0 %v135
  %349 = vmatpush1.msra.mxu0 %v134
  %350 = vmatprep.subr.mxu0 %v143
  %351 = vmatpush1.msra.mxu0 %v142
  %352 = vmatprep.subr.mxu0 %v151
  %353 = vmatpush1.msra.mxu0 %v150
  %354 = vmatprep.subr.mxu0 %v159
  %355 = vmatpush1.msra.mxu0 %v158
  %356 = vmatprep.subr.mxu0 %v167
  %357 = vmatpush1.msra.mxu0 %v166
  %358 = vmatprep.subr.mxu0 %v175
  %359 = vmatpush1.msra.mxu0 %v174
  %360 = vmatprep.subr.mxu0 %v183
  %361 = vmatpush1.msra.mxu0 %v182
  %362 = vmatprep.subr.mxu0 %v191
  %363 = vmatpush1.msra.mxu0 %v190
  %364 = vmatprep.subr.mxu0 %v199
  %365 = vmatpush1.msra.mxu0 %v198
  %366 = vmatprep.subr.mxu0 %v207
  %367 = vmatpush1.msra.mxu0 %v206
  %368 = vmatprep.subr.mxu0 %v215
  %369 = vmatpush1.msra.mxu0 %v214
  %370 = vmatprep.subr.mxu0 %v223
  %371 = vmatpush1.msra.mxu0 %v222
  %372 = vmatprep.subr.mxu0 %v231
  %373 = vmatpush1.msra.mxu0 %v230
  %374 = vmatprep.subr.mxu0 %v239
  %375 = vmatpush1.msra.mxu0 %v238
  %376 = vmatprep.subr.mxu0 %v247
  %377 = vmatpush1.msra.mxu0 %v246
  %378 = vmatprep.subr.mxu0 %v255
  %379 = vmatpush1.msra.mxu0 %v254
  %380 = vmatprep.subr.mxu0 %v263
  %381 = vmatpush1.msra.mxu0 %v262
  %382 = vmatprep.subr.mxu0 %v271
  %383 = vmatpush1.msra.mxu0 %v270
  %384 = vmatprep.mubr.f32.mxu0 %v15
  %385 = vmatmul.mubr.f32.gmra.mrb[0].mxu0 %v14
  %v386 = vpop.f32.mrb[0].mxu0
  %v387 = vadd.f32 %v283, %v386
  %v388 = vpop.f32.mrb[0].mxu0
  %v389 = vadd.f32 %v287, %v388
  %390 = vmatprep.mubr.f32.mxu0 %v17
  %391 = vmatmul.mubr.f32.gmra.mrb[0].mxu0 %v16
  %v392 = vpop.f32.mrb[0].mxu0
  %v393 = vadd.f32 %v283, %v392
  %v394 = vpop.f32.mrb[0].mxu0
  %v395 = vadd.f32 %v287, %v394
  %396 = vmatprep.mubr.f32.mxu0 %v19
  %397 = vmatmul.mubr.f32.gmra.mrb[0].mxu0 %v18
  %v398 = vpop.f32.mrb[0].mxu0
  %v399 = vadd.f32 %v283, %v398
  %v400 = vpop.f32.mrb[0].mxu0
  %v401 = vadd.f32 %v287, %v400
  %402 = vmatprep.mubr.f32.mxu0 %v21
  %403 = vmatmul.mubr.f32.gmra.mrb[0].mxu0 %v20
  %v404 = vpop.f32.mrb[0].mxu0
  %v405 = vadd.f32 %v283, %v404
  %v406 = vpop.f32.mrb[0].mxu0
  %v407 = vadd.f32 %v287, %v406
  %408 = vdwg.mxu0
  %409 = vmatprep.subr.mxu0 %v25
  %410 = vmatpush1.msra.mxu0 %v24
  %411 = vmatprep.subr.mxu0 %v33
  %412 = vmatpush1.msra.mxu0 %v32
  %413 = vmatprep.subr.mxu0 %v41
  %414 = vmatpush1.msra.mxu0 %v40
  %415 = vmatprep.subr.mxu0 %v49
  %416 = vmatpush1.msra.mxu0 %v48
  %417 = vmatprep.subr.mxu0 %v57
  %418 = vmatpush1.msra.mxu0 %v56
  %419 = vmatprep.subr.mxu0 %v65
  %420 = vmatpush1.msra.mxu0 %v64
  %421 = vmatprep.subr.mxu0 %v73
  %422 = vmatpush1.msra.mxu0 %v72
  %423 = vmatprep.subr.mxu0 %v81
  %424 = vmatpush1.msra.mxu0 %v80
  %425 = vmatprep.subr.mxu0 %v89
  %426 = vmatpush1.msra.mxu0 %v88
  %427 = vmatprep.subr.mxu0 %v97
  %428 = vmatpush1.msra.mxu0 %v96
  %429 = vmatprep.subr.mxu0 %v105
  %430 = vmatpush1.msra.mxu0 %v104
  %431 = vmatprep.subr.mxu0 %v113
  %432 = vmatpush1.msra.mxu0 %v112
  %433 = vmatprep.subr.mxu0 %v121
  %434 = vmatpush1.msra.mxu0 %v120
  %435 = vmatprep.subr.mxu0 %v129
  %436 = vmatpush1.msra.mxu0 %v128
  %437 = vmatprep.subr.mxu0 %v137
  %438 = vmatpush1.msra.mxu0 %v136
  %439 = vmatprep.subr.mxu0 %v145
  %440 = vmatpush1.msra.mxu0 %v144
  %441 = vmatprep.subr.mxu0 %v153
  %442 = vmatpush1.msra.mxu0 %v152
  %443 = vmatprep.subr.mxu0 %v161
  %444 = vmatpush1.msra.mxu0 %v160
  %445 = vmatprep.subr.mxu0 %v169
  %446 = vmatpush1.msra.mxu0 %v168
  %447 = vmatprep.subr.mxu0 %v177
  %448 = vmatpush1.msra.mxu0 %v176
  %449 = vmatprep.subr.mxu0 %v185
  %450 = vmatpush1.msra.mxu0 %v184
  %451 = vmatprep.subr.mxu0 %v193
  %452 = vmatpush1.msra.mxu0 %v192
  %453 = vmatprep.subr.mxu0 %v201
  %454 = vmatpush1.msra.mxu0 %v200
  %455 = vmatprep.subr.mxu0 %v209
  %456 = vmatpush1.msra.mxu0 %v208
  %457 = vmatprep.subr.mxu0 %v217
  %458 = vmatpush1.msra.mxu0 %v216
  %459 = vmatprep.subr.mxu0 %v225
  %460 = vmatpush1.msra.mxu0 %v224
  %461 = vmatprep.subr.mxu0 %v233
  %462 = vmatpush1.msra.mxu0 %v232
  %463 = vmatprep.subr.mxu0 %v241
  %464 = vmatpush1.msra.mxu0 %v240
  %465 = vmatprep.subr.mxu0 %v249
  %466 = vmatpush1.msra.mxu0 %v248
  %467 = vmatprep.subr.mxu0 %v257
  %468 = vmatpush1.msra.mxu0 %v256
  %469 = vmatprep.subr.mxu0 %v265
  %470 = vmatpush1.msra.mxu0 %v264
  %471 = vmatprep.subr.mxu0 %v273
  %472 = vmatpush1.msra.mxu0 %v272
  %473 = vmatprep.mubr.f32.mxu0 %v15
  %474 = vmatmul.mubr.f32.gmra.mrb[0].mxu0 %v14
  %v475 = vpop.f32.mrb[0].mxu0
  %v476 = vadd.f32 %v291, %v475
  %v477 = vpop.f32.mrb[0].mxu0
  %v478 = vadd.f32 %v295, %v477
  %479 = vmatprep.mubr.f32.mxu0 %v17
  %480 = vmatmul.mubr.f32.gmra.mrb[0].mxu0 %v16
  %v481 = vpop.f32.mrb[0].mxu0
  %v482 = vadd.f32 %v291, %v481
  %v483 = vpop.f32.mrb[0].mxu0
  %v484 = vadd.f32 %v295, %v483
  %485 = vmatprep.mubr.f32.mxu0 %v19
  %486 = vmatmul.mubr.f32.gmra.mrb[0].mxu0 %v18
  %v487 = vpop.f32.mrb[0].mxu0
  %v488 = vadd.f32 %v291, %v487
  %v489 = vpop.f32.mrb[0].mxu0
  %v490 = vadd.f32 %v295, %v489
  %491 = vmatprep.mubr.f32.mxu0 %v21
  %492 = vmatmul.mubr.f32.gmra.mrb[0].mxu0 %v20
  %v493 = vpop.f32.mrb[0].mxu0
  %v494 = vadd.f32 %v291, %v493
  %v495 = vpop.f32.mrb[0].mxu0
  %v496 = vadd.f32 %v295, %v495
  %497 = vdwg.mxu0
  %498 = vmatprep.subr.mxu0 %v27
  %499 = vmatpush1.msra.mxu0 %v26
  %500 = vmatprep.subr.mxu0 %v35
  %501 = vmatpush1.msra.mxu0 %v34
  %502 = vmatprep.subr.mxu0 %v43
  %503 = vmatpush1.msra.mxu0 %v42
  %504 = vmatprep.subr.mxu0 %v51
  %505 = vmatpush1.msra.mxu0 %v50
  %506 = vmatprep.subr.mxu0 %v59
  %507 = vmatpush1.msra.mxu0 %v58
  %508 = vmatprep.subr.mxu0 %v67
  %509 = vmatpush1.msra.mxu0 %v66
  %510 = vmatprep.subr.mxu0 %v75
  %511 = vmatpush1.msra.mxu0 %v74
  %512 = vmatprep.subr.mxu0 %v83
  %513 = vmatpush1.msra.mxu0 %v82
  %514 = vmatprep.subr.mxu0 %v91
  %515 = vmatpush1.msra.mxu0 %v90
  %516 = vmatprep.subr.mxu0 %v99
  %517 = vmatpush1.msra.mxu0 %v98
  %518 = vmatprep.subr.mxu0 %v107
  %519 = vmatpush1.msra.mxu0 %v106
  %520 = vmatprep.subr.mxu0 %v115
  %521 = vmatpush1.msra.mxu0 %v114
  %522 = vmatprep.subr.mxu0 %v123
  %523 = vmatpush1.msra.mxu0 %v122
  %524 = vmatprep.subr.mxu0 %v131
  %525 = vmatpush1.msra.mxu0 %v130
  %526 = vmatprep.subr.mxu0 %v139
  %527 = vmatpush1.msra.mxu0 %v138
  %528 = vmatprep.subr.mxu0 %v147
  %529 = vmatpush1.msra.mxu0 %v146
  %530 = vmatprep.subr.mxu0 %v155
  %531 = vmatpush1.msra.mxu0 %v154
  %532 = vmatprep.subr.mxu0 %v163
  %533 = vmatpush1.msra.mxu0 %v162
  %534 = vmatprep.subr.mxu0 %v171
  %535 = vmatpush1.msra.mxu0 %v170
  %536 = vmatprep.subr.mxu0 %v179
  %537 = vmatpush1.msra.mxu0 %v178
  %538 = vmatprep.subr.mxu0 %v187
  %539 = vmatpush1.msra.mxu0 %v186
  %540 = vmatprep.subr.mxu0 %v195
  %541 = vmatpush1.msra.mxu0 %v194
  %542 = vmatprep.subr.mxu0 %v203
  %543 = vmatpush1.msra.mxu0 %v202
  %544 = vmatprep.subr.mxu0 %v211
  %545 = vmatpush1.msra.mxu0 %v210
  %546 = vmatprep.subr.mxu0 %v219
  %547 = vmatpush1.msra.mxu0 %v218
  %548 = vmatprep.subr.mxu0 %v227
  %549 = vmatpush1.msra.mxu0 %v226
  %550 = vmatprep.subr.mxu0 %v235
  %551 = vmatpush1.msra.mxu0 %v234
  %552 = vmatprep.subr.mxu0 %v243
  %553 = vmatpush1.msra.mxu0 %v242
  %554 = vmatprep.subr.mxu0 %v251
  %555 = vmatpush1.msra.mxu0 %v250
  %556 = vmatprep.subr.mxu0 %v259
  %557 = vmatpush1.msra.mxu0 %v258
  %558 = vmatprep.subr.mxu0 %v267
  %559 = vmatpush1.msra.mxu0 %v266
  %560 = vmatprep.subr.mxu0 %v275
  %561 = vmatpush1.msra.mxu0 %v274
  %562 = vmatprep.mubr.f32.mxu0 %v15
  %563 = vmatmul.mubr.f32.gmra.mrb[0].mxu0 %v14
  %v564 = vpop.f32.mrb[0].mxu0
  %v565 = vadd.f32 %v299, %v564
  %v566 = vpop.f32.mrb[0].mxu0
  %v567 = vadd.f32 %v303, %v566
  %568 = vmatprep.mubr.f32.mxu0 %v17
  %569 = vmatmul.mubr.f32.gmra.mrb[0].mxu0 %v16
  %v570 = vpop.f32.mrb[0].mxu0
  %v571 = vadd.f32 %v299, %v570
  %v572 = vpop.f32.mrb[0].mxu0
  %v573 = vadd.f32 %v303, %v572
  %574 = vmatprep.mubr.f32.mxu0 %v19
  %575 = vmatmul.mubr.f32.gmra.mrb[0].mxu0 %v18
  %v576 = vpop.f32.mrb[0].mxu0
  %v577 = vadd.f32 %v299, %v576
  %v578 = vpop.f32.mrb[0].mxu0
  %v579 = vadd.f32 %v303, %v578
  %580 = vmatprep.mubr.f32.mxu0 %v21
  %581 = vmatmul.mubr.f32.gmra.mrb[0].mxu0 %v20
  %v582 = vpop.f32.mrb[0].mxu0
  %v583 = vadd.f32 %v299, %v582
  %v584 = vpop.f32.mrb[0].mxu0
  %v585 = vadd.f32 %v303, %v584
  %586 = vdwg.mxu0
  %587 = vmatprep.subr.mxu0 %v29
  %588 = vmatpush1.msra.mxu0 %v28
  %589 = vmatprep.subr.mxu0 %v37
  %590 = vmatpush1.msra.mxu0 %v36
  %591 = vmatprep.subr.mxu0 %v45
  %592 = vmatpush1.msra.mxu0 %v44
  %593 = vmatprep.subr.mxu0 %v53
  %594 = vmatpush1.msra.mxu0 %v52
  %595 = vmatprep.subr.mxu0 %v61
  %596 = vmatpush1.msra.mxu0 %v60
  %597 = vmatprep.subr.mxu0 %v69
  %598 = vmatpush1.msra.mxu0 %v68
  %599 = vmatprep.subr.mxu0 %v77
  %600 = vmatpush1.msra.mxu0 %v76
  %601 = vmatprep.subr.mxu0 %v85
  %602 = vmatpush1.msra.mxu0 %v84
  %603 = vmatprep.subr.mxu0 %v93
  %604 = vmatpush1.msra.mxu0 %v92
  %605 = vmatprep.subr.mxu0 %v101
  %606 = vmatpush1.msra.mxu0 %v100
  %607 = vmatprep.subr.mxu0 %v109
  %608 = vmatpush1.msra.mxu0 %v108
  %609 = vmatprep.subr.mxu0 %v117
  %610 = vmatpush1.msra.mxu0 %v116
  %611 = vmatprep.subr.mxu0 %v125
  %612 = vmatpush1.msra.mxu0 %v124
  %613 = vmatprep.subr.mxu0 %v133
  %614 = vmatpush1.msra.mxu0 %v132
  %615 = vmatprep.subr.mxu0 %v141
  %616 = vmatpush1.msra.mxu0 %v140
  %617 = vmatprep.subr.mxu0 %v149
  %618 = vmatpush1.msra.mxu0 %v148
  %619 = vmatprep.subr.mxu0 %v157
  %620 = vmatpush1.msra.mxu0 %v156
  %621 = vmatprep.subr.mxu0 %v165
  %622 = vmatpush1.msra.mxu0 %v164
  %623 = vmatprep.subr.mxu0 %v173
  %624 = vmatpush1.msra.mxu0 %v172
  %625 = vmatprep.subr.mxu0 %v181
  %626 = vmatpush1.msra.mxu0 %v180
  %627 = vmatprep.subr.mxu0 %v189
  %628 = vmatpush1.msra.mxu0 %v188
  %629 = vmatprep.subr.mxu0 %v197
  %630 = vmatpush1.msra.mxu0 %v196
  %631 = vmatprep.subr.mxu0 %v205
  %632 = vmatpush1.msra.mxu0 %v204
  %633 = vmatprep.subr.mxu0 %v213
  %634 = vmatpush1.msra.mxu0 %v212
  %635 = vmatprep.subr.mxu0 %v221
  %636 = vmatpush1.msra.mxu0 %v220
  %637 = vmatprep.subr.mxu0 %v229
  %638 = vmatpush1.msra.mxu0 %v228
  %639 = vmatprep.subr.mxu0 %v237
  %640 = vmatpush1.msra.mxu0 %v236
  %641 = vmatprep.subr.mxu0 %v245
  %642 = vmatpush1.msra.mxu0 %v244
  %643 = vmatprep.subr.mxu0 %v253
  %644 = vmatpush1.msra.mxu0 %v252
  %645 = vmatprep.subr.mxu0 %v261
  %646 = vmatpush1.msra.mxu0 %v260
  %647 = vmatprep.subr.mxu0 %v269
  %648 = vmatpush1.msra.mxu0 %v268
  %649 = vmatprep.subr.mxu0 %v277
  %650 = vmatpush1.msra.mxu0 %v276
  %651 = vmatprep.mubr.f32.mxu0 %v15
  %652 = vmatmul.mubr.f32.gmra.mrb[0].mxu0 %v14
  %v653 = vpop.f32.mrb[0].mxu0
  %v654 = vadd.f32 %v307, %v653
  %v655 = vpop.f32.mrb[0].mxu0
  %v656 = vadd.f32 %v311, %v655
  %657 = vmatprep.mubr.f32.mxu0 %v17
  %658 = vmatmul.mubr.f32.gmra.mrb[0].mxu0 %v16
  %v659 = vpop.f32.mrb[0].mxu0
  %v660 = vadd.f32 %v307, %v659
  %v661 = vpop.f32.mrb[0].mxu0
  %v662 = vadd.f32 %v311, %v661
  %663 = vmatprep.mubr.f32.mxu0 %v19
  %664 = vmatmul.mubr.f32.gmra.mrb[0].mxu0 %v18
  %v665 = vpop.f32.mrb[0].mxu0
  %v666 = vadd.f32 %v307, %v665
  %v667 = vpop.f32.mrb[0].mxu0
  %v668 = vadd.f32 %v311, %v667
  %669 = vmatprep.mubr.f32.mxu0 %v21
  %670 = vmatmul.mubr.f32.gmra.mrb[0].mxu0 %v20
  %v671 = vpop.f32.mrb[0].mxu0
  %v672 = vadd.f32 %v307, %v671
  %v673 = vpop.f32.mrb[0].mxu0
  %v674 = vadd.f32 %v311, %v673
  %675 = vdwg.mxu0
  %676 = vst [vmem:[%s3] sm:$0xff] %v387
  %677 = vst [vmem:[%s3 + $0x8] sm:$0xff] %v389
  %678 = vst [vmem:[%s3 + $0x10] sm:$0xff] %v476
  %679 = vst [vmem:[%s3 + $0x18] sm:$0xff] %v478
  %680 = vst [vmem:[%s3 + $0x20] sm:$0xff] %v565
  %681 = vst [vmem:[%s3 + $0x28] sm:$0xff] %v567
  %682 = vst [vmem:[%s3 + $0x30] sm:$0xff] %v654
  %683 = vst [vmem:[%s3 + $0x38] sm:$0xff] %v656
  %684 = vst [vmem:[%s3 + $0x40] sm:$0xff] %v393
  %685 = vst [vmem:[%s3 + $0x48] sm:$0xff] %v395
  %686 = vst [vmem:[%s3 + $0x50] sm:$0xff] %v482
  %687 = vst [vmem:[%s3 + $0x58] sm:$0xff] %v484
  %688 = vst [vmem:[%s3 + $0x60] sm:$0xff] %v571
  %689 = vst [vmem:[%s3 + $0x68] sm:$0xff] %v573
  %690 = vst [vmem:[%s3 + $0x70] sm:$0xff] %v660
  %691 = vst [vmem:[%s3 + $0x78] sm:$0xff] %v662
  %692 = vst [vmem:[%s3 + $0x80] sm:$0xff] %v399
  %693 = vst [vmem:[%s3 + $0x88] sm:$0xff] %v401
  %694 = vst [vmem:[%s3 + $0x90] sm:$0xff] %v488
  %695 = vst [vmem:[%s3 + $0x98] sm:$0xff] %v490
  %696 = vst [vmem:[%s3 + $0xa0] sm:$0xff] %v577
  %697 = vst [vmem:[%s3 + $0xa8] sm:$0xff] %v579
  %698 = vst [vmem:[%s3 + $0xb0] sm:$0xff] %v666
  %699 = vst [vmem:[%s3 + $0xb8] sm:$0xff] %v668
  %700 = vst [vmem:[%s3 + $0xc0] sm:$0xff] %v405
  %701 = vst [vmem:[%s3 + $0xc8] sm:$0xff] %v407
  %702 = vst [vmem:[%s3 + $0xd0] sm:$0xff] %v494
  %703 = vst [vmem:[%s3 + $0xd8] sm:$0xff] %v496
  %704 = vst [vmem:[%s3 + $0xe0] sm:$0xff] %v583
  %705 = vst [vmem:[%s3 + $0xe8] sm:$0xff] %v585
  %706 = vst [vmem:[%s3 + $0xf0] sm:$0xff] %v672
  %707 = vst [vmem:[%s3 + $0xf8] sm:$0xff] %v674
  // Predicated region
  $region14: #{_lambda_.7} parent=0 // pred_check
    _
  $region15: #{_lambda_.7} parent=0 // pred_check_branch
    %709 = sbr.rel (0) target = $region17
  $region16: #{_lambda_.7} parent=0 // pred_region
    _
  $region17: #{_lambda_.7} parent=0 // pred_fallthru
    _
  // Predicated region
  $region18: #{_lambda_.7} parent=0 // pred_check
    _
  $region19: #{_lambda_.7} parent=0 // pred_check_branch
    %711 = sbr.rel (0) target = $region21
  $region20: #{_lambda_.7} parent=0 // pred_region
    _
  $region21: #{_lambda_.7} parent=0 // pred_fallthru
    _

// kernel: _lambda_.9
$region0: #{_lambda_.9}
  #allocation0 [shape = 'u32[]', space=smem, size = 0x4, offset = 0x4, fixed_abs, tag = 'smem constant byte address 0x4 - core index']
  #allocation1 [shape = 'u32[144,128]{1,0:T(1,128)}', space=vmem, size = 0x12000, scoped, tag = 'internal scratch']
  %s0 = inlined_call_operand.vmem [shape: f32[32,256], index: 0, kind: input, shape index: {}]
  %s1 = inlined_call_operand.vmem [shape: f32[32,1], index: 1, kind: input, shape index: {}]
  %s2 = inlined_call_operand.vmem [shape: f32[256,128], index: 2, kind: input, shape index: {}]
  %s3 = inlined_call_operand.vmem [shape: f32[1,128], index: 3, kind: input, shape index: {}]
  %s4 = inlined_call_operand.vmem [shape: f32[32,128], index: 4, kind: output, shape index: {}]
  %s5 = sld [smem:[#allocation0]]
  $region26: #{_lambda_.9} parent=0
    _
  %s7 = ssub.s32 1, %s5
  %s8 = scalar_select 0, %s7, %s5
  // Predicated region
  $region2: #{_lambda_.9} parent=0 // pred_check
    _
  $region3: #{_lambda_.9} parent=0 // pred_check_branch
    %10 = sbr.rel (0) target = $region5
  $region4: #{_lambda_.9} parent=0 // pred_region
    _
  $region5: #{_lambda_.9} parent=0 // pred_fallthru
    _
  // Predicated region
  $region6: #{_lambda_.9} parent=0 // pred_check
    _
  $region7: #{_lambda_.9} parent=0 // pred_check_branch
    %12 = sbr.rel (0) target = $region9
  $region8: #{_lambda_.9} parent=0 // pred_region
    _
  $region9: #{_lambda_.9} parent=0 // pred_fallthru
    _
  // Predicated region
  $region10: #{_lambda_.9} parent=0 // pred_check
    _
  $region11: #{_lambda_.9} parent=0 // pred_check_branch
    %14 = sbr.rel (0) target = $region13
  $region12: #{_lambda_.9} parent=0 // pred_region
    _
  $region13: #{_lambda_.9} parent=0 // pred_fallthru
    _
  // Predicated region
  $region14: #{_lambda_.9} parent=0 // pred_check
    _
  $region15: #{_lambda_.9} parent=0 // pred_check_branch
    %16 = sbr.rel (0) target = $region17
  $region16: #{_lambda_.9} parent=0 // pred_region
    _
  $region17: #{_lambda_.9} parent=0 // pred_fallthru
    _
  %v17 = vld [vmem:[%s0] sm:$0xff]
  %v18 = vld [vmem:[%s0 + $0x8] sm:$0xff]
  %v19 = vld [vmem:[%s0 + $0x10] sm:$0xff]
  %v20 = vld [vmem:[%s0 + $0x18] sm:$0xff]
  %v21 = vld [vmem:[%s0 + $0x20] sm:$0xff]
  %v22 = vld [vmem:[%s0 + $0x28] sm:$0xff]
  %v23 = vld [vmem:[%s0 + $0x30] sm:$0xff]
  %v24 = vld [vmem:[%s0 + $0x38] sm:$0xff]
  %v25 = vld [vmem:[%s1] sm:$0xff]
  %v26 = vld [vmem:[%s1 + $0x8] sm:$0xff]
  %v27 = vld [vmem:[%s1 + $0x10] sm:$0xff]
  %v28 = vld [vmem:[%s1 + $0x18] sm:$0xff]
  %30 = vset.pattern.permute.xlu0 0
  %31 = vperm.xlu0 %30, %v25
  %v32 = vpop.permute.xlu0 %31
  %35 = vset.pattern.permute.xlu0 0
  %36 = vperm.xlu0 %35, %v26
  %v37 = vpop.permute.xlu0 %36
  %40 = vset.pattern.permute.xlu0 0
  %41 = vperm.xlu0 %40, %v27
  %v42 = vpop.permute.xlu0 %41
  %45 = vset.pattern.permute.xlu0 0
  %46 = vperm.xlu0 %45, %v28
  %v47 = vpop.permute.xlu0 %46
  %v49 = vmul.f32 %v17, %v32
  %v50 = vmul.f32 %v18, %v32
  %v51 = vmul.f32 %v19, %v37
  %v52 = vmul.f32 %v20, %v37
  %v53 = vmul.f32 %v21, %v42
  %v54 = vmul.f32 %v22, %v42
  %v55 = vmul.f32 %v23, %v47
  %v56 = vmul.f32 %v24, %v47
  %v57 = vld [vmem:[%s2] sm:$0xff]
  %v58 = vld [vmem:[%s2 + $0x8] sm:$0xff]
  %v59 = vld [vmem:[%s2 + $0x10] sm:$0xff]
  %v60 = vld [vmem:[%s2 + $0x18] sm:$0xff]
  %v61 = vld [vmem:[%s2 + $0x20] sm:$0xff]
  %v62 = vld [vmem:[%s2 + $0x28] sm:$0xff]
  %v63 = vld [vmem:[%s2 + $0x30] sm:$0xff]
  %v64 = vld [vmem:[%s2 + $0x38] sm:$0xff]
  %v65 = vld [vmem:[%s2 + $0x40] sm:$0xff]
  %v66 = vld [vmem:[%s2 + $0x48] sm:$0xff]
  %v67 = vld [vmem:[%s2 + $0x50] sm:$0xff]
  %v68 = vld [vmem:[%s2 + $0x58] sm:$0xff]
  %v69 = vld [vmem:[%s2 + $0x60] sm:$0xff]
  %v70 = vld [vmem:[%s2 + $0x68] sm:$0xff]
  %v71 = vld [vmem:[%s2 + $0x70] sm:$0xff]
  %v72 = vld [vmem:[%s2 + $0x78] sm:$0xff]
  %v73 = vld [vmem:[%s2 + $0x80] sm:$0xff]
  %v74 = vld [vmem:[%s2 + $0x88] sm:$0xff]
  %v75 = vld [vmem:[%s2 + $0x90] sm:$0xff]
  %v76 = vld [vmem:[%s2 + $0x98] sm:$0xff]
  %v77 = vld [vmem:[%s2 + $0xa0] sm:$0xff]
  %v78 = vld [vmem:[%s2 + $0xa8] sm:$0xff]
  %v79 = vld [vmem:[%s2 + $0xb0] sm:$0xff]
  %v80 = vld [vmem:[%s2 + $0xb8] sm:$0xff]
  %v81 = vld [vmem:[%s2 + $0xc0] sm:$0xff]
  %v82 = vld [vmem:[%s2 + $0xc8] sm:$0xff]
  %v83 = vld [vmem:[%s2 + $0xd0] sm:$0xff]
  %v84 = vld [vmem:[%s2 + $0xd8] sm:$0xff]
  %v85 = vld [vmem:[%s2 + $0xe0] sm:$0xff]
  %v86 = vld [vmem:[%s2 + $0xe8] sm:$0xff]
  %v87 = vld [vmem:[%s2 + $0xf0] sm:$0xff]
  %v88 = vld [vmem:[%s2 + $0xf8] sm:$0xff]
  %v89 = vld [vmem:[%s3] sm:$0x1]
  %v91 = vlaneseq
  %v92 = vshrl.u32 %v91, 7
  %v93 = vsub.s32 0, %v92
  %v94 = vrot.slane %v89, %v93
  %96 = vmatprep.subr.mxu0 0.0
  %97 = vmatpush1.msra.mxu0 %v57
  %98 = vmatprep.subr.mxu0 0.0
  %99 = vmatpush1.msra.mxu0 %v58
  %100 = vmatprep.subr.mxu0 0.0
  %101 = vmatpush1.msra.mxu0 %v59
  %102 = vmatprep.subr.mxu0 0.0
  %103 = vmatpush1.msra.mxu0 %v60
  %104 = vmatprep.subr.mxu0 0.0
  %105 = vmatpush1.msra.mxu0 %v61
  %106 = vmatprep.subr.mxu0 0.0
  %107 = vmatpush1.msra.mxu0 %v62
  %108 = vmatprep.subr.mxu0 0.0
  %109 = vmatpush1.msra.mxu0 %v63
  %110 = vmatprep.subr.mxu0 0.0
  %111 = vmatpush1.msra.mxu0 %v64
  %112 = vmatprep.subr.mxu0 0.0
  %113 = vmatpush1.msra.mxu0 %v65
  %114 = vmatprep.subr.mxu0 0.0
  %115 = vmatpush1.msra.mxu0 %v66
  %116 = vmatprep.subr.mxu0 0.0
  %117 = vmatpush1.msra.mxu0 %v67
  %118 = vmatprep.subr.mxu0 0.0
  %119 = vmatpush1.msra.mxu0 %v68
  %120 = vmatprep.subr.mxu0 0.0
  %121 = vmatpush1.msra.mxu0 %v69
  %122 = vmatprep.subr.mxu0 0.0
  %123 = vmatpush1.msra.mxu0 %v70
  %124 = vmatprep.subr.mxu0 0.0
  %125 = vmatpush1.msra.mxu0 %v71
  %126 = vmatprep.subr.mxu0 0.0
  %127 = vmatpush1.msra.mxu0 %v72
  %128 = vmatprep.subr.mxu0 0.0
  %129 = vmatpush1.msra.mxu0 %v73
  %130 = vmatprep.subr.mxu0 0.0
  %131 = vmatpush1.msra.mxu0 %v74
  %132 = vmatprep.subr.mxu0 0.0
  %133 = vmatpush1.msra.mxu0 %v75
  %134 = vmatprep.subr.mxu0 0.0
  %135 = vmatpush1.msra.mxu0 %v76
  %136 = vmatprep.subr.mxu0 0.0
  %137 = vmatpush1.msra.mxu0 %v77
  %138 = vmatprep.subr.mxu0 0.0
  %139 = vmatpush1.msra.mxu0 %v78
  %140 = vmatprep.subr.mxu0 0.0
  %141 = vmatpush1.msra.mxu0 %v79
  %142 = vmatprep.subr.mxu0 0.0
  %143 = vmatpush1.msra.mxu0 %v80
  %144 = vmatprep.subr.mxu0 0.0
  %145 = vmatpush1.msra.mxu0 %v81
  %146 = vmatprep.subr.mxu0 0.0
  %147 = vmatpush1.msra.mxu0 %v82
  %148 = vmatprep.subr.mxu0 0.0
  %149 = vmatpush1.msra.mxu0 %v83
  %150 = vmatprep.subr.mxu0 0.0
  %151 = vmatpush1.msra.mxu0 %v84
  %152 = vmatprep.subr.mxu0 0.0
  %153 = vmatpush1.msra.mxu0 %v85
  %154 = vmatprep.subr.mxu0 0.0
  %155 = vmatpush1.msra.mxu0 %v86
  %156 = vmatprep.subr.mxu0 0.0
  %157 = vmatpush1.msra.mxu0 %v87
  %158 = vmatprep.subr.mxu0 0.0
  %159 = vmatpush1.msra.mxu0 %v88
  %160 = vmatprep.mubr.f32.mxu0 %v50
  %161 = vmatmul.mubr.f32.gmra.mrb[0].mxu0 %v49
  %v162 = vpop.f32.mrb[0].mxu0
  %v163 = vadd.f32 %v94, %v162
  %v164 = vpop.f32.mrb[0].mxu0
  %165 = vmatprep.mubr.f32.mxu0 %v52
  %166 = vmatmul.mubr.f32.gmra.mrb[0].mxu0 %v51
  %v167 = vpop.f32.mrb[0].mxu0
  %v168 = vadd.f32 %v94, %v167
  %v169 = vpop.f32.mrb[0].mxu0
  %170 = vmatprep.mubr.f32.mxu0 %v54
  %171 = vmatmul.mubr.f32.gmra.mrb[0].mxu0 %v53
  %v172 = vpop.f32.mrb[0].mxu0
  %v173 = vadd.f32 %v94, %v172
  %v174 = vpop.f32.mrb[0].mxu0
  %175 = vmatprep.mubr.f32.mxu0 %v56
  %176 = vmatmul.mubr.f32.gmra.mrb[0].mxu0 %v55
  %v177 = vpop.f32.mrb[0].mxu0
  %v178 = vadd.f32 %v94, %v177
  %v179 = vpop.f32.mrb[0].mxu0
  %180 = vdwg.mxu0
  %181 = vst [vmem:[%s4] sm:$0xff] %v163
  %182 = vst [vmem:[%s4 + $0x8] sm:$0xff] %v168
  %183 = vst [vmem:[%s4 + $0x10] sm:$0xff] %v173
  %184 = vst [vmem:[%s4 + $0x18] sm:$0xff] %v178
  // Predicated region
  $region18: #{_lambda_.9} parent=0 // pred_check
    _
  $region19: #{_lambda_.9} parent=0 // pred_check_branch
    %186 = sbr.rel (0) target = $region21
  $region20: #{_lambda_.9} parent=0 // pred_region
    _
  $region21: #{_lambda_.9} parent=0 // pred_fallthru
    _
  // Predicated region
  $region22: #{_lambda_.9} parent=0 // pred_check
    _
  $region23: #{_lambda_.9} parent=0 // pred_check_branch
    %188 = sbr.rel (0) target = $region25
  $region24: #{_lambda_.9} parent=0 // pred_region
    _
  $region25: #{_lambda_.9} parent=0 // pred_fallthru
    _

// kernel: _lambda_.6
$region0: #{_lambda_.6}
  #allocation0 [shape = 'u32[]', space=smem, size = 0x4, offset = 0x4, fixed_abs, tag = 'smem constant byte address 0x4 - core index']
  #allocation1 [shape = 'u32[144,128]{1,0:T(1,128)}', space=vmem, size = 0x12000, scoped, tag = 'internal scratch']
  %s0 = inlined_call_operand.vmem [shape: f32[16,2,1024], index: 0, kind: input, shape index: {}]
  %s1 = inlined_call_operand.hbm [shape: f32[256,512], index: 1, kind: input, shape index: {}]
  %s2 = inlined_call_operand.vmem [shape: f32[16,2,256], index: 2, kind: output, shape index: {}]
  %s3 = sld [smem:[#allocation0]]
  $region22: #{_lambda_.6} parent=0
    _
  %s5 = ssub.s32 1, %s3
  %s6 = scalar_select 0, %s5, %s3
  $region1: #{_lambda_.6} parent=0
    #allocation2 [shape = 'u8[524288]{0}', space=vmem, size = 0x80000, scoped, tag = 'input window, operand 1, single buffered']
    #allocation3 [shape = 's32[1]{0}', space=sflag, size = 0x4, scoped, tag = 'scoped memory for _lambda_.6']
    %7 = vsyncpa [#allocation3], 0
    // Predicated region
    $region2: #{_lambda_.6} parent=1 // pred_check
      _
    $region3: #{_lambda_.6} parent=1 // pred_check_branch
      %9 = sbr.rel (0) target = $region5
    $region4: #{_lambda_.6} parent=1 // pred_region
      _
    $region5: #{_lambda_.6} parent=1 // pred_fallthru
      _
    // Predicated region
    $region6: #{_lambda_.6} parent=1 // pred_check
      _
    $region7: #{_lambda_.6} parent=1 // pred_check_branch
      %11 = sbr.rel (0) target = $region9
    $region8: #{_lambda_.6} parent=1 // pred_region
      %s13 = ssub.s32 16384, 16384
      %14 = vsyncadd [#allocation3], %s13
      %s15 = sshll.u32 [#allocation2], 4
      %s16 = int_to_ptr.vmem [resolvable:$true] %s15
      %21 = dma.hbm_to_vmem [thread:$0]  %s1, 16384, %s16, [#allocation3], 512, 512, 32
    $region9: #{_lambda_.6} parent=1 // pred_fallthru
      _
    // Predicated region
    $region10: #{_lambda_.6} parent=1 // pred_check
      _
    $region11: #{_lambda_.6} parent=1 // pred_check_branch
      %23 = sbr.rel (0) target = $region13
    $region12: #{_lambda_.6} parent=1 // pred_region
      %24 = dma.done [#allocation3], 16384
    $region13: #{_lambda_.6} parent=1 // pred_fallthru
      _
    %v25 = vld [vmem:[#allocation2] sm:$0xff]
    %v26 = vld [vmem:[#allocation2 + $0x8] sm:$0xff]
    %v27 = vld [vmem:[#allocation2 + $0x10] sm:$0xff]
    %v28 = vld [vmem:[#allocation2 + $0x18] sm:$0xff]
    %v29 = vld [vmem:[#allocation2 + $0x20] sm:$0xff]
    %v30 = vld [vmem:[#allocation2 + $0x28] sm:$0xff]
    %v31 = vld [vmem:[#allocation2 + $0x30] sm:$0xff]
    %v32 = vld [vmem:[#allocation2 + $0x38] sm:$0xff]
    %v33 = vld [vmem:[#allocation2 + $0x40] sm:$0xff]
    %v34 = vld [vmem:[#allocation2 + $0x48] sm:$0xff]
    %v35 = vld [vmem:[#allocation2 + $0x50] sm:$0xff]
    %v36 = vld [vmem:[#allocation2 + $0x58] sm:$0xff]
    %v37 = vld [vmem:[#allocation2 + $0x60] sm:$0xff]
    %v38 = vld [vmem:[#allocation2 + $0x68] sm:$0xff]
    %v39 = vld [vmem:[#allocation2 + $0x70] sm:$0xff]
    %v40 = vld [vmem:[#allocation2 + $0x78] sm:$0xff]
    %v41 = vld [vmem:[#allocation2 + $0x80] sm:$0xff]
    %v42 = vld [vmem:[#allocation2 + $0x88] sm:$0xff]
    %v43 = vld [vmem:[#allocation2 + $0x90] sm:$0xff]
    %v44 = vld [vmem:[#allocation2 + $0x98] sm:$0xff]
    %v45 = vld [vmem:[#allocation2 + $0xa0] sm:$0xff]
    %v46 = vld [vmem:[#allocation2 + $0xa8] sm:$0xff]
    %v47 = vld [vmem:[#allocation2 + $0xb0] sm:$0xff]
    %v48 = vld [vmem:[#allocation2 + $0xb8] sm:$0xff]
    %v49 = vld [vmem:[#allocation2 + $0xc0] sm:$0xff]
    %v50 = vld [vmem:[#allocation2 + $0xc8] sm:$0xff]
    %v51 = vld [vmem:[#allocation2 + $0xd0] sm:$0xff]
    %v52 = vld [vmem:[#allocation2 + $0xd8] sm:$0xff]
    %v53 = vld [vmem:[#allocation2 + $0xe0] sm:$0xff]
    %v54 = vld [vmem:[#allocation2 + $0xe8] sm:$0xff]
    %v55 = vld [vmem:[#allocation2 + $0xf0] sm:$0xff]
    %v56 = vld [vmem:[#allocation2 + $0xf8] sm:$0xff]
    %v57 = vld [vmem:[#allocation2 + $0x100] sm:$0xff]
    %v58 = vld [vmem:[#allocation2 + $0x108] sm:$0xff]
    %v59 = vld [vmem:[#allocation2 + $0x110] sm:$0xff]
    %v60 = vld [vmem:[#allocation2 + $0x118] sm:$0xff]
    %v61 = vld [vmem:[#allocation2 + $0x120] sm:$0xff]
    %v62 = vld [vmem:[#allocation2 + $0x128] sm:$0xff]
    %v63 = vld [vmem:[#allocation2 + $0x130] sm:$0xff]
    %v64 = vld [vmem:[#allocation2 + $0x138] sm:$0xff]
    %v65 = vld [vmem:[#allocation2 + $0x140] sm:$0xff]
    %v66 = vld [vmem:[#allocation2 + $0x148] sm:$0xff]
    %v67 = vld [vmem:[#allocation2 + $0x150] sm:$0xff]
    %v68 = vld [vmem:[#allocation2 + $0x158] sm:$0xff]
    %v69 = vld [vmem:[#allocation2 + $0x160] sm:$0xff]
    %v70 = vld [vmem:[#allocation2 + $0x168] sm:$0xff]
    %v71 = vld [vmem:[#allocation2 + $0x170] sm:$0xff]
    %v72 = vld [vmem:[#allocation2 + $0x178] sm:$0xff]
    %v73 = vld [vmem:[#allocation2 + $0x180] sm:$0xff]
    %v74 = vld [vmem:[#allocation2 + $0x188] sm:$0xff]
    %v75 = vld [vmem:[#allocation2 + $0x190] sm:$0xff]
    %v76 = vld [vmem:[#allocation2 + $0x198] sm:$0xff]
    %v77 = vld [vmem:[#allocation2 + $0x1a0] sm:$0xff]
    %v78 = vld [vmem:[#allocation2 + $0x1a8] sm:$0xff]
    %v79 = vld [vmem:[#allocation2 + $0x1b0] sm:$0xff]
    %v80 = vld [vmem:[#allocation2 + $0x1b8] sm:$0xff]
    %v81 = vld [vmem:[#allocation2 + $0x1c0] sm:$0xff]
    %v82 = vld [vmem:[#allocation2 + $0x1c8] sm:$0xff]
    %v83 = vld [vmem:[#allocation2 + $0x1d0] sm:$0xff]
    %v84 = vld [vmem:[#allocation2 + $0x1d8] sm:$0xff]
    %v85 = vld [vmem:[#allocation2 + $0x1e0] sm:$0xff]
    %v86 = vld [vmem:[#allocation2 + $0x1e8] sm:$0xff]
    %v87 = vld [vmem:[#allocation2 + $0x1f0] sm:$0xff]
    %v88 = vld [vmem:[#allocation2 + $0x1f8] sm:$0xff]
    %v89 = vld [vmem:[#allocation2 + $0x200] sm:$0xff]
    %v90 = vld [vmem:[#allocation2 + $0x208] sm:$0xff]
    %v91 = vld [vmem:[#allocation2 + $0x210] sm:$0xff]
    %v92 = vld [vmem:[#allocation2 + $0x218] sm:$0xff]
    %v93 = vld [vmem:[#allocation2 + $0x220] sm:$0xff]
    %v94 = vld [vmem:[#allocation2 + $0x228] sm:$0xff]
    %v95 = vld [vmem:[#allocation2 + $0x230] sm:$0xff]
    %v96 = vld [vmem:[#allocation2 + $0x238] sm:$0xff]
    %v97 = vld [vmem:[#allocation2 + $0x240] sm:$0xff]
    %v98 = vld [vmem:[#allocation2 + $0x248] sm:$0xff]
    %v99 = vld [vmem:[#allocation2 + $0x250] sm:$0xff]
    %v100 = vld [vmem:[#allocation2 + $0x258] sm:$0xff]
    %v101 = vld [vmem:[#allocation2 + $0x260] sm:$0xff]
    %v102 = vld [vmem:[#allocation2 + $0x268] sm:$0xff]
    %v103 = vld [vmem:[#allocation2 + $0x270] sm:$0xff]
    %v104 = vld [vmem:[#allocation2 + $0x278] sm:$0xff]
    %v105 = vld [vmem:[#allocation2 + $0x280] sm:$0xff]
    %v106 = vld [vmem:[#allocation2 + $0x288] sm:$0xff]
    %v107 = vld [vmem:[#allocation2 + $0x290] sm:$0xff]
    %v108 = vld [vmem:[#allocation2 + $0x298] sm:$0xff]
    %v109 = vld [vmem:[#allocation2 + $0x2a0] sm:$0xff]
    %v110 = vld [vmem:[#allocation2 + $0x2a8] sm:$0xff]
    %v111 = vld [vmem:[#allocation2 + $0x2b0] sm:$0xff]
    %v112 = vld [vmem:[#allocation2 + $0x2b8] sm:$0xff]
    %v113 = vld [vmem:[#allocation2 + $0x2c0] sm:$0xff]
    %v114 = vld [vmem:[#allocation2 + $0x2c8] sm:$0xff]
    %v115 = vld [vmem:[#allocation2 + $0x2d0] sm:$0xff]
    %v116 = vld [vmem:[#allocation2 + $0x2d8] sm:$0xff]
    %v117 = vld [vmem:[#allocation2 + $0x2e0] sm:$0xff]
    %v118 = vld [vmem:[#allocation2 + $0x2e8] sm:$0xff]
    %v119 = vld [vmem:[#allocation2 + $0x2f0] sm:$0xff]
    %v120 = vld [vmem:[#allocation2 + $0x2f8] sm:$0xff]
    %v121 = vld [vmem:[#allocation2 + $0x300] sm:$0xff]
    %v122 = vld [vmem:[#allocation2 + $0x308] sm:$0xff]
    %v123 = vld [vmem:[#allocation2 + $0x310] sm:$0xff]
    %v124 = vld [vmem:[#allocation2 + $0x318] sm:$0xff]
    %v125 = vld [vmem:[#allocation2 + $0x320] sm:$0xff]
    %v126 = vld [vmem:[#allocation2 + $0x328] sm:$0xff]
    %v127 = vld [vmem:[#allocation2 + $0x330] sm:$0xff]
    %v128 = vld [vmem:[#allocation2 + $0x338] sm:$0xff]
    %v129 = vld [vmem:[#allocation2 + $0x340] sm:$0xff]
    %v130 = vld [vmem:[#allocation2 + $0x348] sm:$0xff]
    %v131 = vld [vmem:[#allocation2 + $0x350] sm:$0xff]
    %v132 = vld [vmem:[#allocation2 + $0x358] sm:$0xff]
    %v133 = vld [vmem:[#allocation2 + $0x360] sm:$0xff]
    %v134 = vld [vmem:[#allocation2 + $0x368] sm:$0xff]
    %v135 = vld [vmem:[#allocation2 + $0x370] sm:$0xff]
    %v136 = vld [vmem:[#allocation2 + $0x378] sm:$0xff]
    %v137 = vld [vmem:[#allocation2 + $0x380] sm:$0xff]
    %v138 = vld [vmem:[#allocation2 + $0x388] sm:$0xff]
    %v139 = vld [vmem:[#allocation2 + $0x390] sm:$0xff]
    %v140 = vld [vmem:[#allocation2 + $0x398] sm:$0xff]
    %v141 = vld [vmem:[#allocation2 + $0x3a0] sm:$0xff]
    %v142 = vld [vmem:[#allocation2 + $0x3a8] sm:$0xff]
    %v143 = vld [vmem:[#allocation2 + $0x3b0] sm:$0xff]
    %v144 = vld [vmem:[#allocation2 + $0x3b8] sm:$0xff]
    %v145 = vld [vmem:[#allocation2 + $0x3c0] sm:$0xff]
    %v146 = vld [vmem:[#allocation2 + $0x3c8] sm:$0xff]
    %v147 = vld [vmem:[#allocation2 + $0x3d0] sm:$0xff]
    %v148 = vld [vmem:[#allocation2 + $0x3d8] sm:$0xff]
    %v149 = vld [vmem:[#allocation2 + $0x3e0] sm:$0xff]
    %v150 = vld [vmem:[#allocation2 + $0x3e8] sm:$0xff]
    %v151 = vld [vmem:[#allocation2 + $0x3f0] sm:$0xff]
    %v152 = vld [vmem:[#allocation2 + $0x3f8] sm:$0xff]
    %v153 = vlaneseq
    %v154 = vshrl.u32 %v153, 7
    %v155 = vlaneseq
    %v156 = vand.u32 %v155, 127
    %v157 = vadd.s32 %v156, 128
    %vm158 = vcmp.lt.s32.totalorder %v154, 2
    %vm159 = vcmp.lt.s32.totalorder %v156, 128
    %vm160 = vcmp.lt.s32.totalorder %v157, 128
    %vm161 = vmxor %vm158, %vm159
    %vm162 = vmxor %vm158, %vm160
    %vm163 = vmxor %vm161, 1
    %vm164 = vmxor %vm162, 1
    %v165 = vsel %vm163, 1.0, 0.0
    %v166 = vsel %vm164, 1.0, 0.0
    %v167 = vld [vmem:[%s0] sm:$0xff]
    %s168 = scalar_lea.vmem %s0, 240
    %v169 = vld [vmem:[%s168 + $0x8] sm:$0xff]
    %v171 = vcombine.high %v167, %v167
    %v173 = vunpack.c.l.s4 1983009808
    %v174 = vunpack.c.0.s8 %v173
    %v175 = vlaneseq
    %v176 = vshrl.u32 %v175, 7
    %v177 = vsub.s32 %v174, %v176
    %v178 = vrot.slane %v167, %v177
    %v180 = vunpack.c.l.s4 1983009808
    %v181 = vunpack.c.0.s8 %v180
    %v182 = vlaneseq
    %v183 = vshrl.u32 %v182, 7
    %v184 = vsub.s32 %v181, %v183
    %v185 = vrot.slane %v171, %v184
    %v186 = vcombine.high %v178, %v178
    %v187 = vcombine.high %v185, %v185
    %v193 = vcombine.low %v169, %v169
    %v195 = vunpack.c.l.s4 1983009808
    %v196 = vunpack.c.0.s8 %v195
    %v197 = vlaneseq
    %v198 = vshrl.u32 %v197, 7
    %v199 = vsub.s32 %v196, %v198
    %v200 = vrot.slane %v193, %v199
    %v202 = vunpack.c.l.s4 1983009808
    %v203 = vunpack.c.0.s8 %v202
    %v204 = vlaneseq
    %v205 = vshrl.u32 %v204, 7
    %v206 = vsub.s32 %v203, %v205
    %v207 = vrot.slane %v169, %v206
    %v208 = vcombine.high %v200, %v200
    %v209 = vcombine.high %v207, %v207
    %vm214 = vcmask 1041408
    %v215 = vsel %vm214, %v178, %v200
    %v216 = vsel %vm214, %v186, %v208
    %v217 = vsel %vm214, %v185, %v207
    %v218 = vsel %vm214, %v187, %v209
    %219 = vmatprep.subr.mxu0 %v26
    %220 = vmatpush1.msra.mxu0 %v25
    %221 = vmatprep.subr.mxu0 %v30
    %222 = vmatpush1.msra.mxu0 %v29
    %223 = vmatprep.subr.mxu0 %v34
    %224 = vmatpush1.msra.mxu0 %v33
    %225 = vmatprep.subr.mxu0 %v38
    %226 = vmatpush1.msra.mxu0 %v37
    %227 = vmatprep.subr.mxu0 %v42
    %228 = vmatpush1.msra.mxu0 %v41
    %229 = vmatprep.subr.mxu0 %v46
    %230 = vmatpush1.msra.mxu0 %v45
    %231 = vmatprep.subr.mxu0 %v50
    %232 = vmatpush1.msra.mxu0 %v49
    %233 = vmatprep.subr.mxu0 %v54
    %234 = vmatpush1.msra.mxu0 %v53
    %235 = vmatprep.subr.mxu0 %v58
    %236 = vmatpush1.msra.mxu0 %v57
    %237 = vmatprep.subr.mxu0 %v62
    %238 = vmatpush1.msra.mxu0 %v61
    %239 = vmatprep.subr.mxu0 %v66
    %240 = vmatpush1.msra.mxu0 %v65
    %241 = vmatprep.subr.mxu0 %v70
    %242 = vmatpush1.msra.mxu0 %v69
    %243 = vmatprep.subr.mxu0 %v74
    %244 = vmatpush1.msra.mxu0 %v73
    %245 = vmatprep.subr.mxu0 %v78
    %246 = vmatpush1.msra.mxu0 %v77
    %247 = vmatprep.subr.mxu0 %v82
    %248 = vmatpush1.msra.mxu0 %v81
    %249 = vmatprep.subr.mxu0 %v86
    %250 = vmatpush1.msra.mxu0 %v85
    %251 = vmatprep.subr.mxu0 %v90
    %252 = vmatpush1.msra.mxu0 %v89
    %253 = vmatprep.subr.mxu0 %v94
    %254 = vmatpush1.msra.mxu0 %v93
    %255 = vmatprep.subr.mxu0 %v98
    %256 = vmatpush1.msra.mxu0 %v97
    %257 = vmatprep.subr.mxu0 %v102
    %258 = vmatpush1.msra.mxu0 %v101
    %259 = vmatprep.subr.mxu0 %v106
    %260 = vmatpush1.msra.mxu0 %v105
    %261 = vmatprep.subr.mxu0 %v110
    %262 = vmatpush1.msra.mxu0 %v109
    %263 = vmatprep.subr.mxu0 %v114
    %264 = vmatpush1.msra.mxu0 %v113
    %265 = vmatprep.subr.mxu0 %v118
    %266 = vmatpush1.msra.mxu0 %v117
    %267 = vmatprep.subr.mxu0 %v122
    %268 = vmatpush1.msra.mxu0 %v121
    %269 = vmatprep.subr.mxu0 %v126
    %270 = vmatpush1.msra.mxu0 %v125
    %271 = vmatprep.subr.mxu0 %v130
    %272 = vmatpush1.msra.mxu0 %v129
    %273 = vmatprep.subr.mxu0 %v134
    %274 = vmatpush1.msra.mxu0 %v133
    %275 = vmatprep.subr.mxu0 %v138
    %276 = vmatpush1.msra.mxu0 %v137
    %277 = vmatprep.subr.mxu0 %v142
    %278 = vmatpush1.msra.mxu0 %v141
    %279 = vmatprep.subr.mxu0 %v146
    %280 = vmatpush1.msra.mxu0 %v145
    %281 = vmatprep.subr.mxu0 %v150
    %282 = vmatpush1.msra.mxu0 %v149
    %283 = vmatprep.mubr.f32.mxu0 0.0
    %284 = vmatmul.mubr.f32.gmra.mrb[0].mxu0 0.0
    %v285 = vpop.f32.mrb[0].mxu0
    %v286 = vadd.f32 0.0, %v285
    %v287 = vpop.f32.mrb[0].mxu0
    %v288 = vadd.f32 0.0, %v287
    %289 = vdwg.mxu0
    %290 = vmatprep.subr.mxu0 %v28
    %291 = vmatpush1.msra.mxu0 %v27
    %292 = vmatprep.subr.mxu0 %v32
    %293 = vmatpush1.msra.mxu0 %v31
    %294 = vmatprep.subr.mxu0 %v36
    %295 = vmatpush1.msra.mxu0 %v35
    %296 = vmatprep.subr.mxu0 %v40
    %297 = vmatpush1.msra.mxu0 %v39
    %298 = vmatprep.subr.mxu0 %v44
    %299 = vmatpush1.msra.mxu0 %v43
    %300 = vmatprep.subr.mxu0 %v48
    %301 = vmatpush1.msra.mxu0 %v47
    %302 = vmatprep.subr.mxu0 %v52
    %303 = vmatpush1.msra.mxu0 %v51
    %304 = vmatprep.subr.mxu0 %v56
    %305 = vmatpush1.msra.mxu0 %v55
    %306 = vmatprep.subr.mxu0 %v60
    %307 = vmatpush1.msra.mxu0 %v59
    %308 = vmatprep.subr.mxu0 %v64
    %309 = vmatpush1.msra.mxu0 %v63
    %310 = vmatprep.subr.mxu0 %v68
    %311 = vmatpush1.msra.mxu0 %v67
    %312 = vmatprep.subr.mxu0 %v72
    %313 = vmatpush1.msra.mxu0 %v71
    %314 = vmatprep.subr.mxu0 %v76
    %315 = vmatpush1.msra.mxu0 %v75
    %316 = vmatprep.subr.mxu0 %v80
    %317 = vmatpush1.msra.mxu0 %v79
    %318 = vmatprep.subr.mxu0 %v84
    %319 = vmatpush1.msra.mxu0 %v83
    %320 = vmatprep.subr.mxu0 %v88
    %321 = vmatpush1.msra.mxu0 %v87
    %322 = vmatprep.subr.mxu0 %v92
    %323 = vmatpush1.msra.mxu0 %v91
    %324 = vmatprep.subr.mxu0 %v96
    %325 = vmatpush1.msra.mxu0 %v95
    %326 = vmatprep.subr.mxu0 %v100
    %327 = vmatpush1.msra.mxu0 %v99
    %328 = vmatprep.subr.mxu0 %v104
    %329 = vmatpush1.msra.mxu0 %v103
    %330 = vmatprep.subr.mxu0 %v108
    %331 = vmatpush1.msra.mxu0 %v107
    %332 = vmatprep.subr.mxu0 %v112
    %333 = vmatpush1.msra.mxu0 %v111
    %334 = vmatprep.subr.mxu0 %v116
    %335 = vmatpush1.msra.mxu0 %v115
    %336 = vmatprep.subr.mxu0 %v120
    %337 = vmatpush1.msra.mxu0 %v119
    %338 = vmatprep.subr.mxu0 %v124
    %339 = vmatpush1.msra.mxu0 %v123
    %340 = vmatprep.subr.mxu0 %v128
    %341 = vmatpush1.msra.mxu0 %v127
    %342 = vmatprep.subr.mxu0 %v132
    %343 = vmatpush1.msra.mxu0 %v131
    %344 = vmatprep.subr.mxu0 %v136
    %345 = vmatpush1.msra.mxu0 %v135
    %346 = vmatprep.subr.mxu0 %v140
    %347 = vmatpush1.msra.mxu0 %v139
    %348 = vmatprep.subr.mxu0 %v144
    %349 = vmatpush1.msra.mxu0 %v143
    %350 = vmatprep.subr.mxu0 %v148
    %351 = vmatpush1.msra.mxu0 %v147
    %352 = vmatprep.subr.mxu0 %v152
    %353 = vmatpush1.msra.mxu0 %v151
    %354 = vmatprep.mubr.f32.mxu0 0.0
    %355 = vmatmul.mubr.f32.gmra.mrb[0].mxu0 0.0
    %v356 = vpop.f32.mrb[0].mxu0
    %v357 = vadd.f32 0.0, %v356
    %v358 = vpop.f32.mrb[0].mxu0
    %v359 = vadd.f32 0.0, %v358
    %360 = vdwg.mxu0
    %v361 = vadd.f32 %v215, %v286
    %v362 = vadd.f32 %v216, %v288
    %v363 = vadd.f32 %v217, %v357
    %v364 = vadd.f32 %v218, %v359
    %v365 = vxor.u32 %v361, 2147483648
    %v366 = vmul.f32 %v365, 1.442695
    %v367 = vpow.pop %v366
    %v368 = vadd.f32 %v367, 1.0
    %v369 = vrcp.pop %v368
    %v370 = vmul.f32 1.0, %v369
    %v371 = vxor.u32 %v362, 2147483648
    %v372 = vmul.f32 %v371, 1.442695
    %v373 = vpow.pop %v372
    %v374 = vadd.f32 %v373, 1.0
    %v375 = vrcp.pop %v374
    %v376 = vmul.f32 1.0, %v375
    %v377 = vtanh.pop %v363
    %v378 = vxor.u32 %v364, 2147483648
    %v379 = vmul.f32 %v378, 1.442695
    %v380 = vpow.pop %v379
    %v381 = vadd.f32 %v380, 1.0
    %v382 = vrcp.pop %v381
    %v383 = vmul.f32 1.0, %v382
    %v384 = vmul.f32 %v376, 0.0
    %v385 = vmul.f32 %v370, %v377
    %v386 = vadd.f32 %v384, %v385
    %v387 = vtanh.pop %v386
    %v388 = vmul.f32 %v383, %v387
    %389 = vst [vmem:[%s2] sm:$0x3] %v388
    %v392 = vunpack.c.l.s4 1983009808
    %v393 = vunpack.c.0.s8 %v392
    %v394 = vlaneseq
    %v395 = vshrl.u32 %v394, 7
    %v396 = vsub.s32 %v393, %v395
    %v397 = vrot.slane %v388, %v396
    %v398 = vcombine.high %v397, %v397
    %s400 = scalar_lea.vmem %s2, 60
    %401 = vst [vmem:[%s400 + $0x2] sm:$0x3] %v398
    %v402 = vmul.f32 %v388, %v165
    %v403 = vmul.f32 %v388, %v166
    %s404 = scalar_lea.vmem %s0, 16
    %v405 = vld [vmem:[%s404] sm:$0xff]
    %s406 = scalar_lea.vmem %s0, 224
    %v407 = vld [vmem:[%s406 + $0x8] sm:$0xff]
    %v409 = vcombine.high %v405, %v405
    %v411 = vunpack.c.l.s4 1983009808
    %v412 = vunpack.c.0.s8 %v411
    %v413 = vlaneseq
    %v414 = vshrl.u32 %v413, 7
    %v415 = vsub.s32 %v412, %v414
    %v416 = vrot.slane %v405, %v415
    %v418 = vunpack.c.l.s4 1983009808
    %v419 = vunpack.c.0.s8 %v418
    %v420 = vlaneseq
    %v421 = vshrl.u32 %v420, 7
    %v422 = vsub.s32 %v419, %v421
    %v423 = vrot.slane %v409, %v422
    %v424 = vcombine.high %v416, %v416
    %v425 = vcombine.high %v423, %v423
    %v431 = vcombine.low %v407, %v407
    %v433 = vunpack.c.l.s4 1983009808
    %v434 = vunpack.c.0.s8 %v433
    %v435 = vlaneseq
    %v436 = vshrl.u32 %v435, 7
    %v437 = vsub.s32 %v434, %v436
    %v438 = vrot.slane %v431, %v437
    %v440 = vunpack.c.l.s4 1983009808
    %v441 = vunpack.c.0.s8 %v440
    %v442 = vlaneseq
    %v443 = vshrl.u32 %v442, 7
    %v444 = vsub.s32 %v441, %v443
    %v445 = vrot.slane %v407, %v444
    %v446 = vcombine.high %v438, %v438
    %v447 = vcombine.high %v445, %v445
    %v452 = vsel %vm214, %v416, %v438
    %v453 = vsel %vm214, %v424, %v446
    %v454 = vsel %vm214, %v423, %v445
    %v455 = vsel %vm214, %v425, %v447
    %456 = vmatprep.subr.mxu0 %v26
    %457 = vmatpush1.msra.mxu0 %v25
    %458 = vmatprep.subr.mxu0 %v30
    %459 = vmatpush1.msra.mxu0 %v29
    %460 = vmatprep.subr.mxu0 %v34
    %461 = vmatpush1.msra.mxu0 %v33
    %462 = vmatprep.subr.mxu0 %v38
    %463 = vmatpush1.msra.mxu0 %v37
    %464 = vmatprep.subr.mxu0 %v42
    %465 = vmatpush1.msra.mxu0 %v41
    %466 = vmatprep.subr.mxu0 %v46
    %467 = vmatpush1.msra.mxu0 %v45
    %468 = vmatprep.subr.mxu0 %v50
    %469 = vmatpush1.msra.mxu0 %v49
    %470 = vmatprep.subr.mxu0 %v54
    %471 = vmatpush1.msra.mxu0 %v53
    %472 = vmatprep.subr.mxu0 %v58
    %473 = vmatpush1.msra.mxu0 %v57
    %474 = vmatprep.subr.mxu0 %v62
    %475 = vmatpush1.msra.mxu0 %v61
    %476 = vmatprep.subr.mxu0 %v66
    %477 = vmatpush1.msra.mxu0 %v65
    %478 = vmatprep.subr.mxu0 %v70
    %479 = vmatpush1.msra.mxu0 %v69
    %480 = vmatprep.subr.mxu0 %v74
    %481 = vmatpush1.msra.mxu0 %v73
    %482 = vmatprep.subr.mxu0 %v78
    %483 = vmatpush1.msra.mxu0 %v77
    %484 = vmatprep.subr.mxu0 %v82
    %485 = vmatpush1.msra.mxu0 %v81
    %486 = vmatprep.subr.mxu0 %v86
    %487 = vmatpush1.msra.mxu0 %v85
    %488 = vmatprep.subr.mxu0 %v90
    %489 = vmatpush1.msra.mxu0 %v89
    %490 = vmatprep.subr.mxu0 %v94
    %491 = vmatpush1.msra.mxu0 %v93
    %492 = vmatprep.subr.mxu0 %v98
    %493 = vmatpush1.msra.mxu0 %v97
    %494 = vmatprep.subr.mxu0 %v102
    %495 = vmatpush1.msra.mxu0 %v101
    %496 = vmatprep.subr.mxu0 %v106
    %497 = vmatpush1.msra.mxu0 %v105
    %498 = vmatprep.subr.mxu0 %v110
    %499 = vmatpush1.msra.mxu0 %v109
    %500 = vmatprep.subr.mxu0 %v114
    %501 = vmatpush1.msra.mxu0 %v113
    %502 = vmatprep.subr.mxu0 %v118
    %503 = vmatpush1.msra.mxu0 %v117
    %504 = vmatprep.subr.mxu0 %v122
    %505 = vmatpush1.msra.mxu0 %v121
    %506 = vmatprep.subr.mxu0 %v126
    %507 = vmatpush1.msra.mxu0 %v125
    %508 = vmatprep.subr.mxu0 %v130
    %509 = vmatpush1.msra.mxu0 %v129
    %510 = vmatprep.subr.mxu0 %v134
    %511 = vmatpush1.msra.mxu0 %v133
    %512 = vmatprep.subr.mxu0 %v138
    %513 = vmatpush1.msra.mxu0 %v137
    %514 = vmatprep.subr.mxu0 %v142
    %515 = vmatpush1.msra.mxu0 %v141
    %516 = vmatprep.subr.mxu0 %v146
    %517 = vmatpush1.msra.mxu0 %v145
    %518 = vmatprep.subr.mxu0 %v150
    %519 = vmatpush1.msra.mxu0 %v149
    %520 = vmatprep.mubr.f32.mxu0 %v403
    %521 = vmatmul.mubr.f32.gmra.mrb[0].mxu0 %v402
    %v522 = vpop.f32.mrb[0].mxu0
    %v523 = vadd.f32 0.0, %v522
    %v524 = vpop.f32.mrb[0].mxu0
    %v525 = vadd.f32 0.0, %v524
    %526 = vdwg.mxu0
    %527 = vmatprep.subr.mxu0 %v28
    %528 = vmatpush1.msra.mxu0 %v27
    %529 = vmatprep.subr.mxu0 %v32
    %530 = vmatpush1.msra.mxu0 %v31
    %531 = vmatprep.subr.mxu0 %v36
    %532 = vmatpush1.msra.mxu0 %v35
    %533 = vmatprep.subr.mxu0 %v40
    %534 = vmatpush1.msra.mxu0 %v39
    %535 = vmatprep.subr.mxu0 %v44
    %536 = vmatpush1.msra.mxu0 %v43
    %537 = vmatprep.subr.mxu0 %v48
    %538 = vmatpush1.msra.mxu0 %v47
    %539 = vmatprep.subr.mxu0 %v52
    %540 = vmatpush1.msra.mxu0 %v51
    %541 = vmatprep.subr.mxu0 %v56
    %542 = vmatpush1.msra.mxu0 %v55
    %543 = vmatprep.subr.mxu0 %v60
    %544 = vmatpush1.msra.mxu0 %v59
    %545 = vmatprep.subr.mxu0 %v64
    %546 = vmatpush1.msra.mxu0 %v63
    %547 = vmatprep.subr.mxu0 %v68
    %548 = vmatpush1.msra.mxu0 %v67
    %549 = vmatprep.subr.mxu0 %v72
    %550 = vmatpush1.msra.mxu0 %v71
    %551 = vmatprep.subr.mxu0 %v76
    %552 = vmatpush1.msra.mxu0 %v75
    %553 = vmatprep.subr.mxu0 %v80
    %554 = vmatpush1.msra.mxu0 %v79
    %555 = vmatprep.subr.mxu0 %v84
    %556 = vmatpush1.msra.mxu0 %v83
    %557 = vmatprep.subr.mxu0 %v88
    %558 = vmatpush1.msra.mxu0 %v87
    %559 = vmatprep.subr.mxu0 %v92
    %560 = vmatpush1.msra.mxu0 %v91
    %561 = vmatprep.subr.mxu0 %v96
    %562 = vmatpush1.msra.mxu0 %v95
    %563 = vmatprep.subr.mxu0 %v100
    %564 = vmatpush1.msra.mxu0 %v99
    %565 = vmatprep.subr.mxu0 %v104
    %566 = vmatpush1.msra.mxu0 %v103
    %567 = vmatprep.subr.mxu0 %v108
    %568 = vmatpush1.msra.mxu0 %v107
    %569 = vmatprep.subr.mxu0 %v112
    %570 = vmatpush1.msra.mxu0 %v111
    %571 = vmatprep.subr.mxu0 %v116
    %572 = vmatpush1.msra.mxu0 %v115
    %573 = vmatprep.subr.mxu0 %v120
    %574 = vmatpush1.msra.mxu0 %v119
    %575 = vmatprep.subr.mxu0 %v124
    %576 = vmatpush1.msra.mxu0 %v123
    %577 = vmatprep.subr.mxu0 %v128
    %578 = vmatpush1.msra.mxu0 %v127
    %579 = vmatprep.subr.mxu0 %v132
    %580 = vmatpush1.msra.mxu0 %v131
    %581 = vmatprep.subr.mxu0 %v136
    %582 = vmatpush1.msra.mxu0 %v135
    %583 = vmatprep.subr.mxu0 %v140
    %584 = vmatpush1.msra.mxu0 %v139
    %585 = vmatprep.subr.mxu0 %v144
    %586 = vmatpush1.msra.mxu0 %v143
    %587 = vmatprep.subr.mxu0 %v148
    %588 = vmatpush1.msra.mxu0 %v147
    %589 = vmatprep.subr.mxu0 %v152
    %590 = vmatpush1.msra.mxu0 %v151
    %591 = vmatprep.mubr.f32.mxu0 %v403
    %592 = vmatmul.mubr.f32.gmra.mrb[0].mxu0 %v402
    %v593 = vpop.f32.mrb[0].mxu0
    %v594 = vadd.f32 0.0, %v593
    %v595 = vpop.f32.mrb[0].mxu0
    %v596 = vadd.f32 0.0, %v595
    %597 = vdwg.mxu0
    %v598 = vadd.f32 %v452, %v523
    %v599 = vadd.f32 %v453, %v525
    %v600 = vadd.f32 %v454, %v594
    %v601 = vadd.f32 %v455, %v596
    %v602 = vxor.u32 %v598, 2147483648
    %v603 = vmul.f32 %v602, 1.442695
    %v604 = vpow.pop %v603
    %v605 = vadd.f32 %v604, 1.0
    %v606 = vrcp.pop %v605
    %v607 = vmul.f32 1.0, %v606
    %v608 = vxor.u32 %v599, 2147483648
    %v609 = vmul.f32 %v608, 1.442695
    %v610 = vpow.pop %v609
    %v611 = vadd.f32 %v610, 1.0
    %v612 = vrcp.pop %v611
    %v613 = vmul.f32 1.0, %v612
    %v614 = vtanh.pop %v600
    %v615 = vxor.u32 %v601, 2147483648
    %v616 = vmul.f32 %v615, 1.442695
    %v617 = vpow.pop %v616
    %v618 = vadd.f32 %v617, 1.0
    %v619 = vrcp.pop %v618
    %v620 = vmul.f32 1.0, %v619
    %v621 = vmul.f32 %v613, %v386
    %v622 = vmul.f32 %v607, %v614
    %v623 = vadd.f32 %v621, %v622
    %v624 = vtanh.pop %v623
    %v625 = vmul.f32 %v620, %v624
    %s626 = scalar_lea.vmem %s2, 4
    %627 = vst [vmem:[%s626] sm:$0x3] %v625
    %v630 = vunpack.c.l.s4 1983009808
    %v631 = vunpack.c.0.s8 %v630
    %v632 = vlaneseq
    %v633 = vshrl.u32 %v632, 7
    %v634 = vsub.s32 %v631, %v633
    %v635 = vrot.slane %v625, %v634
    %v636 = vcombine.high %v635, %v635
    %s638 = scalar_lea.vmem %s2, 56
    %639 = vst [vmem:[%s638 + $0x2] sm:$0x3] %v636
    %v640 = vmul.f32 %v625, %v165
    %v641 = vmul.f32 %v625, %v166
    %s642 = scalar_lea.vmem %s0, 32
    %v643 = vld [vmem:[%s642] sm:$0xff]
    %s644 = scalar_lea.vmem %s0, 208
    %v645 = vld [vmem:[%s644 + $0x8] sm:$0xff]
    %v647 = vcombine.high %v643, %v643
    %v649 = vunpack.c.l.s4 1983009808
    %v650 = vunpack.c.0.s8 %v649
    %v651 = vlaneseq
    %v652 = vshrl.u32 %v651, 7
    %v653 = vsub.s32 %v650, %v652
    %v654 = vrot.slane %v643, %v653
    %v656 = vunpack.c.l.s4 1983009808
    %v657 = vunpack.c.0.s8 %v656
    %v658 = vlaneseq
    %v659 = vshrl.u32 %v658, 7
    %v660 = vsub.s32 %v657, %v659
    %v661 = vrot.slane %v647, %v660
    %v662 = vcombine.high %v654, %v654
    %v663 = vcombine.high %v661, %v661
    %v669 = vcombine.low %v645, %v645
    %v671 = vunpack.c.l.s4 1983009808
    %v672 = vunpack.c.0.s8 %v671
    %v673 = vlaneseq
    %v674 = vshrl.u32 %v673, 7
    %v675 = vsub.s32 %v672, %v674
    %v676 = vrot.slane %v669, %v675
    %v678 = vunpack.c.l.s4 1983009808
    %v679 = vunpack.c.0.s8 %v678
    %v680 = vlaneseq
    %v681 = vshrl.u32 %v680, 7
    %v682 = vsub.s32 %v679, %v681
    %v683 = vrot.slane %v645, %v682
    %v684 = vcombine.high %v676, %v676
    %v685 = vcombine.high %v683, %v683
    %v690 = vsel %vm214, %v654, %v676
    %v691 = vsel %vm214, %v662, %v684
    %v692 = vsel %vm214, %v661, %v683
    %v693 = vsel %vm214, %v663, %v685
    %694 = vmatprep.subr.mxu0 %v26
    %695 = vmatpush1.msra.mxu0 %v25
    %696 = vmatprep.subr.mxu0 %v30
    %697 = vmatpush1.msra.mxu0 %v29
    %698 = vmatprep.subr.mxu0 %v34
    %699 = vmatpush1.msra.mxu0 %v33
    %700 = vmatprep.subr.mxu0 %v38
    %701 = vmatpush1.msra.mxu0 %v37
    %702 = vmatprep.subr.mxu0 %v42
    %703 = vmatpush1.msra.mxu0 %v41
    %704 = vmatprep.subr.mxu0 %v46
    %705 = vmatpush1.msra.mxu0 %v45
    %706 = vmatprep.subr.mxu0 %v50
    %707 = vmatpush1.msra.mxu0 %v49
    %708 = vmatprep.subr.mxu0 %v54
    %709 = vmatpush1.msra.mxu0 %v53
    %710 = vmatprep.subr.mxu0 %v58
    %711 = vmatpush1.msra.mxu0 %v57
    %712 = vmatprep.subr.mxu0 %v62
    %713 = vmatpush1.msra.mxu0 %v61
    %714 = vmatprep.subr.mxu0 %v66
    %715 = vmatpush1.msra.mxu0 %v65
    %716 = vmatprep.subr.mxu0 %v70
    %717 = vmatpush1.msra.mxu0 %v69
    %718 = vmatprep.subr.mxu0 %v74
    %719 = vmatpush1.msra.mxu0 %v73
    %720 = vmatprep.subr.mxu0 %v78
    %721 = vmatpush1.msra.mxu0 %v77
    %722 = vmatprep.subr.mxu0 %v82
    %723 = vmatpush1.msra.mxu0 %v81
    %724 = vmatprep.subr.mxu0 %v86
    %725 = vmatpush1.msra.mxu0 %v85
    %726 = vmatprep.subr.mxu0 %v90
    %727 = vmatpush1.msra.mxu0 %v89
    %728 = vmatprep.subr.mxu0 %v94
    %729 = vmatpush1.msra.mxu0 %v93
    %730 = vmatprep.subr.mxu0 %v98
    %731 = vmatpush1.msra.mxu0 %v97
    %732 = vmatprep.subr.mxu0 %v102
    %733 = vmatpush1.msra.mxu0 %v101
    %734 = vmatprep.subr.mxu0 %v106
    %735 = vmatpush1.msra.mxu0 %v105
    %736 = vmatprep.subr.mxu0 %v110
    %737 = vmatpush1.msra.mxu0 %v109
    %738 = vmatprep.subr.mxu0 %v114
    %739 = vmatpush1.msra.mxu0 %v113
    %740 = vmatprep.subr.mxu0 %v118
    %741 = vmatpush1.msra.mxu0 %v117
    %742 = vmatprep.subr.mxu0 %v122
    %743 = vmatpush1.msra.mxu0 %v121
    %744 = vmatprep.subr.mxu0 %v126
    %745 = vmatpush1.msra.mxu0 %v125
    %746 = vmatprep.subr.mxu0 %v130
    %747 = vmatpush1.msra.mxu0 %v129
    %748 = vmatprep.subr.mxu0 %v134
    %749 = vmatpush1.msra.mxu0 %v133
    %750 = vmatprep.subr.mxu0 %v138
    %751 = vmatpush1.msra.mxu0 %v137
    %752 = vmatprep.subr.mxu0 %v142
    %753 = vmatpush1.msra.mxu0 %v141
    %754 = vmatprep.subr.mxu0 %v146
    %755 = vmatpush1.msra.mxu0 %v145
    %756 = vmatprep.subr.mxu0 %v150
    %757 = vmatpush1.msra.mxu0 %v149
    %758 = vmatprep.mubr.f32.mxu0 %v641
    %759 = vmatmul.mubr.f32.gmra.mrb[0].mxu0 %v640
    %v760 = vpop.f32.mrb[0].mxu0
    %v761 = vadd.f32 0.0, %v760
    %v762 = vpop.f32.mrb[0].mxu0
    %v763 = vadd.f32 0.0, %v762
    %764 = vdwg.mxu0
    %765 = vmatprep.subr.mxu0 %v28
    %766 = vmatpush1.msra.mxu0 %v27
    %767 = vmatprep.subr.mxu0 %v32
    %768 = vmatpush1.msra.mxu0 %v31
    %769 = vmatprep.subr.mxu0 %v36
    %770 = vmatpush1.msra.mxu0 %v35
    %771 = vmatprep.subr.mxu0 %v40
    %772 = vmatpush1.msra.mxu0 %v39
    %773 = vmatprep.subr.mxu0 %v44
    %774 = vmatpush1.msra.mxu0 %v43
    %775 = vmatprep.subr.mxu0 %v48
    %776 = vmatpush1.msra.mxu0 %v47
    %777 = vmatprep.subr.mxu0 %v52
    %778 = vmatpush1.msra.mxu0 %v51
    %779 = vmatprep.subr.mxu0 %v56
    %780 = vmatpush1.msra.mxu0 %v55
    %781 = vmatprep.subr.mxu0 %v60
    %782 = vmatpush1.msra.mxu0 %v59
    %783 = vmatprep.subr.mxu0 %v64
    %784 = vmatpush1.msra.mxu0 %v63
    %785 = vmatprep.subr.mxu0 %v68
    %786 = vmatpush1.msra.mxu0 %v67
    %787 = vmatprep.subr.mxu0 %v72
    %788 = vmatpush1.msra.mxu0 %v71
    %789 = vmatprep.subr.mxu0 %v76
    %790 = vmatpush1.msra.mxu0 %v75
    %791 = vmatprep.subr.mxu0 %v80
    %792 = vmatpush1.msra.mxu0 %v79
    %793 = vmatprep.subr.mxu0 %v84
    %794 = vmatpush1.msra.mxu0 %v83
    %795 = vmatprep.subr.mxu0 %v88
    %796 = vmatpush1.msra.mxu0 %v87
    %797 = vmatprep.subr.mxu0 %v92
    %798 = vmatpush1.msra.mxu0 %v91
    %799 = vmatprep.subr.mxu0 %v96
    %800 = vmatpush1.msra.mxu0 %v95
    %801 = vmatprep.subr.mxu0 %v100
    %802 = vmatpush1.msra.mxu0 %v99
    %803 = vmatprep.subr.mxu0 %v104
    %804 = vmatpush1.msra.mxu0 %v103
    %805 = vmatprep.subr.mxu0 %v108
    %806 = vmatpush1.msra.mxu0 %v107
    %807 = vmatprep.subr.mxu0 %v112
    %808 = vmatpush1.msra.mxu0 %v111
    %809 = vmatprep.subr.mxu0 %v116
    %810 = vmatpush1.msra.mxu0 %v115
    %811 = vmatprep.subr.mxu0 %v120
    %812 = vmatpush1.msra.mxu0 %v119
    %813 = vmatprep.subr.mxu0 %v124
    %814 = vmatpush1.msra.mxu0 %v123
    %815 = vmatprep.subr.mxu0 %v128
    %816 = vmatpush1.msra.mxu0 %v127
    %817 = vmatprep.subr.mxu0 %v132
    %818 = vmatpush1.msra.mxu0 %v131
    %819 = vmatprep.subr.mxu0 %v136
    %820 = vmatpush1.msra.mxu0 %v135
    %821 = vmatprep.subr.mxu0 %v140
    %822 = vmatpush1.msra.mxu0 %v139
    %823 = vmatprep.subr.mxu0 %v144
    %824 = vmatpush1.msra.mxu0 %v143
    %825 = vmatprep.subr.mxu0 %v148
    %826 = vmatpush1.msra.mxu0 %v147
    %827 = vmatprep.subr.mxu0 %v152
    %828 = vmatpush1.msra.mxu0 %v151
    %829 = vmatprep.mubr.f32.mxu0 %v641
    %830 = vmatmul.mubr.f32.gmra.mrb[0].mxu0 %v640
    %v831 = vpop.f32.mrb[0].mxu0
    %v832 = vadd.f32 0.0, %v831
    %v833 = vpop.f32.mrb[0].mxu0
    %v834 = vadd.f32 0.0, %v833
    %835 = vdwg.mxu0
    %v836 = vadd.f32 %v690, %v761
    %v837 = vadd.f32 %v691, %v763
    %v838 = vadd.f32 %v692, %v832
    %v839 = vadd.f32 %v693, %v834
    %v840 = vxor.u32 %v836, 2147483648
    %v841 = vmul.f32 %v840, 1.442695
    %v842 = vpow.pop %v841
    %v843 = vadd.f32 %v842, 1.0
    %v844 = vrcp.pop %v843
    %v845 = vmul.f32 1.0, %v844
    %v846 = vxor.u32 %v837, 2147483648
    %v847 = vmul.f32 %v846, 1.442695
    %v848 = vpow.pop %v847
    %v849 = vadd.f32 %v848, 1.0
    %v850 = vrcp.pop %v849
    %v851 = vmul.f32 1.0, %v850
    %v852 = vtanh.pop %v838
    %v853 = vxor.u32 %v839, 2147483648
    %v854 = vmul.f32 %v853, 1.442695
    %v855 = vpow.pop %v854
    %v856 = vadd.f32 %v855, 1.0
    %v857 = vrcp.pop %v856
    %v858 = vmul.f32 1.0, %v857
    %v859 = vmul.f32 %v851, %v623
    %v860 = vmul.f32 %v845, %v852
    %v861 = vadd.f32 %v859, %v860
    %v862 = vtanh.pop %v861
    %v863 = vmul.f32 %v858, %v862
    %s864 = scalar_lea.vmem %s2, 8
    %865 = vst [vmem:[%s864] sm:$0x3] %v863
    %v868 = vunpack.c.l.s4 1983009808
    %v869 = vunpack.c.0.s8 %v868
    %v870 = vlaneseq
    %v871 = vshrl.u32 %v870, 7
    %v872 = vsub.s32 %v869, %v871
    %v873 = vrot.slane %v863, %v872
    %v874 = vcombine.high %v873, %v873
    %s876 = scalar_lea.vmem %s2, 52
    %877 = vst [vmem:[%s876 + $0x2] sm:$0x3] %v874
    %v878 = vmul.f32 %v863, %v165
    %v879 = vmul.f32 %v863, %v166
    %s880 = scalar_lea.vmem %s0, 48
    %v881 = vld [vmem:[%s880] sm:$0xff]
    %s882 = scalar_lea.vmem %s0, 192
    %v883 = vld [vmem:[%s882 + $0x8] sm:$0xff]
    %v885 = vcombine.high %v881, %v881
    %v887 = vunpack.c.l.s4 1983009808
    %v888 = vunpack.c.0.s8 %v887
    %v889 = vlaneseq
    %v890 = vshrl.u32 %v889, 7
    %v891 = vsub.s32 %v888, %v890
    %v892 = vrot.slane %v881, %v891
    %v894 = vunpack.c.l.s4 1983009808
    %v895 = vunpack.c.0.s8 %v894
    %v896 = vlaneseq
    %v897 = vshrl.u32 %v896, 7
    %v898 = vsub.s32 %v895, %v897
    %v899 = vrot.slane %v885, %v898
    %v900 = vcombine.high %v892, %v892
    %v901 = vcombine.high %v899, %v899
    %v907 = vcombine.low %v883, %v883
    %v909 = vunpack.c.l.s4 1983009808
    %v910 = vunpack.c.0.s8 %v909
    %v911 = vlaneseq
    %v912 = vshrl.u32 %v911, 7
    %v913 = vsub.s32 %v910, %v912
    %v914 = vrot.slane %v907, %v913
    %v916 = vunpack.c.l.s4 1983009808
    %v917 = vunpack.c.0.s8 %v916
    %v918 = vlaneseq
    %v919 = vshrl.u32 %v918, 7
    %v920 = vsub.s32 %v917, %v919
    %v921 = vrot.slane %v883, %v920
    %v922 = vcombine.high %v914, %v914
    %v923 = vcombine.high %v921, %v921
    %v928 = vsel %vm214, %v892, %v914
    %v929 = vsel %vm214, %v900, %v922
    %v930 = vsel %vm214, %v899, %v921
    %v931 = vsel %vm214, %v901, %v923
    %932 = vmatprep.subr.mxu0 %v26
    %933 = vmatpush1.msra.mxu0 %v25
    %934 = vmatprep.subr.mxu0 %v30
    %935 = vmatpush1.msra.mxu0 %v29
    %936 = vmatprep.subr.mxu0 %v34
    %937 = vmatpush1.msra.mxu0 %v33
    %938 = vmatprep.subr.mxu0 %v38
    %939 = vmatpush1.msra.mxu0 %v37
    %940 = vmatprep.subr.mxu0 %v42
    %941 = vmatpush1.msra.mxu0 %v41
    %942 = vmatprep.subr.mxu0 %v46
    %943 = vmatpush1.msra.mxu0 %v45
    %944 = vmatprep.subr.mxu0 %v50
    %945 = vmatpush1.msra.mxu0 %v49
    %946 = vmatprep.subr.mxu0 %v54
    %947 = vmatpush1.msra.mxu0 %v53
    %948 = vmatprep.subr.mxu0 %v58
    %949 = vmatpush1.msra.mxu0 %v57
    %950 = vmatprep.subr.mxu0 %v62
    %951 = vmatpush1.msra.mxu0 %v61
    %952 = vmatprep.subr.mxu0 %v66
    %953 = vmatpush1.msra.mxu0 %v65
    %954 = vmatprep.subr.mxu0 %v70
    %955 = vmatpush1.msra.mxu0 %v69
    %956 = vmatprep.subr.mxu0 %v74
    %957 = vmatpush1.msra.mxu0 %v73
    %958 = vmatprep.subr.mxu0 %v78
    %959 = vmatpush1.msra.mxu0 %v77
    %960 = vmatprep.subr.mxu0 %v82
    %961 = vmatpush1.msra.mxu0 %v81
    %962 = vmatprep.subr.mxu0 %v86
    %963 = vmatpush1.msra.mxu0 %v85
    %964 = vmatprep.subr.mxu0 %v90
    %965 = vmatpush1.msra.mxu0 %v89
    %966 = vmatprep.subr.mxu0 %v94
    %967 = vmatpush1.msra.mxu0 %v93
    %968 = vmatprep.subr.mxu0 %v98
    %969 = vmatpush1.msra.mxu0 %v97
    %970 = vmatprep.subr.mxu0 %v102
    %971 = vmatpush1.msra.mxu0 %v101
    %972 = vmatprep.subr.mxu0 %v106
    %973 = vmatpush1.msra.mxu0 %v105
    %974 = vmatprep.subr.mxu0 %v110
    %975 = vmatpush1.msra.mxu0 %v109
    %976 = vmatprep.subr.mxu0 %v114
    %977 = vmatpush1.msra.mxu0 %v113
    %978 = vmatprep.subr.mxu0 %v118
    %979 = vmatpush1.msra.mxu0 %v117
    %980 = vmatprep.subr.mxu0 %v122
    %981 = vmatpush1.msra.mxu0 %v121
    %982 = vmatprep.subr.mxu0 %v126
    %983 = vmatpush1.msra.mxu0 %v125
    %984 = vmatprep.subr.mxu0 %v130
    %985 = vmatpush1.msra.mxu0 %v129
    %986 = vmatprep.subr.mxu0 %v134
    %987 = vmatpush1.msra.mxu0 %v133
    %988 = vmatprep.subr.mxu0 %v138
    %989 = vmatpush1.msra.mxu0 %v137
    %990 = vmatprep.subr.mxu0 %v142
    %991 = vmatpush1.msra.mxu0 %v141
    %992 = vmatprep.subr.mxu0 %v146
    %993 = vmatpush1.msra.mxu0 %v145
    %994 = vmatprep.subr.mxu0 %v150
    %995 = vmatpush1.msra.mxu0 %v149
    %996 = vmatprep.mubr.f32.mxu0 %v879
    %997 = vmatmul.mubr.f32.gmra.mrb[0].mxu0 %v878
    %v998 = vpop.f32.mrb[0].mxu0
    %v999 = vadd.f32 0.0, %v998
    %v1000 = vpop.f32.mrb[0].mxu0
    %v1001 = vadd.f32 0.0, %v1000
    %1002 = vdwg.mxu0
    %1003 = vmatprep.subr.mxu0 %v28
    %1004 = vmatpush1.msra.mxu0 %v27
    %1005 = vmatprep.subr.mxu0 %v32
    %1006 = vmatpush1.msra.mxu0 %v31
    %1007 = vmatprep.subr.mxu0 %v36
    %1008 = vmatpush1.msra.mxu0 %v35
    %1009 = vmatprep.subr.mxu0 %v40
    %1010 = vmatpush1.msra.mxu0 %v39
    %1011 = vmatprep.subr.mxu0 %v44
    %1012 = vmatpush1.msra.mxu0 %v43
    %1013 = vmatprep.subr.mxu0 %v48
    %1014 = vmatpush1.msra.mxu0 %v47
    %1015 = vmatprep.subr.mxu0 %v52
    %1016 = vmatpush1.msra.mxu0 %v51
    %1017 = vmatprep.subr.mxu0 %v56
    %1018 = vmatpush1.msra.mxu0 %v55
    %1019 = vmatprep.subr.mxu0 %v60
    %1020 = vmatpush1.msra.mxu0 %v59
    %1021 = vmatprep.subr.mxu0 %v64
    %1022 = vmatpush1.msra.mxu0 %v63
    %1023 = vmatprep.subr.mxu0 %v68
    %1024 = vmatpush1.msra.mxu0 %v67
    %1025 = vmatprep.subr.mxu0 %v72
    %1026 = vmatpush1.msra.mxu0 %v71
    %1027 = vmatprep.subr.mxu0 %v76
    %1028 = vmatpush1.msra.mxu0 %v75
    %1029 = vmatprep.subr.mxu0 %v80
    %1030 = vmatpush1.msra.mxu0 %v79
    %1031 = vmatprep.subr.mxu0 %v84
    %1032 = vmatpush1.msra.mxu0 %v83
    %1033 = vmatprep.subr.mxu0 %v88
    %1034 = vmatpush1.msra.mxu0 %v87
    %1035 = vmatprep.subr.mxu0 %v92
    %1036 = vmatpush1.msra.mxu0 %v91
    %1037 = vmatprep.subr.mxu0 %v96
    %1038 = vmatpush1.msra.mxu0 %v95
    %1039 = vmatprep.subr.mxu0 %v100
    %1040 = vmatpush1.msra.mxu0 %v99
    %1041 = vmatprep.subr.mxu0 %v104
    %1042 = vmatpush1.msra.mxu0 %v103
    %1043 = vmatprep.subr.mxu0 %v108
    %1044 = vmatpush1.msra.mxu0 %v107
    %1045 = vmatprep.subr.mxu0 %v112
    %1046 = vmatpush1.msra.mxu0 %v111
    %1047 = vmatprep.subr.mxu0 %v116
    %1048 = vmatpush1.msra.mxu0 %v115
    %1049 = vmatprep.subr.mxu0 %v120
    %1050 = vmatpush1.msra.mxu0 %v119
    %1051 = vmatprep.subr.mxu0 %v124
    %1052 = vmatpush1.msra.mxu0 %v123
    %1053 = vmatprep.subr.mxu0 %v128
    %1054 = vmatpush1.msra.mxu0 %v127
    %1055 = vmatprep.subr.mxu0 %v132
    %1056 = vmatpush1.msra.mxu0 %v131
    %1057 = vmatprep.subr.mxu0 %v136
    %1058 = vmatpush1.msra.mxu0 %v135
    %1059 = vmatprep.subr.mxu0 %v140
    %1060 = vmatpush1.msra.mxu0 %v139
    %1061 = vmatprep.subr.mxu0 %v144
    %1062 = vmatpush1.msra.mxu0 %v143
    %1063 = vmatprep.subr.mxu0 %v148
    %1064 = vmatpush1.msra.mxu0 %v147
    %1065 = vmatprep.subr.mxu0 %v152
    %1066 = vmatpush1.msra.mxu0 %v151
    %1067 = vmatprep.mubr.f32.mxu0 %v879
    %1068 = vmatmul.mubr.f32.gmra.mrb[0].mxu0 %v878
    %v1069 = vpop.f32.mrb[0].mxu0
    %v1070 = vadd.f32 0.0, %v1069
    %v1071 = vpop.f32.mrb[0].mxu0
    %v1072 = vadd.f32 0.0, %v1071
    %1073 = vdwg.mxu0
    %v1074 = vadd.f32 %v928, %v999
    %v1075 = vadd.f32 %v929, %v1001
    %v1076 = vadd.f32 %v930, %v1070
    %v1077 = vadd.f32 %v931, %v1072
    %v1078 = vxor.u32 %v1074, 2147483648
    %v1079 = vmul.f32 %v1078, 1.442695
    %v1080 = vpow.pop %v1079
    %v1081 = vadd.f32 %v1080, 1.0
    %v1082 = vrcp.pop %v1081
    %v1083 = vmul.f32 1.0, %v1082
    %v1084 = vxor.u32 %v1075, 2147483648
    %v1085 = vmul.f32 %v1084, 1.442695
    %v1086 = vpow.pop %v1085
    %v1087 = vadd.f32 %v1086, 1.0
    %v1088 = vrcp.pop %v1087
    %v1089 = vmul.f32 1.0, %v1088
    %v1090 = vtanh.pop %v1076
    %v1091 = vxor.u32 %v1077, 2147483648
    %v1092 = vmul.f32 %v1091, 1.442695
    %v1093 = vpow.pop %v1092
    %v1094 = vadd.f32 %v1093, 1.0
    %v1095 = vrcp.pop %v1094
    %v1096 = vmul.f32 1.0, %v1095
    %v1097 = vmul.f32 %v1089, %v861
    %v1098 = vmul.f32 %v1083, %v1090
    %v1099 = vadd.f32 %v1097, %v1098
    %v1100 = vtanh.pop %v1099
    %v1101 = vmul.f32 %v1096, %v1100
    %s1102 = scalar_lea.vmem %s2, 12
    %1103 = vst [vmem:[%s1102] sm:$0x3] %v1101
    %v1106 = vunpack.c.l.s4 1983009808
    %v1107 = vunpack.c.0.s8 %v1106
    %v1108 = vlaneseq
    %v1109 = vshrl.u32 %v1108, 7
    %v1110 = vsub.s32 %v1107, %v1109
    %v1111 = vrot.slane %v1101, %v1110
    %v1112 = vcombine.high %v1111, %v1111
    %s1114 = scalar_lea.vmem %s2, 48
    %1115 = vst [vmem:[%s1114 + $0x2] sm:$0x3] %v1112
    %v1116 = vmul.f32 %v1101, %v165
    %v1117 = vmul.f32 %v1101, %v166
    %s1118 = scalar_lea.vmem %s0, 64
    %v1119 = vld [vmem:[%s1118] sm:$0xff]
    %s1120 = scalar_lea.vmem %s0, 176
    %v1121 = vld [vmem:[%s1120 + $0x8] sm:$0xff]
    %v1123 = vcombine.high %v1119, %v1119
    %v1125 = vunpack.c.l.s4 1983009808
    %v1126 = vunpack.c.0.s8 %v1125
    %v1127 = vlaneseq
    %v1128 = vshrl.u32 %v1127, 7
    %v1129 = vsub.s32 %v1126, %v1128
    %v1130 = vrot.slane %v1119, %v1129
    %v1132 = vunpack.c.l.s4 1983009808
    %v1133 = vunpack.c.0.s8 %v1132
    %v1134 = vlaneseq
    %v1135 = vshrl.u32 %v1134, 7
    %v1136 = vsub.s32 %v1133, %v1135
    %v1137 = vrot.slane %v1123, %v1136
    %v1138 = vcombine.high %v1130, %v1130
    %v1139 = vcombine.high %v1137, %v1137
    %v1145 = vcombine.low %v1121, %v1121
    %v1147 = vunpack.c.l.s4 1983009808
    %v1148 = vunpack.c.0.s8 %v1147
    %v1149 = vlaneseq
    %v1150 = vshrl.u32 %v1149, 7
    %v1151 = vsub.s32 %v1148, %v1150
    %v1152 = vrot.slane %v1145, %v1151
    %v1154 = vunpack.c.l.s4 1983009808
    %v1155 = vunpack.c.0.s8 %v1154
    %v1156 = vlaneseq
    %v1157 = vshrl.u32 %v1156, 7
    %v1158 = vsub.s32 %v1155, %v1157
    %v1159 = vrot.slane %v1121, %v1158
    %v1160 = vcombine.high %v1152, %v1152
    %v1161 = vcombine.high %v1159, %v1159
    %v1166 = vsel %vm214, %v1130, %v1152
    %v1167 = vsel %vm214, %v1138, %v1160
    %v1168 = vsel %vm214, %v1137, %v1159
    %v1169 = vsel %vm214, %v1139, %v1161
    %1170 = vmatprep.subr.mxu0 %v26
    %1171 = vmatpush1.msra.mxu0 %v25
    %1172 = vmatprep.subr.mxu0 %v30
    %1173 = vmatpush1.msra.mxu0 %v29
    %1174 = vmatprep.subr.mxu0 %v34
    %1175 = vmatpush1.msra.mxu0 %v33
    %1176 = vmatprep.subr.mxu0 %v38
    %1177 = vmatpush1.msra.mxu0 %v37
    %1178 = vmatprep.subr.mxu0 %v42
    %1179 = vmatpush1.msra.mxu0 %v41
    %1180 = vmatprep.subr.mxu0 %v46
    %1181 = vmatpush1.msra.mxu0 %v45
    %1182 = vmatprep.subr.mxu0 %v50
    %1183 = vmatpush1.msra.mxu0 %v49
    %1184 = vmatprep.subr.mxu0 %v54
    %1185 = vmatpush1.msra.mxu0 %v53
    %1186 = vmatprep.subr.mxu0 %v58
    %1187 = vmatpush1.msra.mxu0 %v57
    %1188 = vmatprep.subr.mxu0 %v62
    %1189 = vmatpush1.msra.mxu0 %v61
    %1190 = vmatprep.subr.mxu0 %v66
    %1191 = vmatpush1.msra.mxu0 %v65
    %1192 = vmatprep.subr.mxu0 %v70
    %1193 = vmatpush1.msra.mxu0 %v69
    %1194 = vmatprep.subr.mxu0 %v74
    %1195 = vmatpush1.msra.mxu0 %v73
    %1196 = vmatprep.subr.mxu0 %v78
    %1197 = vmatpush1.msra.mxu0 %v77
    %1198 = vmatprep.subr.mxu0 %v82
    %1199 = vmatpush1.msra.mxu0 %v81
    %1200 = vmatprep.subr.mxu0 %v86
    %1201 = vmatpush1.msra.mxu0 %v85
    %1202 = vmatprep.subr.mxu0 %v90
    %1203 = vmatpush1.msra.mxu0 %v89
    %1204 = vmatprep.subr.mxu0 %v94
    %1205 = vmatpush1.msra.mxu0 %v93
    %1206 = vmatprep.subr.mxu0 %v98
    %1207 = vmatpush1.msra.mxu0 %v97
    %1208 = vmatprep.subr.mxu0 %v102
    %1209 = vmatpush1.msra.mxu0 %v101
    %1210 = vmatprep.subr.mxu0 %v106
    %1211 = vmatpush1.msra.mxu0 %v105
    %1212 = vmatprep.subr.mxu0 %v110
    %1213 = vmatpush1.msra.mxu0 %v109
    %1214 = vmatprep.subr.mxu0 %v114
    %1215 = vmatpush1.msra.mxu0 %v113
    %1216 = vmatprep.subr.mxu0 %v118
    %1217 = vmatpush1.msra.mxu0 %v117
    %1218 = vmatprep.subr.mxu0 %v122
    %1219 = vmatpush1.msra.mxu0 %v121
    %1220 = vmatprep.subr.mxu0 %v126
    %1221 = vmatpush1.msra.mxu0 %v125
    %1222 = vmatprep.subr.mxu0 %v130
    %1223 = vmatpush1.msra.mxu0 %v129
    %1224 = vmatprep.subr.mxu0 %v134
    %1225 = vmatpush1.msra.mxu0 %v133
    %1226 = vmatprep.subr.mxu0 %v138
    %1227 = vmatpush1.msra.mxu0 %v137
    %1228 = vmatprep.subr.mxu0 %v142
    %1229 = vmatpush1.msra.mxu0 %v141
    %1230 = vmatprep.subr.mxu0 %v146
    %1231 = vmatpush1.msra.mxu0 %v145
    %1232 = vmatprep.subr.mxu0 %v150
    %1233 = vmatpush1.msra.mxu0 %v149
    %1234 = vmatprep.mubr.f32.mxu0 %v1117
    %1235 = vmatmul.mubr.f32.gmra.mrb[0].mxu0 %v1116
    %v1236 = vpop.f32.mrb[0].mxu0
    %v1237 = vadd.f32 0.0, %v1236
    %v1238 = vpop.f32.mrb[0].mxu0
    %v1239 = vadd.f32 0.0, %v1238
    %1240 = vdwg.mxu0
    %1241 = vmatprep.subr.mxu0 %v28
    %1242 = vmatpush1.msra.mxu0 %v27
    %1243 = vmatprep.subr.mxu0 %v32
    %1244 = vmatpush1.msra.mxu0 %v31
    %1245 = vmatprep.subr.mxu0 %v36
    %1246 = vmatpush1.msra.mxu0 %v35
    %1247 = vmatprep.subr.mxu0 %v40
    %1248 = vmatpush1.msra.mxu0 %v39
    %1249 = vmatprep.subr.mxu0 %v44
    %1250 = vmatpush1.msra.mxu0 %v43
    %1251 = vmatprep.subr.mxu0 %v48
    %1252 = vmatpush1.msra.mxu0 %v47
    %1253 = vmatprep.subr.mxu0 %v52
    %1254 = vmatpush1.msra.mxu0 %v51
    %1255 = vmatprep.subr.mxu0 %v56
    %1256 = vmatpush1.msra.mxu0 %v55
    %1257 = vmatprep.subr.mxu0 %v60
    %1258 = vmatpush1.msra.mxu0 %v59
    %1259 = vmatprep.subr.mxu0 %v64
    %1260 = vmatpush1.msra.mxu0 %v63
    %1261 = vmatprep.subr.mxu0 %v68
    %1262 = vmatpush1.msra.mxu0 %v67
    %1263 = vmatprep.subr.mxu0 %v72
    %1264 = vmatpush1.msra.mxu0 %v71
    %1265 = vmatprep.subr.mxu0 %v76
    %1266 = vmatpush1.msra.mxu0 %v75
    %1267 = vmatprep.subr.mxu0 %v80
    %1268 = vmatpush1.msra.mxu0 %v79
    %1269 = vmatprep.subr.mxu0 %v84
    %1270 = vmatpush1.msra.mxu0 %v83
    %1271 = vmatprep.subr.mxu0 %v88
    %1272 = vmatpush1.msra.mxu0 %v87
    %1273 = vmatprep.subr.mxu0 %v92
    %1274 = vmatpush1.msra.mxu0 %v91
    %1275 = vmatprep.subr.mxu0 %v96
    %1276 = vmatpush1.msra.mxu0 %v95
    %1277 = vmatprep.subr.mxu0 %v100
    %1278 = vmatpush1.msra.mxu0 %v99
    %1279 = vmatprep.subr.mxu0 %v104
    %1280 = vmatpush1.msra.mxu0 %v103
    %1281 = vmatprep.subr.mxu0 %v108
    %1282 = vmatpush1.msra.mxu0 %v107
    %1283 = vmatprep.subr.mxu0 %v112
    %1284 = vmatpush1.msra.mxu0 %v111
    %1285 = vmatprep.subr.mxu0 %v116
    %1286 = vmatpush1.msra.mxu0 %v115
    %1287 = vmatprep.subr.mxu0 %v120
    %1288 = vmatpush1.msra.mxu0 %v119
    %1289 = vmatprep.subr.mxu0 %v124
    %1290 = vmatpush1.msra.mxu0 %v123
    %1291 = vmatprep.subr.mxu0 %v128
    %1292 = vmatpush1.msra.mxu0 %v127
    %1293 = vmatprep.subr.mxu0 %v132
    %1294 = vmatpush1.msra.mxu0 %v131
    %1295 = vmatprep.subr.mxu0 %v136
    %1296 = vmatpush1.msra.mxu0 %v135
    %1297 = vmatprep.subr.mxu0 %v140
    %1298 = vmatpush1.msra.mxu0 %v139
    %1299 = vmatprep.subr.mxu0 %v144
    %1300 = vmatpush1.msra.mxu0 %v143
    %1301 = vmatprep.subr.mxu0 %v148
    %1302 = vmatpush1.msra.mxu0 %v147
    %1303 = vmatprep.subr.mxu0 %v152
    %1304 = vmatpush1.msra.mxu0 %v151
    %1305 = vmatprep.mubr.f32.mxu0 %v1117
    %1306 = vmatmul.mubr.f32.gmra.mrb[0].mxu0 %v1116
    %v1307 = vpop.f32.mrb[0].mxu0
    %v1308 = vadd.f32 0.0, %v1307
    %v1309 = vpop.f32.mrb[0].mxu0
    %v1310 = vadd.f32 0.0, %v1309
    %1311 = vdwg.mxu0
    %v1312 = vadd.f32 %v1166, %v1237
    %v1313 = vadd.f32 %v1167, %v1239
    %v1314 = vadd.f32 %v1168, %v1308
    %v1315 = vadd.f32 %v1169, %v1310
    %v1316 = vxor.u32 %v1312, 2147483648
    %v1317 = vmul.f32 %v1316, 1.442695
    %v1318 = vpow.pop %v1317
    %v1319 = vadd.f32 %v1318, 1.0
    %v1320 = vrcp.pop %v1319
    %v1321 = vmul.f32 1.0, %v1320
    %v1322 = vxor.u32 %v1313, 2147483648
    %v1323 = vmul.f32 %v1322, 1.442695
    %v1324 = vpow.pop %v1323
    %v1325 = vadd.f32 %v1324, 1.0
    %v1326 = vrcp.pop %v1325
    %v1327 = vmul.f32 1.0, %v1326
    %v1328 = vtanh.pop %v1314
    %v1329 = vxor.u32 %v1315, 2147483648
    %v1330 = vmul.f32 %v1329, 1.442695
    %v1331 = vpow.pop %v1330
    %v1332 = vadd.f32 %v1331, 1.0
    %v1333 = vrcp.pop %v1332
    %v1334 = vmul.f32 1.0, %v1333
    %v1335 = vmul.f32 %v1327, %v1099
    %v1336 = vmul.f32 %v1321, %v1328
    %v1337 = vadd.f32 %v1335, %v1336
    %v1338 = vtanh.pop %v1337
    %v1339 = vmul.f32 %v1334, %v1338
    %s1340 = scalar_lea.vmem %s2, 16
    %1341 = vst [vmem:[%s1340] sm:$0x3] %v1339
    %v1344 = vunpack.c.l.s4 1983009808
    %v1345 = vunpack.c.0.s8 %v1344
    %v1346 = vlaneseq
    %v1347 = vshrl.u32 %v1346, 7
    %v1348 = vsub.s32 %v1345, %v1347
    %v1349 = vrot.slane %v1339, %v1348
    %v1350 = vcombine.high %v1349, %v1349
    %s1352 = scalar_lea.vmem %s2, 44
    %1353 = vst [vmem:[%s1352 + $0x2] sm:$0x3] %v1350
    %v1354 = vmul.f32 %v1339, %v165
    %v1355 = vmul.f32 %v1339, %v166
    %s1356 = scalar_lea.vmem %s0, 80
    %v1357 = vld [vmem:[%s1356] sm:$0xff]
    %s1358 = scalar_lea.vmem %s0, 160
    %v1359 = vld [vmem:[%s1358 + $0x8] sm:$0xff]
    %v1361 = vcombine.high %v1357, %v1357
    %v1363 = vunpack.c.l.s4 1983009808
    %v1364 = vunpack.c.0.s8 %v1363
    %v1365 = vlaneseq
    %v1366 = vshrl.u32 %v1365, 7
    %v1367 = vsub.s32 %v1364, %v1366
    %v1368 = vrot.slane %v1357, %v1367
    %v1370 = vunpack.c.l.s4 1983009808
    %v1371 = vunpack.c.0.s8 %v1370
    %v1372 = vlaneseq
    %v1373 = vshrl.u32 %v1372, 7
    %v1374 = vsub.s32 %v1371, %v1373
    %v1375 = vrot.slane %v1361, %v1374
    %v1376 = vcombine.high %v1368, %v1368
    %v1377 = vcombine.high %v1375, %v1375
    %v1383 = vcombine.low %v1359, %v1359
    %v1385 = vunpack.c.l.s4 1983009808
    %v1386 = vunpack.c.0.s8 %v1385
    %v1387 = vlaneseq
    %v1388 = vshrl.u32 %v1387, 7
    %v1389 = vsub.s32 %v1386, %v1388
    %v1390 = vrot.slane %v1383, %v1389
    %v1392 = vunpack.c.l.s4 1983009808
    %v1393 = vunpack.c.0.s8 %v1392
    %v1394 = vlaneseq
    %v1395 = vshrl.u32 %v1394, 7
    %v1396 = vsub.s32 %v1393, %v1395
    %v1397 = vrot.slane %v1359, %v1396
    %v1398 = vcombine.high %v1390, %v1390
    %v1399 = vcombine.high %v1397, %v1397
    %v1404 = vsel %vm214, %v1368, %v1390
    %v1405 = vsel %vm214, %v1376, %v1398
    %v1406 = vsel %vm214, %v1375, %v1397
    %v1407 = vsel %vm214, %v1377, %v1399
    %1408 = vmatprep.subr.mxu0 %v26
    %1409 = vmatpush1.msra.mxu0 %v25
    %1410 = vmatprep.subr.mxu0 %v30
    %1411 = vmatpush1.msra.mxu0 %v29
    %1412 = vmatprep.subr.mxu0 %v34
    %1413 = vmatpush1.msra.mxu0 %v33
    %1414 = vmatprep.subr.mxu0 %v38
    %1415 = vmatpush1.msra.mxu0 %v37
    %1416 = vmatprep.subr.mxu0 %v42
    %1417 = vmatpush1.msra.mxu0 %v41
    %1418 = vmatprep.subr.mxu0 %v46
    %1419 = vmatpush1.msra.mxu0 %v45
    %1420 = vmatprep.subr.mxu0 %v50
    %1421 = vmatpush1.msra.mxu0 %v49
    %1422 = vmatprep.subr.mxu0 %v54
    %1423 = vmatpush1.msra.mxu0 %v53
    %1424 = vmatprep.subr.mxu0 %v58
    %1425 = vmatpush1.msra.mxu0 %v57
    %1426 = vmatprep.subr.mxu0 %v62
    %1427 = vmatpush1.msra.mxu0 %v61
    %1428 = vmatprep.subr.mxu0 %v66
    %1429 = vmatpush1.msra.mxu0 %v65
    %1430 = vmatprep.subr.mxu0 %v70
    %1431 = vmatpush1.msra.mxu0 %v69
    %1432 = vmatprep.subr.mxu0 %v74
    %1433 = vmatpush1.msra.mxu0 %v73
    %1434 = vmatprep.subr.mxu0 %v78
    %1435 = vmatpush1.msra.mxu0 %v77
    %1436 = vmatprep.subr.mxu0 %v82
    %1437 = vmatpush1.msra.mxu0 %v81
    %1438 = vmatprep.subr.mxu0 %v86
    %1439 = vmatpush1.msra.mxu0 %v85
    %1440 = vmatprep.subr.mxu0 %v90
    %1441 = vmatpush1.msra.mxu0 %v89
    %1442 = vmatprep.subr.mxu0 %v94
    %1443 = vmatpush1.msra.mxu0 %v93
    %1444 = vmatprep.subr.mxu0 %v98
    %1445 = vmatpush1.msra.mxu0 %v97
    %1446 = vmatprep.subr.mxu0 %v102
    %1447 = vmatpush1.msra.mxu0 %v101
    %1448 = vmatprep.subr.mxu0 %v106
    %1449 = vmatpush1.msra.mxu0 %v105
    %1450 = vmatprep.subr.mxu0 %v110
    %1451 = vmatpush1.msra.mxu0 %v109
    %1452 = vmatprep.subr.mxu0 %v114
    %1453 = vmatpush1.msra.mxu0 %v113
    %1454 = vmatprep.subr.mxu0 %v118
    %1455 = vmatpush1.msra.mxu0 %v117
    %1456 = vmatprep.subr.mxu0 %v122
    %1457 = vmatpush1.msra.mxu0 %v121
    %1458 = vmatprep.subr.mxu0 %v126
    %1459 = vmatpush1.msra.mxu0 %v125
    %1460 = vmatprep.subr.mxu0 %v130
    %1461 = vmatpush1.msra.mxu0 %v129
    %1462 = vmatprep.subr.mxu0 %v134
    %1463 = vmatpush1.msra.mxu0 %v133
    %1464 = vmatprep.subr.mxu0 %v138
    %1465 = vmatpush1.msra.mxu0 %v137
    %1466 = vmatprep.subr.mxu0 %v142
    %1467 = vmatpush1.msra.mxu0 %v141
    %1468 = vmatprep.subr.mxu0 %v146
    %1469 = vmatpush1.msra.mxu0 %v145
    %1470 = vmatprep.subr.mxu0 %v150
    %1471 = vmatpush1.msra.mxu0 %v149
    %1472 = vmatprep.mubr.f32.mxu0 %v1355
    %1473 = vmatmul.mubr.f32.gmra.mrb[0].mxu0 %v1354
    %v1474 = vpop.f32.mrb[0].mxu0
    %v1475 = vadd.f32 0.0, %v1474
    %v1476 = vpop.f32.mrb[0].mxu0
    %v1477 = vadd.f32 0.0, %v1476
    %1478 = vdwg.mxu0
    %1479 = vmatprep.subr.mxu0 %v28
    %1480 = vmatpush1.msra.mxu0 %v27
    %1481 = vmatprep.subr.mxu0 %v32
    %1482 = vmatpush1.msra.mxu0 %v31
    %1483 = vmatprep.subr.mxu0 %v36
    %1484 = vmatpush1.msra.mxu0 %v35
    %1485 = vmatprep.subr.mxu0 %v40
    %1486 = vmatpush1.msra.mxu0 %v39
    %1487 = vmatprep.subr.mxu0 %v44
    %1488 = vmatpush1.msra.mxu0 %v43
    %1489 = vmatprep.subr.mxu0 %v48
    %1490 = vmatpush1.msra.mxu0 %v47
    %1491 = vmatprep.subr.mxu0 %v52
    %1492 = vmatpush1.msra.mxu0 %v51
    %1493 = vmatprep.subr.mxu0 %v56
    %1494 = vmatpush1.msra.mxu0 %v55
    %1495 = vmatprep.subr.mxu0 %v60
    %1496 = vmatpush1.msra.mxu0 %v59
    %1497 = vmatprep.subr.mxu0 %v64
    %1498 = vmatpush1.msra.mxu0 %v63
    %1499 = vmatprep.subr.mxu0 %v68
    %1500 = vmatpush1.msra.mxu0 %v67
    %1501 = vmatprep.subr.mxu0 %v72
    %1502 = vmatpush1.msra.mxu0 %v71
    %1503 = vmatprep.subr.mxu0 %v76
    %1504 = vmatpush1.msra.mxu0 %v75
    %1505 = vmatprep.subr.mxu0 %v80
    %1506 = vmatpush1.msra.mxu0 %v79
    %1507 = vmatprep.subr.mxu0 %v84
    %1508 = vmatpush1.msra.mxu0 %v83
    %1509 = vmatprep.subr.mxu0 %v88
    %1510 = vmatpush1.msra.mxu0 %v87
    %1511 = vmatprep.subr.mxu0 %v92
    %1512 = vmatpush1.msra.mxu0 %v91
    %1513 = vmatprep.subr.mxu0 %v96
    %1514 = vmatpush1.msra.mxu0 %v95
    %1515 = vmatprep.subr.mxu0 %v100
    %1516 = vmatpush1.msra.mxu0 %v99
    %1517 = vmatprep.subr.mxu0 %v104
    %1518 = vmatpush1.msra.mxu0 %v103
    %1519 = vmatprep.subr.mxu0 %v108
    %1520 = vmatpush1.msra.mxu0 %v107
    %1521 = vmatprep.subr.mxu0 %v112
    %1522 = vmatpush1.msra.mxu0 %v111
    %1523 = vmatprep.subr.mxu0 %v116
    %1524 = vmatpush1.msra.mxu0 %v115
    %1525 = vmatprep.subr.mxu0 %v120
    %1526 = vmatpush1.msra.mxu0 %v119
    %1527 = vmatprep.subr.mxu0 %v124
    %1528 = vmatpush1.msra.mxu0 %v123
    %1529 = vmatprep.subr.mxu0 %v128
    %1530 = vmatpush1.msra.mxu0 %v127
    %1531 = vmatprep.subr.mxu0 %v132
    %1532 = vmatpush1.msra.mxu0 %v131
    %1533 = vmatprep.subr.mxu0 %v136
    %1534 = vmatpush1.msra.mxu0 %v135
    %1535 = vmatprep.subr.mxu0 %v140
    %1536 = vmatpush1.msra.mxu0 %v139
    %1537 = vmatprep.subr.mxu0 %v144
    %1538 = vmatpush1.msra.mxu0 %v143
    %1539 = vmatprep.subr.mxu0 %v148
    %1540 = vmatpush1.msra.mxu0 %v147
    %1541 = vmatprep.subr.mxu0 %v152
    %1542 = vmatpush1.msra.mxu0 %v151
    %1543 = vmatprep.mubr.f32.mxu0 %v1355
    %1544 = vmatmul.mubr.f32.gmra.mrb[0].mxu0 %v1354
    %v1545 = vpop.f32.mrb[0].mxu0
    %v1546 = vadd.f32 0.0, %v1545
    %v1547 = vpop.f32.mrb[0].mxu0
    %v1548 = vadd.f32 0.0, %v1547
    %1549 = vdwg.mxu0
    %v1550 = vadd.f32 %v1404, %v1475
    %v1551 = vadd.f32 %v1405, %v1477
    %v1552 = vadd.f32 %v1406, %v1546
    %v1553 = vadd.f32 %v1407, %v1548
    %v1554 = vxor.u32 %v1550, 2147483648
    %v1555 = vmul.f32 %v1554, 1.442695
    %v1556 = vpow.pop %v1555
    %v1557 = vadd.f32 %v1556, 1.0
    %v1558 = vrcp.pop %v1557
    %v1559 = vmul.f32 1.0, %v1558
    %v1560 = vxor.u32 %v1551, 2147483648
    %v1561 = vmul.f32 %v1560, 1.442695
    %v1562 = vpow.pop %v1561
    %v1563 = vadd.f32 %v1562, 1.0
    %v1564 = vrcp.pop %v1563
    %v1565 = vmul.f32 1.0, %v1564
    %v1566 = vtanh.pop %v1552
    %v1567 = vxor.u32 %v1553, 2147483648
    %v1568 = vmul.f32 %v1567, 1.442695
    %v1569 = vpow.pop %v1568
    %v1570 = vadd.f32 %v1569, 1.0
    %v1571 = vrcp.pop %v1570
    %v1572 = vmul.f32 1.0, %v1571
    %v1573 = vmul.f32 %v1565, %v1337
    %v1574 = vmul.f32 %v1559, %v1566
    %v1575 = vadd.f32 %v1573, %v1574
    %v1576 = vtanh.pop %v1575
    %v1577 = vmul.f32 %v1572, %v1576
    %s1578 = scalar_lea.vmem %s2, 20
    %1579 = vst [vmem:[%s1578] sm:$0x3] %v1577
    %v1582 = vunpack.c.l.s4 1983009808
    %v1583 = vunpack.c.0.s8 %v1582
    %v1584 = vlaneseq
    %v1585 = vshrl.u32 %v1584, 7
    %v1586 = vsub.s32 %v1583, %v1585
    %v1587 = vrot.slane %v1577, %v1586
    %v1588 = vcombine.high %v1587, %v1587
    %s1590 = scalar_lea.vmem %s2, 40
    %1591 = vst [vmem:[%s1590 + $0x2] sm:$0x3] %v1588
    %v1592 = vmul.f32 %v1577, %v165
    %v1593 = vmul.f32 %v1577, %v166
    %s1594 = scalar_lea.vmem %s0, 96
    %v1595 = vld [vmem:[%s1594] sm:$0xff]
    %s1596 = scalar_lea.vmem %s0, 144
    %v1597 = vld [vmem:[%s1596 + $0x8] sm:$0xff]
    %v1599 = vcombine.high %v1595, %v1595
    %v1601 = vunpack.c.l.s4 1983009808
    %v1602 = vunpack.c.0.s8 %v1601
    %v1603 = vlaneseq
    %v1604 = vshrl.u32 %v1603, 7
    %v1605 = vsub.s32 %v1602, %v1604
    %v1606 = vrot.slane %v1595, %v1605
    %v1608 = vunpack.c.l.s4 1983009808
    %v1609 = vunpack.c.0.s8 %v1608
    %v1610 = vlaneseq
    %v1611 = vshrl.u32 %v1610, 7
    %v1612 = vsub.s32 %v1609, %v1611
    %v1613 = vrot.slane %v1599, %v1612
    %v1614 = vcombine.high %v1606, %v1606
    %v1615 = vcombine.high %v1613, %v1613
    %v1621 = vcombine.low %v1597, %v1597
    %v1623 = vunpack.c.l.s4 1983009808
    %v1624 = vunpack.c.0.s8 %v1623
    %v1625 = vlaneseq
    %v1626 = vshrl.u32 %v1625, 7
    %v1627 = vsub.s32 %v1624, %v1626
    %v1628 = vrot.slane %v1621, %v1627
    %v1630 = vunpack.c.l.s4 1983009808
    %v1631 = vunpack.c.0.s8 %v1630
    %v1632 = vlaneseq
    %v1633 = vshrl.u32 %v1632, 7
    %v1634 = vsub.s32 %v1631, %v1633
    %v1635 = vrot.slane %v1597, %v1634
    %v1636 = vcombine.high %v1628, %v1628
    %v1637 = vcombine.high %v1635, %v1635
    %v1642 = vsel %vm214, %v1606, %v1628
    %v1643 = vsel %vm214, %v1614, %v1636
    %v1644 = vsel %vm214, %v1613, %v1635
    %v1645 = vsel %vm214, %v1615, %v1637
    %1646 = vmatprep.subr.mxu0 %v26
    %1647 = vmatpush1.msra.mxu0 %v25
    %1648 = vmatprep.subr.mxu0 %v30
    %1649 = vmatpush1.msra.mxu0 %v29
    %1650 = vmatprep.subr.mxu0 %v34
    %1651 = vmatpush1.msra.mxu0 %v33
    %1652 = vmatprep.subr.mxu0 %v38
    %1653 = vmatpush1.msra.mxu0 %v37
    %1654 = vmatprep.subr.mxu0 %v42
    %1655 = vmatpush1.msra.mxu0 %v41
    %1656 = vmatprep.subr.mxu0 %v46
    %1657 = vmatpush1.msra.mxu0 %v45
    %1658 = vmatprep.subr.mxu0 %v50
    %1659 = vmatpush1.msra.mxu0 %v49
    %1660 = vmatprep.subr.mxu0 %v54
    %1661 = vmatpush1.msra.mxu0 %v53
    %1662 = vmatprep.subr.mxu0 %v58
    %1663 = vmatpush1.msra.mxu0 %v57
    %1664 = vmatprep.subr.mxu0 %v62
    %1665 = vmatpush1.msra.mxu0 %v61
    %1666 = vmatprep.subr.mxu0 %v66
    %1667 = vmatpush1.msra.mxu0 %v65
    %1668 = vmatprep.subr.mxu0 %v70
    %1669 = vmatpush1.msra.mxu0 %v69
    %1670 = vmatprep.subr.mxu0 %v74
    %1671 = vmatpush1.msra.mxu0 %v73
    %1672 = vmatprep.subr.mxu0 %v78
    %1673 = vmatpush1.msra.mxu0 %v77
    %1674 = vmatprep.subr.mxu0 %v82
    %1675 = vmatpush1.msra.mxu0 %v81
    %1676 = vmatprep.subr.mxu0 %v86
    %1677 = vmatpush1.msra.mxu0 %v85
    %1678 = vmatprep.subr.mxu0 %v90
    %1679 = vmatpush1.msra.mxu0 %v89
    %1680 = vmatprep.subr.mxu0 %v94
    %1681 = vmatpush1.msra.mxu0 %v93
    %1682 = vmatprep.subr.mxu0 %v98
    %1683 = vmatpush1.msra.mxu0 %v97
    %1684 = vmatprep.subr.mxu0 %v102
    %1685 = vmatpush1.msra.mxu0 %v101
    %1686 = vmatprep.subr.mxu0 %v106
    %1687 = vmatpush1.msra.mxu0 %v105
    %1688 = vmatprep.subr.mxu0 %v110
    %1689 = vmatpush1.msra.mxu0 %v109
    %1690 = vmatprep.subr.mxu0 %v114
    %1691 = vmatpush1.msra.mxu0 %v113
    %1692 = vmatprep.subr.mxu0 %v118
    %1693 = vmatpush1.msra.mxu0 %v117
    %1694 = vmatprep.subr.mxu0 %v122
    %1695 = vmatpush1.msra.mxu0 %v121
    %1696 = vmatprep.subr.mxu0 %v126
    %1697 = vmatpush1.msra.mxu0 %v125
    %1698 = vmatprep.subr.mxu0 %v130
    %1699 = vmatpush1.msra.mxu0 %v129
    %1700 = vmatprep.subr.mxu0 %v134
    %1701 = vmatpush1.msra.mxu0 %v133
    %1702 = vmatprep.subr.mxu0 %v138
    %1703 = vmatpush1.msra.mxu0 %v137
    %1704 = vmatprep.subr.mxu0 %v142
    %1705 = vmatpush1.msra.mxu0 %v141
    %1706 = vmatprep.subr.mxu0 %v146
    %1707 = vmatpush1.msra.mxu0 %v145
    %1708 = vmatprep.subr.mxu0 %v150
    %1709 = vmatpush1.msra.mxu0 %v149
    %1710 = vmatprep.mubr.f32.mxu0 %v1593
    %1711 = vmatmul.mubr.f32.gmra.mrb[0].mxu0 %v1592
    %v1712 = vpop.f32.mrb[0].mxu0
    %v1713 = vadd.f32 0.0, %v1712
    %v1714 = vpop.f32.mrb[0].mxu0
    %v1715 = vadd.f32 0.0, %v1714
    %1716 = vdwg.mxu0
    %1717 = vmatprep.subr.mxu0 %v28
    %1718 = vmatpush1.msra.mxu0 %v27
    %1719 = vmatprep.subr.mxu0 %v32
    %1720 = vmatpush1.msra.mxu0 %v31
    %1721 = vmatprep.subr.mxu0 %v36
    %1722 = vmatpush1.msra.mxu0 %v35
    %1723 = vmatprep.subr.mxu0 %v40
    %1724 = vmatpush1.msra.mxu0 %v39
    %1725 = vmatprep.subr.mxu0 %v44
    %1726 = vmatpush1.msra.mxu0 %v43
    %1727 = vmatprep.subr.mxu0 %v48
    %1728 = vmatpush1.msra.mxu0 %v47
    %1729 = vmatprep.subr.mxu0 %v52
    %1730 = vmatpush1.msra.mxu0 %v51
    %1731 = vmatprep.subr.mxu0 %v56
    %1732 = vmatpush1.msra.mxu0 %v55
    %1733 = vmatprep.subr.mxu0 %v60
    %1734 = vmatpush1.msra.mxu0 %v59
    %1735 = vmatprep.subr.mxu0 %v64
    %1736 = vmatpush1.msra.mxu0 %v63
    %1737 = vmatprep.subr.mxu0 %v68
    %1738 = vmatpush1.msra.mxu0 %v67
    %1739 = vmatprep.subr.mxu0 %v72
    %1740 = vmatpush1.msra.mxu0 %v71
    %1741 = vmatprep.subr.mxu0 %v76
    %1742 = vmatpush1.msra.mxu0 %v75
    %1743 = vmatprep.subr.mxu0 %v80
    %1744 = vmatpush1.msra.mxu0 %v79
    %1745 = vmatprep.subr.mxu0 %v84
    %1746 = vmatpush1.msra.mxu0 %v83
    %1747 = vmatprep.subr.mxu0 %v88
    %1748 = vmatpush1.msra.mxu0 %v87
    %1749 = vmatprep.subr.mxu0 %v92
    %1750 = vmatpush1.msra.mxu0 %v91
    %1751 = vmatprep.subr.mxu0 %v96
    %1752 = vmatpush1.msra.mxu0 %v95
    %1753 = vmatprep.subr.mxu0 %v100
    %1754 = vmatpush1.msra.mxu0 %v99
    %1755 = vmatprep.subr.mxu0 %v104
    %1756 = vmatpush1.msra.mxu0 %v103
    %1757 = vmatprep.subr.mxu0 %v108
    %1758 = vmatpush1.msra.mxu0 %v107
    %1759 = vmatprep.subr.mxu0 %v112
    %1760 = vmatpush1.msra.mxu0 %v111
    %1761 = vmatprep.subr.mxu0 %v116
    %1762 = vmatpush1.msra.mxu0 %v115
    %1763 = vmatprep.subr.mxu0 %v120
    %1764 = vmatpush1.msra.mxu0 %v119
    %1765 = vmatprep.subr.mxu0 %v124
    %1766 = vmatpush1.msra.mxu0 %v123
    %1767 = vmatprep.subr.mxu0 %v128
    %1768 = vmatpush1.msra.mxu0 %v127
    %1769 = vmatprep.subr.mxu0 %v132
    %1770 = vmatpush1.msra.mxu0 %v131
    %1771 = vmatprep.subr.mxu0 %v136
    %1772 = vmatpush1.msra.mxu0 %v135
    %1773 = vmatprep.subr.mxu0 %v140
    %1774 = vmatpush1.msra.mxu0 %v139
    %1775 = vmatprep.subr.mxu0 %v144
    %1776 = vmatpush1.msra.mxu0 %v143
    %1777 = vmatprep.subr.mxu0 %v148
    %1778 = vmatpush1.msra.mxu0 %v147
    %1779 = vmatprep.subr.mxu0 %v152
    %1780 = vmatpush1.msra.mxu0 %v151
    %1781 = vmatprep.mubr.f32.mxu0 %v1593
    %1782 = vmatmul.mubr.f32.gmra.mrb[0].mxu0 %v1592
    %v1783 = vpop.f32.mrb[0].mxu0
    %v1784 = vadd.f32 0.0, %v1783
    %v1785 = vpop.f32.mrb[0].mxu0
    %v1786 = vadd.f32 0.0, %v1785
    %1787 = vdwg.mxu0
    %v1788 = vadd.f32 %v1642, %v1713
    %v1789 = vadd.f32 %v1643, %v1715
    %v1790 = vadd.f32 %v1644, %v1784
    %v1791 = vadd.f32 %v1645, %v1786
    %v1792 = vxor.u32 %v1788, 2147483648
    %v1793 = vmul.f32 %v1792, 1.442695
    %v1794 = vpow.pop %v1793
    %v1795 = vadd.f32 %v1794, 1.0
    %v1796 = vrcp.pop %v1795
    %v1797 = vmul.f32 1.0, %v1796
    %v1798 = vxor.u32 %v1789, 2147483648
    %v1799 = vmul.f32 %v1798, 1.442695
    %v1800 = vpow.pop %v1799
    %v1801 = vadd.f32 %v1800, 1.0
    %v1802 = vrcp.pop %v1801
    %v1803 = vmul.f32 1.0, %v1802
    %v1804 = vtanh.pop %v1790
    %v1805 = vxor.u32 %v1791, 2147483648
    %v1806 = vmul.f32 %v1805, 1.442695
    %v1807 = vpow.pop %v1806
    %v1808 = vadd.f32 %v1807, 1.0
    %v1809 = vrcp.pop %v1808
    %v1810 = vmul.f32 1.0, %v1809
    %v1811 = vmul.f32 %v1803, %v1575
    %v1812 = vmul.f32 %v1797, %v1804
    %v1813 = vadd.f32 %v1811, %v1812
    %v1814 = vtanh.pop %v1813
    %v1815 = vmul.f32 %v1810, %v1814
    %s1816 = scalar_lea.vmem %s2, 24
    %1817 = vst [vmem:[%s1816] sm:$0x3] %v1815
    %v1820 = vunpack.c.l.s4 1983009808
    %v1821 = vunpack.c.0.s8 %v1820
    %v1822 = vlaneseq
    %v1823 = vshrl.u32 %v1822, 7
    %v1824 = vsub.s32 %v1821, %v1823
    %v1825 = vrot.slane %v1815, %v1824
    %v1826 = vcombine.high %v1825, %v1825
    %s1828 = scalar_lea.vmem %s2, 36
    %1829 = vst [vmem:[%s1828 + $0x2] sm:$0x3] %v1826
    %v1830 = vmul.f32 %v1815, %v165
    %v1831 = vmul.f32 %v1815, %v166
    %s1832 = scalar_lea.vmem %s0, 112
    %v1833 = vld [vmem:[%s1832] sm:$0xff]
    %s1834 = scalar_lea.vmem %s0, 128
    %v1835 = vld [vmem:[%s1834 + $0x8] sm:$0xff]
    %v1837 = vcombine.high %v1833, %v1833
    %v1839 = vunpack.c.l.s4 1983009808
    %v1840 = vunpack.c.0.s8 %v1839
    %v1841 = vlaneseq
    %v1842 = vshrl.u32 %v1841, 7
    %v1843 = vsub.s32 %v1840, %v1842
    %v1844 = vrot.slane %v1833, %v1843
    %v1846 = vunpack.c.l.s4 1983009808
    %v1847 = vunpack.c.0.s8 %v1846
    %v1848 = vlaneseq
    %v1849 = vshrl.u32 %v1848, 7
    %v1850 = vsub.s32 %v1847, %v1849
    %v1851 = vrot.slane %v1837, %v1850
    %v1852 = vcombine.high %v1844, %v1844
    %v1853 = vcombine.high %v1851, %v1851
    %v1859 = vcombine.low %v1835, %v1835
    %v1861 = vunpack.c.l.s4 1983009808
    %v1862 = vunpack.c.0.s8 %v1861
    %v1863 = vlaneseq
    %v1864 = vshrl.u32 %v1863, 7
    %v1865 = vsub.s32 %v1862, %v1864
    %v1866 = vrot.slane %v1859, %v1865
    %v1868 = vunpack.c.l.s4 1983009808
    %v1869 = vunpack.c.0.s8 %v1868
    %v1870 = vlaneseq
    %v1871 = vshrl.u32 %v1870, 7
    %v1872 = vsub.s32 %v1869, %v1871
    %v1873 = vrot.slane %v1835, %v1872
    %v1874 = vcombine.high %v1866, %v1866
    %v1875 = vcombine.high %v1873, %v1873
    %v1880 = vsel %vm214, %v1844, %v1866
    %v1881 = vsel %vm214, %v1852, %v1874
    %v1882 = vsel %vm214, %v1851, %v1873
    %v1883 = vsel %vm214, %v1853, %v1875
    %1884 = vmatprep.subr.mxu0 %v26
    %1885 = vmatpush1.msra.mxu0 %v25
    %1886 = vmatprep.subr.mxu0 %v30
    %1887 = vmatpush1.msra.mxu0 %v29
    %1888 = vmatprep.subr.mxu0 %v34
    %1889 = vmatpush1.msra.mxu0 %v33
    %1890 = vmatprep.subr.mxu0 %v38
    %1891 = vmatpush1.msra.mxu0 %v37
    %1892 = vmatprep.subr.mxu0 %v42
    %1893 = vmatpush1.msra.mxu0 %v41
    %1894 = vmatprep.subr.mxu0 %v46
    %1895 = vmatpush1.msra.mxu0 %v45
    %1896 = vmatprep.subr.mxu0 %v50
    %1897 = vmatpush1.msra.mxu0 %v49
    %1898 = vmatprep.subr.mxu0 %v54
    %1899 = vmatpush1.msra.mxu0 %v53
    %1900 = vmatprep.subr.mxu0 %v58
    %1901 = vmatpush1.msra.mxu0 %v57
    %1902 = vmatprep.subr.mxu0 %v62
    %1903 = vmatpush1.msra.mxu0 %v61
    %1904 = vmatprep.subr.mxu0 %v66
    %1905 = vmatpush1.msra.mxu0 %v65
    %1906 = vmatprep.subr.mxu0 %v70
    %1907 = vmatpush1.msra.mxu0 %v69
    %1908 = vmatprep.subr.mxu0 %v74
    %1909 = vmatpush1.msra.mxu0 %v73
    %1910 = vmatprep.subr.mxu0 %v78
    %1911 = vmatpush1.msra.mxu0 %v77
    %1912 = vmatprep.subr.mxu0 %v82
    %1913 = vmatpush1.msra.mxu0 %v81
    %1914 = vmatprep.subr.mxu0 %v86
    %1915 = vmatpush1.msra.mxu0 %v85
    %1916 = vmatprep.subr.mxu0 %v90
    %1917 = vmatpush1.msra.mxu0 %v89
    %1918 = vmatprep.subr.mxu0 %v94
    %1919 = vmatpush1.msra.mxu0 %v93
    %1920 = vmatprep.subr.mxu0 %v98
    %1921 = vmatpush1.msra.mxu0 %v97
    %1922 = vmatprep.subr.mxu0 %v102
    %1923 = vmatpush1.msra.mxu0 %v101
    %1924 = vmatprep.subr.mxu0 %v106
    %1925 = vmatpush1.msra.mxu0 %v105
    %1926 = vmatprep.subr.mxu0 %v110
    %1927 = vmatpush1.msra.mxu0 %v109
    %1928 = vmatprep.subr.mxu0 %v114
    %1929 = vmatpush1.msra.mxu0 %v113
    %1930 = vmatprep.subr.mxu0 %v118
    %1931 = vmatpush1.msra.mxu0 %v117
    %1932 = vmatprep.subr.mxu0 %v122
    %1933 = vmatpush1.msra.mxu0 %v121
    %1934 = vmatprep.subr.mxu0 %v126
    %1935 = vmatpush1.msra.mxu0 %v125
    %1936 = vmatprep.subr.mxu0 %v130
    %1937 = vmatpush1.msra.mxu0 %v129
    %1938 = vmatprep.subr.mxu0 %v134
    %1939 = vmatpush1.msra.mxu0 %v133
    %1940 = vmatprep.subr.mxu0 %v138
    %1941 = vmatpush1.msra.mxu0 %v137
    %1942 = vmatprep.subr.mxu0 %v142
    %1943 = vmatpush1.msra.mxu0 %v141
    %1944 = vmatprep.subr.mxu0 %v146
    %1945 = vmatpush1.msra.mxu0 %v145
    %1946 = vmatprep.subr.mxu0 %v150
    %1947 = vmatpush1.msra.mxu0 %v149
    %1948 = vmatprep.mubr.f32.mxu0 %v1831
    %1949 = vmatmul.mubr.f32.gmra.mrb[0].mxu0 %v1830
    %v1950 = vpop.f32.mrb[0].mxu0
    %v1951 = vadd.f32 0.0, %v1950
    %v1952 = vpop.f32.mrb[0].mxu0
    %v1953 = vadd.f32 0.0, %v1952
    %1954 = vdwg.mxu0
    %1955 = vmatprep.subr.mxu0 %v28
    %1956 = vmatpush1.msra.mxu0 %v27
    %1957 = vmatprep.subr.mxu0 %v32
    %1958 = vmatpush1.msra.mxu0 %v31
    %1959 = vmatprep.subr.mxu0 %v36
    %1960 = vmatpush1.msra.mxu0 %v35
    %1961 = vmatprep.subr.mxu0 %v40
    %1962 = vmatpush1.msra.mxu0 %v39
    %1963 = vmatprep.subr.mxu0 %v44
    %1964 = vmatpush1.msra.mxu0 %v43
    %1965 = vmatprep.subr.mxu0 %v48
    %1966 = vmatpush1.msra.mxu0 %v47
    %1967 = vmatprep.subr.mxu0 %v52
    %1968 = vmatpush1.msra.mxu0 %v51
    %1969 = vmatprep.subr.mxu0 %v56
    %1970 = vmatpush1.msra.mxu0 %v55
    %1971 = vmatprep.subr.mxu0 %v60
    %1972 = vmatpush1.msra.mxu0 %v59
    %1973 = vmatprep.subr.mxu0 %v64
    %1974 = vmatpush1.msra.mxu0 %v63
    %1975 = vmatprep.subr.mxu0 %v68
    %1976 = vmatpush1.msra.mxu0 %v67
    %1977 = vmatprep.subr.mxu0 %v72
    %1978 = vmatpush1.msra.mxu0 %v71
    %1979 = vmatprep.subr.mxu0 %v76
    %1980 = vmatpush1.msra.mxu0 %v75
    %1981 = vmatprep.subr.mxu0 %v80
    %1982 = vmatpush1.msra.mxu0 %v79
    %1983 = vmatprep.subr.mxu0 %v84
    %1984 = vmatpush1.msra.mxu0 %v83
    %1985 = vmatprep.subr.mxu0 %v88
    %1986 = vmatpush1.msra.mxu0 %v87
    %1987 = vmatprep.subr.mxu0 %v92
    %1988 = vmatpush1.msra.mxu0 %v91
    %1989 = vmatprep.subr.mxu0 %v96
    %1990 = vmatpush1.msra.mxu0 %v95
    %1991 = vmatprep.subr.mxu0 %v100
    %1992 = vmatpush1.msra.mxu0 %v99
    %1993 = vmatprep.subr.mxu0 %v104
    %1994 = vmatpush1.msra.mxu0 %v103
    %1995 = vmatprep.subr.mxu0 %v108
    %1996 = vmatpush1.msra.mxu0 %v107
    %1997 = vmatprep.subr.mxu0 %v112
    %1998 = vmatpush1.msra.mxu0 %v111
    %1999 = vmatprep.subr.mxu0 %v116
    %2000 = vmatpush1.msra.mxu0 %v115
    %2001 = vmatprep.subr.mxu0 %v120
    %2002 = vmatpush1.msra.mxu0 %v119
    %2003 = vmatprep.subr.mxu0 %v124
    %2004 = vmatpush1.msra.mxu0 %v123
    %2005 = vmatprep.subr.mxu0 %v128
    %2006 = vmatpush1.msra.mxu0 %v127
    %2007 = vmatprep.subr.mxu0 %v132
    %2008 = vmatpush1.msra.mxu0 %v131
    %2009 = vmatprep.subr.mxu0 %v136
    %2010 = vmatpush1.msra.mxu0 %v135
    %2011 = vmatprep.subr.mxu0 %v140
    %2012 = vmatpush1.msra.mxu0 %v139
    %2013 = vmatprep.subr.mxu0 %v144
    %2014 = vmatpush1.msra.mxu0 %v143
    %2015 = vmatprep.subr.mxu0 %v148
    %2016 = vmatpush1.msra.mxu0 %v147
    %2017 = vmatprep.subr.mxu0 %v152
    %2018 = vmatpush1.msra.mxu0 %v151
    %2019 = vmatprep.mubr.f32.mxu0 %v1831
    %2020 = vmatmul.mubr.f32.gmra.mrb[0].mxu0 %v1830
    %v2021 = vpop.f32.mrb[0].mxu0
    %v2022 = vadd.f32 0.0, %v2021
    %v2023 = vpop.f32.mrb[0].mxu0
    %v2024 = vadd.f32 0.0, %v2023
    %2025 = vdwg.mxu0
    %v2026 = vadd.f32 %v1880, %v1951
    %v2027 = vadd.f32 %v1881, %v1953
    %v2028 = vadd.f32 %v1882, %v2022
    %v2029 = vadd.f32 %v1883, %v2024
    %v2030 = vxor.u32 %v2026, 2147483648
    %v2031 = vmul.f32 %v2030, 1.442695
    %v2032 = vpow.pop %v2031
    %v2033 = vadd.f32 %v2032, 1.0
    %v2034 = vrcp.pop %v2033
    %v2035 = vmul.f32 1.0, %v2034
    %v2036 = vxor.u32 %v2027, 2147483648
    %v2037 = vmul.f32 %v2036, 1.442695
    %v2038 = vpow.pop %v2037
    %v2039 = vadd.f32 %v2038, 1.0
    %v2040 = vrcp.pop %v2039
    %v2041 = vmul.f32 1.0, %v2040
    %v2042 = vtanh.pop %v2028
    %v2043 = vxor.u32 %v2029, 2147483648
    %v2044 = vmul.f32 %v2043, 1.442695
    %v2045 = vpow.pop %v2044
    %v2046 = vadd.f32 %v2045, 1.0
    %v2047 = vrcp.pop %v2046
    %v2048 = vmul.f32 1.0, %v2047
    %v2049 = vmul.f32 %v2041, %v1813
    %v2050 = vmul.f32 %v2035, %v2042
    %v2051 = vadd.f32 %v2049, %v2050
    %v2052 = vtanh.pop %v2051
    %v2053 = vmul.f32 %v2048, %v2052
    %s2054 = scalar_lea.vmem %s2, 28
    %2055 = vst [vmem:[%s2054] sm:$0x3] %v2053
    %v2058 = vunpack.c.l.s4 1983009808
    %v2059 = vunpack.c.0.s8 %v2058
    %v2060 = vlaneseq
    %v2061 = vshrl.u32 %v2060, 7
    %v2062 = vsub.s32 %v2059, %v2061
    %v2063 = vrot.slane %v2053, %v2062
    %v2064 = vcombine.high %v2063, %v2063
    %s2066 = scalar_lea.vmem %s2, 32
    %2067 = vst [vmem:[%s2066 + $0x2] sm:$0x3] %v2064
    %v2068 = vmul.f32 %v2053, %v165
    %v2069 = vmul.f32 %v2053, %v166
    %v2070 = vld [vmem:[%s1834] sm:$0xff]
    %v2071 = vld [vmem:[%s1832 + $0x8] sm:$0xff]
    %v2073 = vcombine.high %v2070, %v2070
    %v2075 = vunpack.c.l.s4 1983009808
    %v2076 = vunpack.c.0.s8 %v2075
    %v2077 = vlaneseq
    %v2078 = vshrl.u32 %v2077, 7
    %v2079 = vsub.s32 %v2076, %v2078
    %v2080 = vrot.slane %v2070, %v2079
    %v2082 = vunpack.c.l.s4 1983009808
    %v2083 = vunpack.c.0.s8 %v2082
    %v2084 = vlaneseq
    %v2085 = vshrl.u32 %v2084, 7
    %v2086 = vsub.s32 %v2083, %v2085
    %v2087 = vrot.slane %v2073, %v2086
    %v2088 = vcombine.high %v2080, %v2080
    %v2089 = vcombine.high %v2087, %v2087
    %v2095 = vcombine.low %v2071, %v2071
    %v2097 = vunpack.c.l.s4 1983009808
    %v2098 = vunpack.c.0.s8 %v2097
    %v2099 = vlaneseq
    %v2100 = vshrl.u32 %v2099, 7
    %v2101 = vsub.s32 %v2098, %v2100
    %v2102 = vrot.slane %v2095, %v2101
    %v2104 = vunpack.c.l.s4 1983009808
    %v2105 = vunpack.c.0.s8 %v2104
    %v2106 = vlaneseq
    %v2107 = vshrl.u32 %v2106, 7
    %v2108 = vsub.s32 %v2105, %v2107
    %v2109 = vrot.slane %v2071, %v2108
    %v2110 = vcombine.high %v2102, %v2102
    %v2111 = vcombine.high %v2109, %v2109
    %v2116 = vsel %vm214, %v2080, %v2102
    %v2117 = vsel %vm214, %v2088, %v2110
    %v2118 = vsel %vm214, %v2087, %v2109
    %v2119 = vsel %vm214, %v2089, %v2111
    %2120 = vmatprep.subr.mxu0 %v26
    %2121 = vmatpush1.msra.mxu0 %v25
    %2122 = vmatprep.subr.mxu0 %v30
    %2123 = vmatpush1.msra.mxu0 %v29
    %2124 = vmatprep.subr.mxu0 %v34
    %2125 = vmatpush1.msra.mxu0 %v33
    %2126 = vmatprep.subr.mxu0 %v38
    %2127 = vmatpush1.msra.mxu0 %v37
    %2128 = vmatprep.subr.mxu0 %v42
    %2129 = vmatpush1.msra.mxu0 %v41
    %2130 = vmatprep.subr.mxu0 %v46
    %2131 = vmatpush1.msra.mxu0 %v45
    %2132 = vmatprep.subr.mxu0 %v50
    %2133 = vmatpush1.msra.mxu0 %v49
    %2134 = vmatprep.subr.mxu0 %v54
    %2135 = vmatpush1.msra.mxu0 %v53
    %2136 = vmatprep.subr.mxu0 %v58
    %2137 = vmatpush1.msra.mxu0 %v57
    %2138 = vmatprep.subr.mxu0 %v62
    %2139 = vmatpush1.msra.mxu0 %v61
    %2140 = vmatprep.subr.mxu0 %v66
    %2141 = vmatpush1.msra.mxu0 %v65
    %2142 = vmatprep.subr.mxu0 %v70
    %2143 = vmatpush1.msra.mxu0 %v69
    %2144 = vmatprep.subr.mxu0 %v74
    %2145 = vmatpush1.msra.mxu0 %v73
    %2146 = vmatprep.subr.mxu0 %v78
    %2147 = vmatpush1.msra.mxu0 %v77
    %2148 = vmatprep.subr.mxu0 %v82
    %2149 = vmatpush1.msra.mxu0 %v81
    %2150 = vmatprep.subr.mxu0 %v86
    %2151 = vmatpush1.msra.mxu0 %v85
    %2152 = vmatprep.subr.mxu0 %v90
    %2153 = vmatpush1.msra.mxu0 %v89
    %2154 = vmatprep.subr.mxu0 %v94
    %2155 = vmatpush1.msra.mxu0 %v93
    %2156 = vmatprep.subr.mxu0 %v98
    %2157 = vmatpush1.msra.mxu0 %v97
    %2158 = vmatprep.subr.mxu0 %v102
    %2159 = vmatpush1.msra.mxu0 %v101
    %2160 = vmatprep.subr.mxu0 %v106
    %2161 = vmatpush1.msra.mxu0 %v105
    %2162 = vmatprep.subr.mxu0 %v110
    %2163 = vmatpush1.msra.mxu0 %v109
    %2164 = vmatprep.subr.mxu0 %v114
    %2165 = vmatpush1.msra.mxu0 %v113
    %2166 = vmatprep.subr.mxu0 %v118
    %2167 = vmatpush1.msra.mxu0 %v117
    %2168 = vmatprep.subr.mxu0 %v122
    %2169 = vmatpush1.msra.mxu0 %v121
    %2170 = vmatprep.subr.mxu0 %v126
    %2171 = vmatpush1.msra.mxu0 %v125
    %2172 = vmatprep.subr.mxu0 %v130
    %2173 = vmatpush1.msra.mxu0 %v129
    %2174 = vmatprep.subr.mxu0 %v134
    %2175 = vmatpush1.msra.mxu0 %v133
    %2176 = vmatprep.subr.mxu0 %v138
    %2177 = vmatpush1.msra.mxu0 %v137
    %2178 = vmatprep.subr.mxu0 %v142
    %2179 = vmatpush1.msra.mxu0 %v141
    %2180 = vmatprep.subr.mxu0 %v146
    %2181 = vmatpush1.msra.mxu0 %v145
    %2182 = vmatprep.subr.mxu0 %v150
    %2183 = vmatpush1.msra.mxu0 %v149
    %2184 = vmatprep.mubr.f32.mxu0 %v2069
    %2185 = vmatmul.mubr.f32.gmra.mrb[0].mxu0 %v2068
    %v2186 = vpop.f32.mrb[0].mxu0
    %v2187 = vadd.f32 0.0, %v2186
    %v2188 = vpop.f32.mrb[0].mxu0
    %v2189 = vadd.f32 0.0, %v2188
    %2190 = vdwg.mxu0
    %2191 = vmatprep.subr.mxu0 %v28
    %2192 = vmatpush1.msra.mxu0 %v27
    %2193 = vmatprep.subr.mxu0 %v32
    %2194 = vmatpush1.msra.mxu0 %v31
    %2195 = vmatprep.subr.mxu0 %v36
    %2196 = vmatpush1.msra.mxu0 %v35
    %2197 = vmatprep.subr.mxu0 %v40
    %2198 = vmatpush1.msra.mxu0 %v39
    %2199 = vmatprep.subr.mxu0 %v44
    %2200 = vmatpush1.msra.mxu0 %v43
    %2201 = vmatprep.subr.mxu0 %v48
    %2202 = vmatpush1.msra.mxu0 %v47
    %2203 = vmatprep.subr.mxu0 %v52
    %2204 = vmatpush1.msra.mxu0 %v51
    %2205 = vmatprep.subr.mxu0 %v56
    %2206 = vmatpush1.msra.mxu0 %v55
    %2207 = vmatprep.subr.mxu0 %v60
    %2208 = vmatpush1.msra.mxu0 %v59
    %2209 = vmatprep.subr.mxu0 %v64
    %2210 = vmatpush1.msra.mxu0 %v63
    %2211 = vmatprep.subr.mxu0 %v68
    %2212 = vmatpush1.msra.mxu0 %v67
    %2213 = vmatprep.subr.mxu0 %v72
    %2214 = vmatpush1.msra.mxu0 %v71
    %2215 = vmatprep.subr.mxu0 %v76
    %2216 = vmatpush1.msra.mxu0 %v75
    %2217 = vmatprep.subr.mxu0 %v80
    %2218 = vmatpush1.msra.mxu0 %v79
    %2219 = vmatprep.subr.mxu0 %v84
    %2220 = vmatpush1.msra.mxu0 %v83
    %2221 = vmatprep.subr.mxu0 %v88
    %2222 = vmatpush1.msra.mxu0 %v87
    %2223 = vmatprep.subr.mxu0 %v92
    %2224 = vmatpush1.msra.mxu0 %v91
    %2225 = vmatprep.subr.mxu0 %v96
    %2226 = vmatpush1.msra.mxu0 %v95
    %2227 = vmatprep.subr.mxu0 %v100
    %2228 = vmatpush1.msra.mxu0 %v99
    %2229 = vmatprep.subr.mxu0 %v104
    %2230 = vmatpush1.msra.mxu0 %v103
    %2231 = vmatprep.subr.mxu0 %v108
    %2232 = vmatpush1.msra.mxu0 %v107
    %2233 = vmatprep.subr.mxu0 %v112
    %2234 = vmatpush1.msra.mxu0 %v111
    %2235 = vmatprep.subr.mxu0 %v116
    %2236 = vmatpush1.msra.mxu0 %v115
    %2237 = vmatprep.subr.mxu0 %v120
    %2238 = vmatpush1.msra.mxu0 %v119
    %2239 = vmatprep.subr.mxu0 %v124
    %2240 = vmatpush1.msra.mxu0 %v123
    %2241 = vmatprep.subr.mxu0 %v128
    %2242 = vmatpush1.msra.mxu0 %v127
    %2243 = vmatprep.subr.mxu0 %v132
    %2244 = vmatpush1.msra.mxu0 %v131
    %2245 = vmatprep.subr.mxu0 %v136
    %2246 = vmatpush1.msra.mxu0 %v135
    %2247 = vmatprep.subr.mxu0 %v140
    %2248 = vmatpush1.msra.mxu0 %v139
    %2249 = vmatprep.subr.mxu0 %v144
    %2250 = vmatpush1.msra.mxu0 %v143
    %2251 = vmatprep.subr.mxu0 %v148
    %2252 = vmatpush1.msra.mxu0 %v147
    %2253 = vmatprep.subr.mxu0 %v152
    %2254 = vmatpush1.msra.mxu0 %v151
    %2255 = vmatprep.mubr.f32.mxu0 %v2069
    %2256 = vmatmul.mubr.f32.gmra.mrb[0].mxu0 %v2068
    %v2257 = vpop.f32.mrb[0].mxu0
    %v2258 = vadd.f32 0.0, %v2257
    %v2259 = vpop.f32.mrb[0].mxu0
    %v2260 = vadd.f32 0.0, %v2259
    %2261 = vdwg.mxu0
    %v2262 = vadd.f32 %v2116, %v2187
    %v2263 = vadd.f32 %v2117, %v2189
    %v2264 = vadd.f32 %v2118, %v2258
    %v2265 = vadd.f32 %v2119, %v2260
    %v2266 = vxor.u32 %v2262, 2147483648
    %v2267 = vmul.f32 %v2266, 1.442695
    %v2268 = vpow.pop %v2267
    %v2269 = vadd.f32 %v2268, 1.0
    %v2270 = vrcp.pop %v2269
    %v2271 = vmul.f32 1.0, %v2270
    %v2272 = vxor.u32 %v2263, 2147483648
    %v2273 = vmul.f32 %v2272, 1.442695
    %v2274 = vpow.pop %v2273
    %v2275 = vadd.f32 %v2274, 1.0
    %v2276 = vrcp.pop %v2275
    %v2277 = vmul.f32 1.0, %v2276
    %v2278 = vtanh.pop %v2264
    %v2279 = vxor.u32 %v2265, 2147483648
    %v2280 = vmul.f32 %v2279, 1.442695
    %v2281 = vpow.pop %v2280
    %v2282 = vadd.f32 %v2281, 1.0
    %v2283 = vrcp.pop %v2282
    %v2284 = vmul.f32 1.0, %v2283
    %v2285 = vmul.f32 %v2277, %v2051
    %v2286 = vmul.f32 %v2271, %v2278
    %v2287 = vadd.f32 %v2285, %v2286
    %v2288 = vtanh.pop %v2287
    %v2289 = vmul.f32 %v2284, %v2288
    %2290 = vst [vmem:[%s2066] sm:$0x3] %v2289
    %v2293 = vunpack.c.l.s4 1983009808
    %v2294 = vunpack.c.0.s8 %v2293
    %v2295 = vlaneseq
    %v2296 = vshrl.u32 %v2295, 7
    %v2297 = vsub.s32 %v2294, %v2296
    %v2298 = vrot.slane %v2289, %v2297
    %v2299 = vcombine.high %v2298, %v2298
    %2301 = vst [vmem:[%s2054 + $0x2] sm:$0x3] %v2299
    %v2302 = vmul.f32 %v2289, %v165
    %v2303 = vmul.f32 %v2289, %v166
    %v2304 = vld [vmem:[%s1596] sm:$0xff]
    %v2305 = vld [vmem:[%s1594 + $0x8] sm:$0xff]
    %v2307 = vcombine.high %v2304, %v2304
    %v2309 = vunpack.c.l.s4 1983009808
    %v2310 = vunpack.c.0.s8 %v2309
    %v2311 = vlaneseq
    %v2312 = vshrl.u32 %v2311, 7
    %v2313 = vsub.s32 %v2310, %v2312
    %v2314 = vrot.slane %v2304, %v2313
    %v2316 = vunpack.c.l.s4 1983009808
    %v2317 = vunpack.c.0.s8 %v2316
    %v2318 = vlaneseq
    %v2319 = vshrl.u32 %v2318, 7
    %v2320 = vsub.s32 %v2317, %v2319
    %v2321 = vrot.slane %v2307, %v2320
    %v2322 = vcombine.high %v2314, %v2314
    %v2323 = vcombine.high %v2321, %v2321
    %v2329 = vcombine.low %v2305, %v2305
    %v2331 = vunpack.c.l.s4 1983009808
    %v2332 = vunpack.c.0.s8 %v2331
    %v2333 = vlaneseq
    %v2334 = vshrl.u32 %v2333, 7
    %v2335 = vsub.s32 %v2332, %v2334
    %v2336 = vrot.slane %v2329, %v2335
    %v2338 = vunpack.c.l.s4 1983009808
    %v2339 = vunpack.c.0.s8 %v2338
    %v2340 = vlaneseq
    %v2341 = vshrl.u32 %v2340, 7
    %v2342 = vsub.s32 %v2339, %v2341
    %v2343 = vrot.slane %v2305, %v2342
    %v2344 = vcombine.high %v2336, %v2336
    %v2345 = vcombine.high %v2343, %v2343
    %v2350 = vsel %vm214, %v2314, %v2336
    %v2351 = vsel %vm214, %v2322, %v2344
    %v2352 = vsel %vm214, %v2321, %v2343
    %v2353 = vsel %vm214, %v2323, %v2345
    %2354 = vmatprep.subr.mxu0 %v26
    %2355 = vmatpush1.msra.mxu0 %v25
    %2356 = vmatprep.subr.mxu0 %v30
    %2357 = vmatpush1.msra.mxu0 %v29
    %2358 = vmatprep.subr.mxu0 %v34
    %2359 = vmatpush1.msra.mxu0 %v33
    %2360 = vmatprep.subr.mxu0 %v38
    %2361 = vmatpush1.msra.mxu0 %v37
    %2362 = vmatprep.subr.mxu0 %v42
    %2363 = vmatpush1.msra.mxu0 %v41
    %2364 = vmatprep.subr.mxu0 %v46
    %2365 = vmatpush1.msra.mxu0 %v45
    %2366 = vmatprep.subr.mxu0 %v50
    %2367 = vmatpush1.msra.mxu0 %v49
    %2368 = vmatprep.subr.mxu0 %v54
    %2369 = vmatpush1.msra.mxu0 %v53
    %2370 = vmatprep.subr.mxu0 %v58
    %2371 = vmatpush1.msra.mxu0 %v57
    %2372 = vmatprep.subr.mxu0 %v62
    %2373 = vmatpush1.msra.mxu0 %v61
    %2374 = vmatprep.subr.mxu0 %v66
    %2375 = vmatpush1.msra.mxu0 %v65
    %2376 = vmatprep.subr.mxu0 %v70
    %2377 = vmatpush1.msra.mxu0 %v69
    %2378 = vmatprep.subr.mxu0 %v74
    %2379 = vmatpush1.msra.mxu0 %v73
    %2380 = vmatprep.subr.mxu0 %v78
    %2381 = vmatpush1.msra.mxu0 %v77
    %2382 = vmatprep.subr.mxu0 %v82
    %2383 = vmatpush1.msra.mxu0 %v81
    %2384 = vmatprep.subr.mxu0 %v86
    %2385 = vmatpush1.msra.mxu0 %v85
    %2386 = vmatprep.subr.mxu0 %v90
    %2387 = vmatpush1.msra.mxu0 %v89
    %2388 = vmatprep.subr.mxu0 %v94
    %2389 = vmatpush1.msra.mxu0 %v93
    %2390 = vmatprep.subr.mxu0 %v98
    %2391 = vmatpush1.msra.mxu0 %v97
    %2392 = vmatprep.subr.mxu0 %v102
    %2393 = vmatpush1.msra.mxu0 %v101
    %2394 = vmatprep.subr.mxu0 %v106
    %2395 = vmatpush1.msra.mxu0 %v105
    %2396 = vmatprep.subr.mxu0 %v110
    %2397 = vmatpush1.msra.mxu0 %v109
    %2398 = vmatprep.subr.mxu0 %v114
    %2399 = vmatpush1.msra.mxu0 %v113
    %2400 = vmatprep.subr.mxu0 %v118
    %2401 = vmatpush1.msra.mxu0 %v117
    %2402 = vmatprep.subr.mxu0 %v122
    %2403 = vmatpush1.msra.mxu0 %v121
    %2404 = vmatprep.subr.mxu0 %v126
    %2405 = vmatpush1.msra.mxu0 %v125
    %2406 = vmatprep.subr.mxu0 %v130
    %2407 = vmatpush1.msra.mxu0 %v129
    %2408 = vmatprep.subr.mxu0 %v134
    %2409 = vmatpush1.msra.mxu0 %v133
    %2410 = vmatprep.subr.mxu0 %v138
    %2411 = vmatpush1.msra.mxu0 %v137
    %2412 = vmatprep.subr.mxu0 %v142
    %2413 = vmatpush1.msra.mxu0 %v141
    %2414 = vmatprep.subr.mxu0 %v146
    %2415 = vmatpush1.msra.mxu0 %v145
    %2416 = vmatprep.subr.mxu0 %v150
    %2417 = vmatpush1.msra.mxu0 %v149
    %2418 = vmatprep.mubr.f32.mxu0 %v2303
    %2419 = vmatmul.mubr.f32.gmra.mrb[0].mxu0 %v2302
    %v2420 = vpop.f32.mrb[0].mxu0
    %v2421 = vadd.f32 0.0, %v2420
    %v2422 = vpop.f32.mrb[0].mxu0
    %v2423 = vadd.f32 0.0, %v2422
    %2424 = vdwg.mxu0
    %2425 = vmatprep.subr.mxu0 %v28
    %2426 = vmatpush1.msra.mxu0 %v27
    %2427 = vmatprep.subr.mxu0 %v32
    %2428 = vmatpush1.msra.mxu0 %v31
    %2429 = vmatprep.subr.mxu0 %v36
    %2430 = vmatpush1.msra.mxu0 %v35
    %2431 = vmatprep.subr.mxu0 %v40
    %2432 = vmatpush1.msra.mxu0 %v39
    %2433 = vmatprep.subr.mxu0 %v44
    %2434 = vmatpush1.msra.mxu0 %v43
    %2435 = vmatprep.subr.mxu0 %v48
    %2436 = vmatpush1.msra.mxu0 %v47
    %2437 = vmatprep.subr.mxu0 %v52
    %2438 = vmatpush1.msra.mxu0 %v51
    %2439 = vmatprep.subr.mxu0 %v56
    %2440 = vmatpush1.msra.mxu0 %v55
    %2441 = vmatprep.subr.mxu0 %v60
    %2442 = vmatpush1.msra.mxu0 %v59
    %2443 = vmatprep.subr.mxu0 %v64
    %2444 = vmatpush1.msra.mxu0 %v63
    %2445 = vmatprep.subr.mxu0 %v68
    %2446 = vmatpush1.msra.mxu0 %v67
    %2447 = vmatprep.subr.mxu0 %v72
    %2448 = vmatpush1.msra.mxu0 %v71
    %2449 = vmatprep.subr.mxu0 %v76
    %2450 = vmatpush1.msra.mxu0 %v75
    %2451 = vmatprep.subr.mxu0 %v80
    %2452 = vmatpush1.msra.mxu0 %v79
    %2453 = vmatprep.subr.mxu0 %v84
    %2454 = vmatpush1.msra.mxu0 %v83
    %2455 = vmatprep.subr.mxu0 %v88
    %2456 = vmatpush1.msra.mxu0 %v87
    %2457 = vmatprep.subr.mxu0 %v92
    %2458 = vmatpush1.msra.mxu0 %v91
    %2459 = vmatprep.subr.mxu0 %v96
    %2460 = vmatpush1.msra.mxu0 %v95
    %2461 = vmatprep.subr.mxu0 %v100
    %2462 = vmatpush1.msra.mxu0 %v99
    %2463 = vmatprep.subr.mxu0 %v104
    %2464 = vmatpush1.msra.mxu0 %v103
    %2465 = vmatprep.subr.mxu0 %v108
    %2466 = vmatpush1.msra.mxu0 %v107
    %2467 = vmatprep.subr.mxu0 %v112
    %2468 = vmatpush1.msra.mxu0 %v111
    %2469 = vmatprep.subr.mxu0 %v116
    %2470 = vmatpush1.msra.mxu0 %v115
    %2471 = vmatprep.subr.mxu0 %v120
    %2472 = vmatpush1.msra.mxu0 %v119
    %2473 = vmatprep.subr.mxu0 %v124
    %2474 = vmatpush1.msra.mxu0 %v123
    %2475 = vmatprep.subr.mxu0 %v128
    %2476 = vmatpush1.msra.mxu0 %v127
    %2477 = vmatprep.subr.mxu0 %v132
    %2478 = vmatpush1.msra.mxu0 %v131
    %2479 = vmatprep.subr.mxu0 %v136
    %2480 = vmatpush1.msra.mxu0 %v135
    %2481 = vmatprep.subr.mxu0 %v140
    %2482 = vmatpush1.msra.mxu0 %v139
    %2483 = vmatprep.subr.mxu0 %v144
    %2484 = vmatpush1.msra.mxu0 %v143
    %2485 = vmatprep.subr.mxu0 %v148
    %2486 = vmatpush1.msra.mxu0 %v147
    %2487 = vmatprep.subr.mxu0 %v152
    %2488 = vmatpush1.msra.mxu0 %v151
    %2489 = vmatprep.mubr.f32.mxu0 %v2303
    %2490 = vmatmul.mubr.f32.gmra.mrb[0].mxu0 %v2302
    %v2491 = vpop.f32.mrb[0].mxu0
    %v2492 = vadd.f32 0.0, %v2491
    %v2493 = vpop.f32.mrb[0].mxu0
    %v2494 = vadd.f32 0.0, %v2493
    %2495 = vdwg.mxu0
    %v2496 = vadd.f32 %v2350, %v2421
    %v2497 = vadd.f32 %v2351, %v2423
    %v2498 = vadd.f32 %v2352, %v2492
    %v2499 = vadd.f32 %v2353, %v2494
    %v2500 = vxor.u32 %v2496, 2147483648
    %v2501 = vmul.f32 %v2500, 1.442695
    %v2502 = vpow.pop %v2501
    %v2503 = vadd.f32 %v2502, 1.0
    %v2504 = vrcp.pop %v2503
    %v2505 = vmul.f32 1.0, %v2504
    %v2506 = vxor.u32 %v2497, 2147483648
    %v2507 = vmul.f32 %v2506, 1.442695
    %v2508 = vpow.pop %v2507
    %v2509 = vadd.f32 %v2508, 1.0
    %v2510 = vrcp.pop %v2509
    %v2511 = vmul.f32 1.0, %v2510
    %v2512 = vtanh.pop %v2498
    %v2513 = vxor.u32 %v2499, 2147483648
    %v2514 = vmul.f32 %v2513, 1.442695
    %v2515 = vpow.pop %v2514
    %v2516 = vadd.f32 %v2515, 1.0
    %v2517 = vrcp.pop %v2516
    %v2518 = vmul.f32 1.0, %v2517
    %v2519 = vmul.f32 %v2511, %v2287
    %v2520 = vmul.f32 %v2505, %v2512
    %v2521 = vadd.f32 %v2519, %v2520
    %v2522 = vtanh.pop %v2521
    %v2523 = vmul.f32 %v2518, %v2522
    %2524 = vst [vmem:[%s1828] sm:$0x3] %v2523
    %v2527 = vunpack.c.l.s4 1983009808
    %v2528 = vunpack.c.0.s8 %v2527
    %v2529 = vlaneseq
    %v2530 = vshrl.u32 %v2529, 7
    %v2531 = vsub.s32 %v2528, %v2530
    %v2532 = vrot.slane %v2523, %v2531
    %v2533 = vcombine.high %v2532, %v2532
    %2535 = vst [vmem:[%s1816 + $0x2] sm:$0x3] %v2533
    %v2536 = vmul.f32 %v2523, %v165
    %v2537 = vmul.f32 %v2523, %v166
    %v2538 = vld [vmem:[%s1358] sm:$0xff]
    %v2539 = vld [vmem:[%s1356 + $0x8] sm:$0xff]
    %v2541 = vcombine.high %v2538, %v2538
    %v2543 = vunpack.c.l.s4 1983009808
    %v2544 = vunpack.c.0.s8 %v2543
    %v2545 = vlaneseq
    %v2546 = vshrl.u32 %v2545, 7
    %v2547 = vsub.s32 %v2544, %v2546
    %v2548 = vrot.slane %v2538, %v2547
    %v2550 = vunpack.c.l.s4 1983009808
    %v2551 = vunpack.c.0.s8 %v2550
    %v2552 = vlaneseq
    %v2553 = vshrl.u32 %v2552, 7
    %v2554 = vsub.s32 %v2551, %v2553
    %v2555 = vrot.slane %v2541, %v2554
    %v2556 = vcombine.high %v2548, %v2548
    %v2557 = vcombine.high %v2555, %v2555
    %v2563 = vcombine.low %v2539, %v2539
    %v2565 = vunpack.c.l.s4 1983009808
    %v2566 = vunpack.c.0.s8 %v2565
    %v2567 = vlaneseq
    %v2568 = vshrl.u32 %v2567, 7
    %v2569 = vsub.s32 %v2566, %v2568
    %v2570 = vrot.slane %v2563, %v2569
    %v2572 = vunpack.c.l.s4 1983009808
    %v2573 = vunpack.c.0.s8 %v2572
    %v2574 = vlaneseq
    %v2575 = vshrl.u32 %v2574, 7
    %v2576 = vsub.s32 %v2573, %v2575
    %v2577 = vrot.slane %v2539, %v2576
    %v2578 = vcombine.high %v2570, %v2570
    %v2579 = vcombine.high %v2577, %v2577
    %v2584 = vsel %vm214, %v2548, %v2570
    %v2585 = vsel %vm214, %v2556, %v2578
    %v2586 = vsel %vm214, %v2555, %v2577
    %v2587 = vsel %vm214, %v2557, %v2579
    %2588 = vmatprep.subr.mxu0 %v26
    %2589 = vmatpush1.msra.mxu0 %v25
    %2590 = vmatprep.subr.mxu0 %v30
    %2591 = vmatpush1.msra.mxu0 %v29
    %2592 = vmatprep.subr.mxu0 %v34
    %2593 = vmatpush1.msra.mxu0 %v33
    %2594 = vmatprep.subr.mxu0 %v38
    %2595 = vmatpush1.msra.mxu0 %v37
    %2596 = vmatprep.subr.mxu0 %v42
    %2597 = vmatpush1.msra.mxu0 %v41
    %2598 = vmatprep.subr.mxu0 %v46
    %2599 = vmatpush1.msra.mxu0 %v45
    %2600 = vmatprep.subr.mxu0 %v50
    %2601 = vmatpush1.msra.mxu0 %v49
    %2602 = vmatprep.subr.mxu0 %v54
    %2603 = vmatpush1.msra.mxu0 %v53
    %2604 = vmatprep.subr.mxu0 %v58
    %2605 = vmatpush1.msra.mxu0 %v57
    %2606 = vmatprep.subr.mxu0 %v62
    %2607 = vmatpush1.msra.mxu0 %v61
    %2608 = vmatprep.subr.mxu0 %v66
    %2609 = vmatpush1.msra.mxu0 %v65
    %2610 = vmatprep.subr.mxu0 %v70
    %2611 = vmatpush1.msra.mxu0 %v69
    %2612 = vmatprep.subr.mxu0 %v74
    %2613 = vmatpush1.msra.mxu0 %v73
    %2614 = vmatprep.subr.mxu0 %v78
    %2615 = vmatpush1.msra.mxu0 %v77
    %2616 = vmatprep.subr.mxu0 %v82
    %2617 = vmatpush1.msra.mxu0 %v81
    %2618 = vmatprep.subr.mxu0 %v86
    %2619 = vmatpush1.msra.mxu0 %v85
    %2620 = vmatprep.subr.mxu0 %v90
    %2621 = vmatpush1.msra.mxu0 %v89
    %2622 = vmatprep.subr.mxu0 %v94
    %2623 = vmatpush1.msra.mxu0 %v93
    %2624 = vmatprep.subr.mxu0 %v98
    %2625 = vmatpush1.msra.mxu0 %v97
    %2626 = vmatprep.subr.mxu0 %v102
    %2627 = vmatpush1.msra.mxu0 %v101
    %2628 = vmatprep.subr.mxu0 %v106
    %2629 = vmatpush1.msra.mxu0 %v105
    %2630 = vmatprep.subr.mxu0 %v110
    %2631 = vmatpush1.msra.mxu0 %v109
    %2632 = vmatprep.subr.mxu0 %v114
    %2633 = vmatpush1.msra.mxu0 %v113
    %2634 = vmatprep.subr.mxu0 %v118
    %2635 = vmatpush1.msra.mxu0 %v117
    %2636 = vmatprep.subr.mxu0 %v122
    %2637 = vmatpush1.msra.mxu0 %v121
    %2638 = vmatprep.subr.mxu0 %v126
    %2639 = vmatpush1.msra.mxu0 %v125
    %2640 = vmatprep.subr.mxu0 %v130
    %2641 = vmatpush1.msra.mxu0 %v129
    %2642 = vmatprep.subr.mxu0 %v134
    %2643 = vmatpush1.msra.mxu0 %v133
    %2644 = vmatprep.subr.mxu0 %v138
    %2645 = vmatpush1.msra.mxu0 %v137
    %2646 = vmatprep.subr.mxu0 %v142
    %2647 = vmatpush1.msra.mxu0 %v141
    %2648 = vmatprep.subr.mxu0 %v146
    %2649 = vmatpush1.msra.mxu0 %v145
    %2650 = vmatprep.subr.mxu0 %v150
    %2651 = vmatpush1.msra.mxu0 %v149
    %2652 = vmatprep.mubr.f32.mxu0 %v2537
    %2653 = vmatmul.mubr.f32.gmra.mrb[0].mxu0 %v2536
    %v2654 = vpop.f32.mrb[0].mxu0
    %v2655 = vadd.f32 0.0, %v2654
    %v2656 = vpop.f32.mrb[0].mxu0
    %v2657 = vadd.f32 0.0, %v2656
    %2658 = vdwg.mxu0
    %2659 = vmatprep.subr.mxu0 %v28
    %2660 = vmatpush1.msra.mxu0 %v27
    %2661 = vmatprep.subr.mxu0 %v32
    %2662 = vmatpush1.msra.mxu0 %v31
    %2663 = vmatprep.subr.mxu0 %v36
    %2664 = vmatpush1.msra.mxu0 %v35
    %2665 = vmatprep.subr.mxu0 %v40
    %2666 = vmatpush1.msra.mxu0 %v39
    %2667 = vmatprep.subr.mxu0 %v44
    %2668 = vmatpush1.msra.mxu0 %v43
    %2669 = vmatprep.subr.mxu0 %v48
    %2670 = vmatpush1.msra.mxu0 %v47
    %2671 = vmatprep.subr.mxu0 %v52
    %2672 = vmatpush1.msra.mxu0 %v51
    %2673 = vmatprep.subr.mxu0 %v56
    %2674 = vmatpush1.msra.mxu0 %v55
    %2675 = vmatprep.subr.mxu0 %v60
    %2676 = vmatpush1.msra.mxu0 %v59
    %2677 = vmatprep.subr.mxu0 %v64
    %2678 = vmatpush1.msra.mxu0 %v63
    %2679 = vmatprep.subr.mxu0 %v68
    %2680 = vmatpush1.msra.mxu0 %v67
    %2681 = vmatprep.subr.mxu0 %v72
    %2682 = vmatpush1.msra.mxu0 %v71
    %2683 = vmatprep.subr.mxu0 %v76
    %2684 = vmatpush1.msra.mxu0 %v75
    %2685 = vmatprep.subr.mxu0 %v80
    %2686 = vmatpush1.msra.mxu0 %v79
    %2687 = vmatprep.subr.mxu0 %v84
    %2688 = vmatpush1.msra.mxu0 %v83
    %2689 = vmatprep.subr.mxu0 %v88
    %2690 = vmatpush1.msra.mxu0 %v87
    %2691 = vmatprep.subr.mxu0 %v92
    %2692 = vmatpush1.msra.mxu0 %v91
    %2693 = vmatprep.subr.mxu0 %v96
    %2694 = vmatpush1.msra.mxu0 %v95
    %2695 = vmatprep.subr.mxu0 %v100
    %2696 = vmatpush1.msra.mxu0 %v99
    %2697 = vmatprep.subr.mxu0 %v104
    %2698 = vmatpush1.msra.mxu0 %v103
    %2699 = vmatprep.subr.mxu0 %v108
    %2700 = vmatpush1.msra.mxu0 %v107
    %2701 = vmatprep.subr.mxu0 %v112
    %2702 = vmatpush1.msra.mxu0 %v111
    %2703 = vmatprep.subr.mxu0 %v116
    %2704 = vmatpush1.msra.mxu0 %v115
    %2705 = vmatprep.subr.mxu0 %v120
    %2706 = vmatpush1.msra.mxu0 %v119
    %2707 = vmatprep.subr.mxu0 %v124
    %2708 = vmatpush1.msra.mxu0 %v123
    %2709 = vmatprep.subr.mxu0 %v128
    %2710 = vmatpush1.msra.mxu0 %v127
    %2711 = vmatprep.subr.mxu0 %v132
    %2712 = vmatpush1.msra.mxu0 %v131
    %2713 = vmatprep.subr.mxu0 %v136
    %2714 = vmatpush1.msra.mxu0 %v135
    %2715 = vmatprep.subr.mxu0 %v140
    %2716 = vmatpush1.msra.mxu0 %v139
    %2717 = vmatprep.subr.mxu0 %v144
    %2718 = vmatpush1.msra.mxu0 %v143
    %2719 = vmatprep.subr.mxu0 %v148
    %2720 = vmatpush1.msra.mxu0 %v147
    %2721 = vmatprep.subr.mxu0 %v152
    %2722 = vmatpush1.msra.mxu0 %v151
    %2723 = vmatprep.mubr.f32.mxu0 %v2537
    %2724 = vmatmul.mubr.f32.gmra.mrb[0].mxu0 %v2536
    %v2725 = vpop.f32.mrb[0].mxu0
    %v2726 = vadd.f32 0.0, %v2725
    %v2727 = vpop.f32.mrb[0].mxu0
    %v2728 = vadd.f32 0.0, %v2727
    %2729 = vdwg.mxu0
    %v2730 = vadd.f32 %v2584, %v2655
    %v2731 = vadd.f32 %v2585, %v2657
    %v2732 = vadd.f32 %v2586, %v2726
    %v2733 = vadd.f32 %v2587, %v2728
    %v2734 = vxor.u32 %v2730, 2147483648
    %v2735 = vmul.f32 %v2734, 1.442695
    %v2736 = vpow.pop %v2735
    %v2737 = vadd.f32 %v2736, 1.0
    %v2738 = vrcp.pop %v2737
    %v2739 = vmul.f32 1.0, %v2738
    %v2740 = vxor.u32 %v2731, 2147483648
    %v2741 = vmul.f32 %v2740, 1.442695
    %v2742 = vpow.pop %v2741
    %v2743 = vadd.f32 %v2742, 1.0
    %v2744 = vrcp.pop %v2743
    %v2745 = vmul.f32 1.0, %v2744
    %v2746 = vtanh.pop %v2732
    %v2747 = vxor.u32 %v2733, 2147483648
    %v2748 = vmul.f32 %v2747, 1.442695
    %v2749 = vpow.pop %v2748
    %v2750 = vadd.f32 %v2749, 1.0
    %v2751 = vrcp.pop %v2750
    %v2752 = vmul.f32 1.0, %v2751
    %v2753 = vmul.f32 %v2745, %v2521
    %v2754 = vmul.f32 %v2739, %v2746
    %v2755 = vadd.f32 %v2753, %v2754
    %v2756 = vtanh.pop %v2755
    %v2757 = vmul.f32 %v2752, %v2756
    %2758 = vst [vmem:[%s1590] sm:$0x3] %v2757
    %v2761 = vunpack.c.l.s4 1983009808
    %v2762 = vunpack.c.0.s8 %v2761
    %v2763 = vlaneseq
    %v2764 = vshrl.u32 %v2763, 7
    %v2765 = vsub.s32 %v2762, %v2764
    %v2766 = vrot.slane %v2757, %v2765
    %v2767 = vcombine.high %v2766, %v2766
    %2769 = vst [vmem:[%s1578 + $0x2] sm:$0x3] %v2767
    %v2770 = vmul.f32 %v2757, %v165
    %v2771 = vmul.f32 %v2757, %v166
    %v2772 = vld [vmem:[%s1120] sm:$0xff]
    %v2773 = vld [vmem:[%s1118 + $0x8] sm:$0xff]
    %v2775 = vcombine.high %v2772, %v2772
    %v2777 = vunpack.c.l.s4 1983009808
    %v2778 = vunpack.c.0.s8 %v2777
    %v2779 = vlaneseq
    %v2780 = vshrl.u32 %v2779, 7
    %v2781 = vsub.s32 %v2778, %v2780
    %v2782 = vrot.slane %v2772, %v2781
    %v2784 = vunpack.c.l.s4 1983009808
    %v2785 = vunpack.c.0.s8 %v2784
    %v2786 = vlaneseq
    %v2787 = vshrl.u32 %v2786, 7
    %v2788 = vsub.s32 %v2785, %v2787
    %v2789 = vrot.slane %v2775, %v2788
    %v2790 = vcombine.high %v2782, %v2782
    %v2791 = vcombine.high %v2789, %v2789
    %v2797 = vcombine.low %v2773, %v2773
    %v2799 = vunpack.c.l.s4 1983009808
    %v2800 = vunpack.c.0.s8 %v2799
    %v2801 = vlaneseq
    %v2802 = vshrl.u32 %v2801, 7
    %v2803 = vsub.s32 %v2800, %v2802
    %v2804 = vrot.slane %v2797, %v2803
    %v2806 = vunpack.c.l.s4 1983009808
    %v2807 = vunpack.c.0.s8 %v2806
    %v2808 = vlaneseq
    %v2809 = vshrl.u32 %v2808, 7
    %v2810 = vsub.s32 %v2807, %v2809
    %v2811 = vrot.slane %v2773, %v2810
    %v2812 = vcombine.high %v2804, %v2804
    %v2813 = vcombine.high %v2811, %v2811
    %v2818 = vsel %vm214, %v2782, %v2804
    %v2819 = vsel %vm214, %v2790, %v2812
    %v2820 = vsel %vm214, %v2789, %v2811
    %v2821 = vsel %vm214, %v2791, %v2813
    %2822 = vmatprep.subr.mxu0 %v26
    %2823 = vmatpush1.msra.mxu0 %v25
    %2824 = vmatprep.subr.mxu0 %v30
    %2825 = vmatpush1.msra.mxu0 %v29
    %2826 = vmatprep.subr.mxu0 %v34
    %2827 = vmatpush1.msra.mxu0 %v33
    %2828 = vmatprep.subr.mxu0 %v38
    %2829 = vmatpush1.msra.mxu0 %v37
    %2830 = vmatprep.subr.mxu0 %v42
    %2831 = vmatpush1.msra.mxu0 %v41
    %2832 = vmatprep.subr.mxu0 %v46
    %2833 = vmatpush1.msra.mxu0 %v45
    %2834 = vmatprep.subr.mxu0 %v50
    %2835 = vmatpush1.msra.mxu0 %v49
    %2836 = vmatprep.subr.mxu0 %v54
    %2837 = vmatpush1.msra.mxu0 %v53
    %2838 = vmatprep.subr.mxu0 %v58
    %2839 = vmatpush1.msra.mxu0 %v57
    %2840 = vmatprep.subr.mxu0 %v62
    %2841 = vmatpush1.msra.mxu0 %v61
    %2842 = vmatprep.subr.mxu0 %v66
    %2843 = vmatpush1.msra.mxu0 %v65
    %2844 = vmatprep.subr.mxu0 %v70
    %2845 = vmatpush1.msra.mxu0 %v69
    %2846 = vmatprep.subr.mxu0 %v74
    %2847 = vmatpush1.msra.mxu0 %v73
    %2848 = vmatprep.subr.mxu0 %v78
    %2849 = vmatpush1.msra.mxu0 %v77
    %2850 = vmatprep.subr.mxu0 %v82
    %2851 = vmatpush1.msra.mxu0 %v81
    %2852 = vmatprep.subr.mxu0 %v86
    %2853 = vmatpush1.msra.mxu0 %v85
    %2854 = vmatprep.subr.mxu0 %v90
    %2855 = vmatpush1.msra.mxu0 %v89
    %2856 = vmatprep.subr.mxu0 %v94
    %2857 = vmatpush1.msra.mxu0 %v93
    %2858 = vmatprep.subr.mxu0 %v98
    %2859 = vmatpush1.msra.mxu0 %v97
    %2860 = vmatprep.subr.mxu0 %v102
    %2861 = vmatpush1.msra.mxu0 %v101
    %2862 = vmatprep.subr.mxu0 %v106
    %2863 = vmatpush1.msra.mxu0 %v105
    %2864 = vmatprep.subr.mxu0 %v110
    %2865 = vmatpush1.msra.mxu0 %v109
    %2866 = vmatprep.subr.mxu0 %v114
    %2867 = vmatpush1.msra.mxu0 %v113
    %2868 = vmatprep.subr.mxu0 %v118
    %2869 = vmatpush1.msra.mxu0 %v117
    %2870 = vmatprep.subr.mxu0 %v122
    %2871 = vmatpush1.msra.mxu0 %v121
    %2872 = vmatprep.subr.mxu0 %v126
    %2873 = vmatpush1.msra.mxu0 %v125
    %2874 = vmatprep.subr.mxu0 %v130
    %2875 = vmatpush1.msra.mxu0 %v129
    %2876 = vmatprep.subr.mxu0 %v134
    %2877 = vmatpush1.msra.mxu0 %v133
    %2878 = vmatprep.subr.mxu0 %v138
    %2879 = vmatpush1.msra.mxu0 %v137
    %2880 = vmatprep.subr.mxu0 %v142
    %2881 = vmatpush1.msra.mxu0 %v141
    %2882 = vmatprep.subr.mxu0 %v146
    %2883 = vmatpush1.msra.mxu0 %v145
    %2884 = vmatprep.subr.mxu0 %v150
    %2885 = vmatpush1.msra.mxu0 %v149
    %2886 = vmatprep.mubr.f32.mxu0 %v2771
    %2887 = vmatmul.mubr.f32.gmra.mrb[0].mxu0 %v2770
    %v2888 = vpop.f32.mrb[0].mxu0
    %v2889 = vadd.f32 0.0, %v2888
    %v2890 = vpop.f32.mrb[0].mxu0
    %v2891 = vadd.f32 0.0, %v2890
    %2892 = vdwg.mxu0
    %2893 = vmatprep.subr.mxu0 %v28
    %2894 = vmatpush1.msra.mxu0 %v27
    %2895 = vmatprep.subr.mxu0 %v32
    %2896 = vmatpush1.msra.mxu0 %v31
    %2897 = vmatprep.subr.mxu0 %v36
    %2898 = vmatpush1.msra.mxu0 %v35
    %2899 = vmatprep.subr.mxu0 %v40
    %2900 = vmatpush1.msra.mxu0 %v39
    %2901 = vmatprep.subr.mxu0 %v44
    %2902 = vmatpush1.msra.mxu0 %v43
    %2903 = vmatprep.subr.mxu0 %v48
    %2904 = vmatpush1.msra.mxu0 %v47
    %2905 = vmatprep.subr.mxu0 %v52
    %2906 = vmatpush1.msra.mxu0 %v51
    %2907 = vmatprep.subr.mxu0 %v56
    %2908 = vmatpush1.msra.mxu0 %v55
    %2909 = vmatprep.subr.mxu0 %v60
    %2910 = vmatpush1.msra.mxu0 %v59
    %2911 = vmatprep.subr.mxu0 %v64
    %2912 = vmatpush1.msra.mxu0 %v63
    %2913 = vmatprep.subr.mxu0 %v68
    %2914 = vmatpush1.msra.mxu0 %v67
    %2915 = vmatprep.subr.mxu0 %v72
    %2916 = vmatpush1.msra.mxu0 %v71
    %2917 = vmatprep.subr.mxu0 %v76
    %2918 = vmatpush1.msra.mxu0 %v75
    %2919 = vmatprep.subr.mxu0 %v80
    %2920 = vmatpush1.msra.mxu0 %v79
    %2921 = vmatprep.subr.mxu0 %v84
    %2922 = vmatpush1.msra.mxu0 %v83
    %2923 = vmatprep.subr.mxu0 %v88
    %2924 = vmatpush1.msra.mxu0 %v87
    %2925 = vmatprep.subr.mxu0 %v92
    %2926 = vmatpush1.msra.mxu0 %v91
    %2927 = vmatprep.subr.mxu0 %v96
    %2928 = vmatpush1.msra.mxu0 %v95
    %2929 = vmatprep.subr.mxu0 %v100
    %2930 = vmatpush1.msra.mxu0 %v99
    %2931 = vmatprep.subr.mxu0 %v104
    %2932 = vmatpush1.msra.mxu0 %v103
    %2933 = vmatprep.subr.mxu0 %v108
    %2934 = vmatpush1.msra.mxu0 %v107
    %2935 = vmatprep.subr.mxu0 %v112
    %2936 = vmatpush1.msra.mxu0 %v111
    %2937 = vmatprep.subr.mxu0 %v116
    %2938 = vmatpush1.msra.mxu0 %v115
    %2939 = vmatprep.subr.mxu0 %v120
    %2940 = vmatpush1.msra.mxu0 %v119
    %2941 = vmatprep.subr.mxu0 %v124
    %2942 = vmatpush1.msra.mxu0 %v123
    %2943 = vmatprep.subr.mxu0 %v128
    %2944 = vmatpush1.msra.mxu0 %v127
    %2945 = vmatprep.subr.mxu0 %v132
    %2946 = vmatpush1.msra.mxu0 %v131
    %2947 = vmatprep.subr.mxu0 %v136
    %2948 = vmatpush1.msra.mxu0 %v135
    %2949 = vmatprep.subr.mxu0 %v140
    %2950 = vmatpush1.msra.mxu0 %v139
    %2951 = vmatprep.subr.mxu0 %v144
    %2952 = vmatpush1.msra.mxu0 %v143
    %2953 = vmatprep.subr.mxu0 %v148
    %2954 = vmatpush1.msra.mxu0 %v147
    %2955 = vmatprep.subr.mxu0 %v152
    %2956 = vmatpush1.msra.mxu0 %v151
    %2957 = vmatprep.mubr.f32.mxu0 %v2771
    %2958 = vmatmul.mubr.f32.gmra.mrb[0].mxu0 %v2770
    %v2959 = vpop.f32.mrb[0].mxu0
    %v2960 = vadd.f32 0.0, %v2959
    %v2961 = vpop.f32.mrb[0].mxu0
    %v2962 = vadd.f32 0.0, %v2961
    %2963 = vdwg.mxu0
    %v2964 = vadd.f32 %v2818, %v2889
    %v2965 = vadd.f32 %v2819, %v2891
    %v2966 = vadd.f32 %v2820, %v2960
    %v2967 = vadd.f32 %v2821, %v2962
    %v2968 = vxor.u32 %v2964, 2147483648
    %v2969 = vmul.f32 %v2968, 1.442695
    %v2970 = vpow.pop %v2969
    %v2971 = vadd.f32 %v2970, 1.0
    %v2972 = vrcp.pop %v2971
    %v2973 = vmul.f32 1.0, %v2972
    %v2974 = vxor.u32 %v2965, 2147483648
    %v2975 = vmul.f32 %v2974, 1.442695
    %v2976 = vpow.pop %v2975
    %v2977 = vadd.f32 %v2976, 1.0
    %v2978 = vrcp.pop %v2977
    %v2979 = vmul.f32 1.0, %v2978
    %v2980 = vtanh.pop %v2966
    %v2981 = vxor.u32 %v2967, 2147483648
    %v2982 = vmul.f32 %v2981, 1.442695
    %v2983 = vpow.pop %v2982
    %v2984 = vadd.f32 %v2983, 1.0
    %v2985 = vrcp.pop %v2984
    %v2986 = vmul.f32 1.0, %v2985
    %v2987 = vmul.f32 %v2979, %v2755
    %v2988 = vmul.f32 %v2973, %v2980
    %v2989 = vadd.f32 %v2987, %v2988
    %v2990 = vtanh.pop %v2989
    %v2991 = vmul.f32 %v2986, %v2990
    %2992 = vst [vmem:[%s1352] sm:$0x3] %v2991
    %v2995 = vunpack.c.l.s4 1983009808
    %v2996 = vunpack.c.0.s8 %v2995
    %v2997 = vlaneseq
    %v2998 = vshrl.u32 %v2997, 7
    %v2999 = vsub.s32 %v2996, %v2998
    %v3000 = vrot.slane %v2991, %v2999
    %v3001 = vcombine.high %v3000, %v3000
    %3003 = vst [vmem:[%s1340 + $0x2] sm:$0x3] %v3001
    %v3004 = vmul.f32 %v2991, %v165
    %v3005 = vmul.f32 %v2991, %v166
    %v3006 = vld [vmem:[%s882] sm:$0xff]
    %v3007 = vld [vmem:[%s880 + $0x8] sm:$0xff]
    %v3009 = vcombine.high %v3006, %v3006
    %v3011 = vunpack.c.l.s4 1983009808
    %v3012 = vunpack.c.0.s8 %v3011
    %v3013 = vlaneseq
    %v3014 = vshrl.u32 %v3013, 7
    %v3015 = vsub.s32 %v3012, %v3014
    %v3016 = vrot.slane %v3006, %v3015
    %v3018 = vunpack.c.l.s4 1983009808
    %v3019 = vunpack.c.0.s8 %v3018
    %v3020 = vlaneseq
    %v3021 = vshrl.u32 %v3020, 7
    %v3022 = vsub.s32 %v3019, %v3021
    %v3023 = vrot.slane %v3009, %v3022
    %v3024 = vcombine.high %v3016, %v3016
    %v3025 = vcombine.high %v3023, %v3023
    %v3031 = vcombine.low %v3007, %v3007
    %v3033 = vunpack.c.l.s4 1983009808
    %v3034 = vunpack.c.0.s8 %v3033
    %v3035 = vlaneseq
    %v3036 = vshrl.u32 %v3035, 7
    %v3037 = vsub.s32 %v3034, %v3036
    %v3038 = vrot.slane %v3031, %v3037
    %v3040 = vunpack.c.l.s4 1983009808
    %v3041 = vunpack.c.0.s8 %v3040
    %v3042 = vlaneseq
    %v3043 = vshrl.u32 %v3042, 7
    %v3044 = vsub.s32 %v3041, %v3043
    %v3045 = vrot.slane %v3007, %v3044
    %v3046 = vcombine.high %v3038, %v3038
    %v3047 = vcombine.high %v3045, %v3045
    %v3052 = vsel %vm214, %v3016, %v3038
    %v3053 = vsel %vm214, %v3024, %v3046
    %v3054 = vsel %vm214, %v3023, %v3045
    %v3055 = vsel %vm214, %v3025, %v3047
    %3056 = vmatprep.subr.mxu0 %v26
    %3057 = vmatpush1.msra.mxu0 %v25
    %3058 = vmatprep.subr.mxu0 %v30
    %3059 = vmatpush1.msra.mxu0 %v29
    %3060 = vmatprep.subr.mxu0 %v34
    %3061 = vmatpush1.msra.mxu0 %v33
    %3062 = vmatprep.subr.mxu0 %v38
    %3063 = vmatpush1.msra.mxu0 %v37
    %3064 = vmatprep.subr.mxu0 %v42
    %3065 = vmatpush1.msra.mxu0 %v41
    %3066 = vmatprep.subr.mxu0 %v46
    %3067 = vmatpush1.msra.mxu0 %v45
    %3068 = vmatprep.subr.mxu0 %v50
    %3069 = vmatpush1.msra.mxu0 %v49
    %3070 = vmatprep.subr.mxu0 %v54
    %3071 = vmatpush1.msra.mxu0 %v53
    %3072 = vmatprep.subr.mxu0 %v58
    %3073 = vmatpush1.msra.mxu0 %v57
    %3074 = vmatprep.subr.mxu0 %v62
    %3075 = vmatpush1.msra.mxu0 %v61
    %3076 = vmatprep.subr.mxu0 %v66
    %3077 = vmatpush1.msra.mxu0 %v65
    %3078 = vmatprep.subr.mxu0 %v70
    %3079 = vmatpush1.msra.mxu0 %v69
    %3080 = vmatprep.subr.mxu0 %v74
    %3081 = vmatpush1.msra.mxu0 %v73
    %3082 = vmatprep.subr.mxu0 %v78
    %3083 = vmatpush1.msra.mxu0 %v77
    %3084 = vmatprep.subr.mxu0 %v82
    %3085 = vmatpush1.msra.mxu0 %v81
    %3086 = vmatprep.subr.mxu0 %v86
    %3087 = vmatpush1.msra.mxu0 %v85
    %3088 = vmatprep.subr.mxu0 %v90
    %3089 = vmatpush1.msra.mxu0 %v89
    %3090 = vmatprep.subr.mxu0 %v94
    %3091 = vmatpush1.msra.mxu0 %v93
    %3092 = vmatprep.subr.mxu0 %v98
    %3093 = vmatpush1.msra.mxu0 %v97
    %3094 = vmatprep.subr.mxu0 %v102
    %3095 = vmatpush1.msra.mxu0 %v101
    %3096 = vmatprep.subr.mxu0 %v106
    %3097 = vmatpush1.msra.mxu0 %v105
    %3098 = vmatprep.subr.mxu0 %v110
    %3099 = vmatpush1.msra.mxu0 %v109
    %3100 = vmatprep.subr.mxu0 %v114
    %3101 = vmatpush1.msra.mxu0 %v113
    %3102 = vmatprep.subr.mxu0 %v118
    %3103 = vmatpush1.msra.mxu0 %v117
    %3104 = vmatprep.subr.mxu0 %v122
    %3105 = vmatpush1.msra.mxu0 %v121
    %3106 = vmatprep.subr.mxu0 %v126
    %3107 = vmatpush1.msra.mxu0 %v125
    %3108 = vmatprep.subr.mxu0 %v130
    %3109 = vmatpush1.msra.mxu0 %v129
    %3110 = vmatprep.subr.mxu0 %v134
    %3111 = vmatpush1.msra.mxu0 %v133
    %3112 = vmatprep.subr.mxu0 %v138
    %3113 = vmatpush1.msra.mxu0 %v137
    %3114 = vmatprep.subr.mxu0 %v142
    %3115 = vmatpush1.msra.mxu0 %v141
    %3116 = vmatprep.subr.mxu0 %v146
    %3117 = vmatpush1.msra.mxu0 %v145
    %3118 = vmatprep.subr.mxu0 %v150
    %3119 = vmatpush1.msra.mxu0 %v149
    %3120 = vmatprep.mubr.f32.mxu0 %v3005
    %3121 = vmatmul.mubr.f32.gmra.mrb[0].mxu0 %v3004
    %v3122 = vpop.f32.mrb[0].mxu0
    %v3123 = vadd.f32 0.0, %v3122
    %v3124 = vpop.f32.mrb[0].mxu0
    %v3125 = vadd.f32 0.0, %v3124
    %3126 = vdwg.mxu0
    %3127 = vmatprep.subr.mxu0 %v28
    %3128 = vmatpush1.msra.mxu0 %v27
    %3129 = vmatprep.subr.mxu0 %v32
    %3130 = vmatpush1.msra.mxu0 %v31
    %3131 = vmatprep.subr.mxu0 %v36
    %3132 = vmatpush1.msra.mxu0 %v35
    %3133 = vmatprep.subr.mxu0 %v40
    %3134 = vmatpush1.msra.mxu0 %v39
    %3135 = vmatprep.subr.mxu0 %v44
    %3136 = vmatpush1.msra.mxu0 %v43
    %3137 = vmatprep.subr.mxu0 %v48
    %3138 = vmatpush1.msra.mxu0 %v47
    %3139 = vmatprep.subr.mxu0 %v52
    %3140 = vmatpush1.msra.mxu0 %v51
    %3141 = vmatprep.subr.mxu0 %v56
    %3142 = vmatpush1.msra.mxu0 %v55
    %3143 = vmatprep.subr.mxu0 %v60
    %3144 = vmatpush1.msra.mxu0 %v59
    %3145 = vmatprep.subr.mxu0 %v64
    %3146 = vmatpush1.msra.mxu0 %v63
    %3147 = vmatprep.subr.mxu0 %v68
    %3148 = vmatpush1.msra.mxu0 %v67
    %3149 = vmatprep.subr.mxu0 %v72
    %3150 = vmatpush1.msra.mxu0 %v71
    %3151 = vmatprep.subr.mxu0 %v76
    %3152 = vmatpush1.msra.mxu0 %v75
    %3153 = vmatprep.subr.mxu0 %v80
    %3154 = vmatpush1.msra.mxu0 %v79
    %3155 = vmatprep.subr.mxu0 %v84
    %3156 = vmatpush1.msra.mxu0 %v83
    %3157 = vmatprep.subr.mxu0 %v88
    %3158 = vmatpush1.msra.mxu0 %v87
    %3159 = vmatprep.subr.mxu0 %v92
    %3160 = vmatpush1.msra.mxu0 %v91
    %3161 = vmatprep.subr.mxu0 %v96
    %3162 = vmatpush1.msra.mxu0 %v95
    %3163 = vmatprep.subr.mxu0 %v100
    %3164 = vmatpush1.msra.mxu0 %v99
    %3165 = vmatprep.subr.mxu0 %v104
    %3166 = vmatpush1.msra.mxu0 %v103
    %3167 = vmatprep.subr.mxu0 %v108
    %3168 = vmatpush1.msra.mxu0 %v107
    %3169 = vmatprep.subr.mxu0 %v112
    %3170 = vmatpush1.msra.mxu0 %v111
    %3171 = vmatprep.subr.mxu0 %v116
    %3172 = vmatpush1.msra.mxu0 %v115
    %3173 = vmatprep.subr.mxu0 %v120
    %3174 = vmatpush1.msra.mxu0 %v119
    %3175 = vmatprep.subr.mxu0 %v124
    %3176 = vmatpush1.msra.mxu0 %v123
    %3177 = vmatprep.subr.mxu0 %v128
    %3178 = vmatpush1.msra.mxu0 %v127
    %3179 = vmatprep.subr.mxu0 %v132
    %3180 = vmatpush1.msra.mxu0 %v131
    %3181 = vmatprep.subr.mxu0 %v136
    %3182 = vmatpush1.msra.mxu0 %v135
    %3183 = vmatprep.subr.mxu0 %v140
    %3184 = vmatpush1.msra.mxu0 %v139
    %3185 = vmatprep.subr.mxu0 %v144
    %3186 = vmatpush1.msra.mxu0 %v143
    %3187 = vmatprep.subr.mxu0 %v148
    %3188 = vmatpush1.msra.mxu0 %v147
    %3189 = vmatprep.subr.mxu0 %v152
    %3190 = vmatpush1.msra.mxu0 %v151
    %3191 = vmatprep.mubr.f32.mxu0 %v3005
    %3192 = vmatmul.mubr.f32.gmra.mrb[0].mxu0 %v3004
    %v3193 = vpop.f32.mrb[0].mxu0
    %v3194 = vadd.f32 0.0, %v3193
    %v3195 = vpop.f32.mrb[0].mxu0
    %v3196 = vadd.f32 0.0, %v3195
    %3197 = vdwg.mxu0
    %v3198 = vadd.f32 %v3052, %v3123
    %v3199 = vadd.f32 %v3053, %v3125
    %v3200 = vadd.f32 %v3054, %v3194
    %v3201 = vadd.f32 %v3055, %v3196
    %v3202 = vxor.u32 %v3198, 2147483648
    %v3203 = vmul.f32 %v3202, 1.442695
    %v3204 = vpow.pop %v3203
    %v3205 = vadd.f32 %v3204, 1.0
    %v3206 = vrcp.pop %v3205
    %v3207 = vmul.f32 1.0, %v3206
    %v3208 = vxor.u32 %v3199, 2147483648
    %v3209 = vmul.f32 %v3208, 1.442695
    %v3210 = vpow.pop %v3209
    %v3211 = vadd.f32 %v3210, 1.0
    %v3212 = vrcp.pop %v3211
    %v3213 = vmul.f32 1.0, %v3212
    %v3214 = vtanh.pop %v3200
    %v3215 = vxor.u32 %v3201, 2147483648
    %v3216 = vmul.f32 %v3215, 1.442695
    %v3217 = vpow.pop %v3216
    %v3218 = vadd.f32 %v3217, 1.0
    %v3219 = vrcp.pop %v3218
    %v3220 = vmul.f32 1.0, %v3219
    %v3221 = vmul.f32 %v3213, %v2989
    %v3222 = vmul.f32 %v3207, %v3214
    %v3223 = vadd.f32 %v3221, %v3222
    %v3224 = vtanh.pop %v3223
    %v3225 = vmul.f32 %v3220, %v3224
    %3226 = vst [vmem:[%s1114] sm:$0x3] %v3225
    %v3229 = vunpack.c.l.s4 1983009808
    %v3230 = vunpack.c.0.s8 %v3229
    %v3231 = vlaneseq
    %v3232 = vshrl.u32 %v3231, 7
    %v3233 = vsub.s32 %v3230, %v3232
    %v3234 = vrot.slane %v3225, %v3233
    %v3235 = vcombine.high %v3234, %v3234
    %3237 = vst [vmem:[%s1102 + $0x2] sm:$0x3] %v3235
    %v3238 = vmul.f32 %v3225, %v165
    %v3239 = vmul.f32 %v3225, %v166
    %v3240 = vld [vmem:[%s644] sm:$0xff]
    %v3241 = vld [vmem:[%s642 + $0x8] sm:$0xff]
    %v3243 = vcombine.high %v3240, %v3240
    %v3245 = vunpack.c.l.s4 1983009808
    %v3246 = vunpack.c.0.s8 %v3245
    %v3247 = vlaneseq
    %v3248 = vshrl.u32 %v3247, 7
    %v3249 = vsub.s32 %v3246, %v3248
    %v3250 = vrot.slane %v3240, %v3249
    %v3252 = vunpack.c.l.s4 1983009808
    %v3253 = vunpack.c.0.s8 %v3252
    %v3254 = vlaneseq
    %v3255 = vshrl.u32 %v3254, 7
    %v3256 = vsub.s32 %v3253, %v3255
    %v3257 = vrot.slane %v3243, %v3256
    %v3258 = vcombine.high %v3250, %v3250
    %v3259 = vcombine.high %v3257, %v3257
    %v3265 = vcombine.low %v3241, %v3241
    %v3267 = vunpack.c.l.s4 1983009808
    %v3268 = vunpack.c.0.s8 %v3267
    %v3269 = vlaneseq
    %v3270 = vshrl.u32 %v3269, 7
    %v3271 = vsub.s32 %v3268, %v3270
    %v3272 = vrot.slane %v3265, %v3271
    %v3274 = vunpack.c.l.s4 1983009808
    %v3275 = vunpack.c.0.s8 %v3274
    %v3276 = vlaneseq
    %v3277 = vshrl.u32 %v3276, 7
    %v3278 = vsub.s32 %v3275, %v3277
    %v3279 = vrot.slane %v3241, %v3278
    %v3280 = vcombine.high %v3272, %v3272
    %v3281 = vcombine.high %v3279, %v3279
    %v3286 = vsel %vm214, %v3250, %v3272
    %v3287 = vsel %vm214, %v3258, %v3280
    %v3288 = vsel %vm214, %v3257, %v3279
    %v3289 = vsel %vm214, %v3259, %v3281
    %3290 = vmatprep.subr.mxu0 %v26
    %3291 = vmatpush1.msra.mxu0 %v25
    %3292 = vmatprep.subr.mxu0 %v30
    %3293 = vmatpush1.msra.mxu0 %v29
    %3294 = vmatprep.subr.mxu0 %v34
    %3295 = vmatpush1.msra.mxu0 %v33
    %3296 = vmatprep.subr.mxu0 %v38
    %3297 = vmatpush1.msra.mxu0 %v37
    %3298 = vmatprep.subr.mxu0 %v42
    %3299 = vmatpush1.msra.mxu0 %v41
    %3300 = vmatprep.subr.mxu0 %v46
    %3301 = vmatpush1.msra.mxu0 %v45
    %3302 = vmatprep.subr.mxu0 %v50
    %3303 = vmatpush1.msra.mxu0 %v49
    %3304 = vmatprep.subr.mxu0 %v54
    %3305 = vmatpush1.msra.mxu0 %v53
    %3306 = vmatprep.subr.mxu0 %v58
    %3307 = vmatpush1.msra.mxu0 %v57
    %3308 = vmatprep.subr.mxu0 %v62
    %3309 = vmatpush1.msra.mxu0 %v61
    %3310 = vmatprep.subr.mxu0 %v66
    %3311 = vmatpush1.msra.mxu0 %v65
    %3312 = vmatprep.subr.mxu0 %v70
    %3313 = vmatpush1.msra.mxu0 %v69
    %3314 = vmatprep.subr.mxu0 %v74
    %3315 = vmatpush1.msra.mxu0 %v73
    %3316 = vmatprep.subr.mxu0 %v78
    %3317 = vmatpush1.msra.mxu0 %v77
    %3318 = vmatprep.subr.mxu0 %v82
    %3319 = vmatpush1.msra.mxu0 %v81
    %3320 = vmatprep.subr.mxu0 %v86
    %3321 = vmatpush1.msra.mxu0 %v85
    %3322 = vmatprep.subr.mxu0 %v90
    %3323 = vmatpush1.msra.mxu0 %v89
    %3324 = vmatprep.subr.mxu0 %v94
    %3325 = vmatpush1.msra.mxu0 %v93
    %3326 = vmatprep.subr.mxu0 %v98
    %3327 = vmatpush1.msra.mxu0 %v97
    %3328 = vmatprep.subr.mxu0 %v102
    %3329 = vmatpush1.msra.mxu0 %v101
    %3330 = vmatprep.subr.mxu0 %v106
    %3331 = vmatpush1.msra.mxu0 %v105
    %3332 = vmatprep.subr.mxu0 %v110
    %3333 = vmatpush1.msra.mxu0 %v109
    %3334 = vmatprep.subr.mxu0 %v114
    %3335 = vmatpush1.msra.mxu0 %v113
    %3336 = vmatprep.subr.mxu0 %v118
    %3337 = vmatpush1.msra.mxu0 %v117
    %3338 = vmatprep.subr.mxu0 %v122
    %3339 = vmatpush1.msra.mxu0 %v121
    %3340 = vmatprep.subr.mxu0 %v126
    %3341 = vmatpush1.msra.mxu0 %v125
    %3342 = vmatprep.subr.mxu0 %v130
    %3343 = vmatpush1.msra.mxu0 %v129
    %3344 = vmatprep.subr.mxu0 %v134
    %3345 = vmatpush1.msra.mxu0 %v133
    %3346 = vmatprep.subr.mxu0 %v138
    %3347 = vmatpush1.msra.mxu0 %v137
    %3348 = vmatprep.subr.mxu0 %v142
    %3349 = vmatpush1.msra.mxu0 %v141
    %3350 = vmatprep.subr.mxu0 %v146
    %3351 = vmatpush1.msra.mxu0 %v145
    %3352 = vmatprep.subr.mxu0 %v150
    %3353 = vmatpush1.msra.mxu0 %v149
    %3354 = vmatprep.mubr.f32.mxu0 %v3239
    %3355 = vmatmul.mubr.f32.gmra.mrb[0].mxu0 %v3238
    %v3356 = vpop.f32.mrb[0].mxu0
    %v3357 = vadd.f32 0.0, %v3356
    %v3358 = vpop.f32.mrb[0].mxu0
    %v3359 = vadd.f32 0.0, %v3358
    %3360 = vdwg.mxu0
    %3361 = vmatprep.subr.mxu0 %v28
    %3362 = vmatpush1.msra.mxu0 %v27
    %3363 = vmatprep.subr.mxu0 %v32
    %3364 = vmatpush1.msra.mxu0 %v31
    %3365 = vmatprep.subr.mxu0 %v36
    %3366 = vmatpush1.msra.mxu0 %v35
    %3367 = vmatprep.subr.mxu0 %v40
    %3368 = vmatpush1.msra.mxu0 %v39
    %3369 = vmatprep.subr.mxu0 %v44
    %3370 = vmatpush1.msra.mxu0 %v43
    %3371 = vmatprep.subr.mxu0 %v48
    %3372 = vmatpush1.msra.mxu0 %v47
    %3373 = vmatprep.subr.mxu0 %v52
    %3374 = vmatpush1.msra.mxu0 %v51
    %3375 = vmatprep.subr.mxu0 %v56
    %3376 = vmatpush1.msra.mxu0 %v55
    %3377 = vmatprep.subr.mxu0 %v60
    %3378 = vmatpush1.msra.mxu0 %v59
    %3379 = vmatprep.subr.mxu0 %v64
    %3380 = vmatpush1.msra.mxu0 %v63
    %3381 = vmatprep.subr.mxu0 %v68
    %3382 = vmatpush1.msra.mxu0 %v67
    %3383 = vmatprep.subr.mxu0 %v72
    %3384 = vmatpush1.msra.mxu0 %v71
    %3385 = vmatprep.subr.mxu0 %v76
    %3386 = vmatpush1.msra.mxu0 %v75
    %3387 = vmatprep.subr.mxu0 %v80
    %3388 = vmatpush1.msra.mxu0 %v79
    %3389 = vmatprep.subr.mxu0 %v84
    %3390 = vmatpush1.msra.mxu0 %v83
    %3391 = vmatprep.subr.mxu0 %v88
    %3392 = vmatpush1.msra.mxu0 %v87
    %3393 = vmatprep.subr.mxu0 %v92
    %3394 = vmatpush1.msra.mxu0 %v91
    %3395 = vmatprep.subr.mxu0 %v96
    %3396 = vmatpush1.msra.mxu0 %v95
    %3397 = vmatprep.subr.mxu0 %v100
    %3398 = vmatpush1.msra.mxu0 %v99
    %3399 = vmatprep.subr.mxu0 %v104
    %3400 = vmatpush1.msra.mxu0 %v103
    %3401 = vmatprep.subr.mxu0 %v108
    %3402 = vmatpush1.msra.mxu0 %v107
    %3403 = vmatprep.subr.mxu0 %v112
    %3404 = vmatpush1.msra.mxu0 %v111
    %3405 = vmatprep.subr.mxu0 %v116
    %3406 = vmatpush1.msra.mxu0 %v115
    %3407 = vmatprep.subr.mxu0 %v120
    %3408 = vmatpush1.msra.mxu0 %v119
    %3409 = vmatprep.subr.mxu0 %v124
    %3410 = vmatpush1.msra.mxu0 %v123
    %3411 = vmatprep.subr.mxu0 %v128
    %3412 = vmatpush1.msra.mxu0 %v127
    %3413 = vmatprep.subr.mxu0 %v132
    %3414 = vmatpush1.msra.mxu0 %v131
    %3415 = vmatprep.subr.mxu0 %v136
    %3416 = vmatpush1.msra.mxu0 %v135
    %3417 = vmatprep.subr.mxu0 %v140
    %3418 = vmatpush1.msra.mxu0 %v139
    %3419 = vmatprep.subr.mxu0 %v144
    %3420 = vmatpush1.msra.mxu0 %v143
    %3421 = vmatprep.subr.mxu0 %v148
    %3422 = vmatpush1.msra.mxu0 %v147
    %3423 = vmatprep.subr.mxu0 %v152
    %3424 = vmatpush1.msra.mxu0 %v151
    %3425 = vmatprep.mubr.f32.mxu0 %v3239
    %3426 = vmatmul.mubr.f32.gmra.mrb[0].mxu0 %v3238
    %v3427 = vpop.f32.mrb[0].mxu0
    %v3428 = vadd.f32 0.0, %v3427
    %v3429 = vpop.f32.mrb[0].mxu0
    %v3430 = vadd.f32 0.0, %v3429
    %3431 = vdwg.mxu0
    %v3432 = vadd.f32 %v3286, %v3357
    %v3433 = vadd.f32 %v3287, %v3359
    %v3434 = vadd.f32 %v3288, %v3428
    %v3435 = vadd.f32 %v3289, %v3430
    %v3436 = vxor.u32 %v3432, 2147483648
    %v3437 = vmul.f32 %v3436, 1.442695
    %v3438 = vpow.pop %v3437
    %v3439 = vadd.f32 %v3438, 1.0
    %v3440 = vrcp.pop %v3439
    %v3441 = vmul.f32 1.0, %v3440
    %v3442 = vxor.u32 %v3433, 2147483648
    %v3443 = vmul.f32 %v3442, 1.442695
    %v3444 = vpow.pop %v3443
    %v3445 = vadd.f32 %v3444, 1.0
    %v3446 = vrcp.pop %v3445
    %v3447 = vmul.f32 1.0, %v3446
    %v3448 = vtanh.pop %v3434
    %v3449 = vxor.u32 %v3435, 2147483648
    %v3450 = vmul.f32 %v3449, 1.442695
    %v3451 = vpow.pop %v3450
    %v3452 = vadd.f32 %v3451, 1.0
    %v3453 = vrcp.pop %v3452
    %v3454 = vmul.f32 1.0, %v3453
    %v3455 = vmul.f32 %v3447, %v3223
    %v3456 = vmul.f32 %v3441, %v3448
    %v3457 = vadd.f32 %v3455, %v3456
    %v3458 = vtanh.pop %v3457
    %v3459 = vmul.f32 %v3454, %v3458
    %3460 = vst [vmem:[%s876] sm:$0x3] %v3459
    %v3463 = vunpack.c.l.s4 1983009808
    %v3464 = vunpack.c.0.s8 %v3463
    %v3465 = vlaneseq
    %v3466 = vshrl.u32 %v3465, 7
    %v3467 = vsub.s32 %v3464, %v3466
    %v3468 = vrot.slane %v3459, %v3467
    %v3469 = vcombine.high %v3468, %v3468
    %3471 = vst [vmem:[%s864 + $0x2] sm:$0x3] %v3469
    %v3472 = vmul.f32 %v3459, %v165
    %v3473 = vmul.f32 %v3459, %v166
    %v3474 = vld [vmem:[%s406] sm:$0xff]
    %v3475 = vld [vmem:[%s404 + $0x8] sm:$0xff]
    %v3477 = vcombine.high %v3474, %v3474
    %v3479 = vunpack.c.l.s4 1983009808
    %v3480 = vunpack.c.0.s8 %v3479
    %v3481 = vlaneseq
    %v3482 = vshrl.u32 %v3481, 7
    %v3483 = vsub.s32 %v3480, %v3482
    %v3484 = vrot.slane %v3474, %v3483
    %v3486 = vunpack.c.l.s4 1983009808
    %v3487 = vunpack.c.0.s8 %v3486
    %v3488 = vlaneseq
    %v3489 = vshrl.u32 %v3488, 7
    %v3490 = vsub.s32 %v3487, %v3489
    %v3491 = vrot.slane %v3477, %v3490
    %v3492 = vcombine.high %v3484, %v3484
    %v3493 = vcombine.high %v3491, %v3491
    %v3499 = vcombine.low %v3475, %v3475
    %v3501 = vunpack.c.l.s4 1983009808
    %v3502 = vunpack.c.0.s8 %v3501
    %v3503 = vlaneseq
    %v3504 = vshrl.u32 %v3503, 7
    %v3505 = vsub.s32 %v3502, %v3504
    %v3506 = vrot.slane %v3499, %v3505
    %v3508 = vunpack.c.l.s4 1983009808
    %v3509 = vunpack.c.0.s8 %v3508
    %v3510 = vlaneseq
    %v3511 = vshrl.u32 %v3510, 7
    %v3512 = vsub.s32 %v3509, %v3511
    %v3513 = vrot.slane %v3475, %v3512
    %v3514 = vcombine.high %v3506, %v3506
    %v3515 = vcombine.high %v3513, %v3513
    %v3520 = vsel %vm214, %v3484, %v3506
    %v3521 = vsel %vm214, %v3492, %v3514
    %v3522 = vsel %vm214, %v3491, %v3513
    %v3523 = vsel %vm214, %v3493, %v3515
    %3524 = vmatprep.subr.mxu0 %v26
    %3525 = vmatpush1.msra.mxu0 %v25
    %3526 = vmatprep.subr.mxu0 %v30
    %3527 = vmatpush1.msra.mxu0 %v29
    %3528 = vmatprep.subr.mxu0 %v34
    %3529 = vmatpush1.msra.mxu0 %v33
    %3530 = vmatprep.subr.mxu0 %v38
    %3531 = vmatpush1.msra.mxu0 %v37
    %3532 = vmatprep.subr.mxu0 %v42
    %3533 = vmatpush1.msra.mxu0 %v41
    %3534 = vmatprep.subr.mxu0 %v46
    %3535 = vmatpush1.msra.mxu0 %v45
    %3536 = vmatprep.subr.mxu0 %v50
    %3537 = vmatpush1.msra.mxu0 %v49
    %3538 = vmatprep.subr.mxu0 %v54
    %3539 = vmatpush1.msra.mxu0 %v53
    %3540 = vmatprep.subr.mxu0 %v58
    %3541 = vmatpush1.msra.mxu0 %v57
    %3542 = vmatprep.subr.mxu0 %v62
    %3543 = vmatpush1.msra.mxu0 %v61
    %3544 = vmatprep.subr.mxu0 %v66
    %3545 = vmatpush1.msra.mxu0 %v65
    %3546 = vmatprep.subr.mxu0 %v70
    %3547 = vmatpush1.msra.mxu0 %v69
    %3548 = vmatprep.subr.mxu0 %v74
    %3549 = vmatpush1.msra.mxu0 %v73
    %3550 = vmatprep.subr.mxu0 %v78
    %3551 = vmatpush1.msra.mxu0 %v77
    %3552 = vmatprep.subr.mxu0 %v82
    %3553 = vmatpush1.msra.mxu0 %v81
    %3554 = vmatprep.subr.mxu0 %v86
    %3555 = vmatpush1.msra.mxu0 %v85
    %3556 = vmatprep.subr.mxu0 %v90
    %3557 = vmatpush1.msra.mxu0 %v89
    %3558 = vmatprep.subr.mxu0 %v94
    %3559 = vmatpush1.msra.mxu0 %v93
    %3560 = vmatprep.subr.mxu0 %v98
    %3561 = vmatpush1.msra.mxu0 %v97
    %3562 = vmatprep.subr.mxu0 %v102
    %3563 = vmatpush1.msra.mxu0 %v101
    %3564 = vmatprep.subr.mxu0 %v106
    %3565 = vmatpush1.msra.mxu0 %v105
    %3566 = vmatprep.subr.mxu0 %v110
    %3567 = vmatpush1.msra.mxu0 %v109
    %3568 = vmatprep.subr.mxu0 %v114
    %3569 = vmatpush1.msra.mxu0 %v113
    %3570 = vmatprep.subr.mxu0 %v118
    %3571 = vmatpush1.msra.mxu0 %v117
    %3572 = vmatprep.subr.mxu0 %v122
    %3573 = vmatpush1.msra.mxu0 %v121
    %3574 = vmatprep.subr.mxu0 %v126
    %3575 = vmatpush1.msra.mxu0 %v125
    %3576 = vmatprep.subr.mxu0 %v130
    %3577 = vmatpush1.msra.mxu0 %v129
    %3578 = vmatprep.subr.mxu0 %v134
    %3579 = vmatpush1.msra.mxu0 %v133
    %3580 = vmatprep.subr.mxu0 %v138
    %3581 = vmatpush1.msra.mxu0 %v137
    %3582 = vmatprep.subr.mxu0 %v142
    %3583 = vmatpush1.msra.mxu0 %v141
    %3584 = vmatprep.subr.mxu0 %v146
    %3585 = vmatpush1.msra.mxu0 %v145
    %3586 = vmatprep.subr.mxu0 %v150
    %3587 = vmatpush1.msra.mxu0 %v149
    %3588 = vmatprep.mubr.f32.mxu0 %v3473
    %3589 = vmatmul.mubr.f32.gmra.mrb[0].mxu0 %v3472
    %v3590 = vpop.f32.mrb[0].mxu0
    %v3591 = vadd.f32 0.0, %v3590
    %v3592 = vpop.f32.mrb[0].mxu0
    %v3593 = vadd.f32 0.0, %v3592
    %3594 = vdwg.mxu0
    %3595 = vmatprep.subr.mxu0 %v28
    %3596 = vmatpush1.msra.mxu0 %v27
    %3597 = vmatprep.subr.mxu0 %v32
    %3598 = vmatpush1.msra.mxu0 %v31
    %3599 = vmatprep.subr.mxu0 %v36
    %3600 = vmatpush1.msra.mxu0 %v35
    %3601 = vmatprep.subr.mxu0 %v40
    %3602 = vmatpush1.msra.mxu0 %v39
    %3603 = vmatprep.subr.mxu0 %v44
    %3604 = vmatpush1.msra.mxu0 %v43
    %3605 = vmatprep.subr.mxu0 %v48
    %3606 = vmatpush1.msra.mxu0 %v47
    %3607 = vmatprep.subr.mxu0 %v52
    %3608 = vmatpush1.msra.mxu0 %v51
    %3609 = vmatprep.subr.mxu0 %v56
    %3610 = vmatpush1.msra.mxu0 %v55
    %3611 = vmatprep.subr.mxu0 %v60
    %3612 = vmatpush1.msra.mxu0 %v59
    %3613 = vmatprep.subr.mxu0 %v64
    %3614 = vmatpush1.msra.mxu0 %v63
    %3615 = vmatprep.subr.mxu0 %v68
    %3616 = vmatpush1.msra.mxu0 %v67
    %3617 = vmatprep.subr.mxu0 %v72
    %3618 = vmatpush1.msra.mxu0 %v71
    %3619 = vmatprep.subr.mxu0 %v76
    %3620 = vmatpush1.msra.mxu0 %v75
    %3621 = vmatprep.subr.mxu0 %v80
    %3622 = vmatpush1.msra.mxu0 %v79
    %3623 = vmatprep.subr.mxu0 %v84
    %3624 = vmatpush1.msra.mxu0 %v83
    %3625 = vmatprep.subr.mxu0 %v88
    %3626 = vmatpush1.msra.mxu0 %v87
    %3627 = vmatprep.subr.mxu0 %v92
    %3628 = vmatpush1.msra.mxu0 %v91
    %3629 = vmatprep.subr.mxu0 %v96
    %3630 = vmatpush1.msra.mxu0 %v95
    %3631 = vmatprep.subr.mxu0 %v100
    %3632 = vmatpush1.msra.mxu0 %v99
    %3633 = vmatprep.subr.mxu0 %v104
    %3634 = vmatpush1.msra.mxu0 %v103
    %3635 = vmatprep.subr.mxu0 %v108
    %3636 = vmatpush1.msra.mxu0 %v107
    %3637 = vmatprep.subr.mxu0 %v112
    %3638 = vmatpush1.msra.mxu0 %v111
    %3639 = vmatprep.subr.mxu0 %v116
    %3640 = vmatpush1.msra.mxu0 %v115
    %3641 = vmatprep.subr.mxu0 %v120
    %3642 = vmatpush1.msra.mxu0 %v119
    %3643 = vmatprep.subr.mxu0 %v124
    %3644 = vmatpush1.msra.mxu0 %v123
    %3645 = vmatprep.subr.mxu0 %v128
    %3646 = vmatpush1.msra.mxu0 %v127
    %3647 = vmatprep.subr.mxu0 %v132
    %3648 = vmatpush1.msra.mxu0 %v131
    %3649 = vmatprep.subr.mxu0 %v136
    %3650 = vmatpush1.msra.mxu0 %v135
    %3651 = vmatprep.subr.mxu0 %v140
    %3652 = vmatpush1.msra.mxu0 %v139
    %3653 = vmatprep.subr.mxu0 %v144
    %3654 = vmatpush1.msra.mxu0 %v143
    %3655 = vmatprep.subr.mxu0 %v148
    %3656 = vmatpush1.msra.mxu0 %v147
    %3657 = vmatprep.subr.mxu0 %v152
    %3658 = vmatpush1.msra.mxu0 %v151
    %3659 = vmatprep.mubr.f32.mxu0 %v3473
    %3660 = vmatmul.mubr.f32.gmra.mrb[0].mxu0 %v3472
    %v3661 = vpop.f32.mrb[0].mxu0
    %v3662 = vadd.f32 0.0, %v3661
    %v3663 = vpop.f32.mrb[0].mxu0
    %v3664 = vadd.f32 0.0, %v3663
    %3665 = vdwg.mxu0
    %v3666 = vadd.f32 %v3520, %v3591
    %v3667 = vadd.f32 %v3521, %v3593
    %v3668 = vadd.f32 %v3522, %v3662
    %v3669 = vadd.f32 %v3523, %v3664
    %v3670 = vxor.u32 %v3666, 2147483648
    %v3671 = vmul.f32 %v3670, 1.442695
    %v3672 = vpow.pop %v3671
    %v3673 = vadd.f32 %v3672, 1.0
    %v3674 = vrcp.pop %v3673
    %v3675 = vmul.f32 1.0, %v3674
    %v3676 = vxor.u32 %v3667, 2147483648
    %v3677 = vmul.f32 %v3676, 1.442695
    %v3678 = vpow.pop %v3677
    %v3679 = vadd.f32 %v3678, 1.0
    %v3680 = vrcp.pop %v3679
    %v3681 = vmul.f32 1.0, %v3680
    %v3682 = vtanh.pop %v3668
    %v3683 = vxor.u32 %v3669, 2147483648
    %v3684 = vmul.f32 %v3683, 1.442695
    %v3685 = vpow.pop %v3684
    %v3686 = vadd.f32 %v3685, 1.0
    %v3687 = vrcp.pop %v3686
    %v3688 = vmul.f32 1.0, %v3687
    %v3689 = vmul.f32 %v3681, %v3457
    %v3690 = vmul.f32 %v3675, %v3682
    %v3691 = vadd.f32 %v3689, %v3690
    %v3692 = vtanh.pop %v3691
    %v3693 = vmul.f32 %v3688, %v3692
    %3694 = vst [vmem:[%s638] sm:$0x3] %v3693
    %v3697 = vunpack.c.l.s4 1983009808
    %v3698 = vunpack.c.0.s8 %v3697
    %v3699 = vlaneseq
    %v3700 = vshrl.u32 %v3699, 7
    %v3701 = vsub.s32 %v3698, %v3700
    %v3702 = vrot.slane %v3693, %v3701
    %v3703 = vcombine.high %v3702, %v3702
    %3705 = vst [vmem:[%s626 + $0x2] sm:$0x3] %v3703
    %v3706 = vmul.f32 %v3693, %v165
    %v3707 = vmul.f32 %v3693, %v166
    %v3708 = vld [vmem:[%s168] sm:$0xff]
    %v3709 = vld [vmem:[%s0 + $0x8] sm:$0xff]
    %v3711 = vcombine.high %v3708, %v3708
    %v3713 = vunpack.c.l.s4 1983009808
    %v3714 = vunpack.c.0.s8 %v3713
    %v3715 = vlaneseq
    %v3716 = vshrl.u32 %v3715, 7
    %v3717 = vsub.s32 %v3714, %v3716
    %v3718 = vrot.slane %v3708, %v3717
    %v3720 = vunpack.c.l.s4 1983009808
    %v3721 = vunpack.c.0.s8 %v3720
    %v3722 = vlaneseq
    %v3723 = vshrl.u32 %v3722, 7
    %v3724 = vsub.s32 %v3721, %v3723
    %v3725 = vrot.slane %v3711, %v3724
    %v3726 = vcombine.high %v3718, %v3718
    %v3727 = vcombine.high %v3725, %v3725
    %v3733 = vcombine.low %v3709, %v3709
    %v3735 = vunpack.c.l.s4 1983009808
    %v3736 = vunpack.c.0.s8 %v3735
    %v3737 = vlaneseq
    %v3738 = vshrl.u32 %v3737, 7
    %v3739 = vsub.s32 %v3736, %v3738
    %v3740 = vrot.slane %v3733, %v3739
    %v3742 = vunpack.c.l.s4 1983009808
    %v3743 = vunpack.c.0.s8 %v3742
    %v3744 = vlaneseq
    %v3745 = vshrl.u32 %v3744, 7
    %v3746 = vsub.s32 %v3743, %v3745
    %v3747 = vrot.slane %v3709, %v3746
    %v3748 = vcombine.high %v3740, %v3740
    %v3749 = vcombine.high %v3747, %v3747
    %v3754 = vsel %vm214, %v3718, %v3740
    %v3755 = vsel %vm214, %v3726, %v3748
    %v3756 = vsel %vm214, %v3725, %v3747
    %v3757 = vsel %vm214, %v3727, %v3749
    %3758 = vmatprep.subr.mxu0 %v26
    %3759 = vmatpush1.msra.mxu0 %v25
    %3760 = vmatprep.subr.mxu0 %v30
    %3761 = vmatpush1.msra.mxu0 %v29
    %3762 = vmatprep.subr.mxu0 %v34
    %3763 = vmatpush1.msra.mxu0 %v33
    %3764 = vmatprep.subr.mxu0 %v38
    %3765 = vmatpush1.msra.mxu0 %v37
    %3766 = vmatprep.subr.mxu0 %v42
    %3767 = vmatpush1.msra.mxu0 %v41
    %3768 = vmatprep.subr.mxu0 %v46
    %3769 = vmatpush1.msra.mxu0 %v45
    %3770 = vmatprep.subr.mxu0 %v50
    %3771 = vmatpush1.msra.mxu0 %v49
    %3772 = vmatprep.subr.mxu0 %v54
    %3773 = vmatpush1.msra.mxu0 %v53
    %3774 = vmatprep.subr.mxu0 %v58
    %3775 = vmatpush1.msra.mxu0 %v57
    %3776 = vmatprep.subr.mxu0 %v62
    %3777 = vmatpush1.msra.mxu0 %v61
    %3778 = vmatprep.subr.mxu0 %v66
    %3779 = vmatpush1.msra.mxu0 %v65
    %3780 = vmatprep.subr.mxu0 %v70
    %3781 = vmatpush1.msra.mxu0 %v69
    %3782 = vmatprep.subr.mxu0 %v74
    %3783 = vmatpush1.msra.mxu0 %v73
    %3784 = vmatprep.subr.mxu0 %v78
    %3785 = vmatpush1.msra.mxu0 %v77
    %3786 = vmatprep.subr.mxu0 %v82
    %3787 = vmatpush1.msra.mxu0 %v81
    %3788 = vmatprep.subr.mxu0 %v86
    %3789 = vmatpush1.msra.mxu0 %v85
    %3790 = vmatprep.subr.mxu0 %v90
    %3791 = vmatpush1.msra.mxu0 %v89
    %3792 = vmatprep.subr.mxu0 %v94
    %3793 = vmatpush1.msra.mxu0 %v93
    %3794 = vmatprep.subr.mxu0 %v98
    %3795 = vmatpush1.msra.mxu0 %v97
    %3796 = vmatprep.subr.mxu0 %v102
    %3797 = vmatpush1.msra.mxu0 %v101
    %3798 = vmatprep.subr.mxu0 %v106
    %3799 = vmatpush1.msra.mxu0 %v105
    %3800 = vmatprep.subr.mxu0 %v110
    %3801 = vmatpush1.msra.mxu0 %v109
    %3802 = vmatprep.subr.mxu0 %v114
    %3803 = vmatpush1.msra.mxu0 %v113
    %3804 = vmatprep.subr.mxu0 %v118
    %3805 = vmatpush1.msra.mxu0 %v117
    %3806 = vmatprep.subr.mxu0 %v122
    %3807 = vmatpush1.msra.mxu0 %v121
    %3808 = vmatprep.subr.mxu0 %v126
    %3809 = vmatpush1.msra.mxu0 %v125
    %3810 = vmatprep.subr.mxu0 %v130
    %3811 = vmatpush1.msra.mxu0 %v129
    %3812 = vmatprep.subr.mxu0 %v134
    %3813 = vmatpush1.msra.mxu0 %v133
    %3814 = vmatprep.subr.mxu0 %v138
    %3815 = vmatpush1.msra.mxu0 %v137
    %3816 = vmatprep.subr.mxu0 %v142
    %3817 = vmatpush1.msra.mxu0 %v141
    %3818 = vmatprep.subr.mxu0 %v146
    %3819 = vmatpush1.msra.mxu0 %v145
    %3820 = vmatprep.subr.mxu0 %v150
    %3821 = vmatpush1.msra.mxu0 %v149
    %3822 = vmatprep.mubr.f32.mxu0 %v3707
    %3823 = vmatmul.mubr.f32.gmra.mrb[0].mxu0 %v3706
    %v3824 = vpop.f32.mrb[0].mxu0
    %v3825 = vadd.f32 0.0, %v3824
    %v3826 = vpop.f32.mrb[0].mxu0
    %v3827 = vadd.f32 0.0, %v3826
    %3828 = vdwg.mxu0
    %3829 = vmatprep.subr.mxu0 %v28
    %3830 = vmatpush1.msra.mxu0 %v27
    %3831 = vmatprep.subr.mxu0 %v32
    %3832 = vmatpush1.msra.mxu0 %v31
    %3833 = vmatprep.subr.mxu0 %v36
    %3834 = vmatpush1.msra.mxu0 %v35
    %3835 = vmatprep.subr.mxu0 %v40
    %3836 = vmatpush1.msra.mxu0 %v39
    %3837 = vmatprep.subr.mxu0 %v44
    %3838 = vmatpush1.msra.mxu0 %v43
    %3839 = vmatprep.subr.mxu0 %v48
    %3840 = vmatpush1.msra.mxu0 %v47
    %3841 = vmatprep.subr.mxu0 %v52
    %3842 = vmatpush1.msra.mxu0 %v51
    %3843 = vmatprep.subr.mxu0 %v56
    %3844 = vmatpush1.msra.mxu0 %v55
    %3845 = vmatprep.subr.mxu0 %v60
    %3846 = vmatpush1.msra.mxu0 %v59
    %3847 = vmatprep.subr.mxu0 %v64
    %3848 = vmatpush1.msra.mxu0 %v63
    %3849 = vmatprep.subr.mxu0 %v68
    %3850 = vmatpush1.msra.mxu0 %v67
    %3851 = vmatprep.subr.mxu0 %v72
    %3852 = vmatpush1.msra.mxu0 %v71
    %3853 = vmatprep.subr.mxu0 %v76
    %3854 = vmatpush1.msra.mxu0 %v75
    %3855 = vmatprep.subr.mxu0 %v80
    %3856 = vmatpush1.msra.mxu0 %v79
    %3857 = vmatprep.subr.mxu0 %v84
    %3858 = vmatpush1.msra.mxu0 %v83
    %3859 = vmatprep.subr.mxu0 %v88
    %3860 = vmatpush1.msra.mxu0 %v87
    %3861 = vmatprep.subr.mxu0 %v92
    %3862 = vmatpush1.msra.mxu0 %v91
    %3863 = vmatprep.subr.mxu0 %v96
    %3864 = vmatpush1.msra.mxu0 %v95
    %3865 = vmatprep.subr.mxu0 %v100
    %3866 = vmatpush1.msra.mxu0 %v99
    %3867 = vmatprep.subr.mxu0 %v104
    %3868 = vmatpush1.msra.mxu0 %v103
    %3869 = vmatprep.subr.mxu0 %v108
    %3870 = vmatpush1.msra.mxu0 %v107
    %3871 = vmatprep.subr.mxu0 %v112
    %3872 = vmatpush1.msra.mxu0 %v111
    %3873 = vmatprep.subr.mxu0 %v116
    %3874 = vmatpush1.msra.mxu0 %v115
    %3875 = vmatprep.subr.mxu0 %v120
    %3876 = vmatpush1.msra.mxu0 %v119
    %3877 = vmatprep.subr.mxu0 %v124
    %3878 = vmatpush1.msra.mxu0 %v123
    %3879 = vmatprep.subr.mxu0 %v128
    %3880 = vmatpush1.msra.mxu0 %v127
    %3881 = vmatprep.subr.mxu0 %v132
    %3882 = vmatpush1.msra.mxu0 %v131
    %3883 = vmatprep.subr.mxu0 %v136
    %3884 = vmatpush1.msra.mxu0 %v135
    %3885 = vmatprep.subr.mxu0 %v140
    %3886 = vmatpush1.msra.mxu0 %v139
    %3887 = vmatprep.subr.mxu0 %v144
    %3888 = vmatpush1.msra.mxu0 %v143
    %3889 = vmatprep.subr.mxu0 %v148
    %3890 = vmatpush1.msra.mxu0 %v147
    %3891 = vmatprep.subr.mxu0 %v152
    %3892 = vmatpush1.msra.mxu0 %v151
    %3893 = vmatprep.mubr.f32.mxu0 %v3707
    %3894 = vmatmul.mubr.f32.gmra.mrb[0].mxu0 %v3706
    %v3895 = vpop.f32.mrb[0].mxu0
    %v3896 = vadd.f32 0.0, %v3895
    %v3897 = vpop.f32.mrb[0].mxu0
    %v3898 = vadd.f32 0.0, %v3897
    %3899 = vdwg.mxu0
    %v3900 = vadd.f32 %v3754, %v3825
    %v3901 = vadd.f32 %v3755, %v3827
    %v3902 = vadd.f32 %v3756, %v3896
    %v3903 = vadd.f32 %v3757, %v3898
    %v3904 = vxor.u32 %v3900, 2147483648
    %v3905 = vmul.f32 %v3904, 1.442695
    %v3906 = vpow.pop %v3905
    %v3907 = vadd.f32 %v3906, 1.0
    %v3908 = vrcp.pop %v3907
    %v3909 = vmul.f32 1.0, %v3908
    %v3910 = vxor.u32 %v3901, 2147483648
    %v3911 = vmul.f32 %v3910, 1.442695
    %v3912 = vpow.pop %v3911
    %v3913 = vadd.f32 %v3912, 1.0
    %v3914 = vrcp.pop %v3913
    %v3915 = vmul.f32 1.0, %v3914
    %v3916 = vtanh.pop %v3902
    %v3917 = vxor.u32 %v3903, 2147483648
    %v3918 = vmul.f32 %v3917, 1.442695
    %v3919 = vpow.pop %v3918
    %v3920 = vadd.f32 %v3919, 1.0
    %v3921 = vrcp.pop %v3920
    %v3922 = vmul.f32 1.0, %v3921
    %v3923 = vmul.f32 %v3915, %v3691
    %v3924 = vmul.f32 %v3909, %v3916
    %v3925 = vadd.f32 %v3923, %v3924
    %v3926 = vtanh.pop %v3925
    %v3927 = vmul.f32 %v3922, %v3926
    %3928 = vst [vmem:[%s400] sm:$0x3] %v3927
    %v3931 = vunpack.c.l.s4 1983009808
    %v3932 = vunpack.c.0.s8 %v3931
    %v3933 = vlaneseq
    %v3934 = vshrl.u32 %v3933, 7
    %v3935 = vsub.s32 %v3932, %v3934
    %v3936 = vrot.slane %v3927, %v3935
    %v3937 = vcombine.high %v3936, %v3936
    %3939 = vst [vmem:[%s2 + $0x2] sm:$0x3] %v3937
    // Predicated region
    $region14: #{_lambda_.6} parent=1 // pred_check
      _
    $region15: #{_lambda_.6} parent=1 // pred_check_branch
      %3941 = sbr.rel (0) target = $region17
    $region16: #{_lambda_.6} parent=1 // pred_region
      _
    $region17: #{_lambda_.6} parent=1 // pred_fallthru
      _
    // Predicated region
    $region18: #{_lambda_.6} parent=1 // pred_check
      _
    $region19: #{_lambda_.6} parent=1 // pred_check_branch
      %3943 = sbr.rel (0) target = $region21
    $region20: #{_lambda_.6} parent=1 // pred_region
      _
    $region21: #{_lambda_.6} parent=1 // pred_fallthru
      _
    %3944 = vsyncpa [#allocation3], 1

// kernel: _lambda_.8
$region0: #{_lambda_.8}
  #allocation0 [shape = 'u32[]', space=smem, size = 0x4, offset = 0x4, fixed_abs, tag = 'smem constant byte address 0x4 - core index']
  #allocation1 [shape = 'u32[144,128]{1,0:T(1,128)}', space=vmem, size = 0x12000, scoped, tag = 'internal scratch']
  %s0 = inlined_call_operand.vmem [shape: f32[16,2,1024], index: 0, kind: input, shape index: {}]
  %s1 = inlined_call_operand.vmem [shape: f32[256,512], index: 1, kind: input, shape index: {}]
  %s2 = inlined_call_operand.vmem [shape: f32[16,2,256], index: 2, kind: output, shape index: {}]
  %s3 = sld [smem:[#allocation0]]
  $region18: #{_lambda_.8} parent=0
    _
  %s5 = ssub.s32 1, %s3
  %s6 = scalar_select 0, %s5, %s3
  // Predicated region
  $region2: #{_lambda_.8} parent=0 // pred_check
    _
  $region3: #{_lambda_.8} parent=0 // pred_check_branch
    %8 = sbr.rel (0) target = $region5
  $region4: #{_lambda_.8} parent=0 // pred_region
    _
  $region5: #{_lambda_.8} parent=0 // pred_fallthru
    _
  // Predicated region
  $region6: #{_lambda_.8} parent=0 // pred_check
    _
  $region7: #{_lambda_.8} parent=0 // pred_check_branch
    %10 = sbr.rel (0) target = $region9
  $region8: #{_lambda_.8} parent=0 // pred_region
    _
  $region9: #{_lambda_.8} parent=0 // pred_fallthru
    _
  %v11 = vld [vmem:[%s1] sm:$0xff]
  %v12 = vld [vmem:[%s1 + $0x8] sm:$0xff]
  %v13 = vld [vmem:[%s1 + $0x10] sm:$0xff]
  %v14 = vld [vmem:[%s1 + $0x18] sm:$0xff]
  %v15 = vld [vmem:[%s1 + $0x20] sm:$0xff]
  %v16 = vld [vmem:[%s1 + $0x28] sm:$0xff]
  %v17 = vld [vmem:[%s1 + $0x30] sm:$0xff]
  %v18 = vld [vmem:[%s1 + $0x38] sm:$0xff]
  %v19 = vld [vmem:[%s1 + $0x40] sm:$0xff]
  %v20 = vld [vmem:[%s1 + $0x48] sm:$0xff]
  %v21 = vld [vmem:[%s1 + $0x50] sm:$0xff]
  %v22 = vld [vmem:[%s1 + $0x58] sm:$0xff]
  %v23 = vld [vmem:[%s1 + $0x60] sm:$0xff]
  %v24 = vld [vmem:[%s1 + $0x68] sm:$0xff]
  %v25 = vld [vmem:[%s1 + $0x70] sm:$0xff]
  %v26 = vld [vmem:[%s1 + $0x78] sm:$0xff]
  %v27 = vld [vmem:[%s1 + $0x80] sm:$0xff]
  %v28 = vld [vmem:[%s1 + $0x88] sm:$0xff]
  %v29 = vld [vmem:[%s1 + $0x90] sm:$0xff]
  %v30 = vld [vmem:[%s1 + $0x98] sm:$0xff]
  %v31 = vld [vmem:[%s1 + $0xa0] sm:$0xff]
  %v32 = vld [vmem:[%s1 + $0xa8] sm:$0xff]
  %v33 = vld [vmem:[%s1 + $0xb0] sm:$0xff]
  %v34 = vld [vmem:[%s1 + $0xb8] sm:$0xff]
  %v35 = vld [vmem:[%s1 + $0xc0] sm:$0xff]
  %v36 = vld [vmem:[%s1 + $0xc8] sm:$0xff]
  %v37 = vld [vmem:[%s1 + $0xd0] sm:$0xff]
  %v38 = vld [vmem:[%s1 + $0xd8] sm:$0xff]
  %v39 = vld [vmem:[%s1 + $0xe0] sm:$0xff]
  %v40 = vld [vmem:[%s1 + $0xe8] sm:$0xff]
  %v41 = vld [vmem:[%s1 + $0xf0] sm:$0xff]
  %v42 = vld [vmem:[%s1 + $0xf8] sm:$0xff]
  %v43 = vld [vmem:[%s1 + $0x100] sm:$0xff]
  %v44 = vld [vmem:[%s1 + $0x108] sm:$0xff]
  %v45 = vld [vmem:[%s1 + $0x110] sm:$0xff]
  %v46 = vld [vmem:[%s1 + $0x118] sm:$0xff]
  %v47 = vld [vmem:[%s1 + $0x120] sm:$0xff]
  %v48 = vld [vmem:[%s1 + $0x128] sm:$0xff]
  %v49 = vld [vmem:[%s1 + $0x130] sm:$0xff]
  %v50 = vld [vmem:[%s1 + $0x138] sm:$0xff]
  %v51 = vld [vmem:[%s1 + $0x140] sm:$0xff]
  %v52 = vld [vmem:[%s1 + $0x148] sm:$0xff]
  %v53 = vld [vmem:[%s1 + $0x150] sm:$0xff]
  %v54 = vld [vmem:[%s1 + $0x158] sm:$0xff]
  %v55 = vld [vmem:[%s1 + $0x160] sm:$0xff]
  %v56 = vld [vmem:[%s1 + $0x168] sm:$0xff]
  %v57 = vld [vmem:[%s1 + $0x170] sm:$0xff]
  %v58 = vld [vmem:[%s1 + $0x178] sm:$0xff]
  %v59 = vld [vmem:[%s1 + $0x180] sm:$0xff]
  %v60 = vld [vmem:[%s1 + $0x188] sm:$0xff]
  %v61 = vld [vmem:[%s1 + $0x190] sm:$0xff]
  %v62 = vld [vmem:[%s1 + $0x198] sm:$0xff]
  %v63 = vld [vmem:[%s1 + $0x1a0] sm:$0xff]
  %v64 = vld [vmem:[%s1 + $0x1a8] sm:$0xff]
  %v65 = vld [vmem:[%s1 + $0x1b0] sm:$0xff]
  %v66 = vld [vmem:[%s1 + $0x1b8] sm:$0xff]
  %v67 = vld [vmem:[%s1 + $0x1c0] sm:$0xff]
  %v68 = vld [vmem:[%s1 + $0x1c8] sm:$0xff]
  %v69 = vld [vmem:[%s1 + $0x1d0] sm:$0xff]
  %v70 = vld [vmem:[%s1 + $0x1d8] sm:$0xff]
  %v71 = vld [vmem:[%s1 + $0x1e0] sm:$0xff]
  %v72 = vld [vmem:[%s1 + $0x1e8] sm:$0xff]
  %v73 = vld [vmem:[%s1 + $0x1f0] sm:$0xff]
  %v74 = vld [vmem:[%s1 + $0x1f8] sm:$0xff]
  %v75 = vld [vmem:[%s1 + $0x200] sm:$0xff]
  %v76 = vld [vmem:[%s1 + $0x208] sm:$0xff]
  %v77 = vld [vmem:[%s1 + $0x210] sm:$0xff]
  %v78 = vld [vmem:[%s1 + $0x218] sm:$0xff]
  %v79 = vld [vmem:[%s1 + $0x220] sm:$0xff]
  %v80 = vld [vmem:[%s1 + $0x228] sm:$0xff]
  %v81 = vld [vmem:[%s1 + $0x230] sm:$0xff]
  %v82 = vld [vmem:[%s1 + $0x238] sm:$0xff]
  %v83 = vld [vmem:[%s1 + $0x240] sm:$0xff]
  %v84 = vld [vmem:[%s1 + $0x248] sm:$0xff]
  %v85 = vld [vmem:[%s1 + $0x250] sm:$0xff]
  %v86 = vld [vmem:[%s1 + $0x258] sm:$0xff]
  %v87 = vld [vmem:[%s1 + $0x260] sm:$0xff]
  %v88 = vld [vmem:[%s1 + $0x268] sm:$0xff]
  %v89 = vld [vmem:[%s1 + $0x270] sm:$0xff]
  %v90 = vld [vmem:[%s1 + $0x278] sm:$0xff]
  %v91 = vld [vmem:[%s1 + $0x280] sm:$0xff]
  %v92 = vld [vmem:[%s1 + $0x288] sm:$0xff]
  %v93 = vld [vmem:[%s1 + $0x290] sm:$0xff]
  %v94 = vld [vmem:[%s1 + $0x298] sm:$0xff]
  %v95 = vld [vmem:[%s1 + $0x2a0] sm:$0xff]
  %v96 = vld [vmem:[%s1 + $0x2a8] sm:$0xff]
  %v97 = vld [vmem:[%s1 + $0x2b0] sm:$0xff]
  %v98 = vld [vmem:[%s1 + $0x2b8] sm:$0xff]
  %v99 = vld [vmem:[%s1 + $0x2c0] sm:$0xff]
  %v100 = vld [vmem:[%s1 + $0x2c8] sm:$0xff]
  %v101 = vld [vmem:[%s1 + $0x2d0] sm:$0xff]
  %v102 = vld [vmem:[%s1 + $0x2d8] sm:$0xff]
  %v103 = vld [vmem:[%s1 + $0x2e0] sm:$0xff]
  %v104 = vld [vmem:[%s1 + $0x2e8] sm:$0xff]
  %v105 = vld [vmem:[%s1 + $0x2f0] sm:$0xff]
  %v106 = vld [vmem:[%s1 + $0x2f8] sm:$0xff]
  %v107 = vld [vmem:[%s1 + $0x300] sm:$0xff]
  %v108 = vld [vmem:[%s1 + $0x308] sm:$0xff]
  %v109 = vld [vmem:[%s1 + $0x310] sm:$0xff]
  %v110 = vld [vmem:[%s1 + $0x318] sm:$0xff]
  %v111 = vld [vmem:[%s1 + $0x320] sm:$0xff]
  %v112 = vld [vmem:[%s1 + $0x328] sm:$0xff]
  %v113 = vld [vmem:[%s1 + $0x330] sm:$0xff]
  %v114 = vld [vmem:[%s1 + $0x338] sm:$0xff]
  %v115 = vld [vmem:[%s1 + $0x340] sm:$0xff]
  %v116 = vld [vmem:[%s1 + $0x348] sm:$0xff]
  %v117 = vld [vmem:[%s1 + $0x350] sm:$0xff]
  %v118 = vld [vmem:[%s1 + $0x358] sm:$0xff]
  %v119 = vld [vmem:[%s1 + $0x360] sm:$0xff]
  %v120 = vld [vmem:[%s1 + $0x368] sm:$0xff]
  %v121 = vld [vmem:[%s1 + $0x370] sm:$0xff]
  %v122 = vld [vmem:[%s1 + $0x378] sm:$0xff]
  %v123 = vld [vmem:[%s1 + $0x380] sm:$0xff]
  %v124 = vld [vmem:[%s1 + $0x388] sm:$0xff]
  %v125 = vld [vmem:[%s1 + $0x390] sm:$0xff]
  %v126 = vld [vmem:[%s1 + $0x398] sm:$0xff]
  %v127 = vld [vmem:[%s1 + $0x3a0] sm:$0xff]
  %v128 = vld [vmem:[%s1 + $0x3a8] sm:$0xff]
  %v129 = vld [vmem:[%s1 + $0x3b0] sm:$0xff]
  %v130 = vld [vmem:[%s1 + $0x3b8] sm:$0xff]
  %v131 = vld [vmem:[%s1 + $0x3c0] sm:$0xff]
  %v132 = vld [vmem:[%s1 + $0x3c8] sm:$0xff]
  %v133 = vld [vmem:[%s1 + $0x3d0] sm:$0xff]
  %v134 = vld [vmem:[%s1 + $0x3d8] sm:$0xff]
  %v135 = vld [vmem:[%s1 + $0x3e0] sm:$0xff]
  %v136 = vld [vmem:[%s1 + $0x3e8] sm:$0xff]
  %v137 = vld [vmem:[%s1 + $0x3f0] sm:$0xff]
  %v138 = vld [vmem:[%s1 + $0x3f8] sm:$0xff]
  %v139 = vlaneseq
  %v140 = vshrl.u32 %v139, 7
  %v141 = vlaneseq
  %v142 = vand.u32 %v141, 127
  %v143 = vadd.s32 %v142, 128
  %vm144 = vcmp.lt.s32.totalorder %v140, 2
  %vm145 = vcmp.lt.s32.totalorder %v142, 128
  %vm146 = vcmp.lt.s32.totalorder %v143, 128
  %vm147 = vmxor %vm144, %vm145
  %vm148 = vmxor %vm144, %vm146
  %vm149 = vmxor %vm147, 1
  %vm150 = vmxor %vm148, 1
  %v151 = vsel %vm149, 1.0, 0.0
  %v152 = vsel %vm150, 1.0, 0.0
  %v153 = vld [vmem:[%s0] sm:$0xff]
  %s154 = scalar_lea.vmem %s0, 240
  %v155 = vld [vmem:[%s154 + $0x8] sm:$0xff]
  %v157 = vcombine.high %v153, %v153
  %v159 = vunpack.c.l.s4 1983009808
  %v160 = vunpack.c.0.s8 %v159
  %v161 = vlaneseq
  %v162 = vshrl.u32 %v161, 7
  %v163 = vsub.s32 %v160, %v162
  %v164 = vrot.slane %v153, %v163
  %v166 = vunpack.c.l.s4 1983009808
  %v167 = vunpack.c.0.s8 %v166
  %v168 = vlaneseq
  %v169 = vshrl.u32 %v168, 7
  %v170 = vsub.s32 %v167, %v169
  %v171 = vrot.slane %v157, %v170
  %v172 = vcombine.high %v164, %v164
  %v173 = vcombine.high %v171, %v171
  %v179 = vcombine.low %v155, %v155
  %v181 = vunpack.c.l.s4 1983009808
  %v182 = vunpack.c.0.s8 %v181
  %v183 = vlaneseq
  %v184 = vshrl.u32 %v183, 7
  %v185 = vsub.s32 %v182, %v184
  %v186 = vrot.slane %v179, %v185
  %v188 = vunpack.c.l.s4 1983009808
  %v189 = vunpack.c.0.s8 %v188
  %v190 = vlaneseq
  %v191 = vshrl.u32 %v190, 7
  %v192 = vsub.s32 %v189, %v191
  %v193 = vrot.slane %v155, %v192
  %v194 = vcombine.high %v186, %v186
  %v195 = vcombine.high %v193, %v193
  %vm200 = vcmask 1041408
  %v201 = vsel %vm200, %v164, %v186
  %v202 = vsel %vm200, %v172, %v194
  %v203 = vsel %vm200, %v171, %v193
  %v204 = vsel %vm200, %v173, %v195
  %205 = vmatprep.subr.mxu0 %v12
  %206 = vmatpush1.msra.mxu0 %v11
  %207 = vmatprep.subr.mxu0 %v16
  %208 = vmatpush1.msra.mxu0 %v15
  %209 = vmatprep.subr.mxu0 %v20
  %210 = vmatpush1.msra.mxu0 %v19
  %211 = vmatprep.subr.mxu0 %v24
  %212 = vmatpush1.msra.mxu0 %v23
  %213 = vmatprep.subr.mxu0 %v28
  %214 = vmatpush1.msra.mxu0 %v27
  %215 = vmatprep.subr.mxu0 %v32
  %216 = vmatpush1.msra.mxu0 %v31
  %217 = vmatprep.subr.mxu0 %v36
  %218 = vmatpush1.msra.mxu0 %v35
  %219 = vmatprep.subr.mxu0 %v40
  %220 = vmatpush1.msra.mxu0 %v39
  %221 = vmatprep.subr.mxu0 %v44
  %222 = vmatpush1.msra.mxu0 %v43
  %223 = vmatprep.subr.mxu0 %v48
  %224 = vmatpush1.msra.mxu0 %v47
  %225 = vmatprep.subr.mxu0 %v52
  %226 = vmatpush1.msra.mxu0 %v51
  %227 = vmatprep.subr.mxu0 %v56
  %228 = vmatpush1.msra.mxu0 %v55
  %229 = vmatprep.subr.mxu0 %v60
  %230 = vmatpush1.msra.mxu0 %v59
  %231 = vmatprep.subr.mxu0 %v64
  %232 = vmatpush1.msra.mxu0 %v63
  %233 = vmatprep.subr.mxu0 %v68
  %234 = vmatpush1.msra.mxu0 %v67
  %235 = vmatprep.subr.mxu0 %v72
  %236 = vmatpush1.msra.mxu0 %v71
  %237 = vmatprep.subr.mxu0 %v76
  %238 = vmatpush1.msra.mxu0 %v75
  %239 = vmatprep.subr.mxu0 %v80
  %240 = vmatpush1.msra.mxu0 %v79
  %241 = vmatprep.subr.mxu0 %v84
  %242 = vmatpush1.msra.mxu0 %v83
  %243 = vmatprep.subr.mxu0 %v88
  %244 = vmatpush1.msra.mxu0 %v87
  %245 = vmatprep.subr.mxu0 %v92
  %246 = vmatpush1.msra.mxu0 %v91
  %247 = vmatprep.subr.mxu0 %v96
  %248 = vmatpush1.msra.mxu0 %v95
  %249 = vmatprep.subr.mxu0 %v100
  %250 = vmatpush1.msra.mxu0 %v99
  %251 = vmatprep.subr.mxu0 %v104
  %252 = vmatpush1.msra.mxu0 %v103
  %253 = vmatprep.subr.mxu0 %v108
  %254 = vmatpush1.msra.mxu0 %v107
  %255 = vmatprep.subr.mxu0 %v112
  %256 = vmatpush1.msra.mxu0 %v111
  %257 = vmatprep.subr.mxu0 %v116
  %258 = vmatpush1.msra.mxu0 %v115
  %259 = vmatprep.subr.mxu0 %v120
  %260 = vmatpush1.msra.mxu0 %v119
  %261 = vmatprep.subr.mxu0 %v124
  %262 = vmatpush1.msra.mxu0 %v123
  %263 = vmatprep.subr.mxu0 %v128
  %264 = vmatpush1.msra.mxu0 %v127
  %265 = vmatprep.subr.mxu0 %v132
  %266 = vmatpush1.msra.mxu0 %v131
  %267 = vmatprep.subr.mxu0 %v136
  %268 = vmatpush1.msra.mxu0 %v135
  %269 = vmatprep.mubr.f32.mxu0 0.0
  %270 = vmatmul.mubr.f32.gmra.mrb[0].mxu0 0.0
  %v271 = vpop.f32.mrb[0].mxu0
  %v272 = vadd.f32 0.0, %v271
  %v273 = vpop.f32.mrb[0].mxu0
  %v274 = vadd.f32 0.0, %v273
  %275 = vdwg.mxu0
  %276 = vmatprep.subr.mxu0 %v14
  %277 = vmatpush1.msra.mxu0 %v13
  %278 = vmatprep.subr.mxu0 %v18
  %279 = vmatpush1.msra.mxu0 %v17
  %280 = vmatprep.subr.mxu0 %v22
  %281 = vmatpush1.msra.mxu0 %v21
  %282 = vmatprep.subr.mxu0 %v26
  %283 = vmatpush1.msra.mxu0 %v25
  %284 = vmatprep.subr.mxu0 %v30
  %285 = vmatpush1.msra.mxu0 %v29
  %286 = vmatprep.subr.mxu0 %v34
  %287 = vmatpush1.msra.mxu0 %v33
  %288 = vmatprep.subr.mxu0 %v38
  %289 = vmatpush1.msra.mxu0 %v37
  %290 = vmatprep.subr.mxu0 %v42
  %291 = vmatpush1.msra.mxu0 %v41
  %292 = vmatprep.subr.mxu0 %v46
  %293 = vmatpush1.msra.mxu0 %v45
  %294 = vmatprep.subr.mxu0 %v50
  %295 = vmatpush1.msra.mxu0 %v49
  %296 = vmatprep.subr.mxu0 %v54
  %297 = vmatpush1.msra.mxu0 %v53
  %298 = vmatprep.subr.mxu0 %v58
  %299 = vmatpush1.msra.mxu0 %v57
  %300 = vmatprep.subr.mxu0 %v62
  %301 = vmatpush1.msra.mxu0 %v61
  %302 = vmatprep.subr.mxu0 %v66
  %303 = vmatpush1.msra.mxu0 %v65
  %304 = vmatprep.subr.mxu0 %v70
  %305 = vmatpush1.msra.mxu0 %v69
  %306 = vmatprep.subr.mxu0 %v74
  %307 = vmatpush1.msra.mxu0 %v73
  %308 = vmatprep.subr.mxu0 %v78
  %309 = vmatpush1.msra.mxu0 %v77
  %310 = vmatprep.subr.mxu0 %v82
  %311 = vmatpush1.msra.mxu0 %v81
  %312 = vmatprep.subr.mxu0 %v86
  %313 = vmatpush1.msra.mxu0 %v85
  %314 = vmatprep.subr.mxu0 %v90
  %315 = vmatpush1.msra.mxu0 %v89
  %316 = vmatprep.subr.mxu0 %v94
  %317 = vmatpush1.msra.mxu0 %v93
  %318 = vmatprep.subr.mxu0 %v98
  %319 = vmatpush1.msra.mxu0 %v97
  %320 = vmatprep.subr.mxu0 %v102
  %321 = vmatpush1.msra.mxu0 %v101
  %322 = vmatprep.subr.mxu0 %v106
  %323 = vmatpush1.msra.mxu0 %v105
  %324 = vmatprep.subr.mxu0 %v110
  %325 = vmatpush1.msra.mxu0 %v109
  %326 = vmatprep.subr.mxu0 %v114
  %327 = vmatpush1.msra.mxu0 %v113
  %328 = vmatprep.subr.mxu0 %v118
  %329 = vmatpush1.msra.mxu0 %v117
  %330 = vmatprep.subr.mxu0 %v122
  %331 = vmatpush1.msra.mxu0 %v121
  %332 = vmatprep.subr.mxu0 %v126
  %333 = vmatpush1.msra.mxu0 %v125
  %334 = vmatprep.subr.mxu0 %v130
  %335 = vmatpush1.msra.mxu0 %v129
  %336 = vmatprep.subr.mxu0 %v134
  %337 = vmatpush1.msra.mxu0 %v133
  %338 = vmatprep.subr.mxu0 %v138
  %339 = vmatpush1.msra.mxu0 %v137
  %340 = vmatprep.mubr.f32.mxu0 0.0
  %341 = vmatmul.mubr.f32.gmra.mrb[0].mxu0 0.0
  %v342 = vpop.f32.mrb[0].mxu0
  %v343 = vadd.f32 0.0, %v342
  %v344 = vpop.f32.mrb[0].mxu0
  %v345 = vadd.f32 0.0, %v344
  %346 = vdwg.mxu0
  %v347 = vadd.f32 %v201, %v272
  %v348 = vadd.f32 %v202, %v274
  %v349 = vadd.f32 %v203, %v343
  %v350 = vadd.f32 %v204, %v345
  %v351 = vxor.u32 %v347, 2147483648
  %v352 = vmul.f32 %v351, 1.442695
  %v353 = vpow.pop %v352
  %v354 = vadd.f32 %v353, 1.0
  %v355 = vrcp.pop %v354
  %v356 = vmul.f32 1.0, %v355
  %v357 = vxor.u32 %v348, 2147483648
  %v358 = vmul.f32 %v357, 1.442695
  %v359 = vpow.pop %v358
  %v360 = vadd.f32 %v359, 1.0
  %v361 = vrcp.pop %v360
  %v362 = vmul.f32 1.0, %v361
  %v363 = vtanh.pop %v349
  %v364 = vxor.u32 %v350, 2147483648
  %v365 = vmul.f32 %v364, 1.442695
  %v366 = vpow.pop %v365
  %v367 = vadd.f32 %v366, 1.0
  %v368 = vrcp.pop %v367
  %v369 = vmul.f32 1.0, %v368
  %v370 = vmul.f32 %v362, 0.0
  %v371 = vmul.f32 %v356, %v363
  %v372 = vadd.f32 %v370, %v371
  %v373 = vtanh.pop %v372
  %v374 = vmul.f32 %v369, %v373
  %375 = vst [vmem:[%s2] sm:$0x3] %v374
  %v378 = vunpack.c.l.s4 1983009808
  %v379 = vunpack.c.0.s8 %v378
  %v380 = vlaneseq
  %v381 = vshrl.u32 %v380, 7
  %v382 = vsub.s32 %v379, %v381
  %v383 = vrot.slane %v374, %v382
  %v384 = vcombine.high %v383, %v383
  %s386 = scalar_lea.vmem %s2, 60
  %387 = vst [vmem:[%s386 + $0x2] sm:$0x3] %v384
  %v388 = vmul.f32 %v374, %v151
  %v389 = vmul.f32 %v374, %v152
  %s390 = scalar_lea.vmem %s0, 16
  %v391 = vld [vmem:[%s390] sm:$0xff]
  %s392 = scalar_lea.vmem %s0, 224
  %v393 = vld [vmem:[%s392 + $0x8] sm:$0xff]
  %v395 = vcombine.high %v391, %v391
  %v397 = vunpack.c.l.s4 1983009808
  %v398 = vunpack.c.0.s8 %v397
  %v399 = vlaneseq
  %v400 = vshrl.u32 %v399, 7
  %v401 = vsub.s32 %v398, %v400
  %v402 = vrot.slane %v391, %v401
  %v404 = vunpack.c.l.s4 1983009808
  %v405 = vunpack.c.0.s8 %v404
  %v406 = vlaneseq
  %v407 = vshrl.u32 %v406, 7
  %v408 = vsub.s32 %v405, %v407
  %v409 = vrot.slane %v395, %v408
  %v410 = vcombine.high %v402, %v402
  %v411 = vcombine.high %v409, %v409
  %v417 = vcombine.low %v393, %v393
  %v419 = vunpack.c.l.s4 1983009808
  %v420 = vunpack.c.0.s8 %v419
  %v421 = vlaneseq
  %v422 = vshrl.u32 %v421, 7
  %v423 = vsub.s32 %v420, %v422
  %v424 = vrot.slane %v417, %v423
  %v426 = vunpack.c.l.s4 1983009808
  %v427 = vunpack.c.0.s8 %v426
  %v428 = vlaneseq
  %v429 = vshrl.u32 %v428, 7
  %v430 = vsub.s32 %v427, %v429
  %v431 = vrot.slane %v393, %v430
  %v432 = vcombine.high %v424, %v424
  %v433 = vcombine.high %v431, %v431
  %v438 = vsel %vm200, %v402, %v424
  %v439 = vsel %vm200, %v410, %v432
  %v440 = vsel %vm200, %v409, %v431
  %v441 = vsel %vm200, %v411, %v433
  %442 = vmatprep.subr.mxu0 %v12
  %443 = vmatpush1.msra.mxu0 %v11
  %444 = vmatprep.subr.mxu0 %v16
  %445 = vmatpush1.msra.mxu0 %v15
  %446 = vmatprep.subr.mxu0 %v20
  %447 = vmatpush1.msra.mxu0 %v19
  %448 = vmatprep.subr.mxu0 %v24
  %449 = vmatpush1.msra.mxu0 %v23
  %450 = vmatprep.subr.mxu0 %v28
  %451 = vmatpush1.msra.mxu0 %v27
  %452 = vmatprep.subr.mxu0 %v32
  %453 = vmatpush1.msra.mxu0 %v31
  %454 = vmatprep.subr.mxu0 %v36
  %455 = vmatpush1.msra.mxu0 %v35
  %456 = vmatprep.subr.mxu0 %v40
  %457 = vmatpush1.msra.mxu0 %v39
  %458 = vmatprep.subr.mxu0 %v44
  %459 = vmatpush1.msra.mxu0 %v43
  %460 = vmatprep.subr.mxu0 %v48
  %461 = vmatpush1.msra.mxu0 %v47
  %462 = vmatprep.subr.mxu0 %v52
  %463 = vmatpush1.msra.mxu0 %v51
  %464 = vmatprep.subr.mxu0 %v56
  %465 = vmatpush1.msra.mxu0 %v55
  %466 = vmatprep.subr.mxu0 %v60
  %467 = vmatpush1.msra.mxu0 %v59
  %468 = vmatprep.subr.mxu0 %v64
  %469 = vmatpush1.msra.mxu0 %v63
  %470 = vmatprep.subr.mxu0 %v68
  %471 = vmatpush1.msra.mxu0 %v67
  %472 = vmatprep.subr.mxu0 %v72
  %473 = vmatpush1.msra.mxu0 %v71
  %474 = vmatprep.subr.mxu0 %v76
  %475 = vmatpush1.msra.mxu0 %v75
  %476 = vmatprep.subr.mxu0 %v80
  %477 = vmatpush1.msra.mxu0 %v79
  %478 = vmatprep.subr.mxu0 %v84
  %479 = vmatpush1.msra.mxu0 %v83
  %480 = vmatprep.subr.mxu0 %v88
  %481 = vmatpush1.msra.mxu0 %v87
  %482 = vmatprep.subr.mxu0 %v92
  %483 = vmatpush1.msra.mxu0 %v91
  %484 = vmatprep.subr.mxu0 %v96
  %485 = vmatpush1.msra.mxu0 %v95
  %486 = vmatprep.subr.mxu0 %v100
  %487 = vmatpush1.msra.mxu0 %v99
  %488 = vmatprep.subr.mxu0 %v104
  %489 = vmatpush1.msra.mxu0 %v103
  %490 = vmatprep.subr.mxu0 %v108
  %491 = vmatpush1.msra.mxu0 %v107
  %492 = vmatprep.subr.mxu0 %v112
  %493 = vmatpush1.msra.mxu0 %v111
  %494 = vmatprep.subr.mxu0 %v116
  %495 = vmatpush1.msra.mxu0 %v115
  %496 = vmatprep.subr.mxu0 %v120
  %497 = vmatpush1.msra.mxu0 %v119
  %498 = vmatprep.subr.mxu0 %v124
  %499 = vmatpush1.msra.mxu0 %v123
  %500 = vmatprep.subr.mxu0 %v128
  %501 = vmatpush1.msra.mxu0 %v127
  %502 = vmatprep.subr.mxu0 %v132
  %503 = vmatpush1.msra.mxu0 %v131
  %504 = vmatprep.subr.mxu0 %v136
  %505 = vmatpush1.msra.mxu0 %v135
  %506 = vmatprep.mubr.f32.mxu0 %v389
  %507 = vmatmul.mubr.f32.gmra.mrb[0].mxu0 %v388
  %v508 = vpop.f32.mrb[0].mxu0
  %v509 = vadd.f32 0.0, %v508
  %v510 = vpop.f32.mrb[0].mxu0
  %v511 = vadd.f32 0.0, %v510
  %512 = vdwg.mxu0
  %513 = vmatprep.subr.mxu0 %v14
  %514 = vmatpush1.msra.mxu0 %v13
  %515 = vmatprep.subr.mxu0 %v18
  %516 = vmatpush1.msra.mxu0 %v17
  %517 = vmatprep.subr.mxu0 %v22
  %518 = vmatpush1.msra.mxu0 %v21
  %519 = vmatprep.subr.mxu0 %v26
  %520 = vmatpush1.msra.mxu0 %v25
  %521 = vmatprep.subr.mxu0 %v30
  %522 = vmatpush1.msra.mxu0 %v29
  %523 = vmatprep.subr.mxu0 %v34
  %524 = vmatpush1.msra.mxu0 %v33
  %525 = vmatprep.subr.mxu0 %v38
  %526 = vmatpush1.msra.mxu0 %v37
  %527 = vmatprep.subr.mxu0 %v42
  %528 = vmatpush1.msra.mxu0 %v41
  %529 = vmatprep.subr.mxu0 %v46
  %530 = vmatpush1.msra.mxu0 %v45
  %531 = vmatprep.subr.mxu0 %v50
  %532 = vmatpush1.msra.mxu0 %v49
  %533 = vmatprep.subr.mxu0 %v54
  %534 = vmatpush1.msra.mxu0 %v53
  %535 = vmatprep.subr.mxu0 %v58
  %536 = vmatpush1.msra.mxu0 %v57
  %537 = vmatprep.subr.mxu0 %v62
  %538 = vmatpush1.msra.mxu0 %v61
  %539 = vmatprep.subr.mxu0 %v66
  %540 = vmatpush1.msra.mxu0 %v65
  %541 = vmatprep.subr.mxu0 %v70
  %542 = vmatpush1.msra.mxu0 %v69
  %543 = vmatprep.subr.mxu0 %v74
  %544 = vmatpush1.msra.mxu0 %v73
  %545 = vmatprep.subr.mxu0 %v78
  %546 = vmatpush1.msra.mxu0 %v77
  %547 = vmatprep.subr.mxu0 %v82
  %548 = vmatpush1.msra.mxu0 %v81
  %549 = vmatprep.subr.mxu0 %v86
  %550 = vmatpush1.msra.mxu0 %v85
  %551 = vmatprep.subr.mxu0 %v90
  %552 = vmatpush1.msra.mxu0 %v89
  %553 = vmatprep.subr.mxu0 %v94
  %554 = vmatpush1.msra.mxu0 %v93
  %555 = vmatprep.subr.mxu0 %v98
  %556 = vmatpush1.msra.mxu0 %v97
  %557 = vmatprep.subr.mxu0 %v102
  %558 = vmatpush1.msra.mxu0 %v101
  %559 = vmatprep.subr.mxu0 %v106
  %560 = vmatpush1.msra.mxu0 %v105
  %561 = vmatprep.subr.mxu0 %v110
  %562 = vmatpush1.msra.mxu0 %v109
  %563 = vmatprep.subr.mxu0 %v114
  %564 = vmatpush1.msra.mxu0 %v113
  %565 = vmatprep.subr.mxu0 %v118
  %566 = vmatpush1.msra.mxu0 %v117
  %567 = vmatprep.subr.mxu0 %v122
  %568 = vmatpush1.msra.mxu0 %v121
  %569 = vmatprep.subr.mxu0 %v126
  %570 = vmatpush1.msra.mxu0 %v125
  %571 = vmatprep.subr.mxu0 %v130
  %572 = vmatpush1.msra.mxu0 %v129
  %573 = vmatprep.subr.mxu0 %v134
  %574 = vmatpush1.msra.mxu0 %v133
  %575 = vmatprep.subr.mxu0 %v138
  %576 = vmatpush1.msra.mxu0 %v137
  %577 = vmatprep.mubr.f32.mxu0 %v389
  %578 = vmatmul.mubr.f32.gmra.mrb[0].mxu0 %v388
  %v579 = vpop.f32.mrb[0].mxu0
  %v580 = vadd.f32 0.0, %v579
  %v581 = vpop.f32.mrb[0].mxu0
  %v582 = vadd.f32 0.0, %v581
  %583 = vdwg.mxu0
  %v584 = vadd.f32 %v438, %v509
  %v585 = vadd.f32 %v439, %v511
  %v586 = vadd.f32 %v440, %v580
  %v587 = vadd.f32 %v441, %v582
  %v588 = vxor.u32 %v584, 2147483648
  %v589 = vmul.f32 %v588, 1.442695
  %v590 = vpow.pop %v589
  %v591 = vadd.f32 %v590, 1.0
  %v592 = vrcp.pop %v591
  %v593 = vmul.f32 1.0, %v592
  %v594 = vxor.u32 %v585, 2147483648
  %v595 = vmul.f32 %v594, 1.442695
  %v596 = vpow.pop %v595
  %v597 = vadd.f32 %v596, 1.0
  %v598 = vrcp.pop %v597
  %v599 = vmul.f32 1.0, %v598
  %v600 = vtanh.pop %v586
  %v601 = vxor.u32 %v587, 2147483648
  %v602 = vmul.f32 %v601, 1.442695
  %v603 = vpow.pop %v602
  %v604 = vadd.f32 %v603, 1.0
  %v605 = vrcp.pop %v604
  %v606 = vmul.f32 1.0, %v605
  %v607 = vmul.f32 %v599, %v372
  %v608 = vmul.f32 %v593, %v600
  %v609 = vadd.f32 %v607, %v608
  %v610 = vtanh.pop %v609
  %v611 = vmul.f32 %v606, %v610
  %s612 = scalar_lea.vmem %s2, 4
  %613 = vst [vmem:[%s612] sm:$0x3] %v611
  %v616 = vunpack.c.l.s4 1983009808
  %v617 = vunpack.c.0.s8 %v616
  %v618 = vlaneseq
  %v619 = vshrl.u32 %v618, 7
  %v620 = vsub.s32 %v617, %v619
  %v621 = vrot.slane %v611, %v620
  %v622 = vcombine.high %v621, %v621
  %s624 = scalar_lea.vmem %s2, 56
  %625 = vst [vmem:[%s624 + $0x2] sm:$0x3] %v622
  %v626 = vmul.f32 %v611, %v151
  %v627 = vmul.f32 %v611, %v152
  %s628 = scalar_lea.vmem %s0, 32
  %v629 = vld [vmem:[%s628] sm:$0xff]
  %s630 = scalar_lea.vmem %s0, 208
  %v631 = vld [vmem:[%s630 + $0x8] sm:$0xff]
  %v633 = vcombine.high %v629, %v629
  %v635 = vunpack.c.l.s4 1983009808
  %v636 = vunpack.c.0.s8 %v635
  %v637 = vlaneseq
  %v638 = vshrl.u32 %v637, 7
  %v639 = vsub.s32 %v636, %v638
  %v640 = vrot.slane %v629, %v639
  %v642 = vunpack.c.l.s4 1983009808
  %v643 = vunpack.c.0.s8 %v642
  %v644 = vlaneseq
  %v645 = vshrl.u32 %v644, 7
  %v646 = vsub.s32 %v643, %v645
  %v647 = vrot.slane %v633, %v646
  %v648 = vcombine.high %v640, %v640
  %v649 = vcombine.high %v647, %v647
  %v655 = vcombine.low %v631, %v631
  %v657 = vunpack.c.l.s4 1983009808
  %v658 = vunpack.c.0.s8 %v657
  %v659 = vlaneseq
  %v660 = vshrl.u32 %v659, 7
  %v661 = vsub.s32 %v658, %v660
  %v662 = vrot.slane %v655, %v661
  %v664 = vunpack.c.l.s4 1983009808
  %v665 = vunpack.c.0.s8 %v664
  %v666 = vlaneseq
  %v667 = vshrl.u32 %v666, 7
  %v668 = vsub.s32 %v665, %v667
  %v669 = vrot.slane %v631, %v668
  %v670 = vcombine.high %v662, %v662
  %v671 = vcombine.high %v669, %v669
  %v676 = vsel %vm200, %v640, %v662
  %v677 = vsel %vm200, %v648, %v670
  %v678 = vsel %vm200, %v647, %v669
  %v679 = vsel %vm200, %v649, %v671
  %680 = vmatprep.subr.mxu0 %v12
  %681 = vmatpush1.msra.mxu0 %v11
  %682 = vmatprep.subr.mxu0 %v16
  %683 = vmatpush1.msra.mxu0 %v15
  %684 = vmatprep.subr.mxu0 %v20
  %685 = vmatpush1.msra.mxu0 %v19
  %686 = vmatprep.subr.mxu0 %v24
  %687 = vmatpush1.msra.mxu0 %v23
  %688 = vmatprep.subr.mxu0 %v28
  %689 = vmatpush1.msra.mxu0 %v27
  %690 = vmatprep.subr.mxu0 %v32
  %691 = vmatpush1.msra.mxu0 %v31
  %692 = vmatprep.subr.mxu0 %v36
  %693 = vmatpush1.msra.mxu0 %v35
  %694 = vmatprep.subr.mxu0 %v40
  %695 = vmatpush1.msra.mxu0 %v39
  %696 = vmatprep.subr.mxu0 %v44
  %697 = vmatpush1.msra.mxu0 %v43
  %698 = vmatprep.subr.mxu0 %v48
  %699 = vmatpush1.msra.mxu0 %v47
  %700 = vmatprep.subr.mxu0 %v52
  %701 = vmatpush1.msra.mxu0 %v51
  %702 = vmatprep.subr.mxu0 %v56
  %703 = vmatpush1.msra.mxu0 %v55
  %704 = vmatprep.subr.mxu0 %v60
  %705 = vmatpush1.msra.mxu0 %v59
  %706 = vmatprep.subr.mxu0 %v64
  %707 = vmatpush1.msra.mxu0 %v63
  %708 = vmatprep.subr.mxu0 %v68
  %709 = vmatpush1.msra.mxu0 %v67
  %710 = vmatprep.subr.mxu0 %v72
  %711 = vmatpush1.msra.mxu0 %v71
  %712 = vmatprep.subr.mxu0 %v76
  %713 = vmatpush1.msra.mxu0 %v75
  %714 = vmatprep.subr.mxu0 %v80
  %715 = vmatpush1.msra.mxu0 %v79
  %716 = vmatprep.subr.mxu0 %v84
  %717 = vmatpush1.msra.mxu0 %v83
  %718 = vmatprep.subr.mxu0 %v88
  %719 = vmatpush1.msra.mxu0 %v87
  %720 = vmatprep.subr.mxu0 %v92
  %721 = vmatpush1.msra.mxu0 %v91
  %722 = vmatprep.subr.mxu0 %v96
  %723 = vmatpush1.msra.mxu0 %v95
  %724 = vmatprep.subr.mxu0 %v100
  %725 = vmatpush1.msra.mxu0 %v99
  %726 = vmatprep.subr.mxu0 %v104
  %727 = vmatpush1.msra.mxu0 %v103
  %728 = vmatprep.subr.mxu0 %v108
  %729 = vmatpush1.msra.mxu0 %v107
  %730 = vmatprep.subr.mxu0 %v112
  %731 = vmatpush1.msra.mxu0 %v111
  %732 = vmatprep.subr.mxu0 %v116
  %733 = vmatpush1.msra.mxu0 %v115
  %734 = vmatprep.subr.mxu0 %v120
  %735 = vmatpush1.msra.mxu0 %v119
  %736 = vmatprep.subr.mxu0 %v124
  %737 = vmatpush1.msra.mxu0 %v123
  %738 = vmatprep.subr.mxu0 %v128
  %739 = vmatpush1.msra.mxu0 %v127
  %740 = vmatprep.subr.mxu0 %v132
  %741 = vmatpush1.msra.mxu0 %v131
  %742 = vmatprep.subr.mxu0 %v136
  %743 = vmatpush1.msra.mxu0 %v135
  %744 = vmatprep.mubr.f32.mxu0 %v627
  %745 = vmatmul.mubr.f32.gmra.mrb[0].mxu0 %v626
  %v746 = vpop.f32.mrb[0].mxu0
  %v747 = vadd.f32 0.0, %v746
  %v748 = vpop.f32.mrb[0].mxu0
  %v749 = vadd.f32 0.0, %v748
  %750 = vdwg.mxu0
  %751 = vmatprep.subr.mxu0 %v14
  %752 = vmatpush1.msra.mxu0 %v13
  %753 = vmatprep.subr.mxu0 %v18
  %754 = vmatpush1.msra.mxu0 %v17
  %755 = vmatprep.subr.mxu0 %v22
  %756 = vmatpush1.msra.mxu0 %v21
  %757 = vmatprep.subr.mxu0 %v26
  %758 = vmatpush1.msra.mxu0 %v25
  %759 = vmatprep.subr.mxu0 %v30
  %760 = vmatpush1.msra.mxu0 %v29
  %761 = vmatprep.subr.mxu0 %v34
  %762 = vmatpush1.msra.mxu0 %v33
  %763 = vmatprep.subr.mxu0 %v38
  %764 = vmatpush1.msra.mxu0 %v37
  %765 = vmatprep.subr.mxu0 %v42
  %766 = vmatpush1.msra.mxu0 %v41
  %767 = vmatprep.subr.mxu0 %v46
  %768 = vmatpush1.msra.mxu0 %v45
  %769 = vmatprep.subr.mxu0 %v50
  %770 = vmatpush1.msra.mxu0 %v49
  %771 = vmatprep.subr.mxu0 %v54
  %772 = vmatpush1.msra.mxu0 %v53
  %773 = vmatprep.subr.mxu0 %v58
  %774 = vmatpush1.msra.mxu0 %v57
  %775 = vmatprep.subr.mxu0 %v62
  %776 = vmatpush1.msra.mxu0 %v61
  %777 = vmatprep.subr.mxu0 %v66
  %778 = vmatpush1.msra.mxu0 %v65
  %779 = vmatprep.subr.mxu0 %v70
  %780 = vmatpush1.msra.mxu0 %v69
  %781 = vmatprep.subr.mxu0 %v74
  %782 = vmatpush1.msra.mxu0 %v73
  %783 = vmatprep.subr.mxu0 %v78
  %784 = vmatpush1.msra.mxu0 %v77
  %785 = vmatprep.subr.mxu0 %v82
  %786 = vmatpush1.msra.mxu0 %v81
  %787 = vmatprep.subr.mxu0 %v86
  %788 = vmatpush1.msra.mxu0 %v85
  %789 = vmatprep.subr.mxu0 %v90
  %790 = vmatpush1.msra.mxu0 %v89
  %791 = vmatprep.subr.mxu0 %v94
  %792 = vmatpush1.msra.mxu0 %v93
  %793 = vmatprep.subr.mxu0 %v98
  %794 = vmatpush1.msra.mxu0 %v97
  %795 = vmatprep.subr.mxu0 %v102
  %796 = vmatpush1.msra.mxu0 %v101
  %797 = vmatprep.subr.mxu0 %v106
  %798 = vmatpush1.msra.mxu0 %v105
  %799 = vmatprep.subr.mxu0 %v110
  %800 = vmatpush1.msra.mxu0 %v109
  %801 = vmatprep.subr.mxu0 %v114
  %802 = vmatpush1.msra.mxu0 %v113
  %803 = vmatprep.subr.mxu0 %v118
  %804 = vmatpush1.msra.mxu0 %v117
  %805 = vmatprep.subr.mxu0 %v122
  %806 = vmatpush1.msra.mxu0 %v121
  %807 = vmatprep.subr.mxu0 %v126
  %808 = vmatpush1.msra.mxu0 %v125
  %809 = vmatprep.subr.mxu0 %v130
  %810 = vmatpush1.msra.mxu0 %v129
  %811 = vmatprep.subr.mxu0 %v134
  %812 = vmatpush1.msra.mxu0 %v133
  %813 = vmatprep.subr.mxu0 %v138
  %814 = vmatpush1.msra.mxu0 %v137
  %815 = vmatprep.mubr.f32.mxu0 %v627
  %816 = vmatmul.mubr.f32.gmra.mrb[0].mxu0 %v626
  %v817 = vpop.f32.mrb[0].mxu0
  %v818 = vadd.f32 0.0, %v817
  %v819 = vpop.f32.mrb[0].mxu0
  %v820 = vadd.f32 0.0, %v819
  %821 = vdwg.mxu0
  %v822 = vadd.f32 %v676, %v747
  %v823 = vadd.f32 %v677, %v749
  %v824 = vadd.f32 %v678, %v818
  %v825 = vadd.f32 %v679, %v820
  %v826 = vxor.u32 %v822, 2147483648
  %v827 = vmul.f32 %v826, 1.442695
  %v828 = vpow.pop %v827
  %v829 = vadd.f32 %v828, 1.0
  %v830 = vrcp.pop %v829
  %v831 = vmul.f32 1.0, %v830
  %v832 = vxor.u32 %v823, 2147483648
  %v833 = vmul.f32 %v832, 1.442695
  %v834 = vpow.pop %v833
  %v835 = vadd.f32 %v834, 1.0
  %v836 = vrcp.pop %v835
  %v837 = vmul.f32 1.0, %v836
  %v838 = vtanh.pop %v824
  %v839 = vxor.u32 %v825, 2147483648
  %v840 = vmul.f32 %v839, 1.442695
  %v841 = vpow.pop %v840
  %v842 = vadd.f32 %v841, 1.0
  %v843 = vrcp.pop %v842
  %v844 = vmul.f32 1.0, %v843
  %v845 = vmul.f32 %v837, %v609
  %v846 = vmul.f32 %v831, %v838
  %v847 = vadd.f32 %v845, %v846
  %v848 = vtanh.pop %v847
  %v849 = vmul.f32 %v844, %v848
  %s850 = scalar_lea.vmem %s2, 8
  %851 = vst [vmem:[%s850] sm:$0x3] %v849
  %v854 = vunpack.c.l.s4 1983009808
  %v855 = vunpack.c.0.s8 %v854
  %v856 = vlaneseq
  %v857 = vshrl.u32 %v856, 7
  %v858 = vsub.s32 %v855, %v857
  %v859 = vrot.slane %v849, %v858
  %v860 = vcombine.high %v859, %v859
  %s862 = scalar_lea.vmem %s2, 52
  %863 = vst [vmem:[%s862 + $0x2] sm:$0x3] %v860
  %v864 = vmul.f32 %v849, %v151
  %v865 = vmul.f32 %v849, %v152
  %s866 = scalar_lea.vmem %s0, 48
  %v867 = vld [vmem:[%s866] sm:$0xff]
  %s868 = scalar_lea.vmem %s0, 192
  %v869 = vld [vmem:[%s868 + $0x8] sm:$0xff]
  %v871 = vcombine.high %v867, %v867
  %v873 = vunpack.c.l.s4 1983009808
  %v874 = vunpack.c.0.s8 %v873
  %v875 = vlaneseq
  %v876 = vshrl.u32 %v875, 7
  %v877 = vsub.s32 %v874, %v876
  %v878 = vrot.slane %v867, %v877
  %v880 = vunpack.c.l.s4 1983009808
  %v881 = vunpack.c.0.s8 %v880
  %v882 = vlaneseq
  %v883 = vshrl.u32 %v882, 7
  %v884 = vsub.s32 %v881, %v883
  %v885 = vrot.slane %v871, %v884
  %v886 = vcombine.high %v878, %v878
  %v887 = vcombine.high %v885, %v885
  %v893 = vcombine.low %v869, %v869
  %v895 = vunpack.c.l.s4 1983009808
  %v896 = vunpack.c.0.s8 %v895
  %v897 = vlaneseq
  %v898 = vshrl.u32 %v897, 7
  %v899 = vsub.s32 %v896, %v898
  %v900 = vrot.slane %v893, %v899
  %v902 = vunpack.c.l.s4 1983009808
  %v903 = vunpack.c.0.s8 %v902
  %v904 = vlaneseq
  %v905 = vshrl.u32 %v904, 7
  %v906 = vsub.s32 %v903, %v905
  %v907 = vrot.slane %v869, %v906
  %v908 = vcombine.high %v900, %v900
  %v909 = vcombine.high %v907, %v907
  %v914 = vsel %vm200, %v878, %v900
  %v915 = vsel %vm200, %v886, %v908
  %v916 = vsel %vm200, %v885, %v907
  %v917 = vsel %vm200, %v887, %v909
  %918 = vmatprep.subr.mxu0 %v12
  %919 = vmatpush1.msra.mxu0 %v11
  %920 = vmatprep.subr.mxu0 %v16
  %921 = vmatpush1.msra.mxu0 %v15
  %922 = vmatprep.subr.mxu0 %v20
  %923 = vmatpush1.msra.mxu0 %v19
  %924 = vmatprep.subr.mxu0 %v24
  %925 = vmatpush1.msra.mxu0 %v23
  %926 = vmatprep.subr.mxu0 %v28
  %927 = vmatpush1.msra.mxu0 %v27
  %928 = vmatprep.subr.mxu0 %v32
  %929 = vmatpush1.msra.mxu0 %v31
  %930 = vmatprep.subr.mxu0 %v36
  %931 = vmatpush1.msra.mxu0 %v35
  %932 = vmatprep.subr.mxu0 %v40
  %933 = vmatpush1.msra.mxu0 %v39
  %934 = vmatprep.subr.mxu0 %v44
  %935 = vmatpush1.msra.mxu0 %v43
  %936 = vmatprep.subr.mxu0 %v48
  %937 = vmatpush1.msra.mxu0 %v47
  %938 = vmatprep.subr.mxu0 %v52
  %939 = vmatpush1.msra.mxu0 %v51
  %940 = vmatprep.subr.mxu0 %v56
  %941 = vmatpush1.msra.mxu0 %v55
  %942 = vmatprep.subr.mxu0 %v60
  %943 = vmatpush1.msra.mxu0 %v59
  %944 = vmatprep.subr.mxu0 %v64
  %945 = vmatpush1.msra.mxu0 %v63
  %946 = vmatprep.subr.mxu0 %v68
  %947 = vmatpush1.msra.mxu0 %v67
  %948 = vmatprep.subr.mxu0 %v72
  %949 = vmatpush1.msra.mxu0 %v71
  %950 = vmatprep.subr.mxu0 %v76
  %951 = vmatpush1.msra.mxu0 %v75
  %952 = vmatprep.subr.mxu0 %v80
  %953 = vmatpush1.msra.mxu0 %v79
  %954 = vmatprep.subr.mxu0 %v84
  %955 = vmatpush1.msra.mxu0 %v83
  %956 = vmatprep.subr.mxu0 %v88
  %957 = vmatpush1.msra.mxu0 %v87
  %958 = vmatprep.subr.mxu0 %v92
  %959 = vmatpush1.msra.mxu0 %v91
  %960 = vmatprep.subr.mxu0 %v96
  %961 = vmatpush1.msra.mxu0 %v95
  %962 = vmatprep.subr.mxu0 %v100
  %963 = vmatpush1.msra.mxu0 %v99
  %964 = vmatprep.subr.mxu0 %v104
  %965 = vmatpush1.msra.mxu0 %v103
  %966 = vmatprep.subr.mxu0 %v108
  %967 = vmatpush1.msra.mxu0 %v107
  %968 = vmatprep.subr.mxu0 %v112
  %969 = vmatpush1.msra.mxu0 %v111
  %970 = vmatprep.subr.mxu0 %v116
  %971 = vmatpush1.msra.mxu0 %v115
  %972 = vmatprep.subr.mxu0 %v120
  %973 = vmatpush1.msra.mxu0 %v119
  %974 = vmatprep.subr.mxu0 %v124
  %975 = vmatpush1.msra.mxu0 %v123
  %976 = vmatprep.subr.mxu0 %v128
  %977 = vmatpush1.msra.mxu0 %v127
  %978 = vmatprep.subr.mxu0 %v132
  %979 = vmatpush1.msra.mxu0 %v131
  %980 = vmatprep.subr.mxu0 %v136
  %981 = vmatpush1.msra.mxu0 %v135
  %982 = vmatprep.mubr.f32.mxu0 %v865
  %983 = vmatmul.mubr.f32.gmra.mrb[0].mxu0 %v864
  %v984 = vpop.f32.mrb[0].mxu0
  %v985 = vadd.f32 0.0, %v984
  %v986 = vpop.f32.mrb[0].mxu0
  %v987 = vadd.f32 0.0, %v986
  %988 = vdwg.mxu0
  %989 = vmatprep.subr.mxu0 %v14
  %990 = vmatpush1.msra.mxu0 %v13
  %991 = vmatprep.subr.mxu0 %v18
  %992 = vmatpush1.msra.mxu0 %v17
  %993 = vmatprep.subr.mxu0 %v22
  %994 = vmatpush1.msra.mxu0 %v21
  %995 = vmatprep.subr.mxu0 %v26
  %996 = vmatpush1.msra.mxu0 %v25
  %997 = vmatprep.subr.mxu0 %v30
  %998 = vmatpush1.msra.mxu0 %v29
  %999 = vmatprep.subr.mxu0 %v34
  %1000 = vmatpush1.msra.mxu0 %v33
  %1001 = vmatprep.subr.mxu0 %v38
  %1002 = vmatpush1.msra.mxu0 %v37
  %1003 = vmatprep.subr.mxu0 %v42
  %1004 = vmatpush1.msra.mxu0 %v41
  %1005 = vmatprep.subr.mxu0 %v46
  %1006 = vmatpush1.msra.mxu0 %v45
  %1007 = vmatprep.subr.mxu0 %v50
  %1008 = vmatpush1.msra.mxu0 %v49
  %1009 = vmatprep.subr.mxu0 %v54
  %1010 = vmatpush1.msra.mxu0 %v53
  %1011 = vmatprep.subr.mxu0 %v58
  %1012 = vmatpush1.msra.mxu0 %v57
  %1013 = vmatprep.subr.mxu0 %v62
  %1014 = vmatpush1.msra.mxu0 %v61
  %1015 = vmatprep.subr.mxu0 %v66
  %1016 = vmatpush1.msra.mxu0 %v65
  %1017 = vmatprep.subr.mxu0 %v70
  %1018 = vmatpush1.msra.mxu0 %v69
  %1019 = vmatprep.subr.mxu0 %v74
  %1020 = vmatpush1.msra.mxu0 %v73
  %1021 = vmatprep.subr.mxu0 %v78
  %1022 = vmatpush1.msra.mxu0 %v77
  %1023 = vmatprep.subr.mxu0 %v82
  %1024 = vmatpush1.msra.mxu0 %v81
  %1025 = vmatprep.subr.mxu0 %v86
  %1026 = vmatpush1.msra.mxu0 %v85
  %1027 = vmatprep.subr.mxu0 %v90
  %1028 = vmatpush1.msra.mxu0 %v89
  %1029 = vmatprep.subr.mxu0 %v94
  %1030 = vmatpush1.msra.mxu0 %v93
  %1031 = vmatprep.subr.mxu0 %v98
  %1032 = vmatpush1.msra.mxu0 %v97
  %1033 = vmatprep.subr.mxu0 %v102
  %1034 = vmatpush1.msra.mxu0 %v101
  %1035 = vmatprep.subr.mxu0 %v106
  %1036 = vmatpush1.msra.mxu0 %v105
  %1037 = vmatprep.subr.mxu0 %v110
  %1038 = vmatpush1.msra.mxu0 %v109
  %1039 = vmatprep.subr.mxu0 %v114
  %1040 = vmatpush1.msra.mxu0 %v113
  %1041 = vmatprep.subr.mxu0 %v118
  %1042 = vmatpush1.msra.mxu0 %v117
  %1043 = vmatprep.subr.mxu0 %v122
  %1044 = vmatpush1.msra.mxu0 %v121
  %1045 = vmatprep.subr.mxu0 %v126
  %1046 = vmatpush1.msra.mxu0 %v125
  %1047 = vmatprep.subr.mxu0 %v130
  %1048 = vmatpush1.msra.mxu0 %v129
  %1049 = vmatprep.subr.mxu0 %v134
  %1050 = vmatpush1.msra.mxu0 %v133
  %1051 = vmatprep.subr.mxu0 %v138
  %1052 = vmatpush1.msra.mxu0 %v137
  %1053 = vmatprep.mubr.f32.mxu0 %v865
  %1054 = vmatmul.mubr.f32.gmra.mrb[0].mxu0 %v864
  %v1055 = vpop.f32.mrb[0].mxu0
  %v1056 = vadd.f32 0.0, %v1055
  %v1057 = vpop.f32.mrb[0].mxu0
  %v1058 = vadd.f32 0.0, %v1057
  %1059 = vdwg.mxu0
  %v1060 = vadd.f32 %v914, %v985
  %v1061 = vadd.f32 %v915, %v987
  %v1062 = vadd.f32 %v916, %v1056
  %v1063 = vadd.f32 %v917, %v1058
  %v1064 = vxor.u32 %v1060, 2147483648
  %v1065 = vmul.f32 %v1064, 1.442695
  %v1066 = vpow.pop %v1065
  %v1067 = vadd.f32 %v1066, 1.0
  %v1068 = vrcp.pop %v1067
  %v1069 = vmul.f32 1.0, %v1068
  %v1070 = vxor.u32 %v1061, 2147483648
  %v1071 = vmul.f32 %v1070, 1.442695
  %v1072 = vpow.pop %v1071
  %v1073 = vadd.f32 %v1072, 1.0
  %v1074 = vrcp.pop %v1073
  %v1075 = vmul.f32 1.0, %v1074
  %v1076 = vtanh.pop %v1062
  %v1077 = vxor.u32 %v1063, 2147483648
  %v1078 = vmul.f32 %v1077, 1.442695
  %v1079 = vpow.pop %v1078
  %v1080 = vadd.f32 %v1079, 1.0
  %v1081 = vrcp.pop %v1080
  %v1082 = vmul.f32 1.0, %v1081
  %v1083 = vmul.f32 %v1075, %v847
  %v1084 = vmul.f32 %v1069, %v1076
  %v1085 = vadd.f32 %v1083, %v1084
  %v1086 = vtanh.pop %v1085
  %v1087 = vmul.f32 %v1082, %v1086
  %s1088 = scalar_lea.vmem %s2, 12
  %1089 = vst [vmem:[%s1088] sm:$0x3] %v1087
  %v1092 = vunpack.c.l.s4 1983009808
  %v1093 = vunpack.c.0.s8 %v1092
  %v1094 = vlaneseq
  %v1095 = vshrl.u32 %v1094, 7
  %v1096 = vsub.s32 %v1093, %v1095
  %v1097 = vrot.slane %v1087, %v1096
  %v1098 = vcombine.high %v1097, %v1097
  %s1100 = scalar_lea.vmem %s2, 48
  %1101 = vst [vmem:[%s1100 + $0x2] sm:$0x3] %v1098
  %v1102 = vmul.f32 %v1087, %v151
  %v1103 = vmul.f32 %v1087, %v152
  %s1104 = scalar_lea.vmem %s0, 64
  %v1105 = vld [vmem:[%s1104] sm:$0xff]
  %s1106 = scalar_lea.vmem %s0, 176
  %v1107 = vld [vmem:[%s1106 + $0x8] sm:$0xff]
  %v1109 = vcombine.high %v1105, %v1105
  %v1111 = vunpack.c.l.s4 1983009808
  %v1112 = vunpack.c.0.s8 %v1111
  %v1113 = vlaneseq
  %v1114 = vshrl.u32 %v1113, 7
  %v1115 = vsub.s32 %v1112, %v1114
  %v1116 = vrot.slane %v1105, %v1115
  %v1118 = vunpack.c.l.s4 1983009808
  %v1119 = vunpack.c.0.s8 %v1118
  %v1120 = vlaneseq
  %v1121 = vshrl.u32 %v1120, 7
  %v1122 = vsub.s32 %v1119, %v1121
  %v1123 = vrot.slane %v1109, %v1122
  %v1124 = vcombine.high %v1116, %v1116
  %v1125 = vcombine.high %v1123, %v1123
  %v1131 = vcombine.low %v1107, %v1107
  %v1133 = vunpack.c.l.s4 1983009808
  %v1134 = vunpack.c.0.s8 %v1133
  %v1135 = vlaneseq
  %v1136 = vshrl.u32 %v1135, 7
  %v1137 = vsub.s32 %v1134, %v1136
  %v1138 = vrot.slane %v1131, %v1137
  %v1140 = vunpack.c.l.s4 1983009808
  %v1141 = vunpack.c.0.s8 %v1140
  %v1142 = vlaneseq
  %v1143 = vshrl.u32 %v1142, 7
  %v1144 = vsub.s32 %v1141, %v1143
  %v1145 = vrot.slane %v1107, %v1144
  %v1146 = vcombine.high %v1138, %v1138
  %v1147 = vcombine.high %v1145, %v1145
  %v1152 = vsel %vm200, %v1116, %v1138
  %v1153 = vsel %vm200, %v1124, %v1146
  %v1154 = vsel %vm200, %v1123, %v1145
  %v1155 = vsel %vm200, %v1125, %v1147
  %1156 = vmatprep.subr.mxu0 %v12
  %1157 = vmatpush1.msra.mxu0 %v11
  %1158 = vmatprep.subr.mxu0 %v16
  %1159 = vmatpush1.msra.mxu0 %v15
  %1160 = vmatprep.subr.mxu0 %v20
  %1161 = vmatpush1.msra.mxu0 %v19
  %1162 = vmatprep.subr.mxu0 %v24
  %1163 = vmatpush1.msra.mxu0 %v23
  %1164 = vmatprep.subr.mxu0 %v28
  %1165 = vmatpush1.msra.mxu0 %v27
  %1166 = vmatprep.subr.mxu0 %v32
  %1167 = vmatpush1.msra.mxu0 %v31
  %1168 = vmatprep.subr.mxu0 %v36
  %1169 = vmatpush1.msra.mxu0 %v35
  %1170 = vmatprep.subr.mxu0 %v40
  %1171 = vmatpush1.msra.mxu0 %v39
  %1172 = vmatprep.subr.mxu0 %v44
  %1173 = vmatpush1.msra.mxu0 %v43
  %1174 = vmatprep.subr.mxu0 %v48
  %1175 = vmatpush1.msra.mxu0 %v47
  %1176 = vmatprep.subr.mxu0 %v52
  %1177 = vmatpush1.msra.mxu0 %v51
  %1178 = vmatprep.subr.mxu0 %v56
  %1179 = vmatpush1.msra.mxu0 %v55
  %1180 = vmatprep.subr.mxu0 %v60
  %1181 = vmatpush1.msra.mxu0 %v59
  %1182 = vmatprep.subr.mxu0 %v64
  %1183 = vmatpush1.msra.mxu0 %v63
  %1184 = vmatprep.subr.mxu0 %v68
  %1185 = vmatpush1.msra.mxu0 %v67
  %1186 = vmatprep.subr.mxu0 %v72
  %1187 = vmatpush1.msra.mxu0 %v71
  %1188 = vmatprep.subr.mxu0 %v76
  %1189 = vmatpush1.msra.mxu0 %v75
  %1190 = vmatprep.subr.mxu0 %v80
  %1191 = vmatpush1.msra.mxu0 %v79
  %1192 = vmatprep.subr.mxu0 %v84
  %1193 = vmatpush1.msra.mxu0 %v83
  %1194 = vmatprep.subr.mxu0 %v88
  %1195 = vmatpush1.msra.mxu0 %v87
  %1196 = vmatprep.subr.mxu0 %v92
  %1197 = vmatpush1.msra.mxu0 %v91
  %1198 = vmatprep.subr.mxu0 %v96
  %1199 = vmatpush1.msra.mxu0 %v95
  %1200 = vmatprep.subr.mxu0 %v100
  %1201 = vmatpush1.msra.mxu0 %v99
  %1202 = vmatprep.subr.mxu0 %v104
  %1203 = vmatpush1.msra.mxu0 %v103
  %1204 = vmatprep.subr.mxu0 %v108
  %1205 = vmatpush1.msra.mxu0 %v107
  %1206 = vmatprep.subr.mxu0 %v112
  %1207 = vmatpush1.msra.mxu0 %v111
  %1208 = vmatprep.subr.mxu0 %v116
  %1209 = vmatpush1.msra.mxu0 %v115
  %1210 = vmatprep.subr.mxu0 %v120
  %1211 = vmatpush1.msra.mxu0 %v119
  %1212 = vmatprep.subr.mxu0 %v124
  %1213 = vmatpush1.msra.mxu0 %v123
  %1214 = vmatprep.subr.mxu0 %v128
  %1215 = vmatpush1.msra.mxu0 %v127
  %1216 = vmatprep.subr.mxu0 %v132
  %1217 = vmatpush1.msra.mxu0 %v131
  %1218 = vmatprep.subr.mxu0 %v136
  %1219 = vmatpush1.msra.mxu0 %v135
  %1220 = vmatprep.mubr.f32.mxu0 %v1103
  %1221 = vmatmul.mubr.f32.gmra.mrb[0].mxu0 %v1102
  %v1222 = vpop.f32.mrb[0].mxu0
  %v1223 = vadd.f32 0.0, %v1222
  %v1224 = vpop.f32.mrb[0].mxu0
  %v1225 = vadd.f32 0.0, %v1224
  %1226 = vdwg.mxu0
  %1227 = vmatprep.subr.mxu0 %v14
  %1228 = vmatpush1.msra.mxu0 %v13
  %1229 = vmatprep.subr.mxu0 %v18
  %1230 = vmatpush1.msra.mxu0 %v17
  %1231 = vmatprep.subr.mxu0 %v22
  %1232 = vmatpush1.msra.mxu0 %v21
  %1233 = vmatprep.subr.mxu0 %v26
  %1234 = vmatpush1.msra.mxu0 %v25
  %1235 = vmatprep.subr.mxu0 %v30
  %1236 = vmatpush1.msra.mxu0 %v29
  %1237 = vmatprep.subr.mxu0 %v34
  %1238 = vmatpush1.msra.mxu0 %v33
  %1239 = vmatprep.subr.mxu0 %v38
  %1240 = vmatpush1.msra.mxu0 %v37
  %1241 = vmatprep.subr.mxu0 %v42
  %1242 = vmatpush1.msra.mxu0 %v41
  %1243 = vmatprep.subr.mxu0 %v46
  %1244 = vmatpush1.msra.mxu0 %v45
  %1245 = vmatprep.subr.mxu0 %v50
  %1246 = vmatpush1.msra.mxu0 %v49
  %1247 = vmatprep.subr.mxu0 %v54
  %1248 = vmatpush1.msra.mxu0 %v53
  %1249 = vmatprep.subr.mxu0 %v58
  %1250 = vmatpush1.msra.mxu0 %v57
  %1251 = vmatprep.subr.mxu0 %v62
  %1252 = vmatpush1.msra.mxu0 %v61
  %1253 = vmatprep.subr.mxu0 %v66
  %1254 = vmatpush1.msra.mxu0 %v65
  %1255 = vmatprep.subr.mxu0 %v70
  %1256 = vmatpush1.msra.mxu0 %v69
  %1257 = vmatprep.subr.mxu0 %v74
  %1258 = vmatpush1.msra.mxu0 %v73
  %1259 = vmatprep.subr.mxu0 %v78
  %1260 = vmatpush1.msra.mxu0 %v77
  %1261 = vmatprep.subr.mxu0 %v82
  %1262 = vmatpush1.msra.mxu0 %v81
  %1263 = vmatprep.subr.mxu0 %v86
  %1264 = vmatpush1.msra.mxu0 %v85
  %1265 = vmatprep.subr.mxu0 %v90
  %1266 = vmatpush1.msra.mxu0 %v89
  %1267 = vmatprep.subr.mxu0 %v94
  %1268 = vmatpush1.msra.mxu0 %v93
  %1269 = vmatprep.subr.mxu0 %v98
  %1270 = vmatpush1.msra.mxu0 %v97
  %1271 = vmatprep.subr.mxu0 %v102
  %1272 = vmatpush1.msra.mxu0 %v101
  %1273 = vmatprep.subr.mxu0 %v106
  %1274 = vmatpush1.msra.mxu0 %v105
  %1275 = vmatprep.subr.mxu0 %v110
  %1276 = vmatpush1.msra.mxu0 %v109
  %1277 = vmatprep.subr.mxu0 %v114
  %1278 = vmatpush1.msra.mxu0 %v113
  %1279 = vmatprep.subr.mxu0 %v118
  %1280 = vmatpush1.msra.mxu0 %v117
  %1281 = vmatprep.subr.mxu0 %v122
  %1282 = vmatpush1.msra.mxu0 %v121
  %1283 = vmatprep.subr.mxu0 %v126
  %1284 = vmatpush1.msra.mxu0 %v125
  %1285 = vmatprep.subr.mxu0 %v130
  %1286 = vmatpush1.msra.mxu0 %v129
  %1287 = vmatprep.subr.mxu0 %v134
  %1288 = vmatpush1.msra.mxu0 %v133
  %1289 = vmatprep.subr.mxu0 %v138
  %1290 = vmatpush1.msra.mxu0 %v137
  %1291 = vmatprep.mubr.f32.mxu0 %v1103
  %1292 = vmatmul.mubr.f32.gmra.mrb[0].mxu0 %v1102
  %v1293 = vpop.f32.mrb[0].mxu0
  %v1294 = vadd.f32 0.0, %v1293
  %v1295 = vpop.f32.mrb[0].mxu0
  %v1296 = vadd.f32 0.0, %v1295
  %1297 = vdwg.mxu0
  %v1298 = vadd.f32 %v1152, %v1223
  %v1299 = vadd.f32 %v1153, %v1225
  %v1300 = vadd.f32 %v1154, %v1294
  %v1301 = vadd.f32 %v1155, %v1296
  %v1302 = vxor.u32 %v1298, 2147483648
  %v1303 = vmul.f32 %v1302, 1.442695
  %v1304 = vpow.pop %v1303
  %v1305 = vadd.f32 %v1304, 1.0
  %v1306 = vrcp.pop %v1305
  %v1307 = vmul.f32 1.0, %v1306
  %v1308 = vxor.u32 %v1299, 2147483648
  %v1309 = vmul.f32 %v1308, 1.442695
  %v1310 = vpow.pop %v1309
  %v1311 = vadd.f32 %v1310, 1.0
  %v1312 = vrcp.pop %v1311
  %v1313 = vmul.f32 1.0, %v1312
  %v1314 = vtanh.pop %v1300
  %v1315 = vxor.u32 %v1301, 2147483648
  %v1316 = vmul.f32 %v1315, 1.442695
  %v1317 = vpow.pop %v1316
  %v1318 = vadd.f32 %v1317, 1.0
  %v1319 = vrcp.pop %v1318
  %v1320 = vmul.f32 1.0, %v1319
  %v1321 = vmul.f32 %v1313, %v1085
  %v1322 = vmul.f32 %v1307, %v1314
  %v1323 = vadd.f32 %v1321, %v1322
  %v1324 = vtanh.pop %v1323
  %v1325 = vmul.f32 %v1320, %v1324
  %s1326 = scalar_lea.vmem %s2, 16
  %1327 = vst [vmem:[%s1326] sm:$0x3] %v1325
  %v1330 = vunpack.c.l.s4 1983009808
  %v1331 = vunpack.c.0.s8 %v1330
  %v1332 = vlaneseq
  %v1333 = vshrl.u32 %v1332, 7
  %v1334 = vsub.s32 %v1331, %v1333
  %v1335 = vrot.slane %v1325, %v1334
  %v1336 = vcombine.high %v1335, %v1335
  %s1338 = scalar_lea.vmem %s2, 44
  %1339 = vst [vmem:[%s1338 + $0x2] sm:$0x3] %v1336
  %v1340 = vmul.f32 %v1325, %v151
  %v1341 = vmul.f32 %v1325, %v152
  %s1342 = scalar_lea.vmem %s0, 80
  %v1343 = vld [vmem:[%s1342] sm:$0xff]
  %s1344 = scalar_lea.vmem %s0, 160
  %v1345 = vld [vmem:[%s1344 + $0x8] sm:$0xff]
  %v1347 = vcombine.high %v1343, %v1343
  %v1349 = vunpack.c.l.s4 1983009808
  %v1350 = vunpack.c.0.s8 %v1349
  %v1351 = vlaneseq
  %v1352 = vshrl.u32 %v1351, 7
  %v1353 = vsub.s32 %v1350, %v1352
  %v1354 = vrot.slane %v1343, %v1353
  %v1356 = vunpack.c.l.s4 1983009808
  %v1357 = vunpack.c.0.s8 %v1356
  %v1358 = vlaneseq
  %v1359 = vshrl.u32 %v1358, 7
  %v1360 = vsub.s32 %v1357, %v1359
  %v1361 = vrot.slane %v1347, %v1360
  %v1362 = vcombine.high %v1354, %v1354
  %v1363 = vcombine.high %v1361, %v1361
  %v1369 = vcombine.low %v1345, %v1345
  %v1371 = vunpack.c.l.s4 1983009808
  %v1372 = vunpack.c.0.s8 %v1371
  %v1373 = vlaneseq
  %v1374 = vshrl.u32 %v1373, 7
  %v1375 = vsub.s32 %v1372, %v1374
  %v1376 = vrot.slane %v1369, %v1375
  %v1378 = vunpack.c.l.s4 1983009808
  %v1379 = vunpack.c.0.s8 %v1378
  %v1380 = vlaneseq
  %v1381 = vshrl.u32 %v1380, 7
  %v1382 = vsub.s32 %v1379, %v1381
  %v1383 = vrot.slane %v1345, %v1382
  %v1384 = vcombine.high %v1376, %v1376
  %v1385 = vcombine.high %v1383, %v1383
  %v1390 = vsel %vm200, %v1354, %v1376
  %v1391 = vsel %vm200, %v1362, %v1384
  %v1392 = vsel %vm200, %v1361, %v1383
  %v1393 = vsel %vm200, %v1363, %v1385
  %1394 = vmatprep.subr.mxu0 %v12
  %1395 = vmatpush1.msra.mxu0 %v11
  %1396 = vmatprep.subr.mxu0 %v16
  %1397 = vmatpush1.msra.mxu0 %v15
  %1398 = vmatprep.subr.mxu0 %v20
  %1399 = vmatpush1.msra.mxu0 %v19
  %1400 = vmatprep.subr.mxu0 %v24
  %1401 = vmatpush1.msra.mxu0 %v23
  %1402 = vmatprep.subr.mxu0 %v28
  %1403 = vmatpush1.msra.mxu0 %v27
  %1404 = vmatprep.subr.mxu0 %v32
  %1405 = vmatpush1.msra.mxu0 %v31
  %1406 = vmatprep.subr.mxu0 %v36
  %1407 = vmatpush1.msra.mxu0 %v35
  %1408 = vmatprep.subr.mxu0 %v40
  %1409 = vmatpush1.msra.mxu0 %v39
  %1410 = vmatprep.subr.mxu0 %v44
  %1411 = vmatpush1.msra.mxu0 %v43
  %1412 = vmatprep.subr.mxu0 %v48
  %1413 = vmatpush1.msra.mxu0 %v47
  %1414 = vmatprep.subr.mxu0 %v52
  %1415 = vmatpush1.msra.mxu0 %v51
  %1416 = vmatprep.subr.mxu0 %v56
  %1417 = vmatpush1.msra.mxu0 %v55
  %1418 = vmatprep.subr.mxu0 %v60
  %1419 = vmatpush1.msra.mxu0 %v59
  %1420 = vmatprep.subr.mxu0 %v64
  %1421 = vmatpush1.msra.mxu0 %v63
  %1422 = vmatprep.subr.mxu0 %v68
  %1423 = vmatpush1.msra.mxu0 %v67
  %1424 = vmatprep.subr.mxu0 %v72
  %1425 = vmatpush1.msra.mxu0 %v71
  %1426 = vmatprep.subr.mxu0 %v76
  %1427 = vmatpush1.msra.mxu0 %v75
  %1428 = vmatprep.subr.mxu0 %v80
  %1429 = vmatpush1.msra.mxu0 %v79
  %1430 = vmatprep.subr.mxu0 %v84
  %1431 = vmatpush1.msra.mxu0 %v83
  %1432 = vmatprep.subr.mxu0 %v88
  %1433 = vmatpush1.msra.mxu0 %v87
  %1434 = vmatprep.subr.mxu0 %v92
  %1435 = vmatpush1.msra.mxu0 %v91
  %1436 = vmatprep.subr.mxu0 %v96
  %1437 = vmatpush1.msra.mxu0 %v95
  %1438 = vmatprep.subr.mxu0 %v100
  %1439 = vmatpush1.msra.mxu0 %v99
  %1440 = vmatprep.subr.mxu0 %v104
  %1441 = vmatpush1.msra.mxu0 %v103
  %1442 = vmatprep.subr.mxu0 %v108
  %1443 = vmatpush1.msra.mxu0 %v107
  %1444 = vmatprep.subr.mxu0 %v112
  %1445 = vmatpush1.msra.mxu0 %v111
  %1446 = vmatprep.subr.mxu0 %v116
  %1447 = vmatpush1.msra.mxu0 %v115
  %1448 = vmatprep.subr.mxu0 %v120
  %1449 = vmatpush1.msra.mxu0 %v119
  %1450 = vmatprep.subr.mxu0 %v124
  %1451 = vmatpush1.msra.mxu0 %v123
  %1452 = vmatprep.subr.mxu0 %v128
  %1453 = vmatpush1.msra.mxu0 %v127
  %1454 = vmatprep.subr.mxu0 %v132
  %1455 = vmatpush1.msra.mxu0 %v131
  %1456 = vmatprep.subr.mxu0 %v136
  %1457 = vmatpush1.msra.mxu0 %v135
  %1458 = vmatprep.mubr.f32.mxu0 %v1341
  %1459 = vmatmul.mubr.f32.gmra.mrb[0].mxu0 %v1340
  %v1460 = vpop.f32.mrb[0].mxu0
  %v1461 = vadd.f32 0.0, %v1460
  %v1462 = vpop.f32.mrb[0].mxu0
  %v1463 = vadd.f32 0.0, %v1462
  %1464 = vdwg.mxu0
  %1465 = vmatprep.subr.mxu0 %v14
  %1466 = vmatpush1.msra.mxu0 %v13
  %1467 = vmatprep.subr.mxu0 %v18
  %1468 = vmatpush1.msra.mxu0 %v17
  %1469 = vmatprep.subr.mxu0 %v22
  %1470 = vmatpush1.msra.mxu0 %v21
  %1471 = vmatprep.subr.mxu0 %v26
  %1472 = vmatpush1.msra.mxu0 %v25
  %1473 = vmatprep.subr.mxu0 %v30
  %1474 = vmatpush1.msra.mxu0 %v29
  %1475 = vmatprep.subr.mxu0 %v34
  %1476 = vmatpush1.msra.mxu0 %v33
  %1477 = vmatprep.subr.mxu0 %v38
  %1478 = vmatpush1.msra.mxu0 %v37
  %1479 = vmatprep.subr.mxu0 %v42
  %1480 = vmatpush1.msra.mxu0 %v41
  %1481 = vmatprep.subr.mxu0 %v46
  %1482 = vmatpush1.msra.mxu0 %v45
  %1483 = vmatprep.subr.mxu0 %v50
  %1484 = vmatpush1.msra.mxu0 %v49
  %1485 = vmatprep.subr.mxu0 %v54
  %1486 = vmatpush1.msra.mxu0 %v53
  %1487 = vmatprep.subr.mxu0 %v58
  %1488 = vmatpush1.msra.mxu0 %v57
  %1489 = vmatprep.subr.mxu0 %v62
  %1490 = vmatpush1.msra.mxu0 %v61
  %1491 = vmatprep.subr.mxu0 %v66
  %1492 = vmatpush1.msra.mxu0 %v65
  %1493 = vmatprep.subr.mxu0 %v70
  %1494 = vmatpush1.msra.mxu0 %v69
  %1495 = vmatprep.subr.mxu0 %v74
  %1496 = vmatpush1.msra.mxu0 %v73
  %1497 = vmatprep.subr.mxu0 %v78
  %1498 = vmatpush1.msra.mxu0 %v77
  %1499 = vmatprep.subr.mxu0 %v82
  %1500 = vmatpush1.msra.mxu0 %v81
  %1501 = vmatprep.subr.mxu0 %v86
  %1502 = vmatpush1.msra.mxu0 %v85
  %1503 = vmatprep.subr.mxu0 %v90
  %1504 = vmatpush1.msra.mxu0 %v89
  %1505 = vmatprep.subr.mxu0 %v94
  %1506 = vmatpush1.msra.mxu0 %v93
  %1507 = vmatprep.subr.mxu0 %v98
  %1508 = vmatpush1.msra.mxu0 %v97
  %1509 = vmatprep.subr.mxu0 %v102
  %1510 = vmatpush1.msra.mxu0 %v101
  %1511 = vmatprep.subr.mxu0 %v106
  %1512 = vmatpush1.msra.mxu0 %v105
  %1513 = vmatprep.subr.mxu0 %v110
  %1514 = vmatpush1.msra.mxu0 %v109
  %1515 = vmatprep.subr.mxu0 %v114
  %1516 = vmatpush1.msra.mxu0 %v113
  %1517 = vmatprep.subr.mxu0 %v118
  %1518 = vmatpush1.msra.mxu0 %v117
  %1519 = vmatprep.subr.mxu0 %v122
  %1520 = vmatpush1.msra.mxu0 %v121
  %1521 = vmatprep.subr.mxu0 %v126
  %1522 = vmatpush1.msra.mxu0 %v125
  %1523 = vmatprep.subr.mxu0 %v130
  %1524 = vmatpush1.msra.mxu0 %v129
  %1525 = vmatprep.subr.mxu0 %v134
  %1526 = vmatpush1.msra.mxu0 %v133
  %1527 = vmatprep.subr.mxu0 %v138
  %1528 = vmatpush1.msra.mxu0 %v137
  %1529 = vmatprep.mubr.f32.mxu0 %v1341
  %1530 = vmatmul.mubr.f32.gmra.mrb[0].mxu0 %v1340
  %v1531 = vpop.f32.mrb[0].mxu0
  %v1532 = vadd.f32 0.0, %v1531
  %v1533 = vpop.f32.mrb[0].mxu0
  %v1534 = vadd.f32 0.0, %v1533
  %1535 = vdwg.mxu0
  %v1536 = vadd.f32 %v1390, %v1461
  %v1537 = vadd.f32 %v1391, %v1463
  %v1538 = vadd.f32 %v1392, %v1532
  %v1539 = vadd.f32 %v1393, %v1534
  %v1540 = vxor.u32 %v1536, 2147483648
  %v1541 = vmul.f32 %v1540, 1.442695
  %v1542 = vpow.pop %v1541
  %v1543 = vadd.f32 %v1542, 1.0
  %v1544 = vrcp.pop %v1543
  %v1545 = vmul.f32 1.0, %v1544
  %v1546 = vxor.u32 %v1537, 2147483648
  %v1547 = vmul.f32 %v1546, 1.442695
  %v1548 = vpow.pop %v1547
  %v1549 = vadd.f32 %v1548, 1.0
  %v1550 = vrcp.pop %v1549
  %v1551 = vmul.f32 1.0, %v1550
  %v1552 = vtanh.pop %v1538
  %v1553 = vxor.u32 %v1539, 2147483648
  %v1554 = vmul.f32 %v1553, 1.442695
  %v1555 = vpow.pop %v1554
  %v1556 = vadd.f32 %v1555, 1.0
  %v1557 = vrcp.pop %v1556
  %v1558 = vmul.f32 1.0, %v1557
  %v1559 = vmul.f32 %v1551, %v1323
  %v1560 = vmul.f32 %v1545, %v1552
  %v1561 = vadd.f32 %v1559, %v1560
  %v1562 = vtanh.pop %v1561
  %v1563 = vmul.f32 %v1558, %v1562
  %s1564 = scalar_lea.vmem %s2, 20
  %1565 = vst [vmem:[%s1564] sm:$0x3] %v1563
  %v1568 = vunpack.c.l.s4 1983009808
  %v1569 = vunpack.c.0.s8 %v1568
  %v1570 = vlaneseq
  %v1571 = vshrl.u32 %v1570, 7
  %v1572 = vsub.s32 %v1569, %v1571
  %v1573 = vrot.slane %v1563, %v1572
  %v1574 = vcombine.high %v1573, %v1573
  %s1576 = scalar_lea.vmem %s2, 40
  %1577 = vst [vmem:[%s1576 + $0x2] sm:$0x3] %v1574
  %v1578 = vmul.f32 %v1563, %v151
  %v1579 = vmul.f32 %v1563, %v152
  %s1580 = scalar_lea.vmem %s0, 96
  %v1581 = vld [vmem:[%s1580] sm:$0xff]
  %s1582 = scalar_lea.vmem %s0, 144
  %v1583 = vld [vmem:[%s1582 + $0x8] sm:$0xff]
  %v1585 = vcombine.high %v1581, %v1581
  %v1587 = vunpack.c.l.s4 1983009808
  %v1588 = vunpack.c.0.s8 %v1587
  %v1589 = vlaneseq
  %v1590 = vshrl.u32 %v1589, 7
  %v1591 = vsub.s32 %v1588, %v1590
  %v1592 = vrot.slane %v1581, %v1591
  %v1594 = vunpack.c.l.s4 1983009808
  %v1595 = vunpack.c.0.s8 %v1594
  %v1596 = vlaneseq
  %v1597 = vshrl.u32 %v1596, 7
  %v1598 = vsub.s32 %v1595, %v1597
  %v1599 = vrot.slane %v1585, %v1598
  %v1600 = vcombine.high %v1592, %v1592
  %v1601 = vcombine.high %v1599, %v1599
  %v1607 = vcombine.low %v1583, %v1583
  %v1609 = vunpack.c.l.s4 1983009808
  %v1610 = vunpack.c.0.s8 %v1609
  %v1611 = vlaneseq
  %v1612 = vshrl.u32 %v1611, 7
  %v1613 = vsub.s32 %v1610, %v1612
  %v1614 = vrot.slane %v1607, %v1613
  %v1616 = vunpack.c.l.s4 1983009808
  %v1617 = vunpack.c.0.s8 %v1616
  %v1618 = vlaneseq
  %v1619 = vshrl.u32 %v1618, 7
  %v1620 = vsub.s32 %v1617, %v1619
  %v1621 = vrot.slane %v1583, %v1620
  %v1622 = vcombine.high %v1614, %v1614
  %v1623 = vcombine.high %v1621, %v1621
  %v1628 = vsel %vm200, %v1592, %v1614
  %v1629 = vsel %vm200, %v1600, %v1622
  %v1630 = vsel %vm200, %v1599, %v1621
  %v1631 = vsel %vm200, %v1601, %v1623
  %1632 = vmatprep.subr.mxu0 %v12
  %1633 = vmatpush1.msra.mxu0 %v11
  %1634 = vmatprep.subr.mxu0 %v16
  %1635 = vmatpush1.msra.mxu0 %v15
  %1636 = vmatprep.subr.mxu0 %v20
  %1637 = vmatpush1.msra.mxu0 %v19
  %1638 = vmatprep.subr.mxu0 %v24
  %1639 = vmatpush1.msra.mxu0 %v23
  %1640 = vmatprep.subr.mxu0 %v28
  %1641 = vmatpush1.msra.mxu0 %v27
  %1642 = vmatprep.subr.mxu0 %v32
  %1643 = vmatpush1.msra.mxu0 %v31
  %1644 = vmatprep.subr.mxu0 %v36
  %1645 = vmatpush1.msra.mxu0 %v35
  %1646 = vmatprep.subr.mxu0 %v40
  %1647 = vmatpush1.msra.mxu0 %v39
  %1648 = vmatprep.subr.mxu0 %v44
  %1649 = vmatpush1.msra.mxu0 %v43
  %1650 = vmatprep.subr.mxu0 %v48
  %1651 = vmatpush1.msra.mxu0 %v47
  %1652 = vmatprep.subr.mxu0 %v52
  %1653 = vmatpush1.msra.mxu0 %v51
  %1654 = vmatprep.subr.mxu0 %v56
  %1655 = vmatpush1.msra.mxu0 %v55
  %1656 = vmatprep.subr.mxu0 %v60
  %1657 = vmatpush1.msra.mxu0 %v59
  %1658 = vmatprep.subr.mxu0 %v64
  %1659 = vmatpush1.msra.mxu0 %v63
  %1660 = vmatprep.subr.mxu0 %v68
  %1661 = vmatpush1.msra.mxu0 %v67
  %1662 = vmatprep.subr.mxu0 %v72
  %1663 = vmatpush1.msra.mxu0 %v71
  %1664 = vmatprep.subr.mxu0 %v76
  %1665 = vmatpush1.msra.mxu0 %v75
  %1666 = vmatprep.subr.mxu0 %v80
  %1667 = vmatpush1.msra.mxu0 %v79
  %1668 = vmatprep.subr.mxu0 %v84
  %1669 = vmatpush1.msra.mxu0 %v83
  %1670 = vmatprep.subr.mxu0 %v88
  %1671 = vmatpush1.msra.mxu0 %v87
  %1672 = vmatprep.subr.mxu0 %v92
  %1673 = vmatpush1.msra.mxu0 %v91
  %1674 = vmatprep.subr.mxu0 %v96
  %1675 = vmatpush1.msra.mxu0 %v95
  %1676 = vmatprep.subr.mxu0 %v100
  %1677 = vmatpush1.msra.mxu0 %v99
  %1678 = vmatprep.subr.mxu0 %v104
  %1679 = vmatpush1.msra.mxu0 %v103
  %1680 = vmatprep.subr.mxu0 %v108
  %1681 = vmatpush1.msra.mxu0 %v107
  %1682 = vmatprep.subr.mxu0 %v112
  %1683 = vmatpush1.msra.mxu0 %v111
  %1684 = vmatprep.subr.mxu0 %v116
  %1685 = vmatpush1.msra.mxu0 %v115
  %1686 = vmatprep.subr.mxu0 %v120
  %1687 = vmatpush1.msra.mxu0 %v119
  %1688 = vmatprep.subr.mxu0 %v124
  %1689 = vmatpush1.msra.mxu0 %v123
  %1690 = vmatprep.subr.mxu0 %v128
  %1691 = vmatpush1.msra.mxu0 %v127
  %1692 = vmatprep.subr.mxu0 %v132
  %1693 = vmatpush1.msra.mxu0 %v131
  %1694 = vmatprep.subr.mxu0 %v136
  %1695 = vmatpush1.msra.mxu0 %v135
  %1696 = vmatprep.mubr.f32.mxu0 %v1579
  %1697 = vmatmul.mubr.f32.gmra.mrb[0].mxu0 %v1578
  %v1698 = vpop.f32.mrb[0].mxu0
  %v1699 = vadd.f32 0.0, %v1698
  %v1700 = vpop.f32.mrb[0].mxu0
  %v1701 = vadd.f32 0.0, %v1700
  %1702 = vdwg.mxu0
  %1703 = vmatprep.subr.mxu0 %v14
  %1704 = vmatpush1.msra.mxu0 %v13
  %1705 = vmatprep.subr.mxu0 %v18
  %1706 = vmatpush1.msra.mxu0 %v17
  %1707 = vmatprep.subr.mxu0 %v22
  %1708 = vmatpush1.msra.mxu0 %v21
  %1709 = vmatprep.subr.mxu0 %v26
  %1710 = vmatpush1.msra.mxu0 %v25
  %1711 = vmatprep.subr.mxu0 %v30
  %1712 = vmatpush1.msra.mxu0 %v29
  %1713 = vmatprep.subr.mxu0 %v34
  %1714 = vmatpush1.msra.mxu0 %v33
  %1715 = vmatprep.subr.mxu0 %v38
  %1716 = vmatpush1.msra.mxu0 %v37
  %1717 = vmatprep.subr.mxu0 %v42
  %1718 = vmatpush1.msra.mxu0 %v41
  %1719 = vmatprep.subr.mxu0 %v46
  %1720 = vmatpush1.msra.mxu0 %v45
  %1721 = vmatprep.subr.mxu0 %v50
  %1722 = vmatpush1.msra.mxu0 %v49
  %1723 = vmatprep.subr.mxu0 %v54
  %1724 = vmatpush1.msra.mxu0 %v53
  %1725 = vmatprep.subr.mxu0 %v58
  %1726 = vmatpush1.msra.mxu0 %v57
  %1727 = vmatprep.subr.mxu0 %v62
  %1728 = vmatpush1.msra.mxu0 %v61
  %1729 = vmatprep.subr.mxu0 %v66
  %1730 = vmatpush1.msra.mxu0 %v65
  %1731 = vmatprep.subr.mxu0 %v70
  %1732 = vmatpush1.msra.mxu0 %v69
  %1733 = vmatprep.subr.mxu0 %v74
  %1734 = vmatpush1.msra.mxu0 %v73
  %1735 = vmatprep.subr.mxu0 %v78
  %1736 = vmatpush1.msra.mxu0 %v77
  %1737 = vmatprep.subr.mxu0 %v82
  %1738 = vmatpush1.msra.mxu0 %v81
  %1739 = vmatprep.subr.mxu0 %v86
  %1740 = vmatpush1.msra.mxu0 %v85
  %1741 = vmatprep.subr.mxu0 %v90
  %1742 = vmatpush1.msra.mxu0 %v89
  %1743 = vmatprep.subr.mxu0 %v94
  %1744 = vmatpush1.msra.mxu0 %v93
  %1745 = vmatprep.subr.mxu0 %v98
  %1746 = vmatpush1.msra.mxu0 %v97
  %1747 = vmatprep.subr.mxu0 %v102
  %1748 = vmatpush1.msra.mxu0 %v101
  %1749 = vmatprep.subr.mxu0 %v106
  %1750 = vmatpush1.msra.mxu0 %v105
  %1751 = vmatprep.subr.mxu0 %v110
  %1752 = vmatpush1.msra.mxu0 %v109
  %1753 = vmatprep.subr.mxu0 %v114
  %1754 = vmatpush1.msra.mxu0 %v113
  %1755 = vmatprep.subr.mxu0 %v118
  %1756 = vmatpush1.msra.mxu0 %v117
  %1757 = vmatprep.subr.mxu0 %v122
  %1758 = vmatpush1.msra.mxu0 %v121
  %1759 = vmatprep.subr.mxu0 %v126
  %1760 = vmatpush1.msra.mxu0 %v125
  %1761 = vmatprep.subr.mxu0 %v130
  %1762 = vmatpush1.msra.mxu0 %v129
  %1763 = vmatprep.subr.mxu0 %v134
  %1764 = vmatpush1.msra.mxu0 %v133
  %1765 = vmatprep.subr.mxu0 %v138
  %1766 = vmatpush1.msra.mxu0 %v137
  %1767 = vmatprep.mubr.f32.mxu0 %v1579
  %1768 = vmatmul.mubr.f32.gmra.mrb[0].mxu0 %v1578
  %v1769 = vpop.f32.mrb[0].mxu0
  %v1770 = vadd.f32 0.0, %v1769
  %v1771 = vpop.f32.mrb[0].mxu0
  %v1772 = vadd.f32 0.0, %v1771
  %1773 = vdwg.mxu0
  %v1774 = vadd.f32 %v1628, %v1699
  %v1775 = vadd.f32 %v1629, %v1701
  %v1776 = vadd.f32 %v1630, %v1770
  %v1777 = vadd.f32 %v1631, %v1772
  %v1778 = vxor.u32 %v1774, 2147483648
  %v1779 = vmul.f32 %v1778, 1.442695
  %v1780 = vpow.pop %v1779
  %v1781 = vadd.f32 %v1780, 1.0
  %v1782 = vrcp.pop %v1781
  %v1783 = vmul.f32 1.0, %v1782
  %v1784 = vxor.u32 %v1775, 2147483648
  %v1785 = vmul.f32 %v1784, 1.442695
  %v1786 = vpow.pop %v1785
  %v1787 = vadd.f32 %v1786, 1.0
  %v1788 = vrcp.pop %v1787
  %v1789 = vmul.f32 1.0, %v1788
  %v1790 = vtanh.pop %v1776
  %v1791 = vxor.u32 %v1777, 2147483648
  %v1792 = vmul.f32 %v1791, 1.442695
  %v1793 = vpow.pop %v1792
  %v1794 = vadd.f32 %v1793, 1.0
  %v1795 = vrcp.pop %v1794
  %v1796 = vmul.f32 1.0, %v1795
  %v1797 = vmul.f32 %v1789, %v1561
  %v1798 = vmul.f32 %v1783, %v1790
  %v1799 = vadd.f32 %v1797, %v1798
  %v1800 = vtanh.pop %v1799
  %v1801 = vmul.f32 %v1796, %v1800
  %s1802 = scalar_lea.vmem %s2, 24
  %1803 = vst [vmem:[%s1802] sm:$0x3] %v1801
  %v1806 = vunpack.c.l.s4 1983009808
  %v1807 = vunpack.c.0.s8 %v1806
  %v1808 = vlaneseq
  %v1809 = vshrl.u32 %v1808, 7
  %v1810 = vsub.s32 %v1807, %v1809
  %v1811 = vrot.slane %v1801, %v1810
  %v1812 = vcombine.high %v1811, %v1811
  %s1814 = scalar_lea.vmem %s2, 36
  %1815 = vst [vmem:[%s1814 + $0x2] sm:$0x3] %v1812
  %v1816 = vmul.f32 %v1801, %v151
  %v1817 = vmul.f32 %v1801, %v152
  %s1818 = scalar_lea.vmem %s0, 112
  %v1819 = vld [vmem:[%s1818] sm:$0xff]
  %s1820 = scalar_lea.vmem %s0, 128
  %v1821 = vld [vmem:[%s1820 + $0x8] sm:$0xff]
  %v1823 = vcombine.high %v1819, %v1819
  %v1825 = vunpack.c.l.s4 1983009808
  %v1826 = vunpack.c.0.s8 %v1825
  %v1827 = vlaneseq
  %v1828 = vshrl.u32 %v1827, 7
  %v1829 = vsub.s32 %v1826, %v1828
  %v1830 = vrot.slane %v1819, %v1829
  %v1832 = vunpack.c.l.s4 1983009808
  %v1833 = vunpack.c.0.s8 %v1832
  %v1834 = vlaneseq
  %v1835 = vshrl.u32 %v1834, 7
  %v1836 = vsub.s32 %v1833, %v1835
  %v1837 = vrot.slane %v1823, %v1836
  %v1838 = vcombine.high %v1830, %v1830
  %v1839 = vcombine.high %v1837, %v1837
  %v1845 = vcombine.low %v1821, %v1821
  %v1847 = vunpack.c.l.s4 1983009808
  %v1848 = vunpack.c.0.s8 %v1847
  %v1849 = vlaneseq
  %v1850 = vshrl.u32 %v1849, 7
  %v1851 = vsub.s32 %v1848, %v1850
  %v1852 = vrot.slane %v1845, %v1851
  %v1854 = vunpack.c.l.s4 1983009808
  %v1855 = vunpack.c.0.s8 %v1854
  %v1856 = vlaneseq
  %v1857 = vshrl.u32 %v1856, 7
  %v1858 = vsub.s32 %v1855, %v1857
  %v1859 = vrot.slane %v1821, %v1858
  %v1860 = vcombine.high %v1852, %v1852
  %v1861 = vcombine.high %v1859, %v1859
  %v1866 = vsel %vm200, %v1830, %v1852
  %v1867 = vsel %vm200, %v1838, %v1860
  %v1868 = vsel %vm200, %v1837, %v1859
  %v1869 = vsel %vm200, %v1839, %v1861
  %1870 = vmatprep.subr.mxu0 %v12
  %1871 = vmatpush1.msra.mxu0 %v11
  %1872 = vmatprep.subr.mxu0 %v16
  %1873 = vmatpush1.msra.mxu0 %v15
  %1874 = vmatprep.subr.mxu0 %v20
  %1875 = vmatpush1.msra.mxu0 %v19
  %1876 = vmatprep.subr.mxu0 %v24
  %1877 = vmatpush1.msra.mxu0 %v23
  %1878 = vmatprep.subr.mxu0 %v28
  %1879 = vmatpush1.msra.mxu0 %v27
  %1880 = vmatprep.subr.mxu0 %v32
  %1881 = vmatpush1.msra.mxu0 %v31
  %1882 = vmatprep.subr.mxu0 %v36
  %1883 = vmatpush1.msra.mxu0 %v35
  %1884 = vmatprep.subr.mxu0 %v40
  %1885 = vmatpush1.msra.mxu0 %v39
  %1886 = vmatprep.subr.mxu0 %v44
  %1887 = vmatpush1.msra.mxu0 %v43
  %1888 = vmatprep.subr.mxu0 %v48
  %1889 = vmatpush1.msra.mxu0 %v47
  %1890 = vmatprep.subr.mxu0 %v52
  %1891 = vmatpush1.msra.mxu0 %v51
  %1892 = vmatprep.subr.mxu0 %v56
  %1893 = vmatpush1.msra.mxu0 %v55
  %1894 = vmatprep.subr.mxu0 %v60
  %1895 = vmatpush1.msra.mxu0 %v59
  %1896 = vmatprep.subr.mxu0 %v64
  %1897 = vmatpush1.msra.mxu0 %v63
  %1898 = vmatprep.subr.mxu0 %v68
  %1899 = vmatpush1.msra.mxu0 %v67
  %1900 = vmatprep.subr.mxu0 %v72
  %1901 = vmatpush1.msra.mxu0 %v71
  %1902 = vmatprep.subr.mxu0 %v76
  %1903 = vmatpush1.msra.mxu0 %v75
  %1904 = vmatprep.subr.mxu0 %v80
  %1905 = vmatpush1.msra.mxu0 %v79
  %1906 = vmatprep.subr.mxu0 %v84
  %1907 = vmatpush1.msra.mxu0 %v83
  %1908 = vmatprep.subr.mxu0 %v88
  %1909 = vmatpush1.msra.mxu0 %v87
  %1910 = vmatprep.subr.mxu0 %v92
  %1911 = vmatpush1.msra.mxu0 %v91
  %1912 = vmatprep.subr.mxu0 %v96
  %1913 = vmatpush1.msra.mxu0 %v95
  %1914 = vmatprep.subr.mxu0 %v100
  %1915 = vmatpush1.msra.mxu0 %v99
  %1916 = vmatprep.subr.mxu0 %v104
  %1917 = vmatpush1.msra.mxu0 %v103
  %1918 = vmatprep.subr.mxu0 %v108
  %1919 = vmatpush1.msra.mxu0 %v107
  %1920 = vmatprep.subr.mxu0 %v112
  %1921 = vmatpush1.msra.mxu0 %v111
  %1922 = vmatprep.subr.mxu0 %v116
  %1923 = vmatpush1.msra.mxu0 %v115
  %1924 = vmatprep.subr.mxu0 %v120
  %1925 = vmatpush1.msra.mxu0 %v119
  %1926 = vmatprep.subr.mxu0 %v124
  %1927 = vmatpush1.msra.mxu0 %v123
  %1928 = vmatprep.subr.mxu0 %v128
  %1929 = vmatpush1.msra.mxu0 %v127
  %1930 = vmatprep.subr.mxu0 %v132
  %1931 = vmatpush1.msra.mxu0 %v131
  %1932 = vmatprep.subr.mxu0 %v136
  %1933 = vmatpush1.msra.mxu0 %v135
  %1934 = vmatprep.mubr.f32.mxu0 %v1817
  %1935 = vmatmul.mubr.f32.gmra.mrb[0].mxu0 %v1816
  %v1936 = vpop.f32.mrb[0].mxu0
  %v1937 = vadd.f32 0.0, %v1936
  %v1938 = vpop.f32.mrb[0].mxu0
  %v1939 = vadd.f32 0.0, %v1938
  %1940 = vdwg.mxu0
  %1941 = vmatprep.subr.mxu0 %v14
  %1942 = vmatpush1.msra.mxu0 %v13
  %1943 = vmatprep.subr.mxu0 %v18
  %1944 = vmatpush1.msra.mxu0 %v17
  %1945 = vmatprep.subr.mxu0 %v22
  %1946 = vmatpush1.msra.mxu0 %v21
  %1947 = vmatprep.subr.mxu0 %v26
  %1948 = vmatpush1.msra.mxu0 %v25
  %1949 = vmatprep.subr.mxu0 %v30
  %1950 = vmatpush1.msra.mxu0 %v29
  %1951 = vmatprep.subr.mxu0 %v34
  %1952 = vmatpush1.msra.mxu0 %v33
  %1953 = vmatprep.subr.mxu0 %v38
  %1954 = vmatpush1.msra.mxu0 %v37
  %1955 = vmatprep.subr.mxu0 %v42
  %1956 = vmatpush1.msra.mxu0 %v41
  %1957 = vmatprep.subr.mxu0 %v46
  %1958 = vmatpush1.msra.mxu0 %v45
  %1959 = vmatprep.subr.mxu0 %v50
  %1960 = vmatpush1.msra.mxu0 %v49
  %1961 = vmatprep.subr.mxu0 %v54
  %1962 = vmatpush1.msra.mxu0 %v53
  %1963 = vmatprep.subr.mxu0 %v58
  %1964 = vmatpush1.msra.mxu0 %v57
  %1965 = vmatprep.subr.mxu0 %v62
  %1966 = vmatpush1.msra.mxu0 %v61
  %1967 = vmatprep.subr.mxu0 %v66
  %1968 = vmatpush1.msra.mxu0 %v65
  %1969 = vmatprep.subr.mxu0 %v70
  %1970 = vmatpush1.msra.mxu0 %v69
  %1971 = vmatprep.subr.mxu0 %v74
  %1972 = vmatpush1.msra.mxu0 %v73
  %1973 = vmatprep.subr.mxu0 %v78
  %1974 = vmatpush1.msra.mxu0 %v77
  %1975 = vmatprep.subr.mxu0 %v82
  %1976 = vmatpush1.msra.mxu0 %v81
  %1977 = vmatprep.subr.mxu0 %v86
  %1978 = vmatpush1.msra.mxu0 %v85
  %1979 = vmatprep.subr.mxu0 %v90
  %1980 = vmatpush1.msra.mxu0 %v89
  %1981 = vmatprep.subr.mxu0 %v94
  %1982 = vmatpush1.msra.mxu0 %v93
  %1983 = vmatprep.subr.mxu0 %v98
  %1984 = vmatpush1.msra.mxu0 %v97
  %1985 = vmatprep.subr.mxu0 %v102
  %1986 = vmatpush1.msra.mxu0 %v101
  %1987 = vmatprep.subr.mxu0 %v106
  %1988 = vmatpush1.msra.mxu0 %v105
  %1989 = vmatprep.subr.mxu0 %v110
  %1990 = vmatpush1.msra.mxu0 %v109
  %1991 = vmatprep.subr.mxu0 %v114
  %1992 = vmatpush1.msra.mxu0 %v113
  %1993 = vmatprep.subr.mxu0 %v118
  %1994 = vmatpush1.msra.mxu0 %v117
  %1995 = vmatprep.subr.mxu0 %v122
  %1996 = vmatpush1.msra.mxu0 %v121
  %1997 = vmatprep.subr.mxu0 %v126
  %1998 = vmatpush1.msra.mxu0 %v125
  %1999 = vmatprep.subr.mxu0 %v130
  %2000 = vmatpush1.msra.mxu0 %v129
  %2001 = vmatprep.subr.mxu0 %v134
  %2002 = vmatpush1.msra.mxu0 %v133
  %2003 = vmatprep.subr.mxu0 %v138
  %2004 = vmatpush1.msra.mxu0 %v137
  %2005 = vmatprep.mubr.f32.mxu0 %v1817
  %2006 = vmatmul.mubr.f32.gmra.mrb[0].mxu0 %v1816
  %v2007 = vpop.f32.mrb[0].mxu0
  %v2008 = vadd.f32 0.0, %v2007
  %v2009 = vpop.f32.mrb[0].mxu0
  %v2010 = vadd.f32 0.0, %v2009
  %2011 = vdwg.mxu0
  %v2012 = vadd.f32 %v1866, %v1937
  %v2013 = vadd.f32 %v1867, %v1939
  %v2014 = vadd.f32 %v1868, %v2008
  %v2015 = vadd.f32 %v1869, %v2010
  %v2016 = vxor.u32 %v2012, 2147483648
  %v2017 = vmul.f32 %v2016, 1.442695
  %v2018 = vpow.pop %v2017
  %v2019 = vadd.f32 %v2018, 1.0
  %v2020 = vrcp.pop %v2019
  %v2021 = vmul.f32 1.0, %v2020
  %v2022 = vxor.u32 %v2013, 2147483648
  %v2023 = vmul.f32 %v2022, 1.442695
  %v2024 = vpow.pop %v2023
  %v2025 = vadd.f32 %v2024, 1.0
  %v2026 = vrcp.pop %v2025
  %v2027 = vmul.f32 1.0, %v2026
  %v2028 = vtanh.pop %v2014
  %v2029 = vxor.u32 %v2015, 2147483648
  %v2030 = vmul.f32 %v2029, 1.442695
  %v2031 = vpow.pop %v2030
  %v2032 = vadd.f32 %v2031, 1.0
  %v2033 = vrcp.pop %v2032
  %v2034 = vmul.f32 1.0, %v2033
  %v2035 = vmul.f32 %v2027, %v1799
  %v2036 = vmul.f32 %v2021, %v2028
  %v2037 = vadd.f32 %v2035, %v2036
  %v2038 = vtanh.pop %v2037
  %v2039 = vmul.f32 %v2034, %v2038
  %s2040 = scalar_lea.vmem %s2, 28
  %2041 = vst [vmem:[%s2040] sm:$0x3] %v2039
  %v2044 = vunpack.c.l.s4 1983009808
  %v2045 = vunpack.c.0.s8 %v2044
  %v2046 = vlaneseq
  %v2047 = vshrl.u32 %v2046, 7
  %v2048 = vsub.s32 %v2045, %v2047
  %v2049 = vrot.slane %v2039, %v2048
  %v2050 = vcombine.high %v2049, %v2049
  %s2052 = scalar_lea.vmem %s2, 32
  %2053 = vst [vmem:[%s2052 + $0x2] sm:$0x3] %v2050
  %v2054 = vmul.f32 %v2039, %v151
  %v2055 = vmul.f32 %v2039, %v152
  %v2056 = vld [vmem:[%s1820] sm:$0xff]
  %v2057 = vld [vmem:[%s1818 + $0x8] sm:$0xff]
  %v2059 = vcombine.high %v2056, %v2056
  %v2061 = vunpack.c.l.s4 1983009808
  %v2062 = vunpack.c.0.s8 %v2061
  %v2063 = vlaneseq
  %v2064 = vshrl.u32 %v2063, 7
  %v2065 = vsub.s32 %v2062, %v2064
  %v2066 = vrot.slane %v2056, %v2065
  %v2068 = vunpack.c.l.s4 1983009808
  %v2069 = vunpack.c.0.s8 %v2068
  %v2070 = vlaneseq
  %v2071 = vshrl.u32 %v2070, 7
  %v2072 = vsub.s32 %v2069, %v2071
  %v2073 = vrot.slane %v2059, %v2072
  %v2074 = vcombine.high %v2066, %v2066
  %v2075 = vcombine.high %v2073, %v2073
  %v2081 = vcombine.low %v2057, %v2057
  %v2083 = vunpack.c.l.s4 1983009808
  %v2084 = vunpack.c.0.s8 %v2083
  %v2085 = vlaneseq
  %v2086 = vshrl.u32 %v2085, 7
  %v2087 = vsub.s32 %v2084, %v2086
  %v2088 = vrot.slane %v2081, %v2087
  %v2090 = vunpack.c.l.s4 1983009808
  %v2091 = vunpack.c.0.s8 %v2090
  %v2092 = vlaneseq
  %v2093 = vshrl.u32 %v2092, 7
  %v2094 = vsub.s32 %v2091, %v2093
  %v2095 = vrot.slane %v2057, %v2094
  %v2096 = vcombine.high %v2088, %v2088
  %v2097 = vcombine.high %v2095, %v2095
  %v2102 = vsel %vm200, %v2066, %v2088
  %v2103 = vsel %vm200, %v2074, %v2096
  %v2104 = vsel %vm200, %v2073, %v2095
  %v2105 = vsel %vm200, %v2075, %v2097
  %2106 = vmatprep.subr.mxu0 %v12
  %2107 = vmatpush1.msra.mxu0 %v11
  %2108 = vmatprep.subr.mxu0 %v16
  %2109 = vmatpush1.msra.mxu0 %v15
  %2110 = vmatprep.subr.mxu0 %v20
  %2111 = vmatpush1.msra.mxu0 %v19
  %2112 = vmatprep.subr.mxu0 %v24
  %2113 = vmatpush1.msra.mxu0 %v23
  %2114 = vmatprep.subr.mxu0 %v28
  %2115 = vmatpush1.msra.mxu0 %v27
  %2116 = vmatprep.subr.mxu0 %v32
  %2117 = vmatpush1.msra.mxu0 %v31
  %2118 = vmatprep.subr.mxu0 %v36
  %2119 = vmatpush1.msra.mxu0 %v35
  %2120 = vmatprep.subr.mxu0 %v40
  %2121 = vmatpush1.msra.mxu0 %v39
  %2122 = vmatprep.subr.mxu0 %v44
  %2123 = vmatpush1.msra.mxu0 %v43
  %2124 = vmatprep.subr.mxu0 %v48
  %2125 = vmatpush1.msra.mxu0 %v47
  %2126 = vmatprep.subr.mxu0 %v52
  %2127 = vmatpush1.msra.mxu0 %v51
  %2128 = vmatprep.subr.mxu0 %v56
  %2129 = vmatpush1.msra.mxu0 %v55
  %2130 = vmatprep.subr.mxu0 %v60
  %2131 = vmatpush1.msra.mxu0 %v59
  %2132 = vmatprep.subr.mxu0 %v64
  %2133 = vmatpush1.msra.mxu0 %v63
  %2134 = vmatprep.subr.mxu0 %v68
  %2135 = vmatpush1.msra.mxu0 %v67
  %2136 = vmatprep.subr.mxu0 %v72
  %2137 = vmatpush1.msra.mxu0 %v71
  %2138 = vmatprep.subr.mxu0 %v76
  %2139 = vmatpush1.msra.mxu0 %v75
  %2140 = vmatprep.subr.mxu0 %v80
  %2141 = vmatpush1.msra.mxu0 %v79
  %2142 = vmatprep.subr.mxu0 %v84
  %2143 = vmatpush1.msra.mxu0 %v83
  %2144 = vmatprep.subr.mxu0 %v88
  %2145 = vmatpush1.msra.mxu0 %v87
  %2146 = vmatprep.subr.mxu0 %v92
  %2147 = vmatpush1.msra.mxu0 %v91
  %2148 = vmatprep.subr.mxu0 %v96
  %2149 = vmatpush1.msra.mxu0 %v95
  %2150 = vmatprep.subr.mxu0 %v100
  %2151 = vmatpush1.msra.mxu0 %v99
  %2152 = vmatprep.subr.mxu0 %v104
  %2153 = vmatpush1.msra.mxu0 %v103
  %2154 = vmatprep.subr.mxu0 %v108
  %2155 = vmatpush1.msra.mxu0 %v107
  %2156 = vmatprep.subr.mxu0 %v112
  %2157 = vmatpush1.msra.mxu0 %v111
  %2158 = vmatprep.subr.mxu0 %v116
  %2159 = vmatpush1.msra.mxu0 %v115
  %2160 = vmatprep.subr.mxu0 %v120
  %2161 = vmatpush1.msra.mxu0 %v119
  %2162 = vmatprep.subr.mxu0 %v124
  %2163 = vmatpush1.msra.mxu0 %v123
  %2164 = vmatprep.subr.mxu0 %v128
  %2165 = vmatpush1.msra.mxu0 %v127
  %2166 = vmatprep.subr.mxu0 %v132
  %2167 = vmatpush1.msra.mxu0 %v131
  %2168 = vmatprep.subr.mxu0 %v136
  %2169 = vmatpush1.msra.mxu0 %v135
  %2170 = vmatprep.mubr.f32.mxu0 %v2055
  %2171 = vmatmul.mubr.f32.gmra.mrb[0].mxu0 %v2054
  %v2172 = vpop.f32.mrb[0].mxu0
  %v2173 = vadd.f32 0.0, %v2172
  %v2174 = vpop.f32.mrb[0].mxu0
  %v2175 = vadd.f32 0.0, %v2174
  %2176 = vdwg.mxu0
  %2177 = vmatprep.subr.mxu0 %v14
  %2178 = vmatpush1.msra.mxu0 %v13
  %2179 = vmatprep.subr.mxu0 %v18
  %2180 = vmatpush1.msra.mxu0 %v17
  %2181 = vmatprep.subr.mxu0 %v22
  %2182 = vmatpush1.msra.mxu0 %v21
  %2183 = vmatprep.subr.mxu0 %v26
  %2184 = vmatpush1.msra.mxu0 %v25
  %2185 = vmatprep.subr.mxu0 %v30
  %2186 = vmatpush1.msra.mxu0 %v29
  %2187 = vmatprep.subr.mxu0 %v34
  %2188 = vmatpush1.msra.mxu0 %v33
  %2189 = vmatprep.subr.mxu0 %v38
  %2190 = vmatpush1.msra.mxu0 %v37
  %2191 = vmatprep.subr.mxu0 %v42
  %2192 = vmatpush1.msra.mxu0 %v41
  %2193 = vmatprep.subr.mxu0 %v46
  %2194 = vmatpush1.msra.mxu0 %v45
  %2195 = vmatprep.subr.mxu0 %v50
  %2196 = vmatpush1.msra.mxu0 %v49
  %2197 = vmatprep.subr.mxu0 %v54
  %2198 = vmatpush1.msra.mxu0 %v53
  %2199 = vmatprep.subr.mxu0 %v58
  %2200 = vmatpush1.msra.mxu0 %v57
  %2201 = vmatprep.subr.mxu0 %v62
  %2202 = vmatpush1.msra.mxu0 %v61
  %2203 = vmatprep.subr.mxu0 %v66
  %2204 = vmatpush1.msra.mxu0 %v65
  %2205 = vmatprep.subr.mxu0 %v70
  %2206 = vmatpush1.msra.mxu0 %v69
  %2207 = vmatprep.subr.mxu0 %v74
  %2208 = vmatpush1.msra.mxu0 %v73
  %2209 = vmatprep.subr.mxu0 %v78
  %2210 = vmatpush1.msra.mxu0 %v77
  %2211 = vmatprep.subr.mxu0 %v82
  %2212 = vmatpush1.msra.mxu0 %v81
  %2213 = vmatprep.subr.mxu0 %v86
  %2214 = vmatpush1.msra.mxu0 %v85
  %2215 = vmatprep.subr.mxu0 %v90
  %2216 = vmatpush1.msra.mxu0 %v89
  %2217 = vmatprep.subr.mxu0 %v94
  %2218 = vmatpush1.msra.mxu0 %v93
  %2219 = vmatprep.subr.mxu0 %v98
  %2220 = vmatpush1.msra.mxu0 %v97
  %2221 = vmatprep.subr.mxu0 %v102
  %2222 = vmatpush1.msra.mxu0 %v101
  %2223 = vmatprep.subr.mxu0 %v106
  %2224 = vmatpush1.msra.mxu0 %v105
  %2225 = vmatprep.subr.mxu0 %v110
  %2226 = vmatpush1.msra.mxu0 %v109
  %2227 = vmatprep.subr.mxu0 %v114
  %2228 = vmatpush1.msra.mxu0 %v113
  %2229 = vmatprep.subr.mxu0 %v118
  %2230 = vmatpush1.msra.mxu0 %v117
  %2231 = vmatprep.subr.mxu0 %v122
  %2232 = vmatpush1.msra.mxu0 %v121
  %2233 = vmatprep.subr.mxu0 %v126
  %2234 = vmatpush1.msra.mxu0 %v125
  %2235 = vmatprep.subr.mxu0 %v130
  %2236 = vmatpush1.msra.mxu0 %v129
  %2237 = vmatprep.subr.mxu0 %v134
  %2238 = vmatpush1.msra.mxu0 %v133
  %2239 = vmatprep.subr.mxu0 %v138
  %2240 = vmatpush1.msra.mxu0 %v137
  %2241 = vmatprep.mubr.f32.mxu0 %v2055
  %2242 = vmatmul.mubr.f32.gmra.mrb[0].mxu0 %v2054
  %v2243 = vpop.f32.mrb[0].mxu0
  %v2244 = vadd.f32 0.0, %v2243
  %v2245 = vpop.f32.mrb[0].mxu0
  %v2246 = vadd.f32 0.0, %v2245
  %2247 = vdwg.mxu0
  %v2248 = vadd.f32 %v2102, %v2173
  %v2249 = vadd.f32 %v2103, %v2175
  %v2250 = vadd.f32 %v2104, %v2244
  %v2251 = vadd.f32 %v2105, %v2246
  %v2252 = vxor.u32 %v2248, 2147483648
  %v2253 = vmul.f32 %v2252, 1.442695
  %v2254 = vpow.pop %v2253
  %v2255 = vadd.f32 %v2254, 1.0
  %v2256 = vrcp.pop %v2255
  %v2257 = vmul.f32 1.0, %v2256
  %v2258 = vxor.u32 %v2249, 2147483648
  %v2259 = vmul.f32 %v2258, 1.442695
  %v2260 = vpow.pop %v2259
  %v2261 = vadd.f32 %v2260, 1.0
  %v2262 = vrcp.pop %v2261
  %v2263 = vmul.f32 1.0, %v2262
  %v2264 = vtanh.pop %v2250
  %v2265 = vxor.u32 %v2251, 2147483648
  %v2266 = vmul.f32 %v2265, 1.442695
  %v2267 = vpow.pop %v2266
  %v2268 = vadd.f32 %v2267, 1.0
  %v2269 = vrcp.pop %v2268
  %v2270 = vmul.f32 1.0, %v2269
  %v2271 = vmul.f32 %v2263, %v2037
  %v2272 = vmul.f32 %v2257, %v2264
  %v2273 = vadd.f32 %v2271, %v2272
  %v2274 = vtanh.pop %v2273
  %v2275 = vmul.f32 %v2270, %v2274
  %2276 = vst [vmem:[%s2052] sm:$0x3] %v2275
  %v2279 = vunpack.c.l.s4 1983009808
  %v2280 = vunpack.c.0.s8 %v2279
  %v2281 = vlaneseq
  %v2282 = vshrl.u32 %v2281, 7
  %v2283 = vsub.s32 %v2280, %v2282
  %v2284 = vrot.slane %v2275, %v2283
  %v2285 = vcombine.high %v2284, %v2284
  %2287 = vst [vmem:[%s2040 + $0x2] sm:$0x3] %v2285
  %v2288 = vmul.f32 %v2275, %v151
  %v2289 = vmul.f32 %v2275, %v152
  %v2290 = vld [vmem:[%s1582] sm:$0xff]
  %v2291 = vld [vmem:[%s1580 + $0x8] sm:$0xff]
  %v2293 = vcombine.high %v2290, %v2290
  %v2295 = vunpack.c.l.s4 1983009808
  %v2296 = vunpack.c.0.s8 %v2295
  %v2297 = vlaneseq
  %v2298 = vshrl.u32 %v2297, 7
  %v2299 = vsub.s32 %v2296, %v2298
  %v2300 = vrot.slane %v2290, %v2299
  %v2302 = vunpack.c.l.s4 1983009808
  %v2303 = vunpack.c.0.s8 %v2302
  %v2304 = vlaneseq
  %v2305 = vshrl.u32 %v2304, 7
  %v2306 = vsub.s32 %v2303, %v2305
  %v2307 = vrot.slane %v2293, %v2306
  %v2308 = vcombine.high %v2300, %v2300
  %v2309 = vcombine.high %v2307, %v2307
  %v2315 = vcombine.low %v2291, %v2291
  %v2317 = vunpack.c.l.s4 1983009808
  %v2318 = vunpack.c.0.s8 %v2317
  %v2319 = vlaneseq
  %v2320 = vshrl.u32 %v2319, 7
  %v2321 = vsub.s32 %v2318, %v2320
  %v2322 = vrot.slane %v2315, %v2321
  %v2324 = vunpack.c.l.s4 1983009808
  %v2325 = vunpack.c.0.s8 %v2324
  %v2326 = vlaneseq
  %v2327 = vshrl.u32 %v2326, 7
  %v2328 = vsub.s32 %v2325, %v2327
  %v2329 = vrot.slane %v2291, %v2328
  %v2330 = vcombine.high %v2322, %v2322
  %v2331 = vcombine.high %v2329, %v2329
  %v2336 = vsel %vm200, %v2300, %v2322
  %v2337 = vsel %vm200, %v2308, %v2330
  %v2338 = vsel %vm200, %v2307, %v2329
  %v2339 = vsel %vm200, %v2309, %v2331
  %2340 = vmatprep.subr.mxu0 %v12
  %2341 = vmatpush1.msra.mxu0 %v11
  %2342 = vmatprep.subr.mxu0 %v16
  %2343 = vmatpush1.msra.mxu0 %v15
  %2344 = vmatprep.subr.mxu0 %v20
  %2345 = vmatpush1.msra.mxu0 %v19
  %2346 = vmatprep.subr.mxu0 %v24
  %2347 = vmatpush1.msra.mxu0 %v23
  %2348 = vmatprep.subr.mxu0 %v28
  %2349 = vmatpush1.msra.mxu0 %v27
  %2350 = vmatprep.subr.mxu0 %v32
  %2351 = vmatpush1.msra.mxu0 %v31
  %2352 = vmatprep.subr.mxu0 %v36
  %2353 = vmatpush1.msra.mxu0 %v35
  %2354 = vmatprep.subr.mxu0 %v40
  %2355 = vmatpush1.msra.mxu0 %v39
  %2356 = vmatprep.subr.mxu0 %v44
  %2357 = vmatpush1.msra.mxu0 %v43
  %2358 = vmatprep.subr.mxu0 %v48
  %2359 = vmatpush1.msra.mxu0 %v47
  %2360 = vmatprep.subr.mxu0 %v52
  %2361 = vmatpush1.msra.mxu0 %v51
  %2362 = vmatprep.subr.mxu0 %v56
  %2363 = vmatpush1.msra.mxu0 %v55
  %2364 = vmatprep.subr.mxu0 %v60
  %2365 = vmatpush1.msra.mxu0 %v59
  %2366 = vmatprep.subr.mxu0 %v64
  %2367 = vmatpush1.msra.mxu0 %v63
  %2368 = vmatprep.subr.mxu0 %v68
  %2369 = vmatpush1.msra.mxu0 %v67
  %2370 = vmatprep.subr.mxu0 %v72
  %2371 = vmatpush1.msra.mxu0 %v71
  %2372 = vmatprep.subr.mxu0 %v76
  %2373 = vmatpush1.msra.mxu0 %v75
  %2374 = vmatprep.subr.mxu0 %v80
  %2375 = vmatpush1.msra.mxu0 %v79
  %2376 = vmatprep.subr.mxu0 %v84
  %2377 = vmatpush1.msra.mxu0 %v83
  %2378 = vmatprep.subr.mxu0 %v88
  %2379 = vmatpush1.msra.mxu0 %v87
  %2380 = vmatprep.subr.mxu0 %v92
  %2381 = vmatpush1.msra.mxu0 %v91
  %2382 = vmatprep.subr.mxu0 %v96
  %2383 = vmatpush1.msra.mxu0 %v95
  %2384 = vmatprep.subr.mxu0 %v100
  %2385 = vmatpush1.msra.mxu0 %v99
  %2386 = vmatprep.subr.mxu0 %v104
  %2387 = vmatpush1.msra.mxu0 %v103
  %2388 = vmatprep.subr.mxu0 %v108
  %2389 = vmatpush1.msra.mxu0 %v107
  %2390 = vmatprep.subr.mxu0 %v112
  %2391 = vmatpush1.msra.mxu0 %v111
  %2392 = vmatprep.subr.mxu0 %v116
  %2393 = vmatpush1.msra.mxu0 %v115
  %2394 = vmatprep.subr.mxu0 %v120
  %2395 = vmatpush1.msra.mxu0 %v119
  %2396 = vmatprep.subr.mxu0 %v124
  %2397 = vmatpush1.msra.mxu0 %v123
  %2398 = vmatprep.subr.mxu0 %v128
  %2399 = vmatpush1.msra.mxu0 %v127
  %2400 = vmatprep.subr.mxu0 %v132
  %2401 = vmatpush1.msra.mxu0 %v131
  %2402 = vmatprep.subr.mxu0 %v136
  %2403 = vmatpush1.msra.mxu0 %v135
  %2404 = vmatprep.mubr.f32.mxu0 %v2289
  %2405 = vmatmul.mubr.f32.gmra.mrb[0].mxu0 %v2288
  %v2406 = vpop.f32.mrb[0].mxu0
  %v2407 = vadd.f32 0.0, %v2406
  %v2408 = vpop.f32.mrb[0].mxu0
  %v2409 = vadd.f32 0.0, %v2408
  %2410 = vdwg.mxu0
  %2411 = vmatprep.subr.mxu0 %v14
  %2412 = vmatpush1.msra.mxu0 %v13
  %2413 = vmatprep.subr.mxu0 %v18
  %2414 = vmatpush1.msra.mxu0 %v17
  %2415 = vmatprep.subr.mxu0 %v22
  %2416 = vmatpush1.msra.mxu0 %v21
  %2417 = vmatprep.subr.mxu0 %v26
  %2418 = vmatpush1.msra.mxu0 %v25
  %2419 = vmatprep.subr.mxu0 %v30
  %2420 = vmatpush1.msra.mxu0 %v29
  %2421 = vmatprep.subr.mxu0 %v34
  %2422 = vmatpush1.msra.mxu0 %v33
  %2423 = vmatprep.subr.mxu0 %v38
  %2424 = vmatpush1.msra.mxu0 %v37
  %2425 = vmatprep.subr.mxu0 %v42
  %2426 = vmatpush1.msra.mxu0 %v41
  %2427 = vmatprep.subr.mxu0 %v46
  %2428 = vmatpush1.msra.mxu0 %v45
  %2429 = vmatprep.subr.mxu0 %v50
  %2430 = vmatpush1.msra.mxu0 %v49
  %2431 = vmatprep.subr.mxu0 %v54
  %2432 = vmatpush1.msra.mxu0 %v53
  %2433 = vmatprep.subr.mxu0 %v58
  %2434 = vmatpush1.msra.mxu0 %v57
  %2435 = vmatprep.subr.mxu0 %v62
  %2436 = vmatpush1.msra.mxu0 %v61
  %2437 = vmatprep.subr.mxu0 %v66
  %2438 = vmatpush1.msra.mxu0 %v65
  %2439 = vmatprep.subr.mxu0 %v70
  %2440 = vmatpush1.msra.mxu0 %v69
  %2441 = vmatprep.subr.mxu0 %v74
  %2442 = vmatpush1.msra.mxu0 %v73
  %2443 = vmatprep.subr.mxu0 %v78
  %2444 = vmatpush1.msra.mxu0 %v77
  %2445 = vmatprep.subr.mxu0 %v82
  %2446 = vmatpush1.msra.mxu0 %v81
  %2447 = vmatprep.subr.mxu0 %v86
  %2448 = vmatpush1.msra.mxu0 %v85
  %2449 = vmatprep.subr.mxu0 %v90
  %2450 = vmatpush1.msra.mxu0 %v89
  %2451 = vmatprep.subr.mxu0 %v94
  %2452 = vmatpush1.msra.mxu0 %v93
  %2453 = vmatprep.subr.mxu0 %v98
  %2454 = vmatpush1.msra.mxu0 %v97
  %2455 = vmatprep.subr.mxu0 %v102
  %2456 = vmatpush1.msra.mxu0 %v101
  %2457 = vmatprep.subr.mxu0 %v106
  %2458 = vmatpush1.msra.mxu0 %v105
  %2459 = vmatprep.subr.mxu0 %v110
  %2460 = vmatpush1.msra.mxu0 %v109
  %2461 = vmatprep.subr.mxu0 %v114
  %2462 = vmatpush1.msra.mxu0 %v113
  %2463 = vmatprep.subr.mxu0 %v118
  %2464 = vmatpush1.msra.mxu0 %v117
  %2465 = vmatprep.subr.mxu0 %v122
  %2466 = vmatpush1.msra.mxu0 %v121
  %2467 = vmatprep.subr.mxu0 %v126
  %2468 = vmatpush1.msra.mxu0 %v125
  %2469 = vmatprep.subr.mxu0 %v130
  %2470 = vmatpush1.msra.mxu0 %v129
  %2471 = vmatprep.subr.mxu0 %v134
  %2472 = vmatpush1.msra.mxu0 %v133
  %2473 = vmatprep.subr.mxu0 %v138
  %2474 = vmatpush1.msra.mxu0 %v137
  %2475 = vmatprep.mubr.f32.mxu0 %v2289
  %2476 = vmatmul.mubr.f32.gmra.mrb[0].mxu0 %v2288
  %v2477 = vpop.f32.mrb[0].mxu0
  %v2478 = vadd.f32 0.0, %v2477
  %v2479 = vpop.f32.mrb[0].mxu0
  %v2480 = vadd.f32 0.0, %v2479
  %2481 = vdwg.mxu0
  %v2482 = vadd.f32 %v2336, %v2407
  %v2483 = vadd.f32 %v2337, %v2409
  %v2484 = vadd.f32 %v2338, %v2478
  %v2485 = vadd.f32 %v2339, %v2480
  %v2486 = vxor.u32 %v2482, 2147483648
  %v2487 = vmul.f32 %v2486, 1.442695
  %v2488 = vpow.pop %v2487
  %v2489 = vadd.f32 %v2488, 1.0
  %v2490 = vrcp.pop %v2489
  %v2491 = vmul.f32 1.0, %v2490
  %v2492 = vxor.u32 %v2483, 2147483648
  %v2493 = vmul.f32 %v2492, 1.442695
  %v2494 = vpow.pop %v2493
  %v2495 = vadd.f32 %v2494, 1.0
  %v2496 = vrcp.pop %v2495
  %v2497 = vmul.f32 1.0, %v2496
  %v2498 = vtanh.pop %v2484
  %v2499 = vxor.u32 %v2485, 2147483648
  %v2500 = vmul.f32 %v2499, 1.442695
  %v2501 = vpow.pop %v2500
  %v2502 = vadd.f32 %v2501, 1.0
  %v2503 = vrcp.pop %v2502
  %v2504 = vmul.f32 1.0, %v2503
  %v2505 = vmul.f32 %v2497, %v2273
  %v2506 = vmul.f32 %v2491, %v2498
  %v2507 = vadd.f32 %v2505, %v2506
  %v2508 = vtanh.pop %v2507
  %v2509 = vmul.f32 %v2504, %v2508
  %2510 = vst [vmem:[%s1814] sm:$0x3] %v2509
  %v2513 = vunpack.c.l.s4 1983009808
  %v2514 = vunpack.c.0.s8 %v2513
  %v2515 = vlaneseq
  %v2516 = vshrl.u32 %v2515, 7
  %v2517 = vsub.s32 %v2514, %v2516
  %v2518 = vrot.slane %v2509, %v2517
  %v2519 = vcombine.high %v2518, %v2518
  %2521 = vst [vmem:[%s1802 + $0x2] sm:$0x3] %v2519
  %v2522 = vmul.f32 %v2509, %v151
  %v2523 = vmul.f32 %v2509, %v152
  %v2524 = vld [vmem:[%s1344] sm:$0xff]
  %v2525 = vld [vmem:[%s1342 + $0x8] sm:$0xff]
  %v2527 = vcombine.high %v2524, %v2524
  %v2529 = vunpack.c.l.s4 1983009808
  %v2530 = vunpack.c.0.s8 %v2529
  %v2531 = vlaneseq
  %v2532 = vshrl.u32 %v2531, 7
  %v2533 = vsub.s32 %v2530, %v2532
  %v2534 = vrot.slane %v2524, %v2533
  %v2536 = vunpack.c.l.s4 1983009808
  %v2537 = vunpack.c.0.s8 %v2536
  %v2538 = vlaneseq
  %v2539 = vshrl.u32 %v2538, 7
  %v2540 = vsub.s32 %v2537, %v2539
  %v2541 = vrot.slane %v2527, %v2540
  %v2542 = vcombine.high %v2534, %v2534
  %v2543 = vcombine.high %v2541, %v2541
  %v2549 = vcombine.low %v2525, %v2525
  %v2551 = vunpack.c.l.s4 1983009808
  %v2552 = vunpack.c.0.s8 %v2551
  %v2553 = vlaneseq
  %v2554 = vshrl.u32 %v2553, 7
  %v2555 = vsub.s32 %v2552, %v2554
  %v2556 = vrot.slane %v2549, %v2555
  %v2558 = vunpack.c.l.s4 1983009808
  %v2559 = vunpack.c.0.s8 %v2558
  %v2560 = vlaneseq
  %v2561 = vshrl.u32 %v2560, 7
  %v2562 = vsub.s32 %v2559, %v2561
  %v2563 = vrot.slane %v2525, %v2562
  %v2564 = vcombine.high %v2556, %v2556
  %v2565 = vcombine.high %v2563, %v2563
  %v2570 = vsel %vm200, %v2534, %v2556
  %v2571 = vsel %vm200, %v2542, %v2564
  %v2572 = vsel %vm200, %v2541, %v2563
  %v2573 = vsel %vm200, %v2543, %v2565
  %2574 = vmatprep.subr.mxu0 %v12
  %2575 = vmatpush1.msra.mxu0 %v11
  %2576 = vmatprep.subr.mxu0 %v16
  %2577 = vmatpush1.msra.mxu0 %v15
  %2578 = vmatprep.subr.mxu0 %v20
  %2579 = vmatpush1.msra.mxu0 %v19
  %2580 = vmatprep.subr.mxu0 %v24
  %2581 = vmatpush1.msra.mxu0 %v23
  %2582 = vmatprep.subr.mxu0 %v28
  %2583 = vmatpush1.msra.mxu0 %v27
  %2584 = vmatprep.subr.mxu0 %v32
  %2585 = vmatpush1.msra.mxu0 %v31
  %2586 = vmatprep.subr.mxu0 %v36
  %2587 = vmatpush1.msra.mxu0 %v35
  %2588 = vmatprep.subr.mxu0 %v40
  %2589 = vmatpush1.msra.mxu0 %v39
  %2590 = vmatprep.subr.mxu0 %v44
  %2591 = vmatpush1.msra.mxu0 %v43
  %2592 = vmatprep.subr.mxu0 %v48
  %2593 = vmatpush1.msra.mxu0 %v47
  %2594 = vmatprep.subr.mxu0 %v52
  %2595 = vmatpush1.msra.mxu0 %v51
  %2596 = vmatprep.subr.mxu0 %v56
  %2597 = vmatpush1.msra.mxu0 %v55
  %2598 = vmatprep.subr.mxu0 %v60
  %2599 = vmatpush1.msra.mxu0 %v59
  %2600 = vmatprep.subr.mxu0 %v64
  %2601 = vmatpush1.msra.mxu0 %v63
  %2602 = vmatprep.subr.mxu0 %v68
  %2603 = vmatpush1.msra.mxu0 %v67
  %2604 = vmatprep.subr.mxu0 %v72
  %2605 = vmatpush1.msra.mxu0 %v71
  %2606 = vmatprep.subr.mxu0 %v76
  %2607 = vmatpush1.msra.mxu0 %v75
  %2608 = vmatprep.subr.mxu0 %v80
  %2609 = vmatpush1.msra.mxu0 %v79
  %2610 = vmatprep.subr.mxu0 %v84
  %2611 = vmatpush1.msra.mxu0 %v83
  %2612 = vmatprep.subr.mxu0 %v88
  %2613 = vmatpush1.msra.mxu0 %v87
  %2614 = vmatprep.subr.mxu0 %v92
  %2615 = vmatpush1.msra.mxu0 %v91
  %2616 = vmatprep.subr.mxu0 %v96
  %2617 = vmatpush1.msra.mxu0 %v95
  %2618 = vmatprep.subr.mxu0 %v100
  %2619 = vmatpush1.msra.mxu0 %v99
  %2620 = vmatprep.subr.mxu0 %v104
  %2621 = vmatpush1.msra.mxu0 %v103
  %2622 = vmatprep.subr.mxu0 %v108
  %2623 = vmatpush1.msra.mxu0 %v107
  %2624 = vmatprep.subr.mxu0 %v112
  %2625 = vmatpush1.msra.mxu0 %v111
  %2626 = vmatprep.subr.mxu0 %v116
  %2627 = vmatpush1.msra.mxu0 %v115
  %2628 = vmatprep.subr.mxu0 %v120
  %2629 = vmatpush1.msra.mxu0 %v119
  %2630 = vmatprep.subr.mxu0 %v124
  %2631 = vmatpush1.msra.mxu0 %v123
  %2632 = vmatprep.subr.mxu0 %v128
  %2633 = vmatpush1.msra.mxu0 %v127
  %2634 = vmatprep.subr.mxu0 %v132
  %2635 = vmatpush1.msra.mxu0 %v131
  %2636 = vmatprep.subr.mxu0 %v136
  %2637 = vmatpush1.msra.mxu0 %v135
  %2638 = vmatprep.mubr.f32.mxu0 %v2523
  %2639 = vmatmul.mubr.f32.gmra.mrb[0].mxu0 %v2522
  %v2640 = vpop.f32.mrb[0].mxu0
  %v2641 = vadd.f32 0.0, %v2640
  %v2642 = vpop.f32.mrb[0].mxu0
  %v2643 = vadd.f32 0.0, %v2642
  %2644 = vdwg.mxu0
  %2645 = vmatprep.subr.mxu0 %v14
  %2646 = vmatpush1.msra.mxu0 %v13
  %2647 = vmatprep.subr.mxu0 %v18
  %2648 = vmatpush1.msra.mxu0 %v17
  %2649 = vmatprep.subr.mxu0 %v22
  %2650 = vmatpush1.msra.mxu0 %v21
  %2651 = vmatprep.subr.mxu0 %v26
  %2652 = vmatpush1.msra.mxu0 %v25
  %2653 = vmatprep.subr.mxu0 %v30
  %2654 = vmatpush1.msra.mxu0 %v29
  %2655 = vmatprep.subr.mxu0 %v34
  %2656 = vmatpush1.msra.mxu0 %v33
  %2657 = vmatprep.subr.mxu0 %v38
  %2658 = vmatpush1.msra.mxu0 %v37
  %2659 = vmatprep.subr.mxu0 %v42
  %2660 = vmatpush1.msra.mxu0 %v41
  %2661 = vmatprep.subr.mxu0 %v46
  %2662 = vmatpush1.msra.mxu0 %v45
  %2663 = vmatprep.subr.mxu0 %v50
  %2664 = vmatpush1.msra.mxu0 %v49
  %2665 = vmatprep.subr.mxu0 %v54
  %2666 = vmatpush1.msra.mxu0 %v53
  %2667 = vmatprep.subr.mxu0 %v58
  %2668 = vmatpush1.msra.mxu0 %v57
  %2669 = vmatprep.subr.mxu0 %v62
  %2670 = vmatpush1.msra.mxu0 %v61
  %2671 = vmatprep.subr.mxu0 %v66
  %2672 = vmatpush1.msra.mxu0 %v65
  %2673 = vmatprep.subr.mxu0 %v70
  %2674 = vmatpush1.msra.mxu0 %v69
  %2675 = vmatprep.subr.mxu0 %v74
  %2676 = vmatpush1.msra.mxu0 %v73
  %2677 = vmatprep.subr.mxu0 %v78
  %2678 = vmatpush1.msra.mxu0 %v77
  %2679 = vmatprep.subr.mxu0 %v82
  %2680 = vmatpush1.msra.mxu0 %v81
  %2681 = vmatprep.subr.mxu0 %v86
  %2682 = vmatpush1.msra.mxu0 %v85
  %2683 = vmatprep.subr.mxu0 %v90
  %2684 = vmatpush1.msra.mxu0 %v89
  %2685 = vmatprep.subr.mxu0 %v94
  %2686 = vmatpush1.msra.mxu0 %v93
  %2687 = vmatprep.subr.mxu0 %v98
  %2688 = vmatpush1.msra.mxu0 %v97
  %2689 = vmatprep.subr.mxu0 %v102
  %2690 = vmatpush1.msra.mxu0 %v101
  %2691 = vmatprep.subr.mxu0 %v106
  %2692 = vmatpush1.msra.mxu0 %v105
  %2693 = vmatprep.subr.mxu0 %v110
  %2694 = vmatpush1.msra.mxu0 %v109
  %2695 = vmatprep.subr.mxu0 %v114
  %2696 = vmatpush1.msra.mxu0 %v113
  %2697 = vmatprep.subr.mxu0 %v118
  %2698 = vmatpush1.msra.mxu0 %v117
  %2699 = vmatprep.subr.mxu0 %v122
  %2700 = vmatpush1.msra.mxu0 %v121
  %2701 = vmatprep.subr.mxu0 %v126
  %2702 = vmatpush1.msra.mxu0 %v125
  %2703 = vmatprep.subr.mxu0 %v130
  %2704 = vmatpush1.msra.mxu0 %v129
  %2705 = vmatprep.subr.mxu0 %v134
  %2706 = vmatpush1.msra.mxu0 %v133
  %2707 = vmatprep.subr.mxu0 %v138
  %2708 = vmatpush1.msra.mxu0 %v137
  %2709 = vmatprep.mubr.f32.mxu0 %v2523
  %2710 = vmatmul.mubr.f32.gmra.mrb[0].mxu0 %v2522
  %v2711 = vpop.f32.mrb[0].mxu0
  %v2712 = vadd.f32 0.0, %v2711
  %v2713 = vpop.f32.mrb[0].mxu0
  %v2714 = vadd.f32 0.0, %v2713
  %2715 = vdwg.mxu0
  %v2716 = vadd.f32 %v2570, %v2641
  %v2717 = vadd.f32 %v2571, %v2643
  %v2718 = vadd.f32 %v2572, %v2712
  %v2719 = vadd.f32 %v2573, %v2714
  %v2720 = vxor.u32 %v2716, 2147483648
  %v2721 = vmul.f32 %v2720, 1.442695
  %v2722 = vpow.pop %v2721
  %v2723 = vadd.f32 %v2722, 1.0
  %v2724 = vrcp.pop %v2723
  %v2725 = vmul.f32 1.0, %v2724
  %v2726 = vxor.u32 %v2717, 2147483648
  %v2727 = vmul.f32 %v2726, 1.442695
  %v2728 = vpow.pop %v2727
  %v2729 = vadd.f32 %v2728, 1.0
  %v2730 = vrcp.pop %v2729
  %v2731 = vmul.f32 1.0, %v2730
  %v2732 = vtanh.pop %v2718
  %v2733 = vxor.u32 %v2719, 2147483648
  %v2734 = vmul.f32 %v2733, 1.442695
  %v2735 = vpow.pop %v2734
  %v2736 = vadd.f32 %v2735, 1.0
  %v2737 = vrcp.pop %v2736
  %v2738 = vmul.f32 1.0, %v2737
  %v2739 = vmul.f32 %v2731, %v2507
  %v2740 = vmul.f32 %v2725, %v2732
  %v2741 = vadd.f32 %v2739, %v2740
  %v2742 = vtanh.pop %v2741
  %v2743 = vmul.f32 %v2738, %v2742
  %2744 = vst [vmem:[%s1576] sm:$0x3] %v2743
  %v2747 = vunpack.c.l.s4 1983009808
  %v2748 = vunpack.c.0.s8 %v2747
  %v2749 = vlaneseq
  %v2750 = vshrl.u32 %v2749, 7
  %v2751 = vsub.s32 %v2748, %v2750
  %v2752 = vrot.slane %v2743, %v2751
  %v2753 = vcombine.high %v2752, %v2752
  %2755 = vst [vmem:[%s1564 + $0x2] sm:$0x3] %v2753
  %v2756 = vmul.f32 %v2743, %v151
  %v2757 = vmul.f32 %v2743, %v152
  %v2758 = vld [vmem:[%s1106] sm:$0xff]
  %v2759 = vld [vmem:[%s1104 + $0x8] sm:$0xff]
  %v2761 = vcombine.high %v2758, %v2758
  %v2763 = vunpack.c.l.s4 1983009808
  %v2764 = vunpack.c.0.s8 %v2763
  %v2765 = vlaneseq
  %v2766 = vshrl.u32 %v2765, 7
  %v2767 = vsub.s32 %v2764, %v2766
  %v2768 = vrot.slane %v2758, %v2767
  %v2770 = vunpack.c.l.s4 1983009808
  %v2771 = vunpack.c.0.s8 %v2770
  %v2772 = vlaneseq
  %v2773 = vshrl.u32 %v2772, 7
  %v2774 = vsub.s32 %v2771, %v2773
  %v2775 = vrot.slane %v2761, %v2774
  %v2776 = vcombine.high %v2768, %v2768
  %v2777 = vcombine.high %v2775, %v2775
  %v2783 = vcombine.low %v2759, %v2759
  %v2785 = vunpack.c.l.s4 1983009808
  %v2786 = vunpack.c.0.s8 %v2785
  %v2787 = vlaneseq
  %v2788 = vshrl.u32 %v2787, 7
  %v2789 = vsub.s32 %v2786, %v2788
  %v2790 = vrot.slane %v2783, %v2789
  %v2792 = vunpack.c.l.s4 1983009808
  %v2793 = vunpack.c.0.s8 %v2792
  %v2794 = vlaneseq
  %v2795 = vshrl.u32 %v2794, 7
  %v2796 = vsub.s32 %v2793, %v2795
  %v2797 = vrot.slane %v2759, %v2796
  %v2798 = vcombine.high %v2790, %v2790
  %v2799 = vcombine.high %v2797, %v2797
  %v2804 = vsel %vm200, %v2768, %v2790
  %v2805 = vsel %vm200, %v2776, %v2798
  %v2806 = vsel %vm200, %v2775, %v2797
  %v2807 = vsel %vm200, %v2777, %v2799
  %2808 = vmatprep.subr.mxu0 %v12
  %2809 = vmatpush1.msra.mxu0 %v11
  %2810 = vmatprep.subr.mxu0 %v16
  %2811 = vmatpush1.msra.mxu0 %v15
  %2812 = vmatprep.subr.mxu0 %v20
  %2813 = vmatpush1.msra.mxu0 %v19
  %2814 = vmatprep.subr.mxu0 %v24
  %2815 = vmatpush1.msra.mxu0 %v23
  %2816 = vmatprep.subr.mxu0 %v28
  %2817 = vmatpush1.msra.mxu0 %v27
  %2818 = vmatprep.subr.mxu0 %v32
  %2819 = vmatpush1.msra.mxu0 %v31
  %2820 = vmatprep.subr.mxu0 %v36
  %2821 = vmatpush1.msra.mxu0 %v35
  %2822 = vmatprep.subr.mxu0 %v40
  %2823 = vmatpush1.msra.mxu0 %v39
  %2824 = vmatprep.subr.mxu0 %v44
  %2825 = vmatpush1.msra.mxu0 %v43
  %2826 = vmatprep.subr.mxu0 %v48
  %2827 = vmatpush1.msra.mxu0 %v47
  %2828 = vmatprep.subr.mxu0 %v52
  %2829 = vmatpush1.msra.mxu0 %v51
  %2830 = vmatprep.subr.mxu0 %v56
  %2831 = vmatpush1.msra.mxu0 %v55
  %2832 = vmatprep.subr.mxu0 %v60
  %2833 = vmatpush1.msra.mxu0 %v59
  %2834 = vmatprep.subr.mxu0 %v64
  %2835 = vmatpush1.msra.mxu0 %v63
  %2836 = vmatprep.subr.mxu0 %v68
  %2837 = vmatpush1.msra.mxu0 %v67
  %2838 = vmatprep.subr.mxu0 %v72
  %2839 = vmatpush1.msra.mxu0 %v71
  %2840 = vmatprep.subr.mxu0 %v76
  %2841 = vmatpush1.msra.mxu0 %v75
  %2842 = vmatprep.subr.mxu0 %v80
  %2843 = vmatpush1.msra.mxu0 %v79
  %2844 = vmatprep.subr.mxu0 %v84
  %2845 = vmatpush1.msra.mxu0 %v83
  %2846 = vmatprep.subr.mxu0 %v88
  %2847 = vmatpush1.msra.mxu0 %v87
  %2848 = vmatprep.subr.mxu0 %v92
  %2849 = vmatpush1.msra.mxu0 %v91
  %2850 = vmatprep.subr.mxu0 %v96
  %2851 = vmatpush1.msra.mxu0 %v95
  %2852 = vmatprep.subr.mxu0 %v100
  %2853 = vmatpush1.msra.mxu0 %v99
  %2854 = vmatprep.subr.mxu0 %v104
  %2855 = vmatpush1.msra.mxu0 %v103
  %2856 = vmatprep.subr.mxu0 %v108
  %2857 = vmatpush1.msra.mxu0 %v107
  %2858 = vmatprep.subr.mxu0 %v112
  %2859 = vmatpush1.msra.mxu0 %v111
  %2860 = vmatprep.subr.mxu0 %v116
  %2861 = vmatpush1.msra.mxu0 %v115
  %2862 = vmatprep.subr.mxu0 %v120
  %2863 = vmatpush1.msra.mxu0 %v119
  %2864 = vmatprep.subr.mxu0 %v124
  %2865 = vmatpush1.msra.mxu0 %v123
  %2866 = vmatprep.subr.mxu0 %v128
  %2867 = vmatpush1.msra.mxu0 %v127
  %2868 = vmatprep.subr.mxu0 %v132
  %2869 = vmatpush1.msra.mxu0 %v131
  %2870 = vmatprep.subr.mxu0 %v136
  %2871 = vmatpush1.msra.mxu0 %v135
  %2872 = vmatprep.mubr.f32.mxu0 %v2757
  %2873 = vmatmul.mubr.f32.gmra.mrb[0].mxu0 %v2756
  %v2874 = vpop.f32.mrb[0].mxu0
  %v2875 = vadd.f32 0.0, %v2874
  %v2876 = vpop.f32.mrb[0].mxu0
  %v2877 = vadd.f32 0.0, %v2876
  %2878 = vdwg.mxu0
  %2879 = vmatprep.subr.mxu0 %v14
  %2880 = vmatpush1.msra.mxu0 %v13
  %2881 = vmatprep.subr.mxu0 %v18
  %2882 = vmatpush1.msra.mxu0 %v17
  %2883 = vmatprep.subr.mxu0 %v22
  %2884 = vmatpush1.msra.mxu0 %v21
  %2885 = vmatprep.subr.mxu0 %v26
  %2886 = vmatpush1.msra.mxu0 %v25
  %2887 = vmatprep.subr.mxu0 %v30
  %2888 = vmatpush1.msra.mxu0 %v29
  %2889 = vmatprep.subr.mxu0 %v34
  %2890 = vmatpush1.msra.mxu0 %v33
  %2891 = vmatprep.subr.mxu0 %v38
  %2892 = vmatpush1.msra.mxu0 %v37
  %2893 = vmatprep.subr.mxu0 %v42
  %2894 = vmatpush1.msra.mxu0 %v41
  %2895 = vmatprep.subr.mxu0 %v46
  %2896 = vmatpush1.msra.mxu0 %v45
  %2897 = vmatprep.subr.mxu0 %v50
  %2898 = vmatpush1.msra.mxu0 %v49
  %2899 = vmatprep.subr.mxu0 %v54
  %2900 = vmatpush1.msra.mxu0 %v53
  %2901 = vmatprep.subr.mxu0 %v58
  %2902 = vmatpush1.msra.mxu0 %v57
  %2903 = vmatprep.subr.mxu0 %v62
  %2904 = vmatpush1.msra.mxu0 %v61
  %2905 = vmatprep.subr.mxu0 %v66
  %2906 = vmatpush1.msra.mxu0 %v65
  %2907 = vmatprep.subr.mxu0 %v70
  %2908 = vmatpush1.msra.mxu0 %v69
  %2909 = vmatprep.subr.mxu0 %v74
  %2910 = vmatpush1.msra.mxu0 %v73
  %2911 = vmatprep.subr.mxu0 %v78
  %2912 = vmatpush1.msra.mxu0 %v77
  %2913 = vmatprep.subr.mxu0 %v82
  %2914 = vmatpush1.msra.mxu0 %v81
  %2915 = vmatprep.subr.mxu0 %v86
  %2916 = vmatpush1.msra.mxu0 %v85
  %2917 = vmatprep.subr.mxu0 %v90
  %2918 = vmatpush1.msra.mxu0 %v89
  %2919 = vmatprep.subr.mxu0 %v94
  %2920 = vmatpush1.msra.mxu0 %v93
  %2921 = vmatprep.subr.mxu0 %v98
  %2922 = vmatpush1.msra.mxu0 %v97
  %2923 = vmatprep.subr.mxu0 %v102
  %2924 = vmatpush1.msra.mxu0 %v101
  %2925 = vmatprep.subr.mxu0 %v106
  %2926 = vmatpush1.msra.mxu0 %v105
  %2927 = vmatprep.subr.mxu0 %v110
  %2928 = vmatpush1.msra.mxu0 %v109
  %2929 = vmatprep.subr.mxu0 %v114
  %2930 = vmatpush1.msra.mxu0 %v113
  %2931 = vmatprep.subr.mxu0 %v118
  %2932 = vmatpush1.msra.mxu0 %v117
  %2933 = vmatprep.subr.mxu0 %v122
  %2934 = vmatpush1.msra.mxu0 %v121
  %2935 = vmatprep.subr.mxu0 %v126
  %2936 = vmatpush1.msra.mxu0 %v125
  %2937 = vmatprep.subr.mxu0 %v130
  %2938 = vmatpush1.msra.mxu0 %v129
  %2939 = vmatprep.subr.mxu0 %v134
  %2940 = vmatpush1.msra.mxu0 %v133
  %2941 = vmatprep.subr.mxu0 %v138
  %2942 = vmatpush1.msra.mxu0 %v137
  %2943 = vmatprep.mubr.f32.mxu0 %v2757
  %2944 = vmatmul.mubr.f32.gmra.mrb[0].mxu0 %v2756
  %v2945 = vpop.f32.mrb[0].mxu0
  %v2946 = vadd.f32 0.0, %v2945
  %v2947 = vpop.f32.mrb[0].mxu0
  %v2948 = vadd.f32 0.0, %v2947
  %2949 = vdwg.mxu0
  %v2950 = vadd.f32 %v2804, %v2875
  %v2951 = vadd.f32 %v2805, %v2877
  %v2952 = vadd.f32 %v2806, %v2946
  %v2953 = vadd.f32 %v2807, %v2948
  %v2954 = vxor.u32 %v2950, 2147483648
  %v2955 = vmul.f32 %v2954, 1.442695
  %v2956 = vpow.pop %v2955
  %v2957 = vadd.f32 %v2956, 1.0
  %v2958 = vrcp.pop %v2957
  %v2959 = vmul.f32 1.0, %v2958
  %v2960 = vxor.u32 %v2951, 2147483648
  %v2961 = vmul.f32 %v2960, 1.442695
  %v2962 = vpow.pop %v2961
  %v2963 = vadd.f32 %v2962, 1.0
  %v2964 = vrcp.pop %v2963
  %v2965 = vmul.f32 1.0, %v2964
  %v2966 = vtanh.pop %v2952
  %v2967 = vxor.u32 %v2953, 2147483648
  %v2968 = vmul.f32 %v2967, 1.442695
  %v2969 = vpow.pop %v2968
  %v2970 = vadd.f32 %v2969, 1.0
  %v2971 = vrcp.pop %v2970
  %v2972 = vmul.f32 1.0, %v2971
  %v2973 = vmul.f32 %v2965, %v2741
  %v2974 = vmul.f32 %v2959, %v2966
  %v2975 = vadd.f32 %v2973, %v2974
  %v2976 = vtanh.pop %v2975
  %v2977 = vmul.f32 %v2972, %v2976
  %2978 = vst [vmem:[%s1338] sm:$0x3] %v2977
  %v2981 = vunpack.c.l.s4 1983009808
  %v2982 = vunpack.c.0.s8 %v2981
  %v2983 = vlaneseq
  %v2984 = vshrl.u32 %v2983, 7
  %v2985 = vsub.s32 %v2982, %v2984
  %v2986 = vrot.slane %v2977, %v2985
  %v2987 = vcombine.high %v2986, %v2986
  %2989 = vst [vmem:[%s1326 + $0x2] sm:$0x3] %v2987
  %v2990 = vmul.f32 %v2977, %v151
  %v2991 = vmul.f32 %v2977, %v152
  %v2992 = vld [vmem:[%s868] sm:$0xff]
  %v2993 = vld [vmem:[%s866 + $0x8] sm:$0xff]
  %v2995 = vcombine.high %v2992, %v2992
  %v2997 = vunpack.c.l.s4 1983009808
  %v2998 = vunpack.c.0.s8 %v2997
  %v2999 = vlaneseq
  %v3000 = vshrl.u32 %v2999, 7
  %v3001 = vsub.s32 %v2998, %v3000
  %v3002 = vrot.slane %v2992, %v3001
  %v3004 = vunpack.c.l.s4 1983009808
  %v3005 = vunpack.c.0.s8 %v3004
  %v3006 = vlaneseq
  %v3007 = vshrl.u32 %v3006, 7
  %v3008 = vsub.s32 %v3005, %v3007
  %v3009 = vrot.slane %v2995, %v3008
  %v3010 = vcombine.high %v3002, %v3002
  %v3011 = vcombine.high %v3009, %v3009
  %v3017 = vcombine.low %v2993, %v2993
  %v3019 = vunpack.c.l.s4 1983009808
  %v3020 = vunpack.c.0.s8 %v3019
  %v3021 = vlaneseq
  %v3022 = vshrl.u32 %v3021, 7
  %v3023 = vsub.s32 %v3020, %v3022
  %v3024 = vrot.slane %v3017, %v3023
  %v3026 = vunpack.c.l.s4 1983009808
  %v3027 = vunpack.c.0.s8 %v3026
  %v3028 = vlaneseq
  %v3029 = vshrl.u32 %v3028, 7
  %v3030 = vsub.s32 %v3027, %v3029
  %v3031 = vrot.slane %v2993, %v3030
  %v3032 = vcombine.high %v3024, %v3024
  %v3033 = vcombine.high %v3031, %v3031
  %v3038 = vsel %vm200, %v3002, %v3024
  %v3039 = vsel %vm200, %v3010, %v3032
  %v3040 = vsel %vm200, %v3009, %v3031
  %v3041 = vsel %vm200, %v3011, %v3033
  %3042 = vmatprep.subr.mxu0 %v12
  %3043 = vmatpush1.msra.mxu0 %v11
  %3044 = vmatprep.subr.mxu0 %v16
  %3045 = vmatpush1.msra.mxu0 %v15
  %3046 = vmatprep.subr.mxu0 %v20
  %3047 = vmatpush1.msra.mxu0 %v19
  %3048 = vmatprep.subr.mxu0 %v24
  %3049 = vmatpush1.msra.mxu0 %v23
  %3050 = vmatprep.subr.mxu0 %v28
  %3051 = vmatpush1.msra.mxu0 %v27
  %3052 = vmatprep.subr.mxu0 %v32
  %3053 = vmatpush1.msra.mxu0 %v31
  %3054 = vmatprep.subr.mxu0 %v36
  %3055 = vmatpush1.msra.mxu0 %v35
  %3056 = vmatprep.subr.mxu0 %v40
  %3057 = vmatpush1.msra.mxu0 %v39
  %3058 = vmatprep.subr.mxu0 %v44
  %3059 = vmatpush1.msra.mxu0 %v43
  %3060 = vmatprep.subr.mxu0 %v48
  %3061 = vmatpush1.msra.mxu0 %v47
  %3062 = vmatprep.subr.mxu0 %v52
  %3063 = vmatpush1.msra.mxu0 %v51
  %3064 = vmatprep.subr.mxu0 %v56
  %3065 = vmatpush1.msra.mxu0 %v55
  %3066 = vmatprep.subr.mxu0 %v60
  %3067 = vmatpush1.msra.mxu0 %v59
  %3068 = vmatprep.subr.mxu0 %v64
  %3069 = vmatpush1.msra.mxu0 %v63
  %3070 = vmatprep.subr.mxu0 %v68
  %3071 = vmatpush1.msra.mxu0 %v67
  %3072 = vmatprep.subr.mxu0 %v72
  %3073 = vmatpush1.msra.mxu0 %v71
  %3074 = vmatprep.subr.mxu0 %v76
  %3075 = vmatpush1.msra.mxu0 %v75
  %3076 = vmatprep.subr.mxu0 %v80
  %3077 = vmatpush1.msra.mxu0 %v79
  %3078 = vmatprep.subr.mxu0 %v84
  %3079 = vmatpush1.msra.mxu0 %v83
  %3080 = vmatprep.subr.mxu0 %v88
  %3081 = vmatpush1.msra.mxu0 %v87
  %3082 = vmatprep.subr.mxu0 %v92
  %3083 = vmatpush1.msra.mxu0 %v91
  %3084 = vmatprep.subr.mxu0 %v96
  %3085 = vmatpush1.msra.mxu0 %v95
  %3086 = vmatprep.subr.mxu0 %v100
  %3087 = vmatpush1.msra.mxu0 %v99
  %3088 = vmatprep.subr.mxu0 %v104
  %3089 = vmatpush1.msra.mxu0 %v103
  %3090 = vmatprep.subr.mxu0 %v108
  %3091 = vmatpush1.msra.mxu0 %v107
  %3092 = vmatprep.subr.mxu0 %v112
  %3093 = vmatpush1.msra.mxu0 %v111
  %3094 = vmatprep.subr.mxu0 %v116
  %3095 = vmatpush1.msra.mxu0 %v115
  %3096 = vmatprep.subr.mxu0 %v120
  %3097 = vmatpush1.msra.mxu0 %v119
  %3098 = vmatprep.subr.mxu0 %v124
  %3099 = vmatpush1.msra.mxu0 %v123
  %3100 = vmatprep.subr.mxu0 %v128
  %3101 = vmatpush1.msra.mxu0 %v127
  %3102 = vmatprep.subr.mxu0 %v132
  %3103 = vmatpush1.msra.mxu0 %v131
  %3104 = vmatprep.subr.mxu0 %v136
  %3105 = vmatpush1.msra.mxu0 %v135
  %3106 = vmatprep.mubr.f32.mxu0 %v2991
  %3107 = vmatmul.mubr.f32.gmra.mrb[0].mxu0 %v2990
  %v3108 = vpop.f32.mrb[0].mxu0
  %v3109 = vadd.f32 0.0, %v3108
  %v3110 = vpop.f32.mrb[0].mxu0
  %v3111 = vadd.f32 0.0, %v3110
  %3112 = vdwg.mxu0
  %3113 = vmatprep.subr.mxu0 %v14
  %3114 = vmatpush1.msra.mxu0 %v13
  %3115 = vmatprep.subr.mxu0 %v18
  %3116 = vmatpush1.msra.mxu0 %v17
  %3117 = vmatprep.subr.mxu0 %v22
  %3118 = vmatpush1.msra.mxu0 %v21
  %3119 = vmatprep.subr.mxu0 %v26
  %3120 = vmatpush1.msra.mxu0 %v25
  %3121 = vmatprep.subr.mxu0 %v30
  %3122 = vmatpush1.msra.mxu0 %v29
  %3123 = vmatprep.subr.mxu0 %v34
  %3124 = vmatpush1.msra.mxu0 %v33
  %3125 = vmatprep.subr.mxu0 %v38
  %3126 = vmatpush1.msra.mxu0 %v37
  %3127 = vmatprep.subr.mxu0 %v42
  %3128 = vmatpush1.msra.mxu0 %v41
  %3129 = vmatprep.subr.mxu0 %v46
  %3130 = vmatpush1.msra.mxu0 %v45
  %3131 = vmatprep.subr.mxu0 %v50
  %3132 = vmatpush1.msra.mxu0 %v49
  %3133 = vmatprep.subr.mxu0 %v54
  %3134 = vmatpush1.msra.mxu0 %v53
  %3135 = vmatprep.subr.mxu0 %v58
  %3136 = vmatpush1.msra.mxu0 %v57
  %3137 = vmatprep.subr.mxu0 %v62
  %3138 = vmatpush1.msra.mxu0 %v61
  %3139 = vmatprep.subr.mxu0 %v66
  %3140 = vmatpush1.msra.mxu0 %v65
  %3141 = vmatprep.subr.mxu0 %v70
  %3142 = vmatpush1.msra.mxu0 %v69
  %3143 = vmatprep.subr.mxu0 %v74
  %3144 = vmatpush1.msra.mxu0 %v73
  %3145 = vmatprep.subr.mxu0 %v78
  %3146 = vmatpush1.msra.mxu0 %v77
  %3147 = vmatprep.subr.mxu0 %v82
  %3148 = vmatpush1.msra.mxu0 %v81
  %3149 = vmatprep.subr.mxu0 %v86
  %3150 = vmatpush1.msra.mxu0 %v85
  %3151 = vmatprep.subr.mxu0 %v90
  %3152 = vmatpush1.msra.mxu0 %v89
  %3153 = vmatprep.subr.mxu0 %v94
  %3154 = vmatpush1.msra.mxu0 %v93
  %3155 = vmatprep.subr.mxu0 %v98
  %3156 = vmatpush1.msra.mxu0 %v97
  %3157 = vmatprep.subr.mxu0 %v102
  %3158 = vmatpush1.msra.mxu0 %v101
  %3159 = vmatprep.subr.mxu0 %v106
  %3160 = vmatpush1.msra.mxu0 %v105
  %3161 = vmatprep.subr.mxu0 %v110
  %3162 = vmatpush1.msra.mxu0 %v109
  %3163 = vmatprep.subr.mxu0 %v114
  %3164 = vmatpush1.msra.mxu0 %v113
  %3165 = vmatprep.subr.mxu0 %v118
  %3166 = vmatpush1.msra.mxu0 %v117
  %3167 = vmatprep.subr.mxu0 %v122
  %3168 = vmatpush1.msra.mxu0 %v121
  %3169 = vmatprep.subr.mxu0 %v126
  %3170 = vmatpush1.msra.mxu0 %v125
  %3171 = vmatprep.subr.mxu0 %v130
  %3172 = vmatpush1.msra.mxu0 %v129
  %3173 = vmatprep.subr.mxu0 %v134
  %3174 = vmatpush1.msra.mxu0 %v133
  %3175 = vmatprep.subr.mxu0 %v138
  %3176 = vmatpush1.msra.mxu0 %v137
  %3177 = vmatprep.mubr.f32.mxu0 %v2991
  %3178 = vmatmul.mubr.f32.gmra.mrb[0].mxu0 %v2990
  %v3179 = vpop.f32.mrb[0].mxu0
  %v3180 = vadd.f32 0.0, %v3179
  %v3181 = vpop.f32.mrb[0].mxu0
  %v3182 = vadd.f32 0.0, %v3181
  %3183 = vdwg.mxu0
  %v3184 = vadd.f32 %v3038, %v3109
  %v3185 = vadd.f32 %v3039, %v3111
  %v3186 = vadd.f32 %v3040, %v3180
  %v3187 = vadd.f32 %v3041, %v3182
  %v3188 = vxor.u32 %v3184, 2147483648
  %v3189 = vmul.f32 %v3188, 1.442695
  %v3190 = vpow.pop %v3189
  %v3191 = vadd.f32 %v3190, 1.0
  %v3192 = vrcp.pop %v3191
  %v3193 = vmul.f32 1.0, %v3192
  %v3194 = vxor.u32 %v3185, 2147483648
  %v3195 = vmul.f32 %v3194, 1.442695
  %v3196 = vpow.pop %v3195
  %v3197 = vadd.f32 %v3196, 1.0
  %v3198 = vrcp.pop %v3197
  %v3199 = vmul.f32 1.0, %v3198
  %v3200 = vtanh.pop %v3186
  %v3201 = vxor.u32 %v3187, 2147483648
  %v3202 = vmul.f32 %v3201, 1.442695
  %v3203 = vpow.pop %v3202
  %v3204 = vadd.f32 %v3203, 1.0
  %v3205 = vrcp.pop %v3204
  %v3206 = vmul.f32 1.0, %v3205
  %v3207 = vmul.f32 %v3199, %v2975
  %v3208 = vmul.f32 %v3193, %v3200
  %v3209 = vadd.f32 %v3207, %v3208
  %v3210 = vtanh.pop %v3209
  %v3211 = vmul.f32 %v3206, %v3210
  %3212 = vst [vmem:[%s1100] sm:$0x3] %v3211
  %v3215 = vunpack.c.l.s4 1983009808
  %v3216 = vunpack.c.0.s8 %v3215
  %v3217 = vlaneseq
  %v3218 = vshrl.u32 %v3217, 7
  %v3219 = vsub.s32 %v3216, %v3218
  %v3220 = vrot.slane %v3211, %v3219
  %v3221 = vcombine.high %v3220, %v3220
  %3223 = vst [vmem:[%s1088 + $0x2] sm:$0x3] %v3221
  %v3224 = vmul.f32 %v3211, %v151
  %v3225 = vmul.f32 %v3211, %v152
  %v3226 = vld [vmem:[%s630] sm:$0xff]
  %v3227 = vld [vmem:[%s628 + $0x8] sm:$0xff]
  %v3229 = vcombine.high %v3226, %v3226
  %v3231 = vunpack.c.l.s4 1983009808
  %v3232 = vunpack.c.0.s8 %v3231
  %v3233 = vlaneseq
  %v3234 = vshrl.u32 %v3233, 7
  %v3235 = vsub.s32 %v3232, %v3234
  %v3236 = vrot.slane %v3226, %v3235
  %v3238 = vunpack.c.l.s4 1983009808
  %v3239 = vunpack.c.0.s8 %v3238
  %v3240 = vlaneseq
  %v3241 = vshrl.u32 %v3240, 7
  %v3242 = vsub.s32 %v3239, %v3241
  %v3243 = vrot.slane %v3229, %v3242
  %v3244 = vcombine.high %v3236, %v3236
  %v3245 = vcombine.high %v3243, %v3243
  %v3251 = vcombine.low %v3227, %v3227
  %v3253 = vunpack.c.l.s4 1983009808
  %v3254 = vunpack.c.0.s8 %v3253
  %v3255 = vlaneseq
  %v3256 = vshrl.u32 %v3255, 7
  %v3257 = vsub.s32 %v3254, %v3256
  %v3258 = vrot.slane %v3251, %v3257
  %v3260 = vunpack.c.l.s4 1983009808
  %v3261 = vunpack.c.0.s8 %v3260
  %v3262 = vlaneseq
  %v3263 = vshrl.u32 %v3262, 7
  %v3264 = vsub.s32 %v3261, %v3263
  %v3265 = vrot.slane %v3227, %v3264
  %v3266 = vcombine.high %v3258, %v3258
  %v3267 = vcombine.high %v3265, %v3265
  %v3272 = vsel %vm200, %v3236, %v3258
  %v3273 = vsel %vm200, %v3244, %v3266
  %v3274 = vsel %vm200, %v3243, %v3265
  %v3275 = vsel %vm200, %v3245, %v3267
  %3276 = vmatprep.subr.mxu0 %v12
  %3277 = vmatpush1.msra.mxu0 %v11
  %3278 = vmatprep.subr.mxu0 %v16
  %3279 = vmatpush1.msra.mxu0 %v15
  %3280 = vmatprep.subr.mxu0 %v20
  %3281 = vmatpush1.msra.mxu0 %v19
  %3282 = vmatprep.subr.mxu0 %v24
  %3283 = vmatpush1.msra.mxu0 %v23
  %3284 = vmatprep.subr.mxu0 %v28
  %3285 = vmatpush1.msra.mxu0 %v27
  %3286 = vmatprep.subr.mxu0 %v32
  %3287 = vmatpush1.msra.mxu0 %v31
  %3288 = vmatprep.subr.mxu0 %v36
  %3289 = vmatpush1.msra.mxu0 %v35
  %3290 = vmatprep.subr.mxu0 %v40
  %3291 = vmatpush1.msra.mxu0 %v39
  %3292 = vmatprep.subr.mxu0 %v44
  %3293 = vmatpush1.msra.mxu0 %v43
  %3294 = vmatprep.subr.mxu0 %v48
  %3295 = vmatpush1.msra.mxu0 %v47
  %3296 = vmatprep.subr.mxu0 %v52
  %3297 = vmatpush1.msra.mxu0 %v51
  %3298 = vmatprep.subr.mxu0 %v56
  %3299 = vmatpush1.msra.mxu0 %v55
  %3300 = vmatprep.subr.mxu0 %v60
  %3301 = vmatpush1.msra.mxu0 %v59
  %3302 = vmatprep.subr.mxu0 %v64
  %3303 = vmatpush1.msra.mxu0 %v63
  %3304 = vmatprep.subr.mxu0 %v68
  %3305 = vmatpush1.msra.mxu0 %v67
  %3306 = vmatprep.subr.mxu0 %v72
  %3307 = vmatpush1.msra.mxu0 %v71
  %3308 = vmatprep.subr.mxu0 %v76
  %3309 = vmatpush1.msra.mxu0 %v75
  %3310 = vmatprep.subr.mxu0 %v80
  %3311 = vmatpush1.msra.mxu0 %v79
  %3312 = vmatprep.subr.mxu0 %v84
  %3313 = vmatpush1.msra.mxu0 %v83
  %3314 = vmatprep.subr.mxu0 %v88
  %3315 = vmatpush1.msra.mxu0 %v87
  %3316 = vmatprep.subr.mxu0 %v92
  %3317 = vmatpush1.msra.mxu0 %v91
  %3318 = vmatprep.subr.mxu0 %v96
  %3319 = vmatpush1.msra.mxu0 %v95
  %3320 = vmatprep.subr.mxu0 %v100
  %3321 = vmatpush1.msra.mxu0 %v99
  %3322 = vmatprep.subr.mxu0 %v104
  %3323 = vmatpush1.msra.mxu0 %v103
  %3324 = vmatprep.subr.mxu0 %v108
  %3325 = vmatpush1.msra.mxu0 %v107
  %3326 = vmatprep.subr.mxu0 %v112
  %3327 = vmatpush1.msra.mxu0 %v111
  %3328 = vmatprep.subr.mxu0 %v116
  %3329 = vmatpush1.msra.mxu0 %v115
  %3330 = vmatprep.subr.mxu0 %v120
  %3331 = vmatpush1.msra.mxu0 %v119
  %3332 = vmatprep.subr.mxu0 %v124
  %3333 = vmatpush1.msra.mxu0 %v123
  %3334 = vmatprep.subr.mxu0 %v128
  %3335 = vmatpush1.msra.mxu0 %v127
  %3336 = vmatprep.subr.mxu0 %v132
  %3337 = vmatpush1.msra.mxu0 %v131
  %3338 = vmatprep.subr.mxu0 %v136
  %3339 = vmatpush1.msra.mxu0 %v135
  %3340 = vmatprep.mubr.f32.mxu0 %v3225
  %3341 = vmatmul.mubr.f32.gmra.mrb[0].mxu0 %v3224
  %v3342 = vpop.f32.mrb[0].mxu0
  %v3343 = vadd.f32 0.0, %v3342
  %v3344 = vpop.f32.mrb[0].mxu0
  %v3345 = vadd.f32 0.0, %v3344
  %3346 = vdwg.mxu0
  %3347 = vmatprep.subr.mxu0 %v14
  %3348 = vmatpush1.msra.mxu0 %v13
  %3349 = vmatprep.subr.mxu0 %v18
  %3350 = vmatpush1.msra.mxu0 %v17
  %3351 = vmatprep.subr.mxu0 %v22
  %3352 = vmatpush1.msra.mxu0 %v21
  %3353 = vmatprep.subr.mxu0 %v26
  %3354 = vmatpush1.msra.mxu0 %v25
  %3355 = vmatprep.subr.mxu0 %v30
  %3356 = vmatpush1.msra.mxu0 %v29
  %3357 = vmatprep.subr.mxu0 %v34
  %3358 = vmatpush1.msra.mxu0 %v33
  %3359 = vmatprep.subr.mxu0 %v38
  %3360 = vmatpush1.msra.mxu0 %v37
  %3361 = vmatprep.subr.mxu0 %v42
  %3362 = vmatpush1.msra.mxu0 %v41
  %3363 = vmatprep.subr.mxu0 %v46
  %3364 = vmatpush1.msra.mxu0 %v45
  %3365 = vmatprep.subr.mxu0 %v50
  %3366 = vmatpush1.msra.mxu0 %v49
  %3367 = vmatprep.subr.mxu0 %v54
  %3368 = vmatpush1.msra.mxu0 %v53
  %3369 = vmatprep.subr.mxu0 %v58
  %3370 = vmatpush1.msra.mxu0 %v57
  %3371 = vmatprep.subr.mxu0 %v62
  %3372 = vmatpush1.msra.mxu0 %v61
  %3373 = vmatprep.subr.mxu0 %v66
  %3374 = vmatpush1.msra.mxu0 %v65
  %3375 = vmatprep.subr.mxu0 %v70
  %3376 = vmatpush1.msra.mxu0 %v69
  %3377 = vmatprep.subr.mxu0 %v74
  %3378 = vmatpush1.msra.mxu0 %v73
  %3379 = vmatprep.subr.mxu0 %v78
  %3380 = vmatpush1.msra.mxu0 %v77
  %3381 = vmatprep.subr.mxu0 %v82
  %3382 = vmatpush1.msra.mxu0 %v81
  %3383 = vmatprep.subr.mxu0 %v86
  %3384 = vmatpush1.msra.mxu0 %v85
  %3385 = vmatprep.subr.mxu0 %v90
  %3386 = vmatpush1.msra.mxu0 %v89
  %3387 = vmatprep.subr.mxu0 %v94
  %3388 = vmatpush1.msra.mxu0 %v93
  %3389 = vmatprep.subr.mxu0 %v98
  %3390 = vmatpush1.msra.mxu0 %v97
  %3391 = vmatprep.subr.mxu0 %v102
  %3392 = vmatpush1.msra.mxu0 %v101
  %3393 = vmatprep.subr.mxu0 %v106
  %3394 = vmatpush1.msra.mxu0 %v105
  %3395 = vmatprep.subr.mxu0 %v110
  %3396 = vmatpush1.msra.mxu0 %v109
  %3397 = vmatprep.subr.mxu0 %v114
  %3398 = vmatpush1.msra.mxu0 %v113
  %3399 = vmatprep.subr.mxu0 %v118
  %3400 = vmatpush1.msra.mxu0 %v117
  %3401 = vmatprep.subr.mxu0 %v122
  %3402 = vmatpush1.msra.mxu0 %v121
  %3403 = vmatprep.subr.mxu0 %v126
  %3404 = vmatpush1.msra.mxu0 %v125
  %3405 = vmatprep.subr.mxu0 %v130
  %3406 = vmatpush1.msra.mxu0 %v129
  %3407 = vmatprep.subr.mxu0 %v134
  %3408 = vmatpush1.msra.mxu0 %v133
  %3409 = vmatprep.subr.mxu0 %v138
  %3410 = vmatpush1.msra.mxu0 %v137
  %3411 = vmatprep.mubr.f32.mxu0 %v3225
  %3412 = vmatmul.mubr.f32.gmra.mrb[0].mxu0 %v3224
  %v3413 = vpop.f32.mrb[0].mxu0
  %v3414 = vadd.f32 0.0, %v3413
  %v3415 = vpop.f32.mrb[0].mxu0
  %v3416 = vadd.f32 0.0, %v3415
  %3417 = vdwg.mxu0
  %v3418 = vadd.f32 %v3272, %v3343
  %v3419 = vadd.f32 %v3273, %v3345
  %v3420 = vadd.f32 %v3274, %v3414
  %v3421 = vadd.f32 %v3275, %v3416
  %v3422 = vxor.u32 %v3418, 2147483648
  %v3423 = vmul.f32 %v3422, 1.442695
  %v3424 = vpow.pop %v3423
  %v3425 = vadd.f32 %v3424, 1.0
  %v3426 = vrcp.pop %v3425
  %v3427 = vmul.f32 1.0, %v3426
  %v3428 = vxor.u32 %v3419, 2147483648
  %v3429 = vmul.f32 %v3428, 1.442695
  %v3430 = vpow.pop %v3429
  %v3431 = vadd.f32 %v3430, 1.0
  %v3432 = vrcp.pop %v3431
  %v3433 = vmul.f32 1.0, %v3432
  %v3434 = vtanh.pop %v3420
  %v3435 = vxor.u32 %v3421, 2147483648
  %v3436 = vmul.f32 %v3435, 1.442695
  %v3437 = vpow.pop %v3436
  %v3438 = vadd.f32 %v3437, 1.0
  %v3439 = vrcp.pop %v3438
  %v3440 = vmul.f32 1.0, %v3439
  %v3441 = vmul.f32 %v3433, %v3209
  %v3442 = vmul.f32 %v3427, %v3434
  %v3443 = vadd.f32 %v3441, %v3442
  %v3444 = vtanh.pop %v3443
  %v3445 = vmul.f32 %v3440, %v3444
  %3446 = vst [vmem:[%s862] sm:$0x3] %v3445
  %v3449 = vunpack.c.l.s4 1983009808
  %v3450 = vunpack.c.0.s8 %v3449
  %v3451 = vlaneseq
  %v3452 = vshrl.u32 %v3451, 7
  %v3453 = vsub.s32 %v3450, %v3452
  %v3454 = vrot.slane %v3445, %v3453
  %v3455 = vcombine.high %v3454, %v3454
  %3457 = vst [vmem:[%s850 + $0x2] sm:$0x3] %v3455
  %v3458 = vmul.f32 %v3445, %v151
  %v3459 = vmul.f32 %v3445, %v152
  %v3460 = vld [vmem:[%s392] sm:$0xff]
  %v3461 = vld [vmem:[%s390 + $0x8] sm:$0xff]
  %v3463 = vcombine.high %v3460, %v3460
  %v3465 = vunpack.c.l.s4 1983009808
  %v3466 = vunpack.c.0.s8 %v3465
  %v3467 = vlaneseq
  %v3468 = vshrl.u32 %v3467, 7
  %v3469 = vsub.s32 %v3466, %v3468
  %v3470 = vrot.slane %v3460, %v3469
  %v3472 = vunpack.c.l.s4 1983009808
  %v3473 = vunpack.c.0.s8 %v3472
  %v3474 = vlaneseq
  %v3475 = vshrl.u32 %v3474, 7
  %v3476 = vsub.s32 %v3473, %v3475
  %v3477 = vrot.slane %v3463, %v3476
  %v3478 = vcombine.high %v3470, %v3470
  %v3479 = vcombine.high %v3477, %v3477
  %v3485 = vcombine.low %v3461, %v3461
  %v3487 = vunpack.c.l.s4 1983009808
  %v3488 = vunpack.c.0.s8 %v3487
  %v3489 = vlaneseq
  %v3490 = vshrl.u32 %v3489, 7
  %v3491 = vsub.s32 %v3488, %v3490
  %v3492 = vrot.slane %v3485, %v3491
  %v3494 = vunpack.c.l.s4 1983009808
  %v3495 = vunpack.c.0.s8 %v3494
  %v3496 = vlaneseq
  %v3497 = vshrl.u32 %v3496, 7
  %v3498 = vsub.s32 %v3495, %v3497
  %v3499 = vrot.slane %v3461, %v3498
  %v3500 = vcombine.high %v3492, %v3492
  %v3501 = vcombine.high %v3499, %v3499
  %v3506 = vsel %vm200, %v3470, %v3492
  %v3507 = vsel %vm200, %v3478, %v3500
  %v3508 = vsel %vm200, %v3477, %v3499
  %v3509 = vsel %vm200, %v3479, %v3501
  %3510 = vmatprep.subr.mxu0 %v12
  %3511 = vmatpush1.msra.mxu0 %v11
  %3512 = vmatprep.subr.mxu0 %v16
  %3513 = vmatpush1.msra.mxu0 %v15
  %3514 = vmatprep.subr.mxu0 %v20
  %3515 = vmatpush1.msra.mxu0 %v19
  %3516 = vmatprep.subr.mxu0 %v24
  %3517 = vmatpush1.msra.mxu0 %v23
  %3518 = vmatprep.subr.mxu0 %v28
  %3519 = vmatpush1.msra.mxu0 %v27
  %3520 = vmatprep.subr.mxu0 %v32
  %3521 = vmatpush1.msra.mxu0 %v31
  %3522 = vmatprep.subr.mxu0 %v36
  %3523 = vmatpush1.msra.mxu0 %v35
  %3524 = vmatprep.subr.mxu0 %v40
  %3525 = vmatpush1.msra.mxu0 %v39
  %3526 = vmatprep.subr.mxu0 %v44
  %3527 = vmatpush1.msra.mxu0 %v43
  %3528 = vmatprep.subr.mxu0 %v48
  %3529 = vmatpush1.msra.mxu0 %v47
  %3530 = vmatprep.subr.mxu0 %v52
  %3531 = vmatpush1.msra.mxu0 %v51
  %3532 = vmatprep.subr.mxu0 %v56
  %3533 = vmatpush1.msra.mxu0 %v55
  %3534 = vmatprep.subr.mxu0 %v60
  %3535 = vmatpush1.msra.mxu0 %v59
  %3536 = vmatprep.subr.mxu0 %v64
  %3537 = vmatpush1.msra.mxu0 %v63
  %3538 = vmatprep.subr.mxu0 %v68
  %3539 = vmatpush1.msra.mxu0 %v67
  %3540 = vmatprep.subr.mxu0 %v72
  %3541 = vmatpush1.msra.mxu0 %v71
  %3542 = vmatprep.subr.mxu0 %v76
  %3543 = vmatpush1.msra.mxu0 %v75
  %3544 = vmatprep.subr.mxu0 %v80
  %3545 = vmatpush1.msra.mxu0 %v79
  %3546 = vmatprep.subr.mxu0 %v84
  %3547 = vmatpush1.msra.mxu0 %v83
  %3548 = vmatprep.subr.mxu0 %v88
  %3549 = vmatpush1.msra.mxu0 %v87
  %3550 = vmatprep.subr.mxu0 %v92
  %3551 = vmatpush1.msra.mxu0 %v91
  %3552 = vmatprep.subr.mxu0 %v96
  %3553 = vmatpush1.msra.mxu0 %v95
  %3554 = vmatprep.subr.mxu0 %v100
  %3555 = vmatpush1.msra.mxu0 %v99
  %3556 = vmatprep.subr.mxu0 %v104
  %3557 = vmatpush1.msra.mxu0 %v103
  %3558 = vmatprep.subr.mxu0 %v108
  %3559 = vmatpush1.msra.mxu0 %v107
  %3560 = vmatprep.subr.mxu0 %v112
  %3561 = vmatpush1.msra.mxu0 %v111
  %3562 = vmatprep.subr.mxu0 %v116
  %3563 = vmatpush1.msra.mxu0 %v115
  %3564 = vmatprep.subr.mxu0 %v120
  %3565 = vmatpush1.msra.mxu0 %v119
  %3566 = vmatprep.subr.mxu0 %v124
  %3567 = vmatpush1.msra.mxu0 %v123
  %3568 = vmatprep.subr.mxu0 %v128
  %3569 = vmatpush1.msra.mxu0 %v127
  %3570 = vmatprep.subr.mxu0 %v132
  %3571 = vmatpush1.msra.mxu0 %v131
  %3572 = vmatprep.subr.mxu0 %v136
  %3573 = vmatpush1.msra.mxu0 %v135
  %3574 = vmatprep.mubr.f32.mxu0 %v3459
  %3575 = vmatmul.mubr.f32.gmra.mrb[0].mxu0 %v3458
  %v3576 = vpop.f32.mrb[0].mxu0
  %v3577 = vadd.f32 0.0, %v3576
  %v3578 = vpop.f32.mrb[0].mxu0
  %v3579 = vadd.f32 0.0, %v3578
  %3580 = vdwg.mxu0
  %3581 = vmatprep.subr.mxu0 %v14
  %3582 = vmatpush1.msra.mxu0 %v13
  %3583 = vmatprep.subr.mxu0 %v18
  %3584 = vmatpush1.msra.mxu0 %v17
  %3585 = vmatprep.subr.mxu0 %v22
  %3586 = vmatpush1.msra.mxu0 %v21
  %3587 = vmatprep.subr.mxu0 %v26
  %3588 = vmatpush1.msra.mxu0 %v25
  %3589 = vmatprep.subr.mxu0 %v30
  %3590 = vmatpush1.msra.mxu0 %v29
  %3591 = vmatprep.subr.mxu0 %v34
  %3592 = vmatpush1.msra.mxu0 %v33
  %3593 = vmatprep.subr.mxu0 %v38
  %3594 = vmatpush1.msra.mxu0 %v37
  %3595 = vmatprep.subr.mxu0 %v42
  %3596 = vmatpush1.msra.mxu0 %v41
  %3597 = vmatprep.subr.mxu0 %v46
  %3598 = vmatpush1.msra.mxu0 %v45
  %3599 = vmatprep.subr.mxu0 %v50
  %3600 = vmatpush1.msra.mxu0 %v49
  %3601 = vmatprep.subr.mxu0 %v54
  %3602 = vmatpush1.msra.mxu0 %v53
  %3603 = vmatprep.subr.mxu0 %v58
  %3604 = vmatpush1.msra.mxu0 %v57
  %3605 = vmatprep.subr.mxu0 %v62
  %3606 = vmatpush1.msra.mxu0 %v61
  %3607 = vmatprep.subr.mxu0 %v66
  %3608 = vmatpush1.msra.mxu0 %v65
  %3609 = vmatprep.subr.mxu0 %v70
  %3610 = vmatpush1.msra.mxu0 %v69
  %3611 = vmatprep.subr.mxu0 %v74
  %3612 = vmatpush1.msra.mxu0 %v73
  %3613 = vmatprep.subr.mxu0 %v78
  %3614 = vmatpush1.msra.mxu0 %v77
  %3615 = vmatprep.subr.mxu0 %v82
  %3616 = vmatpush1.msra.mxu0 %v81
  %3617 = vmatprep.subr.mxu0 %v86
  %3618 = vmatpush1.msra.mxu0 %v85
  %3619 = vmatprep.subr.mxu0 %v90
  %3620 = vmatpush1.msra.mxu0 %v89
  %3621 = vmatprep.subr.mxu0 %v94
  %3622 = vmatpush1.msra.mxu0 %v93
  %3623 = vmatprep.subr.mxu0 %v98
  %3624 = vmatpush1.msra.mxu0 %v97
  %3625 = vmatprep.subr.mxu0 %v102
  %3626 = vmatpush1.msra.mxu0 %v101
  %3627 = vmatprep.subr.mxu0 %v106
  %3628 = vmatpush1.msra.mxu0 %v105
  %3629 = vmatprep.subr.mxu0 %v110
  %3630 = vmatpush1.msra.mxu0 %v109
  %3631 = vmatprep.subr.mxu0 %v114
  %3632 = vmatpush1.msra.mxu0 %v113
  %3633 = vmatprep.subr.mxu0 %v118
  %3634 = vmatpush1.msra.mxu0 %v117
  %3635 = vmatprep.subr.mxu0 %v122
  %3636 = vmatpush1.msra.mxu0 %v121
  %3637 = vmatprep.subr.mxu0 %v126
  %3638 = vmatpush1.msra.mxu0 %v125
  %3639 = vmatprep.subr.mxu0 %v130
  %3640 = vmatpush1.msra.mxu0 %v129
  %3641 = vmatprep.subr.mxu0 %v134
  %3642 = vmatpush1.msra.mxu0 %v133
  %3643 = vmatprep.subr.mxu0 %v138
  %3644 = vmatpush1.msra.mxu0 %v137
  %3645 = vmatprep.mubr.f32.mxu0 %v3459
  %3646 = vmatmul.mubr.f32.gmra.mrb[0].mxu0 %v3458
  %v3647 = vpop.f32.mrb[0].mxu0
  %v3648 = vadd.f32 0.0, %v3647
  %v3649 = vpop.f32.mrb[0].mxu0
  %v3650 = vadd.f32 0.0, %v3649
  %3651 = vdwg.mxu0
  %v3652 = vadd.f32 %v3506, %v3577
  %v3653 = vadd.f32 %v3507, %v3579
  %v3654 = vadd.f32 %v3508, %v3648
  %v3655 = vadd.f32 %v3509, %v3650
  %v3656 = vxor.u32 %v3652, 2147483648
  %v3657 = vmul.f32 %v3656, 1.442695
  %v3658 = vpow.pop %v3657
  %v3659 = vadd.f32 %v3658, 1.0
  %v3660 = vrcp.pop %v3659
  %v3661 = vmul.f32 1.0, %v3660
  %v3662 = vxor.u32 %v3653, 2147483648
  %v3663 = vmul.f32 %v3662, 1.442695
  %v3664 = vpow.pop %v3663
  %v3665 = vadd.f32 %v3664, 1.0
  %v3666 = vrcp.pop %v3665
  %v3667 = vmul.f32 1.0, %v3666
  %v3668 = vtanh.pop %v3654
  %v3669 = vxor.u32 %v3655, 2147483648
  %v3670 = vmul.f32 %v3669, 1.442695
  %v3671 = vpow.pop %v3670
  %v3672 = vadd.f32 %v3671, 1.0
  %v3673 = vrcp.pop %v3672
  %v3674 = vmul.f32 1.0, %v3673
  %v3675 = vmul.f32 %v3667, %v3443
  %v3676 = vmul.f32 %v3661, %v3668
  %v3677 = vadd.f32 %v3675, %v3676
  %v3678 = vtanh.pop %v3677
  %v3679 = vmul.f32 %v3674, %v3678
  %3680 = vst [vmem:[%s624] sm:$0x3] %v3679
  %v3683 = vunpack.c.l.s4 1983009808
  %v3684 = vunpack.c.0.s8 %v3683
  %v3685 = vlaneseq
  %v3686 = vshrl.u32 %v3685, 7
  %v3687 = vsub.s32 %v3684, %v3686
  %v3688 = vrot.slane %v3679, %v3687
  %v3689 = vcombine.high %v3688, %v3688
  %3691 = vst [vmem:[%s612 + $0x2] sm:$0x3] %v3689
  %v3692 = vmul.f32 %v3679, %v151
  %v3693 = vmul.f32 %v3679, %v152
  %v3694 = vld [vmem:[%s154] sm:$0xff]
  %v3695 = vld [vmem:[%s0 + $0x8] sm:$0xff]
  %v3697 = vcombine.high %v3694, %v3694
  %v3699 = vunpack.c.l.s4 1983009808
  %v3700 = vunpack.c.0.s8 %v3699
  %v3701 = vlaneseq
  %v3702 = vshrl.u32 %v3701, 7
  %v3703 = vsub.s32 %v3700, %v3702
  %v3704 = vrot.slane %v3694, %v3703
  %v3706 = vunpack.c.l.s4 1983009808
  %v3707 = vunpack.c.0.s8 %v3706
  %v3708 = vlaneseq
  %v3709 = vshrl.u32 %v3708, 7
  %v3710 = vsub.s32 %v3707, %v3709
  %v3711 = vrot.slane %v3697, %v3710
  %v3712 = vcombine.high %v3704, %v3704
  %v3713 = vcombine.high %v3711, %v3711
  %v3719 = vcombine.low %v3695, %v3695
  %v3721 = vunpack.c.l.s4 1983009808
  %v3722 = vunpack.c.0.s8 %v3721
  %v3723 = vlaneseq
  %v3724 = vshrl.u32 %v3723, 7
  %v3725 = vsub.s32 %v3722, %v3724
  %v3726 = vrot.slane %v3719, %v3725
  %v3728 = vunpack.c.l.s4 1983009808
  %v3729 = vunpack.c.0.s8 %v3728
  %v3730 = vlaneseq
  %v3731 = vshrl.u32 %v3730, 7
  %v3732 = vsub.s32 %v3729, %v3731
  %v3733 = vrot.slane %v3695, %v3732
  %v3734 = vcombine.high %v3726, %v3726
  %v3735 = vcombine.high %v3733, %v3733
  %v3740 = vsel %vm200, %v3704, %v3726
  %v3741 = vsel %vm200, %v3712, %v3734
  %v3742 = vsel %vm200, %v3711, %v3733
  %v3743 = vsel %vm200, %v3713, %v3735
  %3744 = vmatprep.subr.mxu0 %v12
  %3745 = vmatpush1.msra.mxu0 %v11
  %3746 = vmatprep.subr.mxu0 %v16
  %3747 = vmatpush1.msra.mxu0 %v15
  %3748 = vmatprep.subr.mxu0 %v20
  %3749 = vmatpush1.msra.mxu0 %v19
  %3750 = vmatprep.subr.mxu0 %v24
  %3751 = vmatpush1.msra.mxu0 %v23
  %3752 = vmatprep.subr.mxu0 %v28
  %3753 = vmatpush1.msra.mxu0 %v27
  %3754 = vmatprep.subr.mxu0 %v32
  %3755 = vmatpush1.msra.mxu0 %v31
  %3756 = vmatprep.subr.mxu0 %v36
  %3757 = vmatpush1.msra.mxu0 %v35
  %3758 = vmatprep.subr.mxu0 %v40
  %3759 = vmatpush1.msra.mxu0 %v39
  %3760 = vmatprep.subr.mxu0 %v44
  %3761 = vmatpush1.msra.mxu0 %v43
  %3762 = vmatprep.subr.mxu0 %v48
  %3763 = vmatpush1.msra.mxu0 %v47
  %3764 = vmatprep.subr.mxu0 %v52
  %3765 = vmatpush1.msra.mxu0 %v51
  %3766 = vmatprep.subr.mxu0 %v56
  %3767 = vmatpush1.msra.mxu0 %v55
  %3768 = vmatprep.subr.mxu0 %v60
  %3769 = vmatpush1.msra.mxu0 %v59
  %3770 = vmatprep.subr.mxu0 %v64
  %3771 = vmatpush1.msra.mxu0 %v63
  %3772 = vmatprep.subr.mxu0 %v68
  %3773 = vmatpush1.msra.mxu0 %v67
  %3774 = vmatprep.subr.mxu0 %v72
  %3775 = vmatpush1.msra.mxu0 %v71
  %3776 = vmatprep.subr.mxu0 %v76
  %3777 = vmatpush1.msra.mxu0 %v75
  %3778 = vmatprep.subr.mxu0 %v80
  %3779 = vmatpush1.msra.mxu0 %v79
  %3780 = vmatprep.subr.mxu0 %v84
  %3781 = vmatpush1.msra.mxu0 %v83
  %3782 = vmatprep.subr.mxu0 %v88
  %3783 = vmatpush1.msra.mxu0 %v87
  %3784 = vmatprep.subr.mxu0 %v92
  %3785 = vmatpush1.msra.mxu0 %v91
  %3786 = vmatprep.subr.mxu0 %v96
  %3787 = vmatpush1.msra.mxu0 %v95
  %3788 = vmatprep.subr.mxu0 %v100
  %3789 = vmatpush1.msra.mxu0 %v99
  %3790 = vmatprep.subr.mxu0 %v104
  %3791 = vmatpush1.msra.mxu0 %v103
  %3792 = vmatprep.subr.mxu0 %v108
  %3793 = vmatpush1.msra.mxu0 %v107
  %3794 = vmatprep.subr.mxu0 %v112
  %3795 = vmatpush1.msra.mxu0 %v111
  %3796 = vmatprep.subr.mxu0 %v116
  %3797 = vmatpush1.msra.mxu0 %v115
  %3798 = vmatprep.subr.mxu0 %v120
  %3799 = vmatpush1.msra.mxu0 %v119
  %3800 = vmatprep.subr.mxu0 %v124
  %3801 = vmatpush1.msra.mxu0 %v123
  %3802 = vmatprep.subr.mxu0 %v128
  %3803 = vmatpush1.msra.mxu0 %v127
  %3804 = vmatprep.subr.mxu0 %v132
  %3805 = vmatpush1.msra.mxu0 %v131
  %3806 = vmatprep.subr.mxu0 %v136
  %3807 = vmatpush1.msra.mxu0 %v135
  %3808 = vmatprep.mubr.f32.mxu0 %v3693
  %3809 = vmatmul.mubr.f32.gmra.mrb[0].mxu0 %v3692
  %v3810 = vpop.f32.mrb[0].mxu0
  %v3811 = vadd.f32 0.0, %v3810
  %v3812 = vpop.f32.mrb[0].mxu0
  %v3813 = vadd.f32 0.0, %v3812
  %3814 = vdwg.mxu0
  %3815 = vmatprep.subr.mxu0 %v14
  %3816 = vmatpush1.msra.mxu0 %v13
  %3817 = vmatprep.subr.mxu0 %v18
  %3818 = vmatpush1.msra.mxu0 %v17
  %3819 = vmatprep.subr.mxu0 %v22
  %3820 = vmatpush1.msra.mxu0 %v21
  %3821 = vmatprep.subr.mxu0 %v26
  %3822 = vmatpush1.msra.mxu0 %v25
  %3823 = vmatprep.subr.mxu0 %v30
  %3824 = vmatpush1.msra.mxu0 %v29
  %3825 = vmatprep.subr.mxu0 %v34
  %3826 = vmatpush1.msra.mxu0 %v33
  %3827 = vmatprep.subr.mxu0 %v38
  %3828 = vmatpush1.msra.mxu0 %v37
  %3829 = vmatprep.subr.mxu0 %v42
  %3830 = vmatpush1.msra.mxu0 %v41
  %3831 = vmatprep.subr.mxu0 %v46
  %3832 = vmatpush1.msra.mxu0 %v45
  %3833 = vmatprep.subr.mxu0 %v50
  %3834 = vmatpush1.msra.mxu0 %v49
  %3835 = vmatprep.subr.mxu0 %v54
  %3836 = vmatpush1.msra.mxu0 %v53
  %3837 = vmatprep.subr.mxu0 %v58
  %3838 = vmatpush1.msra.mxu0 %v57
  %3839 = vmatprep.subr.mxu0 %v62
  %3840 = vmatpush1.msra.mxu0 %v61
  %3841 = vmatprep.subr.mxu0 %v66
  %3842 = vmatpush1.msra.mxu0 %v65
  %3843 = vmatprep.subr.mxu0 %v70
  %3844 = vmatpush1.msra.mxu0 %v69
  %3845 = vmatprep.subr.mxu0 %v74
  %3846 = vmatpush1.msra.mxu0 %v73
  %3847 = vmatprep.subr.mxu0 %v78
  %3848 = vmatpush1.msra.mxu0 %v77
  %3849 = vmatprep.subr.mxu0 %v82
  %3850 = vmatpush1.msra.mxu0 %v81
  %3851 = vmatprep.subr.mxu0 %v86
  %3852 = vmatpush1.msra.mxu0 %v85
  %3853 = vmatprep.subr.mxu0 %v90
  %3854 = vmatpush1.msra.mxu0 %v89
  %3855 = vmatprep.subr.mxu0 %v94
  %3856 = vmatpush1.msra.mxu0 %v93
  %3857 = vmatprep.subr.mxu0 %v98
  %3858 = vmatpush1.msra.mxu0 %v97
  %3859 = vmatprep.subr.mxu0 %v102
  %3860 = vmatpush1.msra.mxu0 %v101
  %3861 = vmatprep.subr.mxu0 %v106
  %3862 = vmatpush1.msra.mxu0 %v105
  %3863 = vmatprep.subr.mxu0 %v110
  %3864 = vmatpush1.msra.mxu0 %v109
  %3865 = vmatprep.subr.mxu0 %v114
  %3866 = vmatpush1.msra.mxu0 %v113
  %3867 = vmatprep.subr.mxu0 %v118
  %3868 = vmatpush1.msra.mxu0 %v117
  %3869 = vmatprep.subr.mxu0 %v122
  %3870 = vmatpush1.msra.mxu0 %v121
  %3871 = vmatprep.subr.mxu0 %v126
  %3872 = vmatpush1.msra.mxu0 %v125
  %3873 = vmatprep.subr.mxu0 %v130
  %3874 = vmatpush1.msra.mxu0 %v129
  %3875 = vmatprep.subr.mxu0 %v134
  %3876 = vmatpush1.msra.mxu0 %v133
  %3877 = vmatprep.subr.mxu0 %v138
  %3878 = vmatpush1.msra.mxu0 %v137
  %3879 = vmatprep.mubr.f32.mxu0 %v3693
  %3880 = vmatmul.mubr.f32.gmra.mrb[0].mxu0 %v3692
  %v3881 = vpop.f32.mrb[0].mxu0
  %v3882 = vadd.f32 0.0, %v3881
  %v3883 = vpop.f32.mrb[0].mxu0
  %v3884 = vadd.f32 0.0, %v3883
  %3885 = vdwg.mxu0
  %v3886 = vadd.f32 %v3740, %v3811
  %v3887 = vadd.f32 %v3741, %v3813
  %v3888 = vadd.f32 %v3742, %v3882
  %v3889 = vadd.f32 %v3743, %v3884
  %v3890 = vxor.u32 %v3886, 2147483648
  %v3891 = vmul.f32 %v3890, 1.442695
  %v3892 = vpow.pop %v3891
  %v3893 = vadd.f32 %v3892, 1.0
  %v3894 = vrcp.pop %v3893
  %v3895 = vmul.f32 1.0, %v3894
  %v3896 = vxor.u32 %v3887, 2147483648
  %v3897 = vmul.f32 %v3896, 1.442695
  %v3898 = vpow.pop %v3897
  %v3899 = vadd.f32 %v3898, 1.0
  %v3900 = vrcp.pop %v3899
  %v3901 = vmul.f32 1.0, %v3900
  %v3902 = vtanh.pop %v3888
  %v3903 = vxor.u32 %v3889, 2147483648
  %v3904 = vmul.f32 %v3903, 1.442695
  %v3905 = vpow.pop %v3904
  %v3906 = vadd.f32 %v3905, 1.0
  %v3907 = vrcp.pop %v3906
  %v3908 = vmul.f32 1.0, %v3907
  %v3909 = vmul.f32 %v3901, %v3677
  %v3910 = vmul.f32 %v3895, %v3902
  %v3911 = vadd.f32 %v3909, %v3910
  %v3912 = vtanh.pop %v3911
  %v3913 = vmul.f32 %v3908, %v3912
  %3914 = vst [vmem:[%s386] sm:$0x3] %v3913
  %v3917 = vunpack.c.l.s4 1983009808
  %v3918 = vunpack.c.0.s8 %v3917
  %v3919 = vlaneseq
  %v3920 = vshrl.u32 %v3919, 7
  %v3921 = vsub.s32 %v3918, %v3920
  %v3922 = vrot.slane %v3913, %v3921
  %v3923 = vcombine.high %v3922, %v3922
  %3925 = vst [vmem:[%s2 + $0x2] sm:$0x3] %v3923
  // Predicated region
  $region10: #{_lambda_.8} parent=0 // pred_check
    _
  $region11: #{_lambda_.8} parent=0 // pred_check_branch
    %3927 = sbr.rel (0) target = $region13
  $region12: #{_lambda_.8} parent=0 // pred_region
    _
  $region13: #{_lambda_.8} parent=0 // pred_fallthru
    _
  // Predicated region
  $region14: #{_lambda_.8} parent=0 // pred_check
    _
  $region15: #{_lambda_.8} parent=0 // pred_check_branch
    %3929 = sbr.rel (0) target = $region17
  $region16: #{_lambda_.8} parent=0 // pred_region
    _
  $region17: #{_lambda_.8} parent=0 // pred_fallthru
    _

</llo_original>
